<compile_context>
chip_gen: v7x
topology: tpu7x:2x2x1
jax: 0.10.0
libtpu: 0.0.40
codegen_flags: <defaults>
</compile_context>

<pallas_src>
import functools

import jax
import jax.numpy as jnp
from jax.experimental import pallas as pl
from jax.experimental.pallas import tpu as pltpu


# ----------------------------------------------------------------------------
# Pallas kernels
# ----------------------------------------------------------------------------

def _mm_affine_kernel(a_ref, b_ref, scale_ref, shift_ref, o_ref, acc_ref, *, relu):
    """Tiled matmul with f32 accumulator; epilogue: acc*scale + shift (+ReLU)."""
    @pl.when(pl.program_id(2) == 0)
    def _init():
        acc_ref[...] = jnp.zeros_like(acc_ref)

    acc_ref[...] += jnp.dot(a_ref[...], b_ref[...],
                            preferred_element_type=jnp.float32)

    @pl.when(pl.program_id(2) == pl.num_programs(2) - 1)
    def _fin():
        out = acc_ref[...] * scale_ref[...] + shift_ref[...]
        if relu:
            out = jnp.maximum(out, 0.0)
        o_ref[...] = out.astype(o_ref.dtype)


def _mm_affine_res_kernel(a_ref, b_ref, scale_ref, shift_ref, r_ref, o_ref, acc_ref,
                          *, relu):
    """Same as above but fuses a residual add into the epilogue (Bottleneck conv3)."""
    @pl.when(pl.program_id(2) == 0)
    def _init():
        acc_ref[...] = jnp.zeros_like(acc_ref)

    acc_ref[...] += jnp.dot(a_ref[...], b_ref[...],
                            preferred_element_type=jnp.float32)

    @pl.when(pl.program_id(2) == pl.num_programs(2) - 1)
    def _fin():
        out = acc_ref[...] * scale_ref[...] + shift_ref[...] + r_ref[...].astype(jnp.float32)
        if relu:
            out = jnp.maximum(out, 0.0)
        o_ref[...] = out.astype(o_ref.dtype)


def _attnpool_kernel(q_ref, k_ref, v_ref, o_ref):
    """Single-query (Lq=1) multi-head attention: q (BH,Dh), k/v (BH,L,Dh)."""
    q = q_ref[...].astype(jnp.float32)
    k = k_ref[...].astype(jnp.float32)
    v = v_ref[...].astype(jnp.float32)
    s = jnp.sum(q[:, None, :] * k, axis=-1)            # (BH, L)  — VPU/XLU work
    s = s - jnp.max(s, axis=-1, keepdims=True)
    p = jnp.exp(s)
    p = p * pl.reciprocal(jnp.sum(p, axis=-1, keepdims=True), approx=True)
    o_ref[...] = jnp.sum(p[:, :, None] * v, axis=1).astype(o_ref.dtype)


# ----------------------------------------------------------------------------
# Kernel wrappers
# ----------------------------------------------------------------------------

def _round_up(x, m):
    return ((x + m - 1) // m) * m


def matmul_affine(a, b, scale, shift, *, residual=None, relu=False,
                  tm_max=256, tn_max=256, tk_max=512, out_dtype=jnp.float32):
    """out = maybe_relu((a @ b) * scale + shift [+ residual]).

    a: (M, K), b: (K, N), scale/shift: (1, N).  Operands are padded to tile
    multiples and cast to bf16 for the MXU; accumulation and epilogue are f32.
    """
    M, K = a.shape
    K2, N = b.shape
    assert K == K2

    tm = min(tm_max, _round_up(M, 16))
    tn = min(tn_max, _round_up(N, 128))
    tk = min(tk_max, _round_up(K, 128))
    Mp, Np, Kp = _round_up(M, tm), _round_up(N, tn), _round_up(K, tk)

    a_p = jnp.pad(a, ((0, Mp - M), (0, Kp - K))).astype(jnp.bfloat16)
    b_p = jnp.pad(b.astype(jnp.bfloat16), ((0, Kp - K), (0, Np - N)))
    sc_p = jnp.pad(scale.astype(jnp.float32).reshape(1, N), ((0, 0), (0, Np - N)))
    sh_p = jnp.pad(shift.astype(jnp.float32).reshape(1, N), ((0, 0), (0, Np - N)))

    grid = (Mp // tm, Np // tn, Kp // tk)
    in_specs = [
        pl.BlockSpec((tm, tk), lambda i, j, k: (i, k)),
        pl.BlockSpec((tk, tn), lambda i, j, k: (k, j)),
        pl.BlockSpec((1, tn), lambda i, j, k: (0, j)),
        pl.BlockSpec((1, tn), lambda i, j, k: (0, j)),
    ]
    operands = [a_p, b_p, sc_p, sh_p]
    if residual is not None:
        r_p = jnp.pad(residual.astype(jnp.float32), ((0, Mp - M), (0, Np - N)))
        in_specs.append(pl.BlockSpec((tm, tn), lambda i, j, k: (i, j)))
        operands.append(r_p)
        kernel = functools.partial(_mm_affine_res_kernel, relu=relu)
    else:
        kernel = functools.partial(_mm_affine_kernel, relu=relu)

    out = pl.pallas_call(
        kernel,
        out_shape=jax.ShapeDtypeStruct((Mp, Np), out_dtype),
        grid=grid,
        in_specs=in_specs,
        out_specs=pl.BlockSpec((tm, tn), lambda i, j, k: (i, j)),
        scratch_shapes=[pltpu.VMEM((tm, tn), jnp.float32)],
        compiler_params=pltpu.CompilerParams(
            dimension_semantics=("parallel", "parallel", "arbitrary"),
            vmem_limit_bytes=32 * 1024 * 1024,
        ),
    )(*operands)
    return out[:M, :N]


def attention_pool(q, k, v):
    """q: (B*heads, Dh), k/v: (B*heads, L, Dh) -> (B*heads, Dh)."""
    BH, Dh = q.shape
    _, L, _ = k.shape
    return pl.pallas_call(
        _attnpool_kernel,
        out_shape=jax.ShapeDtypeStruct((BH, Dh), jnp.float32),
        grid=(1,),
        in_specs=[pl.BlockSpec((BH, Dh), lambda i: (0, 0)),
                  pl.BlockSpec((BH, L, Dh), lambda i: (0, 0, 0)),
                  pl.BlockSpec((BH, L, Dh), lambda i: (0, 0, 0))],
        out_specs=pl.BlockSpec((BH, Dh), lambda i: (0, 0)),
    )(q, k, v)


# ----------------------------------------------------------------------------
# Glue: conv-as-matmul, avg-pool
# ----------------------------------------------------------------------------

def conv_bn(x, cp, *, ksize=1, stride=1, padding=0, relu=False, residual=None):
    """x: NHWC f32.  cp = {'w': (kh*kw*Cin, Cout) bf16, 'scale', 'shift': (1, Cout) f32}.

    1x1 convs skip im2col entirely; for kxk convs the patch matrix is built in bf16.
    Optional `residual` (B,Ho,Wo,Cout) is fused into the matmul epilogue with ReLU.
    """
    B, H, W, Cin = x.shape
    Cout = cp['w'].shape[1]
    if ksize == 1:
        assert stride == 1 and padding == 0
        Ho, Wo = H, W
        patches = x.reshape(B * H * W, Cin)
    else:
        Ho = (H + 2 * padding - ksize) // stride + 1
        Wo = (W + 2 * padding - ksize) // stride + 1
        xp = jnp.pad(x, ((0, 0), (padding, padding), (padding, padding), (0, 0)))
        xp = xp.astype(jnp.bfloat16)
        cols = []
        for i in range(ksize):
            for j in range(ksize):
                cols.append(xp[:, i:i + stride * Ho:stride, j:j + stride * Wo:stride, :])
        # TODO(synk): fold the kh*kw taps into the matmul K grid axis (shifted slabs via
        # index_map) to avoid materializing this im2col matrix in HBM for 3x3 convs.
        patches = jnp.concatenate(cols, axis=-1).reshape(B * Ho * Wo, ksize * ksize * Cin)

    res2d = None
    if residual is not None:
        res2d = residual.reshape(B * Ho * Wo, Cout)
    out = matmul_affine(patches, cp['w'], cp['scale'], cp['shift'],
                        residual=res2d, relu=relu)
    return out.reshape(B, Ho, Wo, Cout)


def avg_pool(x, k):
    # TODO(synk): avg-pool kept in plain JAX (tiny, memory-bound glue); assumes H,W % k == 0.
    B, H, W, C = x.shape
    return x.reshape(B, H // k, k, W // k, k, C).mean(axis=(2, 4))


# ----------------------------------------------------------------------------
# Parameter initialization (deterministic, synthetic) + preparation
# ----------------------------------------------------------------------------

def init_conv(key, cout, cin, k):
    return jax.random.normal(key, (cout, cin, k, k), jnp.float32) / float((cin * k * k) ** 0.5)


def init_bn(key, c):
    k1, k2, k3, k4 = jax.random.split(key, 4)
    return dict(gamma=1.0 + 0.1 * jax.random.normal(k1, (c,), jnp.float32),
                beta=0.1 * jax.random.normal(k2, (c,), jnp.float32),
                mean=0.1 * jax.random.normal(k3, (c,), jnp.float32),
                var=jnp.abs(jax.random.normal(k4, (c,), jnp.float32)) + 0.5)


def init_linear(key, cin, cout):
    k1, k2 = jax.random.split(key)
    return dict(w=jax.random.normal(k1, (cout, cin), jnp.float32) / float(cin ** 0.5),
                b=0.1 * jax.random.normal(k2, (cout,), jnp.float32))


def init_bottleneck(key, inplanes, planes, stride):
    keys = jax.random.split(key, 8)
    p = dict(
        conv1=init_conv(keys[0], planes, inplanes, 1), bn1=init_bn(keys[1], planes),
        conv2=init_conv(keys[2], planes, planes, 3), bn2=init_bn(keys[3], planes),
        conv3=init_conv(keys[4], planes * 4, planes, 1), bn3=init_bn(keys[5], planes * 4),
    )
    if stride > 1 or inplanes != planes * 4:
        p['ds_conv'] = init_conv(keys[6], planes * 4, inplanes, 1)
        p['ds_bn'] = init_bn(keys[7], planes * 4)
    return p


def init_modified_resnet(key, layers, output_dim, heads, input_resolution, width):
    keys = jax.random.split(key, 16)
    params = dict(
        conv1=init_conv(keys[0], width // 2, 3, 3), bn1=init_bn(keys[1], width // 2),
        conv2=init_conv(keys[2], width // 2, width // 2, 3), bn2=init_bn(keys[3], width // 2),
        conv3=init_conv(keys[4], width, width // 2, 3), bn3=init_bn(keys[5], width),
    )
    inplanes = width
    layer_params = []
    stage_widths = [width, width * 2, width * 4, width * 8]
    stage_strides = [1, 2, 2, 2]
    kidx = 6
    for planes, n_blocks, stride in zip(stage_widths, layers, stage_strides):
        blocks = [init_bottleneck(keys[kidx], inplanes, planes, stride)]
        inplanes = planes * 4
        for bi in range(1, n_blocks):
            blocks.append(init_bottleneck(jax.random.fold_in(keys[kidx], bi),
                                          inplanes, planes, 1))
        layer_params.append(blocks)
        kidx += 1
    params['layers'] = layer_params

    embed_dim = width * 32
    spacial_dim = input_resolution // 32
    ak = jax.random.split(keys[kidx], 5)
    params['attnpool'] = dict(
        pos_embed=jax.random.normal(ak[0], (spacial_dim ** 2 + 1, embed_dim), jnp.float32)
        / float(embed_dim ** 0.5),
        q=init_linear(ak[1], embed_dim, embed_dim),
        k=init_linear(ak[2], embed_dim, embed_dim),
        v=init_linear(ak[3], embed_dim, embed_dim),
        c=init_linear(ak[4], embed_dim, output_dim or embed_dim),
    )
    return params


def _fold_bn(bn, eps=1e-5):
    scale = bn['gamma'] / jnp.sqrt(bn['var'] + eps)
    shift = bn['beta'] - bn['mean'] * scale
    return scale, shift


def prepare_conv(w, bn):
    """Fold BN and reshape (Cout,Cin,kh,kw) -> (kh*kw*Cin, Cout) bf16 (done once)."""
    cout, cin, kh, kw = w.shape
    scale, shift = _fold_bn(bn)
    wmat = jnp.transpose(w, (2, 3, 1, 0)).reshape(kh * kw * cin, cout).astype(jnp.bfloat16)
    return dict(w=wmat, scale=scale.reshape(1, cout), shift=shift.reshape(1, cout))


def prepare_linear(lin):
    cout, _ = lin['w'].shape
    return dict(w=jnp.transpose(lin['w']).astype(jnp.bfloat16),
                scale=jnp.ones((1, cout), jnp.float32),
                shift=lin['b'].reshape(1, cout))


def prepare_params(params):
    fp = dict(
        stem=[prepare_conv(params['conv1'], params['bn1']),
              prepare_conv(params['conv2'], params['bn2']),
              prepare_conv(params['conv3'], params['bn3'])],
        layers=[],
        attnpool=dict(
            pos_embed=params['attnpool']['pos_embed'],
            q=prepare_linear(params['attnpool']['q']),
            k=prepare_linear(params['attnpool']['k']),
            v=prepare_linear(params['attnpool']['v']),
            c=prepare_linear(params['attnpool']['c']),
        ),
    )
    for layer in params['layers']:
        blocks = []
        for blk in layer:
            fb = dict(conv1=prepare_conv(blk['conv1'], blk['bn1']),
                      conv2=prepare_conv(blk['conv2'], blk['bn2']),
                      conv3=prepare_conv(blk['conv3'], blk['bn3']))
            if 'ds_conv' in blk:
                fb['ds'] = prepare_conv(blk['ds_conv'], blk['ds_bn'])
            blocks.append(fb)
        fp['layers'].append(blocks)
    return fp


# ----------------------------------------------------------------------------
# Forward pass
# ----------------------------------------------------------------------------

def bottleneck_fwd(x, p, stride):
    out = conv_bn(x, p['conv1'], relu=True)                                # 1x1 + BN + ReLU
    out = conv_bn(out, p['conv2'], ksize=3, padding=1, relu=True)          # 3x3 + BN + ReLU
    if stride > 1:
        out = avg_pool(out, stride)
    if 'ds' in p:
        idn = avg_pool(x, stride) if stride > 1 else x
        idn = conv_bn(idn, p['ds'])                                        # 1x1 + BN
    else:
        idn = x
    # conv3 (1x1 + BN) with residual add + ReLU fused into the matmul epilogue.
    return conv_bn(out, p['conv3'], relu=True, residual=idn)


def attnpool_fwd(x, p, num_heads):
    B, H, W, C = x.shape
    L = H * W + 1
    Dh = C // num_heads
    tokens = x.reshape(B, H * W, C)
    seq = jnp.concatenate([tokens.mean(axis=1, keepdims=True), tokens], axis=1)
    seq = seq + p['pos_embed'][None, :, :]

    q_in = seq[:, 0, :]                     # query = (mean + pos) token only
    kv_in = seq.reshape(B * L, C)
    q = matmul_affine(q_in, p['q']['w'], p['q']['scale'], p['q']['shift'])
    k = matmul_affine(kv_in, p['k']['w'], p['k']['scale'], p['k']['shift'])
    v = matmul_affine(kv_in, p['v']['w'], p['v']['scale'], p['v']['shift'])
    q = q * (Dh ** -0.5)

    qh = q.reshape(B, num_heads, Dh).reshape(B * num_heads, Dh)
    kh = k.reshape(B, L, num_heads, Dh).transpose(0, 2, 1, 3).reshape(B * num_heads, L, Dh)
    vh = v.reshape(B, L, num_heads, Dh).transpose(0, 2, 1, 3).reshape(B * num_heads, L, Dh)

    o = attention_pool(qh, kh, vh)          # (B*heads, Dh)
    o = o.reshape(B, C)
    return matmul_affine(o, p['c']['w'], p['c']['scale'], p['c']['shift'])


def modified_resnet_fwd(x_nchw, fp, *, heads, stage_strides=(1, 2, 2, 2)):
    # x_nchw: (B, 3, R, R) — PyTorch layout; convert to NHWC internally.
    x = jnp.transpose(x_nchw, (0, 2, 3, 1)).astype(jnp.float32)
    x = conv_bn(x, fp['stem'][0], ksize=3, stride=2, padding=1, relu=True)
    x = conv_bn(x, fp['stem'][1], ksize=3, stride=1, padding=1, relu=True)
    x = conv_bn(x, fp['stem'][2], ksize=3, stride=1, padding=1, relu=True)
    x = avg_pool(x, 2)
    for si, layer in enumerate(fp['layers']):
        for bi, blk in enumerate(layer):
            stride = stage_strides[si] if bi == 0 else 1
            x = bottleneck_fwd(x, blk, stride)
    return attnpool_fwd(x, fp['attnpool'], heads)


# ----------------------------------------------------------------------------
# Main
# ----------------------------------------------------------------------------

if __name__ == "__main__":
    key = jax.random.PRNGKey(0)
    pkey, xkey = jax.random.split(key)

    # Small config: layers=(1,1,1,1), output_dim=16, heads=4, input_resolution=32, width=8
    layers = (1, 1, 1, 1)
    output_dim = 16
    heads = 4
    input_resolution = 32
    width = 8

    raw_params = init_modified_resnet(pkey, layers, output_dim, heads,
                                      input_resolution, width)
    fparams = prepare_params(raw_params)      # fold BN, reshape/cast weights once

    batch = 2
    x = jax.random.normal(xkey, (batch, 3, input_resolution, input_resolution), jnp.float32)

    fwd = jax.jit(functools.partial(modified_resnet_fwd, heads=heads))
    out = jax.block_until_ready(fwd(x, fparams))

    assert out.shape == (batch, output_dim), out.shape
    assert bool(jnp.all(jnp.isfinite(out)))
    print("KERNEL_OK")
</pallas_src>

<mosaic_0001>
module attributes {stable_mosaic.version = 11 : i64} {
  func.func @_mm_affine_kernel(%arg0: i32, %arg1: i32, %arg2: i32, %arg3: memref<256x128xbf16, #tpu.memory_space<vmem>>, %arg4: memref<128x128xbf16, #tpu.memory_space<vmem>>, %arg5: memref<1x128xf32, #tpu.memory_space<vmem>>, %arg6: memref<1x128xf32, #tpu.memory_space<vmem>>, %arg7: memref<256x128xf32, #tpu.memory_space<vmem>>, %arg8: memref<256x128xf32, #tpu.memory_space<vmem>>) attributes {dimension_semantics = [#tpu.dimension_semantics<parallel>, #tpu.dimension_semantics<parallel>, #tpu.dimension_semantics<arbitrary>], iteration_bounds = array<i64: 2, 1, 1>, scalar_prefetch = 0 : i64, scratch_operands = 1 : i64, tpu.core_type = #tpu.core_type<tc>, window_params = [{transform_indices = @transform_0, window_bounds = array<i64: 256, 128>}, {transform_indices = @transform_1, window_bounds = array<i64: 128, 128>}, {transform_indices = @transform_2, window_bounds = array<i64: 1, 128>}, {transform_indices = @transform_3, window_bounds = array<i64: 1, 128>}, {transform_indices = @transform_4, window_bounds = array<i64: 256, 128>}]} {
    %c0_i32 = arith.constant 0 : i32
    %0 = arith.cmpi eq, %arg2, %c0_i32 : i32
    %1 = arith.extui %0 : i1 to i32
    %c0_i32_0 = arith.constant 0 : i32
    %2 = arith.cmpi ne, %1, %c0_i32_0 : i32
    scf.if %2 {
      %cst_10 = arith.constant 0.000000e+00 : f32
      %12 = vector.broadcast %cst_10 : f32 to vector<256x128xf32>
      %c0_11 = arith.constant 0 : index
      %c0_12 = arith.constant 0 : index
      %13 = vector.load %arg8[%c0_11, %c0_12] : memref<256x128xf32, #tpu.memory_space<vmem>>, vector<256x128xf32>
      tpu.vector_store %arg8[%c0_11, %c0_12], %12 {strides = array<i32>} : memref<256x128xf32, #tpu.memory_space<vmem>>, vector<256x128xf32>,
    } else {
    }
    %c0 = arith.constant 0 : index
    %c0_1 = arith.constant 0 : index
    %3 = vector.load %arg8[%c0, %c0_1] : memref<256x128xf32, #tpu.memory_space<vmem>>, vector<256x128xf32>
    %c0_2 = arith.constant 0 : index
    %c0_3 = arith.constant 0 : index
    %4 = vector.load %arg3[%c0_2, %c0_3] : memref<256x128xbf16, #tpu.memory_space<vmem>>, vector<256x128xbf16>
    %c0_4 = arith.constant 0 : index
    %c0_5 = arith.constant 0 : index
    %5 = vector.load %arg4[%c0_4, %c0_5] : memref<128x128xbf16, #tpu.memory_space<vmem>>, vector<128x128xbf16>
    %cst = arith.constant dense<0.000000e+00> : vector<256x128xf32>
    %6 = tpu.matmul %4, %5, %cst {dimension_numbers = #tpu.dot_dimension_numbers<[1], [0], [0], [1], [0, 0, 1, 1], [], []>} : vector<256x128xbf16>, vector<128x128xbf16>, vector<256x128xf32> -> vector<256x128xf32>
    %7 = arith.addf %3, %6 : vector<256x128xf32>
    %c0_6 = arith.constant 0 : index
    %c0_7 = arith.constant 0 : index
    %8 = vector.load %arg8[%c0_6, %c0_7] : memref<256x128xf32, #tpu.memory_space<vmem>>, vector<256x128xf32>
    tpu.vector_store %arg8[%c0_6, %c0_7], %7 {strides = array<i32>} : memref<256x128xf32, #tpu.memory_space<vmem>>, vector<256x128xf32>,
    %c0_i32_8 = arith.constant 0 : i32
    %9 = arith.cmpi eq, %arg2, %c0_i32_8 : i32
    %10 = arith.extui %9 : i1 to i32
    %c0_i32_9 = arith.constant 0 : i32
    %11 = arith.cmpi ne, %10, %c0_i32_9 : i32
    scf.if %11 {
      %c0_10 = arith.constant 0 : index
      %c0_11 = arith.constant 0 : index
      %12 = vector.load %arg8[%c0_10, %c0_11] : memref<256x128xf32, #tpu.memory_space<vmem>>, vector<256x128xf32>
      %c0_12 = arith.constant 0 : index
      %c0_13 = arith.constant 0 : index
      %13 = vector.load %arg5[%c0_12, %c0_13] : memref<1x128xf32, #tpu.memory_space<vmem>>, vector<1x128xf32>
      %14 = vector.broadcast %13 : vector<1x128xf32> to vector<256x128xf32>
      %15 = arith.mulf %12, %14 : vector<256x128xf32>
      %c0_14 = arith.constant 0 : index
      %c0_15 = arith.constant 0 : index
      %16 = vector.load %arg6[%c0_14, %c0_15] : memref<1x128xf32, #tpu.memory_space<vmem>>, vector<1x128xf32>
      %17 = vector.broadcast %16 : vector<1x128xf32> to vector<256x128xf32>
      %18 = arith.addf %15, %17 : vector<256x128xf32>
      %cst_16 = arith.constant 0.000000e+00 : f32
      %19 = vector.broadcast %cst_16 : f32 to vector<256x128xf32>
      %20 = arith.maximumf %18, %19 : vector<256x128xf32>
      %c0_17 = arith.constant 0 : index
      %c0_18 = arith.constant 0 : index
      %21 = vector.load %arg7[%c0_17, %c0_18] : memref<256x128xf32, #tpu.memory_space<vmem>>, vector<256x128xf32>
      tpu.vector_store %arg7[%c0_17, %c0_18], %20 {strides = array<i32>} : memref<256x128xf32, #tpu.memory_space<vmem>>, vector<256x128xf32>,
    } else {
    }
    return
  }
  func.func @transform_0(%arg0: i32, %arg1: i32, %arg2: i32) -> (i32, i32) {
    %c0_i32 = arith.constant 0 : i32
    return %arg0, %arg2 : i32, i32
  }
  func.func @transform_1(%arg0: i32, %arg1: i32, %arg2: i32) -> (i32, i32) {
    %c0_i32 = arith.constant 0 : i32
    return %arg2, %arg1 : i32, i32
  }
  func.func @transform_2(%arg0: i32, %arg1: i32, %arg2: i32) -> (i32, i32) {
    %c0_i32 = arith.constant 0 : i32
    %c0_i32_0 = arith.constant 0 : i32
    return %c0_i32, %arg1 : i32, i32
  }
  func.func @transform_3(%arg0: i32, %arg1: i32, %arg2: i32) -> (i32, i32) {
    %c0_i32 = arith.constant 0 : i32
    %c0_i32_0 = arith.constant 0 : i32
    return %c0_i32, %arg1 : i32, i32
  }
  func.func @transform_4(%arg0: i32, %arg1: i32, %arg2: i32) -> (i32, i32) {
    %c0_i32 = arith.constant 0 : i32
    return %arg0, %arg1 : i32, i32
  }
}

module attributes {stable_mosaic.version = 11 : i64} {
  func.func @_mm_affine_kernel(%arg0: i32, %arg1: i32, %arg2: i32, %arg3: memref<128x128xbf16, #tpu.memory_space<vmem>>, %arg4: memref<128x128xbf16, #tpu.memory_space<vmem>>, %arg5: memref<1x128xf32, #tpu.memory_space<vmem>>, %arg6: memref<1x128xf32, #tpu.memory_space<vmem>>, %arg7: memref<128x128xf32, #tpu.memory_space<vmem>>, %arg8: memref<128x128xf32, #tpu.memory_space<vmem>>) attributes {dimension_semantics = [#tpu.dimension_semantics<parallel>, #tpu.dimension_semantics<parallel>, #tpu.dimension_semantics<arbitrary>], iteration_bounds = array<i64: 1, 1, 1>, scalar_prefetch = 0 : i64, scratch_operands = 1 : i64, tpu.core_type = #tpu.core_type<tc>, window_params = [{transform_indices = @transform_0, window_bounds = array<i64: 128, 128>}, {transform_indices = @transform_1, window_bounds = array<i64: 128, 128>}, {transform_indices = @transform_2, window_bounds = array<i64: 1, 128>}, {transform_indices = @transform_3, window_bounds = array<i64: 1, 128>}, {transform_indices = @transform_4, window_bounds = array<i64: 128, 128>}]} {
    %c0_i32 = arith.constant 0 : i32
    %0 = arith.cmpi eq, %arg2, %c0_i32 : i32
    %1 = arith.extui %0 : i1 to i32
    %c0_i32_0 = arith.constant 0 : i32
    %2 = arith.cmpi ne, %1, %c0_i32_0 : i32
    scf.if %2 {
      %cst_10 = arith.constant 0.000000e+00 : f32
      %12 = vector.broadcast %cst_10 : f32 to vector<128x128xf32>
      %c0_11 = arith.constant 0 : index
      %c0_12 = arith.constant 0 : index
      %13 = vector.load %arg8[%c0_11, %c0_12] : memref<128x128xf32, #tpu.memory_space<vmem>>, vector<128x128xf32>
      tpu.vector_store %arg8[%c0_11, %c0_12], %12 {strides = array<i32>} : memref<128x128xf32, #tpu.memory_space<vmem>>, vector<128x128xf32>,
    } else {
    }
    %c0 = arith.constant 0 : index
    %c0_1 = arith.constant 0 : index
    %3 = vector.load %arg8[%c0, %c0_1] : memref<128x128xf32, #tpu.memory_space<vmem>>, vector<128x128xf32>
    %c0_2 = arith.constant 0 : index
    %c0_3 = arith.constant 0 : index
    %4 = vector.load %arg3[%c0_2, %c0_3] : memref<128x128xbf16, #tpu.memory_space<vmem>>, vector<128x128xbf16>
    %c0_4 = arith.constant 0 : index
    %c0_5 = arith.constant 0 : index
    %5 = vector.load %arg4[%c0_4, %c0_5] : memref<128x128xbf16, #tpu.memory_space<vmem>>, vector<128x128xbf16>
    %cst = arith.constant dense<0.000000e+00> : vector<128x128xf32>
    %6 = tpu.matmul %4, %5, %cst {dimension_numbers = #tpu.dot_dimension_numbers<[1], [0], [0], [1], [0, 0, 1, 1], [], []>} : vector<128x128xbf16>, vector<128x128xbf16>, vector<128x128xf32> -> vector<128x128xf32>
    %7 = arith.addf %3, %6 : vector<128x128xf32>
    %c0_6 = arith.constant 0 : index
    %c0_7 = arith.constant 0 : index
    %8 = vector.load %arg8[%c0_6, %c0_7] : memref<128x128xf32, #tpu.memory_space<vmem>>, vector<128x128xf32>
    tpu.vector_store %arg8[%c0_6, %c0_7], %7 {strides = array<i32>} : memref<128x128xf32, #tpu.memory_space<vmem>>, vector<128x128xf32>,
    %c0_i32_8 = arith.constant 0 : i32
    %9 = arith.cmpi eq, %arg2, %c0_i32_8 : i32
    %10 = arith.extui %9 : i1 to i32
    %c0_i32_9 = arith.constant 0 : i32
    %11 = arith.cmpi ne, %10, %c0_i32_9 : i32
    scf.if %11 {
      %c0_10 = arith.constant 0 : index
      %c0_11 = arith.constant 0 : index
      %12 = vector.load %arg8[%c0_10, %c0_11] : memref<128x128xf32, #tpu.memory_space<vmem>>, vector<128x128xf32>
      %c0_12 = arith.constant 0 : index
      %c0_13 = arith.constant 0 : index
      %13 = vector.load %arg5[%c0_12, %c0_13] : memref<1x128xf32, #tpu.memory_space<vmem>>, vector<1x128xf32>
      %14 = vector.broadcast %13 : vector<1x128xf32> to vector<128x128xf32>
      %15 = arith.mulf %12, %14 : vector<128x128xf32>
      %c0_14 = arith.constant 0 : index
      %c0_15 = arith.constant 0 : index
      %16 = vector.load %arg6[%c0_14, %c0_15] : memref<1x128xf32, #tpu.memory_space<vmem>>, vector<1x128xf32>
      %17 = vector.broadcast %16 : vector<1x128xf32> to vector<128x128xf32>
      %18 = arith.addf %15, %17 : vector<128x128xf32>
      %cst_16 = arith.constant 0.000000e+00 : f32
      %19 = vector.broadcast %cst_16 : f32 to vector<128x128xf32>
      %20 = arith.maximumf %18, %19 : vector<128x128xf32>
      %c0_17 = arith.constant 0 : index
      %c0_18 = arith.constant 0 : index
      %21 = vector.load %arg7[%c0_17, %c0_18] : memref<128x128xf32, #tpu.memory_space<vmem>>, vector<128x128xf32>
      tpu.vector_store %arg7[%c0_17, %c0_18], %20 {strides = array<i32>} : memref<128x128xf32, #tpu.memory_space<vmem>>, vector<128x128xf32>,
    } else {
    }
    return
  }
  func.func @transform_0(%arg0: i32, %arg1: i32, %arg2: i32) -> (i32, i32) {
    %c0_i32 = arith.constant 0 : i32
    return %arg0, %arg2 : i32, i32
  }
  func.func @transform_1(%arg0: i32, %arg1: i32, %arg2: i32) -> (i32, i32) {
    %c0_i32 = arith.constant 0 : i32
    return %arg2, %arg1 : i32, i32
  }
  func.func @transform_2(%arg0: i32, %arg1: i32, %arg2: i32) -> (i32, i32) {
    %c0_i32 = arith.constant 0 : i32
    %c0_i32_0 = arith.constant 0 : i32
    return %c0_i32, %arg1 : i32, i32
  }
  func.func @transform_3(%arg0: i32, %arg1: i32, %arg2: i32) -> (i32, i32) {
    %c0_i32 = arith.constant 0 : i32
    %c0_i32_0 = arith.constant 0 : i32
    return %c0_i32, %arg1 : i32, i32
  }
  func.func @transform_4(%arg0: i32, %arg1: i32, %arg2: i32) -> (i32, i32) {
    %c0_i32 = arith.constant 0 : i32
    return %arg0, %arg1 : i32, i32
  }
}

module attributes {stable_mosaic.version = 11 : i64} {
  func.func @_mm_affine_res_kernel(%arg0: i32, %arg1: i32, %arg2: i32, %arg3: memref<128x128xbf16, #tpu.memory_space<vmem>>, %arg4: memref<128x128xbf16, #tpu.memory_space<vmem>>, %arg5: memref<1x128xf32, #tpu.memory_space<vmem>>, %arg6: memref<1x128xf32, #tpu.memory_space<vmem>>, %arg7: memref<128x128xf32, #tpu.memory_space<vmem>>, %arg8: memref<128x128xf32, #tpu.memory_space<vmem>>, %arg9: memref<128x128xf32, #tpu.memory_space<vmem>>) attributes {dimension_semantics = [#tpu.dimension_semantics<parallel>, #tpu.dimension_semantics<parallel>, #tpu.dimension_semantics<arbitrary>], iteration_bounds = array<i64: 1, 1, 1>, scalar_prefetch = 0 : i64, scratch_operands = 1 : i64, tpu.core_type = #tpu.core_type<tc>, window_params = [{transform_indices = @transform_0, window_bounds = array<i64: 128, 128>}, {transform_indices = @transform_1, window_bounds = array<i64: 128, 128>}, {transform_indices = @transform_2, window_bounds = array<i64: 1, 128>}, {transform_indices = @transform_3, window_bounds = array<i64: 1, 128>}, {transform_indices = @transform_4, window_bounds = array<i64: 128, 128>}, {transform_indices = @transform_5, window_bounds = array<i64: 128, 128>}]} {
    %c0_i32 = arith.constant 0 : i32
    %0 = arith.cmpi eq, %arg2, %c0_i32 : i32
    %1 = arith.extui %0 : i1 to i32
    %c0_i32_0 = arith.constant 0 : i32
    %2 = arith.cmpi ne, %1, %c0_i32_0 : i32
    scf.if %2 {
      %cst_10 = arith.constant 0.000000e+00 : f32
      %12 = vector.broadcast %cst_10 : f32 to vector<128x128xf32>
      %c0_11 = arith.constant 0 : index
      %c0_12 = arith.constant 0 : index
      %13 = vector.load %arg9[%c0_11, %c0_12] : memref<128x128xf32, #tpu.memory_space<vmem>>, vector<128x128xf32>
      tpu.vector_store %arg9[%c0_11, %c0_12], %12 {strides = array<i32>} : memref<128x128xf32, #tpu.memory_space<vmem>>, vector<128x128xf32>,
    } else {
    }
    %c0 = arith.constant 0 : index
    %c0_1 = arith.constant 0 : index
    %3 = vector.load %arg9[%c0, %c0_1] : memref<128x128xf32, #tpu.memory_space<vmem>>, vector<128x128xf32>
    %c0_2 = arith.constant 0 : index
    %c0_3 = arith.constant 0 : index
    %4 = vector.load %arg3[%c0_2, %c0_3] : memref<128x128xbf16, #tpu.memory_space<vmem>>, vector<128x128xbf16>
    %c0_4 = arith.constant 0 : index
    %c0_5 = arith.constant 0 : index
    %5 = vector.load %arg4[%c0_4, %c0_5] : memref<128x128xbf16, #tpu.memory_space<vmem>>, vector<128x128xbf16>
    %cst = arith.constant dense<0.000000e+00> : vector<128x128xf32>
    %6 = tpu.matmul %4, %5, %cst {dimension_numbers = #tpu.dot_dimension_numbers<[1], [0], [0], [1], [0, 0, 1, 1], [], []>} : vector<128x128xbf16>, vector<128x128xbf16>, vector<128x128xf32> -> vector<128x128xf32>
    %7 = arith.addf %3, %6 : vector<128x128xf32>
    %c0_6 = arith.constant 0 : index
    %c0_7 = arith.constant 0 : index
    %8 = vector.load %arg9[%c0_6, %c0_7] : memref<128x128xf32, #tpu.memory_space<vmem>>, vector<128x128xf32>
    tpu.vector_store %arg9[%c0_6, %c0_7], %7 {strides = array<i32>} : memref<128x128xf32, #tpu.memory_space<vmem>>, vector<128x128xf32>,
    %c0_i32_8 = arith.constant 0 : i32
    %9 = arith.cmpi eq, %arg2, %c0_i32_8 : i32
    %10 = arith.extui %9 : i1 to i32
    %c0_i32_9 = arith.constant 0 : i32
    %11 = arith.cmpi ne, %10, %c0_i32_9 : i32
    scf.if %11 {
      %c0_10 = arith.constant 0 : index
      %c0_11 = arith.constant 0 : index
      %12 = vector.load %arg9[%c0_10, %c0_11] : memref<128x128xf32, #tpu.memory_space<vmem>>, vector<128x128xf32>
      %c0_12 = arith.constant 0 : index
      %c0_13 = arith.constant 0 : index
      %13 = vector.load %arg5[%c0_12, %c0_13] : memref<1x128xf32, #tpu.memory_space<vmem>>, vector<1x128xf32>
      %14 = vector.broadcast %13 : vector<1x128xf32> to vector<128x128xf32>
      %15 = arith.mulf %12, %14 : vector<128x128xf32>
      %c0_14 = arith.constant 0 : index
      %c0_15 = arith.constant 0 : index
      %16 = vector.load %arg6[%c0_14, %c0_15] : memref<1x128xf32, #tpu.memory_space<vmem>>, vector<1x128xf32>
      %17 = vector.broadcast %16 : vector<1x128xf32> to vector<128x128xf32>
      %18 = arith.addf %15, %17 : vector<128x128xf32>
      %c0_16 = arith.constant 0 : index
      %c0_17 = arith.constant 0 : index
      %19 = vector.load %arg7[%c0_16, %c0_17] : memref<128x128xf32, #tpu.memory_space<vmem>>, vector<128x128xf32>
      %20 = arith.addf %18, %19 : vector<128x128xf32>
      %cst_18 = arith.constant 0.000000e+00 : f32
      %21 = vector.broadcast %cst_18 : f32 to vector<128x128xf32>
      %22 = arith.maximumf %20, %21 : vector<128x128xf32>
      %c0_19 = arith.constant 0 : index
      %c0_20 = arith.constant 0 : index
      %23 = vector.load %arg8[%c0_19, %c0_20] : memref<128x128xf32, #tpu.memory_space<vmem>>, vector<128x128xf32>
      tpu.vector_store %arg8[%c0_19, %c0_20], %22 {strides = array<i32>} : memref<128x128xf32, #tpu.memory_space<vmem>>, vector<128x128xf32>,
    } else {
    }
    return
  }
  func.func @transform_0(%arg0: i32, %arg1: i32, %arg2: i32) -> (i32, i32) {
    %c0_i32 = arith.constant 0 : i32
    return %arg0, %arg2 : i32, i32
  }
  func.func @transform_1(%arg0: i32, %arg1: i32, %arg2: i32) -> (i32, i32) {
    %c0_i32 = arith.constant 0 : i32
    return %arg2, %arg1 : i32, i32
  }
  func.func @transform_2(%arg0: i32, %arg1: i32, %arg2: i32) -> (i32, i32) {
    %c0_i32 = arith.constant 0 : i32
    %c0_i32_0 = arith.constant 0 : i32
    return %c0_i32, %arg1 : i32, i32
  }
  func.func @transform_3(%arg0: i32, %arg1: i32, %arg2: i32) -> (i32, i32) {
    %c0_i32 = arith.constant 0 : i32
    %c0_i32_0 = arith.constant 0 : i32
    return %c0_i32, %arg1 : i32, i32
  }
  func.func @transform_4(%arg0: i32, %arg1: i32, %arg2: i32) -> (i32, i32) {
    %c0_i32 = arith.constant 0 : i32
    return %arg0, %arg1 : i32, i32
  }
  func.func @transform_5(%arg0: i32, %arg1: i32, %arg2: i32) -> (i32, i32) {
    %c0_i32 = arith.constant 0 : i32
    return %arg0, %arg1 : i32, i32
  }
}

module attributes {stable_mosaic.version = 11 : i64} {
  func.func @_mm_affine_kernel(%arg0: i32, %arg1: i32, %arg2: i32, %arg3: memref<128x128xbf16, #tpu.memory_space<vmem>>, %arg4: memref<128x128xbf16, #tpu.memory_space<vmem>>, %arg5: memref<1x128xf32, #tpu.memory_space<vmem>>, %arg6: memref<1x128xf32, #tpu.memory_space<vmem>>, %arg7: memref<128x128xf32, #tpu.memory_space<vmem>>, %arg8: memref<128x128xf32, #tpu.memory_space<vmem>>) attributes {dimension_semantics = [#tpu.dimension_semantics<parallel>, #tpu.dimension_semantics<parallel>, #tpu.dimension_semantics<arbitrary>], iteration_bounds = array<i64: 1, 1, 1>, scalar_prefetch = 0 : i64, scratch_operands = 1 : i64, tpu.core_type = #tpu.core_type<tc>, window_params = [{transform_indices = @transform_0, window_bounds = array<i64: 128, 128>}, {transform_indices = @transform_1, window_bounds = array<i64: 128, 128>}, {transform_indices = @transform_2, window_bounds = array<i64: 1, 128>}, {transform_indices = @transform_3, window_bounds = array<i64: 1, 128>}, {transform_indices = @transform_4, window_bounds = array<i64: 128, 128>}]} {
    %c0_i32 = arith.constant 0 : i32
    %0 = arith.cmpi eq, %arg2, %c0_i32 : i32
    %1 = arith.extui %0 : i1 to i32
    %c0_i32_0 = arith.constant 0 : i32
    %2 = arith.cmpi ne, %1, %c0_i32_0 : i32
    scf.if %2 {
      %cst_10 = arith.constant 0.000000e+00 : f32
      %12 = vector.broadcast %cst_10 : f32 to vector<128x128xf32>
      %c0_11 = arith.constant 0 : index
      %c0_12 = arith.constant 0 : index
      %13 = vector.load %arg8[%c0_11, %c0_12] : memref<128x128xf32, #tpu.memory_space<vmem>>, vector<128x128xf32>
      tpu.vector_store %arg8[%c0_11, %c0_12], %12 {strides = array<i32>} : memref<128x128xf32, #tpu.memory_space<vmem>>, vector<128x128xf32>,
    } else {
    }
    %c0 = arith.constant 0 : index
    %c0_1 = arith.constant 0 : index
    %3 = vector.load %arg8[%c0, %c0_1] : memref<128x128xf32, #tpu.memory_space<vmem>>, vector<128x128xf32>
    %c0_2 = arith.constant 0 : index
    %c0_3 = arith.constant 0 : index
    %4 = vector.load %arg3[%c0_2, %c0_3] : memref<128x128xbf16, #tpu.memory_space<vmem>>, vector<128x128xbf16>
    %c0_4 = arith.constant 0 : index
    %c0_5 = arith.constant 0 : index
    %5 = vector.load %arg4[%c0_4, %c0_5] : memref<128x128xbf16, #tpu.memory_space<vmem>>, vector<128x128xbf16>
    %cst = arith.constant dense<0.000000e+00> : vector<128x128xf32>
    %6 = tpu.matmul %4, %5, %cst {dimension_numbers = #tpu.dot_dimension_numbers<[1], [0], [0], [1], [0, 0, 1, 1], [], []>} : vector<128x128xbf16>, vector<128x128xbf16>, vector<128x128xf32> -> vector<128x128xf32>
    %7 = arith.addf %3, %6 : vector<128x128xf32>
    %c0_6 = arith.constant 0 : index
    %c0_7 = arith.constant 0 : index
    %8 = vector.load %arg8[%c0_6, %c0_7] : memref<128x128xf32, #tpu.memory_space<vmem>>, vector<128x128xf32>
    tpu.vector_store %arg8[%c0_6, %c0_7], %7 {strides = array<i32>} : memref<128x128xf32, #tpu.memory_space<vmem>>, vector<128x128xf32>,
    %c0_i32_8 = arith.constant 0 : i32
    %9 = arith.cmpi eq, %arg2, %c0_i32_8 : i32
    %10 = arith.extui %9 : i1 to i32
    %c0_i32_9 = arith.constant 0 : i32
    %11 = arith.cmpi ne, %10, %c0_i32_9 : i32
    scf.if %11 {
      %c0_10 = arith.constant 0 : index
      %c0_11 = arith.constant 0 : index
      %12 = vector.load %arg8[%c0_10, %c0_11] : memref<128x128xf32, #tpu.memory_space<vmem>>, vector<128x128xf32>
      %c0_12 = arith.constant 0 : index
      %c0_13 = arith.constant 0 : index
      %13 = vector.load %arg5[%c0_12, %c0_13] : memref<1x128xf32, #tpu.memory_space<vmem>>, vector<1x128xf32>
      %14 = vector.broadcast %13 : vector<1x128xf32> to vector<128x128xf32>
      %15 = arith.mulf %12, %14 : vector<128x128xf32>
      %c0_14 = arith.constant 0 : index
      %c0_15 = arith.constant 0 : index
      %16 = vector.load %arg6[%c0_14, %c0_15] : memref<1x128xf32, #tpu.memory_space<vmem>>, vector<1x128xf32>
      %17 = vector.broadcast %16 : vector<1x128xf32> to vector<128x128xf32>
      %18 = arith.addf %15, %17 : vector<128x128xf32>
      %c0_16 = arith.constant 0 : index
      %c0_17 = arith.constant 0 : index
      %19 = vector.load %arg7[%c0_16, %c0_17] : memref<128x128xf32, #tpu.memory_space<vmem>>, vector<128x128xf32>
      tpu.vector_store %arg7[%c0_16, %c0_17], %18 {strides = array<i32>} : memref<128x128xf32, #tpu.memory_space<vmem>>, vector<128x128xf32>,
    } else {
    }
    return
  }
  func.func @transform_0(%arg0: i32, %arg1: i32, %arg2: i32) -> (i32, i32) {
    %c0_i32 = arith.constant 0 : i32
    return %arg0, %arg2 : i32, i32
  }
  func.func @transform_1(%arg0: i32, %arg1: i32, %arg2: i32) -> (i32, i32) {
    %c0_i32 = arith.constant 0 : i32
    return %arg2, %arg1 : i32, i32
  }
  func.func @transform_2(%arg0: i32, %arg1: i32, %arg2: i32) -> (i32, i32) {
    %c0_i32 = arith.constant 0 : i32
    %c0_i32_0 = arith.constant 0 : i32
    return %c0_i32, %arg1 : i32, i32
  }
  func.func @transform_3(%arg0: i32, %arg1: i32, %arg2: i32) -> (i32, i32) {
    %c0_i32 = arith.constant 0 : i32
    %c0_i32_0 = arith.constant 0 : i32
    return %c0_i32, %arg1 : i32, i32
  }
  func.func @transform_4(%arg0: i32, %arg1: i32, %arg2: i32) -> (i32, i32) {
    %c0_i32 = arith.constant 0 : i32
    return %arg0, %arg1 : i32, i32
  }
}

module attributes {stable_mosaic.version = 11 : i64} {
  func.func @_mm_affine_kernel(%arg0: i32, %arg1: i32, %arg2: i32, %arg3: memref<128x256xbf16, #tpu.memory_space<vmem>>, %arg4: memref<256x128xbf16, #tpu.memory_space<vmem>>, %arg5: memref<1x128xf32, #tpu.memory_space<vmem>>, %arg6: memref<1x128xf32, #tpu.memory_space<vmem>>, %arg7: memref<128x128xf32, #tpu.memory_space<vmem>>, %arg8: memref<128x128xf32, #tpu.memory_space<vmem>>) attributes {dimension_semantics = [#tpu.dimension_semantics<parallel>, #tpu.dimension_semantics<parallel>, #tpu.dimension_semantics<arbitrary>], iteration_bounds = array<i64: 1, 1, 1>, scalar_prefetch = 0 : i64, scratch_operands = 1 : i64, tpu.core_type = #tpu.core_type<tc>, window_params = [{transform_indices = @transform_0, window_bounds = array<i64: 128, 256>}, {transform_indices = @transform_1, window_bounds = array<i64: 256, 128>}, {transform_indices = @transform_2, window_bounds = array<i64: 1, 128>}, {transform_indices = @transform_3, window_bounds = array<i64: 1, 128>}, {transform_indices = @transform_4, window_bounds = array<i64: 128, 128>}]} {
    %c0_i32 = arith.constant 0 : i32
    %0 = arith.cmpi eq, %arg2, %c0_i32 : i32
    %1 = arith.extui %0 : i1 to i32
    %c0_i32_0 = arith.constant 0 : i32
    %2 = arith.cmpi ne, %1, %c0_i32_0 : i32
    scf.if %2 {
      %cst_10 = arith.constant 0.000000e+00 : f32
      %12 = vector.broadcast %cst_10 : f32 to vector<128x128xf32>
      %c0_11 = arith.constant 0 : index
      %c0_12 = arith.constant 0 : index
      %13 = vector.load %arg8[%c0_11, %c0_12] : memref<128x128xf32, #tpu.memory_space<vmem>>, vector<128x128xf32>
      tpu.vector_store %arg8[%c0_11, %c0_12], %12 {strides = array<i32>} : memref<128x128xf32, #tpu.memory_space<vmem>>, vector<128x128xf32>,
    } else {
    }
    %c0 = arith.constant 0 : index
    %c0_1 = arith.constant 0 : index
    %3 = vector.load %arg8[%c0, %c0_1] : memref<128x128xf32, #tpu.memory_space<vmem>>, vector<128x128xf32>
    %c0_2 = arith.constant 0 : index
    %c0_3 = arith.constant 0 : index
    %4 = vector.load %arg3[%c0_2, %c0_3] : memref<128x256xbf16, #tpu.memory_space<vmem>>, vector<128x256xbf16>
    %c0_4 = arith.constant 0 : index
    %c0_5 = arith.constant 0 : index
    %5 = vector.load %arg4[%c0_4, %c0_5] : memref<256x128xbf16, #tpu.memory_space<vmem>>, vector<256x128xbf16>
    %cst = arith.constant dense<0.000000e+00> : vector<128x128xf32>
    %6 = tpu.matmul %4, %5, %cst {dimension_numbers = #tpu.dot_dimension_numbers<[1], [0], [0], [1], [0, 0, 1, 1], [], []>} : vector<128x256xbf16>, vector<256x128xbf16>, vector<128x128xf32> -> vector<128x128xf32>
    %7 = arith.addf %3, %6 : vector<128x128xf32>
    %c0_6 = arith.constant 0 : index
    %c0_7 = arith.constant 0 : index
    %8 = vector.load %arg8[%c0_6, %c0_7] : memref<128x128xf32, #tpu.memory_space<vmem>>, vector<128x128xf32>
    tpu.vector_store %arg8[%c0_6, %c0_7], %7 {strides = array<i32>} : memref<128x128xf32, #tpu.memory_space<vmem>>, vector<128x128xf32>,
    %c0_i32_8 = arith.constant 0 : i32
    %9 = arith.cmpi eq, %arg2, %c0_i32_8 : i32
    %10 = arith.extui %9 : i1 to i32
    %c0_i32_9 = arith.constant 0 : i32
    %11 = arith.cmpi ne, %10, %c0_i32_9 : i32
    scf.if %11 {
      %c0_10 = arith.constant 0 : index
      %c0_11 = arith.constant 0 : index
      %12 = vector.load %arg8[%c0_10, %c0_11] : memref<128x128xf32, #tpu.memory_space<vmem>>, vector<128x128xf32>
      %c0_12 = arith.constant 0 : index
      %c0_13 = arith.constant 0 : index
      %13 = vector.load %arg5[%c0_12, %c0_13] : memref<1x128xf32, #tpu.memory_space<vmem>>, vector<1x128xf32>
      %14 = vector.broadcast %13 : vector<1x128xf32> to vector<128x128xf32>
      %15 = arith.mulf %12, %14 : vector<128x128xf32>
      %c0_14 = arith.constant 0 : index
      %c0_15 = arith.constant 0 : index
      %16 = vector.load %arg6[%c0_14, %c0_15] : memref<1x128xf32, #tpu.memory_space<vmem>>, vector<1x128xf32>
      %17 = vector.broadcast %16 : vector<1x128xf32> to vector<128x128xf32>
      %18 = arith.addf %15, %17 : vector<128x128xf32>
      %cst_16 = arith.constant 0.000000e+00 : f32
      %19 = vector.broadcast %cst_16 : f32 to vector<128x128xf32>
      %20 = arith.maximumf %18, %19 : vector<128x128xf32>
      %c0_17 = arith.constant 0 : index
      %c0_18 = arith.constant 0 : index
      %21 = vector.load %arg7[%c0_17, %c0_18] : memref<128x128xf32, #tpu.memory_space<vmem>>, vector<128x128xf32>
      tpu.vector_store %arg7[%c0_17, %c0_18], %20 {strides = array<i32>} : memref<128x128xf32, #tpu.memory_space<vmem>>, vector<128x128xf32>,
    } else {
    }
    return
  }
  func.func @transform_0(%arg0: i32, %arg1: i32, %arg2: i32) -> (i32, i32) {
    %c0_i32 = arith.constant 0 : i32
    return %arg0, %arg2 : i32, i32
  }
  func.func @transform_1(%arg0: i32, %arg1: i32, %arg2: i32) -> (i32, i32) {
    %c0_i32 = arith.constant 0 : i32
    return %arg2, %arg1 : i32, i32
  }
  func.func @transform_2(%arg0: i32, %arg1: i32, %arg2: i32) -> (i32, i32) {
    %c0_i32 = arith.constant 0 : i32
    %c0_i32_0 = arith.constant 0 : i32
    return %c0_i32, %arg1 : i32, i32
  }
  func.func @transform_3(%arg0: i32, %arg1: i32, %arg2: i32) -> (i32, i32) {
    %c0_i32 = arith.constant 0 : i32
    %c0_i32_0 = arith.constant 0 : i32
    return %c0_i32, %arg1 : i32, i32
  }
  func.func @transform_4(%arg0: i32, %arg1: i32, %arg2: i32) -> (i32, i32) {
    %c0_i32 = arith.constant 0 : i32
    return %arg0, %arg1 : i32, i32
  }
}

module attributes {stable_mosaic.version = 11 : i64} {
  func.func @_mm_affine_kernel(%arg0: i32, %arg1: i32, %arg2: i32, %arg3: memref<32x128xbf16, #tpu.memory_space<vmem>>, %arg4: memref<128x128xbf16, #tpu.memory_space<vmem>>, %arg5: memref<1x128xf32, #tpu.memory_space<vmem>>, %arg6: memref<1x128xf32, #tpu.memory_space<vmem>>, %arg7: memref<32x128xf32, #tpu.memory_space<vmem>>, %arg8: memref<32x128xf32, #tpu.memory_space<vmem>>) attributes {dimension_semantics = [#tpu.dimension_semantics<parallel>, #tpu.dimension_semantics<parallel>, #tpu.dimension_semantics<arbitrary>], iteration_bounds = array<i64: 1, 1, 1>, scalar_prefetch = 0 : i64, scratch_operands = 1 : i64, tpu.core_type = #tpu.core_type<tc>, window_params = [{transform_indices = @transform_0, window_bounds = array<i64: 32, 128>}, {transform_indices = @transform_1, window_bounds = array<i64: 128, 128>}, {transform_indices = @transform_2, window_bounds = array<i64: 1, 128>}, {transform_indices = @transform_3, window_bounds = array<i64: 1, 128>}, {transform_indices = @transform_4, window_bounds = array<i64: 32, 128>}]} {
    %c0_i32 = arith.constant 0 : i32
    %0 = arith.cmpi eq, %arg2, %c0_i32 : i32
    %1 = arith.extui %0 : i1 to i32
    %c0_i32_0 = arith.constant 0 : i32
    %2 = arith.cmpi ne, %1, %c0_i32_0 : i32
    scf.if %2 {
      %cst_10 = arith.constant 0.000000e+00 : f32
      %12 = vector.broadcast %cst_10 : f32 to vector<32x128xf32>
      %c0_11 = arith.constant 0 : index
      %c0_12 = arith.constant 0 : index
      %13 = vector.load %arg8[%c0_11, %c0_12] : memref<32x128xf32, #tpu.memory_space<vmem>>, vector<32x128xf32>
      tpu.vector_store %arg8[%c0_11, %c0_12], %12 {strides = array<i32>} : memref<32x128xf32, #tpu.memory_space<vmem>>, vector<32x128xf32>,
    } else {
    }
    %c0 = arith.constant 0 : index
    %c0_1 = arith.constant 0 : index
    %3 = vector.load %arg8[%c0, %c0_1] : memref<32x128xf32, #tpu.memory_space<vmem>>, vector<32x128xf32>
    %c0_2 = arith.constant 0 : index
    %c0_3 = arith.constant 0 : index
    %4 = vector.load %arg3[%c0_2, %c0_3] : memref<32x128xbf16, #tpu.memory_space<vmem>>, vector<32x128xbf16>
    %c0_4 = arith.constant 0 : index
    %c0_5 = arith.constant 0 : index
    %5 = vector.load %arg4[%c0_4, %c0_5] : memref<128x128xbf16, #tpu.memory_space<vmem>>, vector<128x128xbf16>
    %cst = arith.constant dense<0.000000e+00> : vector<32x128xf32>
    %6 = tpu.matmul %4, %5, %cst {dimension_numbers = #tpu.dot_dimension_numbers<[1], [0], [0], [1], [0, 0, 1, 1], [], []>} : vector<32x128xbf16>, vector<128x128xbf16>, vector<32x128xf32> -> vector<32x128xf32>
    %7 = arith.addf %3, %6 : vector<32x128xf32>
    %c0_6 = arith.constant 0 : index
    %c0_7 = arith.constant 0 : index
    %8 = vector.load %arg8[%c0_6, %c0_7] : memref<32x128xf32, #tpu.memory_space<vmem>>, vector<32x128xf32>
    tpu.vector_store %arg8[%c0_6, %c0_7], %7 {strides = array<i32>} : memref<32x128xf32, #tpu.memory_space<vmem>>, vector<32x128xf32>,
    %c0_i32_8 = arith.constant 0 : i32
    %9 = arith.cmpi eq, %arg2, %c0_i32_8 : i32
    %10 = arith.extui %9 : i1 to i32
    %c0_i32_9 = arith.constant 0 : i32
    %11 = arith.cmpi ne, %10, %c0_i32_9 : i32
    scf.if %11 {
      %c0_10 = arith.constant 0 : index
      %c0_11 = arith.constant 0 : index
      %12 = vector.load %arg8[%c0_10, %c0_11] : memref<32x128xf32, #tpu.memory_space<vmem>>, vector<32x128xf32>
      %c0_12 = arith.constant 0 : index
      %c0_13 = arith.constant 0 : index
      %13 = vector.load %arg5[%c0_12, %c0_13] : memref<1x128xf32, #tpu.memory_space<vmem>>, vector<1x128xf32>
      %14 = vector.broadcast %13 : vector<1x128xf32> to vector<32x128xf32>
      %15 = arith.mulf %12, %14 : vector<32x128xf32>
      %c0_14 = arith.constant 0 : index
      %c0_15 = arith.constant 0 : index
      %16 = vector.load %arg6[%c0_14, %c0_15] : memref<1x128xf32, #tpu.memory_space<vmem>>, vector<1x128xf32>
      %17 = vector.broadcast %16 : vector<1x128xf32> to vector<32x128xf32>
      %18 = arith.addf %15, %17 : vector<32x128xf32>
      %c0_16 = arith.constant 0 : index
      %c0_17 = arith.constant 0 : index
      %19 = vector.load %arg7[%c0_16, %c0_17] : memref<32x128xf32, #tpu.memory_space<vmem>>, vector<32x128xf32>
      tpu.vector_store %arg7[%c0_16, %c0_17], %18 {strides = array<i32>} : memref<32x128xf32, #tpu.memory_space<vmem>>, vector<32x128xf32>,
    } else {
    }
    return
  }
  func.func @transform_0(%arg0: i32, %arg1: i32, %arg2: i32) -> (i32, i32) {
    %c0_i32 = arith.constant 0 : i32
    return %arg0, %arg2 : i32, i32
  }
  func.func @transform_1(%arg0: i32, %arg1: i32, %arg2: i32) -> (i32, i32) {
    %c0_i32 = arith.constant 0 : i32
    return %arg2, %arg1 : i32, i32
  }
  func.func @transform_2(%arg0: i32, %arg1: i32, %arg2: i32) -> (i32, i32) {
    %c0_i32 = arith.constant 0 : i32
    %c0_i32_0 = arith.constant 0 : i32
    return %c0_i32, %arg1 : i32, i32
  }
  func.func @transform_3(%arg0: i32, %arg1: i32, %arg2: i32) -> (i32, i32) {
    %c0_i32 = arith.constant 0 : i32
    %c0_i32_0 = arith.constant 0 : i32
    return %c0_i32, %arg1 : i32, i32
  }
  func.func @transform_4(%arg0: i32, %arg1: i32, %arg2: i32) -> (i32, i32) {
    %c0_i32 = arith.constant 0 : i32
    return %arg0, %arg1 : i32, i32
  }
}

module attributes {stable_mosaic.version = 11 : i64} {
  func.func @_mm_affine_res_kernel(%arg0: i32, %arg1: i32, %arg2: i32, %arg3: memref<32x128xbf16, #tpu.memory_space<vmem>>, %arg4: memref<128x128xbf16, #tpu.memory_space<vmem>>, %arg5: memref<1x128xf32, #tpu.memory_space<vmem>>, %arg6: memref<1x128xf32, #tpu.memory_space<vmem>>, %arg7: memref<32x128xf32, #tpu.memory_space<vmem>>, %arg8: memref<32x128xf32, #tpu.memory_space<vmem>>, %arg9: memref<32x128xf32, #tpu.memory_space<vmem>>) attributes {dimension_semantics = [#tpu.dimension_semantics<parallel>, #tpu.dimension_semantics<parallel>, #tpu.dimension_semantics<arbitrary>], iteration_bounds = array<i64: 1, 1, 1>, scalar_prefetch = 0 : i64, scratch_operands = 1 : i64, tpu.core_type = #tpu.core_type<tc>, window_params = [{transform_indices = @transform_0, window_bounds = array<i64: 32, 128>}, {transform_indices = @transform_1, window_bounds = array<i64: 128, 128>}, {transform_indices = @transform_2, window_bounds = array<i64: 1, 128>}, {transform_indices = @transform_3, window_bounds = array<i64: 1, 128>}, {transform_indices = @transform_4, window_bounds = array<i64: 32, 128>}, {transform_indices = @transform_5, window_bounds = array<i64: 32, 128>}]} {
    %c0_i32 = arith.constant 0 : i32
    %0 = arith.cmpi eq, %arg2, %c0_i32 : i32
    %1 = arith.extui %0 : i1 to i32
    %c0_i32_0 = arith.constant 0 : i32
    %2 = arith.cmpi ne, %1, %c0_i32_0 : i32
    scf.if %2 {
      %cst_10 = arith.constant 0.000000e+00 : f32
      %12 = vector.broadcast %cst_10 : f32 to vector<32x128xf32>
      %c0_11 = arith.constant 0 : index
      %c0_12 = arith.constant 0 : index
      %13 = vector.load %arg9[%c0_11, %c0_12] : memref<32x128xf32, #tpu.memory_space<vmem>>, vector<32x128xf32>
      tpu.vector_store %arg9[%c0_11, %c0_12], %12 {strides = array<i32>} : memref<32x128xf32, #tpu.memory_space<vmem>>, vector<32x128xf32>,
    } else {
    }
    %c0 = arith.constant 0 : index
    %c0_1 = arith.constant 0 : index
    %3 = vector.load %arg9[%c0, %c0_1] : memref<32x128xf32, #tpu.memory_space<vmem>>, vector<32x128xf32>
    %c0_2 = arith.constant 0 : index
    %c0_3 = arith.constant 0 : index
    %4 = vector.load %arg3[%c0_2, %c0_3] : memref<32x128xbf16, #tpu.memory_space<vmem>>, vector<32x128xbf16>
    %c0_4 = arith.constant 0 : index
    %c0_5 = arith.constant 0 : index
    %5 = vector.load %arg4[%c0_4, %c0_5] : memref<128x128xbf16, #tpu.memory_space<vmem>>, vector<128x128xbf16>
    %cst = arith.constant dense<0.000000e+00> : vector<32x128xf32>
    %6 = tpu.matmul %4, %5, %cst {dimension_numbers = #tpu.dot_dimension_numbers<[1], [0], [0], [1], [0, 0, 1, 1], [], []>} : vector<32x128xbf16>, vector<128x128xbf16>, vector<32x128xf32> -> vector<32x128xf32>
    %7 = arith.addf %3, %6 : vector<32x128xf32>
    %c0_6 = arith.constant 0 : index
    %c0_7 = arith.constant 0 : index
    %8 = vector.load %arg9[%c0_6, %c0_7] : memref<32x128xf32, #tpu.memory_space<vmem>>, vector<32x128xf32>
    tpu.vector_store %arg9[%c0_6, %c0_7], %7 {strides = array<i32>} : memref<32x128xf32, #tpu.memory_space<vmem>>, vector<32x128xf32>,
    %c0_i32_8 = arith.constant 0 : i32
    %9 = arith.cmpi eq, %arg2, %c0_i32_8 : i32
    %10 = arith.extui %9 : i1 to i32
    %c0_i32_9 = arith.constant 0 : i32
    %11 = arith.cmpi ne, %10, %c0_i32_9 : i32
    scf.if %11 {
      %c0_10 = arith.constant 0 : index
      %c0_11 = arith.constant 0 : index
      %12 = vector.load %arg9[%c0_10, %c0_11] : memref<32x128xf32, #tpu.memory_space<vmem>>, vector<32x128xf32>
      %c0_12 = arith.constant 0 : index
      %c0_13 = arith.constant 0 : index
      %13 = vector.load %arg5[%c0_12, %c0_13] : memref<1x128xf32, #tpu.memory_space<vmem>>, vector<1x128xf32>
      %14 = vector.broadcast %13 : vector<1x128xf32> to vector<32x128xf32>
      %15 = arith.mulf %12, %14 : vector<32x128xf32>
      %c0_14 = arith.constant 0 : index
      %c0_15 = arith.constant 0 : index
      %16 = vector.load %arg6[%c0_14, %c0_15] : memref<1x128xf32, #tpu.memory_space<vmem>>, vector<1x128xf32>
      %17 = vector.broadcast %16 : vector<1x128xf32> to vector<32x128xf32>
      %18 = arith.addf %15, %17 : vector<32x128xf32>
      %c0_16 = arith.constant 0 : index
      %c0_17 = arith.constant 0 : index
      %19 = vector.load %arg7[%c0_16, %c0_17] : memref<32x128xf32, #tpu.memory_space<vmem>>, vector<32x128xf32>
      %20 = arith.addf %18, %19 : vector<32x128xf32>
      %cst_18 = arith.constant 0.000000e+00 : f32
      %21 = vector.broadcast %cst_18 : f32 to vector<32x128xf32>
      %22 = arith.maximumf %20, %21 : vector<32x128xf32>
      %c0_19 = arith.constant 0 : index
      %c0_20 = arith.constant 0 : index
      %23 = vector.load %arg8[%c0_19, %c0_20] : memref<32x128xf32, #tpu.memory_space<vmem>>, vector<32x128xf32>
      tpu.vector_store %arg8[%c0_19, %c0_20], %22 {strides = array<i32>} : memref<32x128xf32, #tpu.memory_space<vmem>>, vector<32x128xf32>,
    } else {
    }
    return
  }
  func.func @transform_0(%arg0: i32, %arg1: i32, %arg2: i32) -> (i32, i32) {
    %c0_i32 = arith.constant 0 : i32
    return %arg0, %arg2 : i32, i32
  }
  func.func @transform_1(%arg0: i32, %arg1: i32, %arg2: i32) -> (i32, i32) {
    %c0_i32 = arith.constant 0 : i32
    return %arg2, %arg1 : i32, i32
  }
  func.func @transform_2(%arg0: i32, %arg1: i32, %arg2: i32) -> (i32, i32) {
    %c0_i32 = arith.constant 0 : i32
    %c0_i32_0 = arith.constant 0 : i32
    return %c0_i32, %arg1 : i32, i32
  }
  func.func @transform_3(%arg0: i32, %arg1: i32, %arg2: i32) -> (i32, i32) {
    %c0_i32 = arith.constant 0 : i32
    %c0_i32_0 = arith.constant 0 : i32
    return %c0_i32, %arg1 : i32, i32
  }
  func.func @transform_4(%arg0: i32, %arg1: i32, %arg2: i32) -> (i32, i32) {
    %c0_i32 = arith.constant 0 : i32
    return %arg0, %arg1 : i32, i32
  }
  func.func @transform_5(%arg0: i32, %arg1: i32, %arg2: i32) -> (i32, i32) {
    %c0_i32 = arith.constant 0 : i32
    return %arg0, %arg1 : i32, i32
  }
}

module attributes {stable_mosaic.version = 11 : i64} {
  func.func @_mm_affine_kernel(%arg0: i32, %arg1: i32, %arg2: i32, %arg3: memref<32x128xbf16, #tpu.memory_space<vmem>>, %arg4: memref<128x128xbf16, #tpu.memory_space<vmem>>, %arg5: memref<1x128xf32, #tpu.memory_space<vmem>>, %arg6: memref<1x128xf32, #tpu.memory_space<vmem>>, %arg7: memref<32x128xf32, #tpu.memory_space<vmem>>, %arg8: memref<32x128xf32, #tpu.memory_space<vmem>>) attributes {dimension_semantics = [#tpu.dimension_semantics<parallel>, #tpu.dimension_semantics<parallel>, #tpu.dimension_semantics<arbitrary>], iteration_bounds = array<i64: 1, 1, 1>, scalar_prefetch = 0 : i64, scratch_operands = 1 : i64, tpu.core_type = #tpu.core_type<tc>, window_params = [{transform_indices = @transform_0, window_bounds = array<i64: 32, 128>}, {transform_indices = @transform_1, window_bounds = array<i64: 128, 128>}, {transform_indices = @transform_2, window_bounds = array<i64: 1, 128>}, {transform_indices = @transform_3, window_bounds = array<i64: 1, 128>}, {transform_indices = @transform_4, window_bounds = array<i64: 32, 128>}]} {
    %c0_i32 = arith.constant 0 : i32
    %0 = arith.cmpi eq, %arg2, %c0_i32 : i32
    %1 = arith.extui %0 : i1 to i32
    %c0_i32_0 = arith.constant 0 : i32
    %2 = arith.cmpi ne, %1, %c0_i32_0 : i32
    scf.if %2 {
      %cst_10 = arith.constant 0.000000e+00 : f32
      %12 = vector.broadcast %cst_10 : f32 to vector<32x128xf32>
      %c0_11 = arith.constant 0 : index
      %c0_12 = arith.constant 0 : index
      %13 = vector.load %arg8[%c0_11, %c0_12] : memref<32x128xf32, #tpu.memory_space<vmem>>, vector<32x128xf32>
      tpu.vector_store %arg8[%c0_11, %c0_12], %12 {strides = array<i32>} : memref<32x128xf32, #tpu.memory_space<vmem>>, vector<32x128xf32>,
    } else {
    }
    %c0 = arith.constant 0 : index
    %c0_1 = arith.constant 0 : index
    %3 = vector.load %arg8[%c0, %c0_1] : memref<32x128xf32, #tpu.memory_space<vmem>>, vector<32x128xf32>
    %c0_2 = arith.constant 0 : index
    %c0_3 = arith.constant 0 : index
    %4 = vector.load %arg3[%c0_2, %c0_3] : memref<32x128xbf16, #tpu.memory_space<vmem>>, vector<32x128xbf16>
    %c0_4 = arith.constant 0 : index
    %c0_5 = arith.constant 0 : index
    %5 = vector.load %arg4[%c0_4, %c0_5] : memref<128x128xbf16, #tpu.memory_space<vmem>>, vector<128x128xbf16>
    %cst = arith.constant dense<0.000000e+00> : vector<32x128xf32>
    %6 = tpu.matmul %4, %5, %cst {dimension_numbers = #tpu.dot_dimension_numbers<[1], [0], [0], [1], [0, 0, 1, 1], [], []>} : vector<32x128xbf16>, vector<128x128xbf16>, vector<32x128xf32> -> vector<32x128xf32>
    %7 = arith.addf %3, %6 : vector<32x128xf32>
    %c0_6 = arith.constant 0 : index
    %c0_7 = arith.constant 0 : index
    %8 = vector.load %arg8[%c0_6, %c0_7] : memref<32x128xf32, #tpu.memory_space<vmem>>, vector<32x128xf32>
    tpu.vector_store %arg8[%c0_6, %c0_7], %7 {strides = array<i32>} : memref<32x128xf32, #tpu.memory_space<vmem>>, vector<32x128xf32>,
    %c0_i32_8 = arith.constant 0 : i32
    %9 = arith.cmpi eq, %arg2, %c0_i32_8 : i32
    %10 = arith.extui %9 : i1 to i32
    %c0_i32_9 = arith.constant 0 : i32
    %11 = arith.cmpi ne, %10, %c0_i32_9 : i32
    scf.if %11 {
      %c0_10 = arith.constant 0 : index
      %c0_11 = arith.constant 0 : index
      %12 = vector.load %arg8[%c0_10, %c0_11] : memref<32x128xf32, #tpu.memory_space<vmem>>, vector<32x128xf32>
      %c0_12 = arith.constant 0 : index
      %c0_13 = arith.constant 0 : index
      %13 = vector.load %arg5[%c0_12, %c0_13] : memref<1x128xf32, #tpu.memory_space<vmem>>, vector<1x128xf32>
      %14 = vector.broadcast %13 : vector<1x128xf32> to vector<32x128xf32>
      %15 = arith.mulf %12, %14 : vector<32x128xf32>
      %c0_14 = arith.constant 0 : index
      %c0_15 = arith.constant 0 : index
      %16 = vector.load %arg6[%c0_14, %c0_15] : memref<1x128xf32, #tpu.memory_space<vmem>>, vector<1x128xf32>
      %17 = vector.broadcast %16 : vector<1x128xf32> to vector<32x128xf32>
      %18 = arith.addf %15, %17 : vector<32x128xf32>
      %cst_16 = arith.constant 0.000000e+00 : f32
      %19 = vector.broadcast %cst_16 : f32 to vector<32x128xf32>
      %20 = arith.maximumf %18, %19 : vector<32x128xf32>
      %c0_17 = arith.constant 0 : index
      %c0_18 = arith.constant 0 : index
      %21 = vector.load %arg7[%c0_17, %c0_18] : memref<32x128xf32, #tpu.memory_space<vmem>>, vector<32x128xf32>
      tpu.vector_store %arg7[%c0_17, %c0_18], %20 {strides = array<i32>} : memref<32x128xf32, #tpu.memory_space<vmem>>, vector<32x128xf32>,
    } else {
    }
    return
  }
  func.func @transform_0(%arg0: i32, %arg1: i32, %arg2: i32) -> (i32, i32) {
    %c0_i32 = arith.constant 0 : i32
    return %arg0, %arg2 : i32, i32
  }
  func.func @transform_1(%arg0: i32, %arg1: i32, %arg2: i32) -> (i32, i32) {
    %c0_i32 = arith.constant 0 : i32
    return %arg2, %arg1 : i32, i32
  }
  func.func @transform_2(%arg0: i32, %arg1: i32, %arg2: i32) -> (i32, i32) {
    %c0_i32 = arith.constant 0 : i32
    %c0_i32_0 = arith.constant 0 : i32
    return %c0_i32, %arg1 : i32, i32
  }
  func.func @transform_3(%arg0: i32, %arg1: i32, %arg2: i32) -> (i32, i32) {
    %c0_i32 = arith.constant 0 : i32
    %c0_i32_0 = arith.constant 0 : i32
    return %c0_i32, %arg1 : i32, i32
  }
  func.func @transform_4(%arg0: i32, %arg1: i32, %arg2: i32) -> (i32, i32) {
    %c0_i32 = arith.constant 0 : i32
    return %arg0, %arg1 : i32, i32
  }
}

module attributes {stable_mosaic.version = 11 : i64} {
  func.func @_mm_affine_kernel(%arg0: i32, %arg1: i32, %arg2: i32, %arg3: memref<32x384xbf16, #tpu.memory_space<vmem>>, %arg4: memref<384x128xbf16, #tpu.memory_space<vmem>>, %arg5: memref<1x128xf32, #tpu.memory_space<vmem>>, %arg6: memref<1x128xf32, #tpu.memory_space<vmem>>, %arg7: memref<32x128xf32, #tpu.memory_space<vmem>>, %arg8: memref<32x128xf32, #tpu.memory_space<vmem>>) attributes {dimension_semantics = [#tpu.dimension_semantics<parallel>, #tpu.dimension_semantics<parallel>, #tpu.dimension_semantics<arbitrary>], iteration_bounds = array<i64: 1, 1, 1>, scalar_prefetch = 0 : i64, scratch_operands = 1 : i64, tpu.core_type = #tpu.core_type<tc>, window_params = [{transform_indices = @transform_0, window_bounds = array<i64: 32, 384>}, {transform_indices = @transform_1, window_bounds = array<i64: 384, 128>}, {transform_indices = @transform_2, window_bounds = array<i64: 1, 128>}, {transform_indices = @transform_3, window_bounds = array<i64: 1, 128>}, {transform_indices = @transform_4, window_bounds = array<i64: 32, 128>}]} {
    %c0_i32 = arith.constant 0 : i32
    %0 = arith.cmpi eq, %arg2, %c0_i32 : i32
    %1 = arith.extui %0 : i1 to i32
    %c0_i32_0 = arith.constant 0 : i32
    %2 = arith.cmpi ne, %1, %c0_i32_0 : i32
    scf.if %2 {
      %cst_10 = arith.constant 0.000000e+00 : f32
      %12 = vector.broadcast %cst_10 : f32 to vector<32x128xf32>
      %c0_11 = arith.constant 0 : index
      %c0_12 = arith.constant 0 : index
      %13 = vector.load %arg8[%c0_11, %c0_12] : memref<32x128xf32, #tpu.memory_space<vmem>>, vector<32x128xf32>
      tpu.vector_store %arg8[%c0_11, %c0_12], %12 {strides = array<i32>} : memref<32x128xf32, #tpu.memory_space<vmem>>, vector<32x128xf32>,
    } else {
    }
    %c0 = arith.constant 0 : index
    %c0_1 = arith.constant 0 : index
    %3 = vector.load %arg8[%c0, %c0_1] : memref<32x128xf32, #tpu.memory_space<vmem>>, vector<32x128xf32>
    %c0_2 = arith.constant 0 : index
    %c0_3 = arith.constant 0 : index
    %4 = vector.load %arg3[%c0_2, %c0_3] : memref<32x384xbf16, #tpu.memory_space<vmem>>, vector<32x384xbf16>
    %c0_4 = arith.constant 0 : index
    %c0_5 = arith.constant 0 : index
    %5 = vector.load %arg4[%c0_4, %c0_5] : memref<384x128xbf16, #tpu.memory_space<vmem>>, vector<384x128xbf16>
    %cst = arith.constant dense<0.000000e+00> : vector<32x128xf32>
    %6 = tpu.matmul %4, %5, %cst {dimension_numbers = #tpu.dot_dimension_numbers<[1], [0], [0], [1], [0, 0, 1, 1], [], []>} : vector<32x384xbf16>, vector<384x128xbf16>, vector<32x128xf32> -> vector<32x128xf32>
    %7 = arith.addf %3, %6 : vector<32x128xf32>
    %c0_6 = arith.constant 0 : index
    %c0_7 = arith.constant 0 : index
    %8 = vector.load %arg8[%c0_6, %c0_7] : memref<32x128xf32, #tpu.memory_space<vmem>>, vector<32x128xf32>
    tpu.vector_store %arg8[%c0_6, %c0_7], %7 {strides = array<i32>} : memref<32x128xf32, #tpu.memory_space<vmem>>, vector<32x128xf32>,
    %c0_i32_8 = arith.constant 0 : i32
    %9 = arith.cmpi eq, %arg2, %c0_i32_8 : i32
    %10 = arith.extui %9 : i1 to i32
    %c0_i32_9 = arith.constant 0 : i32
    %11 = arith.cmpi ne, %10, %c0_i32_9 : i32
    scf.if %11 {
      %c0_10 = arith.constant 0 : index
      %c0_11 = arith.constant 0 : index
      %12 = vector.load %arg8[%c0_10, %c0_11] : memref<32x128xf32, #tpu.memory_space<vmem>>, vector<32x128xf32>
      %c0_12 = arith.constant 0 : index
      %c0_13 = arith.constant 0 : index
      %13 = vector.load %arg5[%c0_12, %c0_13] : memref<1x128xf32, #tpu.memory_space<vmem>>, vector<1x128xf32>
      %14 = vector.broadcast %13 : vector<1x128xf32> to vector<32x128xf32>
      %15 = arith.mulf %12, %14 : vector<32x128xf32>
      %c0_14 = arith.constant 0 : index
      %c0_15 = arith.constant 0 : index
      %16 = vector.load %arg6[%c0_14, %c0_15] : memref<1x128xf32, #tpu.memory_space<vmem>>, vector<1x128xf32>
      %17 = vector.broadcast %16 : vector<1x128xf32> to vector<32x128xf32>
      %18 = arith.addf %15, %17 : vector<32x128xf32>
      %cst_16 = arith.constant 0.000000e+00 : f32
      %19 = vector.broadcast %cst_16 : f32 to vector<32x128xf32>
      %20 = arith.maximumf %18, %19 : vector<32x128xf32>
      %c0_17 = arith.constant 0 : index
      %c0_18 = arith.constant 0 : index
      %21 = vector.load %arg7[%c0_17, %c0_18] : memref<32x128xf32, #tpu.memory_space<vmem>>, vector<32x128xf32>
      tpu.vector_store %arg7[%c0_17, %c0_18], %20 {strides = array<i32>} : memref<32x128xf32, #tpu.memory_space<vmem>>, vector<32x128xf32>,
    } else {
    }
    return
  }
  func.func @transform_0(%arg0: i32, %arg1: i32, %arg2: i32) -> (i32, i32) {
    %c0_i32 = arith.constant 0 : i32
    return %arg0, %arg2 : i32, i32
  }
  func.func @transform_1(%arg0: i32, %arg1: i32, %arg2: i32) -> (i32, i32) {
    %c0_i32 = arith.constant 0 : i32
    return %arg2, %arg1 : i32, i32
  }
  func.func @transform_2(%arg0: i32, %arg1: i32, %arg2: i32) -> (i32, i32) {
    %c0_i32 = arith.constant 0 : i32
    %c0_i32_0 = arith.constant 0 : i32
    return %c0_i32, %arg1 : i32, i32
  }
  func.func @transform_3(%arg0: i32, %arg1: i32, %arg2: i32) -> (i32, i32) {
    %c0_i32 = arith.constant 0 : i32
    %c0_i32_0 = arith.constant 0 : i32
    return %c0_i32, %arg1 : i32, i32
  }
  func.func @transform_4(%arg0: i32, %arg1: i32, %arg2: i32) -> (i32, i32) {
    %c0_i32 = arith.constant 0 : i32
    return %arg0, %arg1 : i32, i32
  }
}

module attributes {stable_mosaic.version = 11 : i64} {
  func.func @_mm_affine_kernel(%arg0: i32, %arg1: i32, %arg2: i32, %arg3: memref<16x128xbf16, #tpu.memory_space<vmem>>, %arg4: memref<128x128xbf16, #tpu.memory_space<vmem>>, %arg5: memref<1x128xf32, #tpu.memory_space<vmem>>, %arg6: memref<1x128xf32, #tpu.memory_space<vmem>>, %arg7: memref<16x128xf32, #tpu.memory_space<vmem>>, %arg8: memref<16x128xf32, #tpu.memory_space<vmem>>) attributes {dimension_semantics = [#tpu.dimension_semantics<parallel>, #tpu.dimension_semantics<parallel>, #tpu.dimension_semantics<arbitrary>], iteration_bounds = array<i64: 1, 1, 1>, scalar_prefetch = 0 : i64, scratch_operands = 1 : i64, tpu.core_type = #tpu.core_type<tc>, window_params = [{transform_indices = @transform_0, window_bounds = array<i64: 16, 128>}, {transform_indices = @transform_1, window_bounds = array<i64: 128, 128>}, {transform_indices = @transform_2, window_bounds = array<i64: 1, 128>}, {transform_indices = @transform_3, window_bounds = array<i64: 1, 128>}, {transform_indices = @transform_4, window_bounds = array<i64: 16, 128>}]} {
    %c0_i32 = arith.constant 0 : i32
    %0 = arith.cmpi eq, %arg2, %c0_i32 : i32
    %1 = arith.extui %0 : i1 to i32
    %c0_i32_0 = arith.constant 0 : i32
    %2 = arith.cmpi ne, %1, %c0_i32_0 : i32
    scf.if %2 {
      %cst_10 = arith.constant 0.000000e+00 : f32
      %12 = vector.broadcast %cst_10 : f32 to vector<16x128xf32>
      %c0_11 = arith.constant 0 : index
      %c0_12 = arith.constant 0 : index
      %13 = vector.load %arg8[%c0_11, %c0_12] : memref<16x128xf32, #tpu.memory_space<vmem>>, vector<16x128xf32>
      tpu.vector_store %arg8[%c0_11, %c0_12], %12 {strides = array<i32>} : memref<16x128xf32, #tpu.memory_space<vmem>>, vector<16x128xf32>,
    } else {
    }
    %c0 = arith.constant 0 : index
    %c0_1 = arith.constant 0 : index
    %3 = vector.load %arg8[%c0, %c0_1] : memref<16x128xf32, #tpu.memory_space<vmem>>, vector<16x128xf32>
    %c0_2 = arith.constant 0 : index
    %c0_3 = arith.constant 0 : index
    %4 = vector.load %arg3[%c0_2, %c0_3] : memref<16x128xbf16, #tpu.memory_space<vmem>>, vector<16x128xbf16>
    %c0_4 = arith.constant 0 : index
    %c0_5 = arith.constant 0 : index
    %5 = vector.load %arg4[%c0_4, %c0_5] : memref<128x128xbf16, #tpu.memory_space<vmem>>, vector<128x128xbf16>
    %cst = arith.constant dense<0.000000e+00> : vector<16x128xf32>
    %6 = tpu.matmul %4, %5, %cst {dimension_numbers = #tpu.dot_dimension_numbers<[1], [0], [0], [1], [0, 0, 1, 1], [], []>} : vector<16x128xbf16>, vector<128x128xbf16>, vector<16x128xf32> -> vector<16x128xf32>
    %7 = arith.addf %3, %6 : vector<16x128xf32>
    %c0_6 = arith.constant 0 : index
    %c0_7 = arith.constant 0 : index
    %8 = vector.load %arg8[%c0_6, %c0_7] : memref<16x128xf32, #tpu.memory_space<vmem>>, vector<16x128xf32>
    tpu.vector_store %arg8[%c0_6, %c0_7], %7 {strides = array<i32>} : memref<16x128xf32, #tpu.memory_space<vmem>>, vector<16x128xf32>,
    %c0_i32_8 = arith.constant 0 : i32
    %9 = arith.cmpi eq, %arg2, %c0_i32_8 : i32
    %10 = arith.extui %9 : i1 to i32
    %c0_i32_9 = arith.constant 0 : i32
    %11 = arith.cmpi ne, %10, %c0_i32_9 : i32
    scf.if %11 {
      %c0_10 = arith.constant 0 : index
      %c0_11 = arith.constant 0 : index
      %12 = vector.load %arg8[%c0_10, %c0_11] : memref<16x128xf32, #tpu.memory_space<vmem>>, vector<16x128xf32>
      %c0_12 = arith.constant 0 : index
      %c0_13 = arith.constant 0 : index
      %13 = vector.load %arg5[%c0_12, %c0_13] : memref<1x128xf32, #tpu.memory_space<vmem>>, vector<1x128xf32>
      %14 = vector.broadcast %13 : vector<1x128xf32> to vector<16x128xf32>
      %15 = arith.mulf %12, %14 : vector<16x128xf32>
      %c0_14 = arith.constant 0 : index
      %c0_15 = arith.constant 0 : index
      %16 = vector.load %arg6[%c0_14, %c0_15] : memref<1x128xf32, #tpu.memory_space<vmem>>, vector<1x128xf32>
      %17 = vector.broadcast %16 : vector<1x128xf32> to vector<16x128xf32>
      %18 = arith.addf %15, %17 : vector<16x128xf32>
      %c0_16 = arith.constant 0 : index
      %c0_17 = arith.constant 0 : index
      %19 = vector.load %arg7[%c0_16, %c0_17] : memref<16x128xf32, #tpu.memory_space<vmem>>, vector<16x128xf32>
      tpu.vector_store %arg7[%c0_16, %c0_17], %18 {strides = array<i32>} : memref<16x128xf32, #tpu.memory_space<vmem>>, vector<16x128xf32>,
    } else {
    }
    return
  }
  func.func @transform_0(%arg0: i32, %arg1: i32, %arg2: i32) -> (i32, i32) {
    %c0_i32 = arith.constant 0 : i32
    return %arg0, %arg2 : i32, i32
  }
  func.func @transform_1(%arg0: i32, %arg1: i32, %arg2: i32) -> (i32, i32) {
    %c0_i32 = arith.constant 0 : i32
    return %arg2, %arg1 : i32, i32
  }
  func.func @transform_2(%arg0: i32, %arg1: i32, %arg2: i32) -> (i32, i32) {
    %c0_i32 = arith.constant 0 : i32
    %c0_i32_0 = arith.constant 0 : i32
    return %c0_i32, %arg1 : i32, i32
  }
  func.func @transform_3(%arg0: i32, %arg1: i32, %arg2: i32) -> (i32, i32) {
    %c0_i32 = arith.constant 0 : i32
    %c0_i32_0 = arith.constant 0 : i32
    return %c0_i32, %arg1 : i32, i32
  }
  func.func @transform_4(%arg0: i32, %arg1: i32, %arg2: i32) -> (i32, i32) {
    %c0_i32 = arith.constant 0 : i32
    return %arg0, %arg1 : i32, i32
  }
}

module attributes {stable_mosaic.version = 11 : i64} {
  func.func @_mm_affine_res_kernel(%arg0: i32, %arg1: i32, %arg2: i32, %arg3: memref<16x128xbf16, #tpu.memory_space<vmem>>, %arg4: memref<128x128xbf16, #tpu.memory_space<vmem>>, %arg5: memref<1x128xf32, #tpu.memory_space<vmem>>, %arg6: memref<1x128xf32, #tpu.memory_space<vmem>>, %arg7: memref<16x128xf32, #tpu.memory_space<vmem>>, %arg8: memref<16x128xf32, #tpu.memory_space<vmem>>, %arg9: memref<16x128xf32, #tpu.memory_space<vmem>>) attributes {dimension_semantics = [#tpu.dimension_semantics<parallel>, #tpu.dimension_semantics<parallel>, #tpu.dimension_semantics<arbitrary>], iteration_bounds = array<i64: 1, 1, 1>, scalar_prefetch = 0 : i64, scratch_operands = 1 : i64, tpu.core_type = #tpu.core_type<tc>, window_params = [{transform_indices = @transform_0, window_bounds = array<i64: 16, 128>}, {transform_indices = @transform_1, window_bounds = array<i64: 128, 128>}, {transform_indices = @transform_2, window_bounds = array<i64: 1, 128>}, {transform_indices = @transform_3, window_bounds = array<i64: 1, 128>}, {transform_indices = @transform_4, window_bounds = array<i64: 16, 128>}, {transform_indices = @transform_5, window_bounds = array<i64: 16, 128>}]} {
    %c0_i32 = arith.constant 0 : i32
    %0 = arith.cmpi eq, %arg2, %c0_i32 : i32
    %1 = arith.extui %0 : i1 to i32
    %c0_i32_0 = arith.constant 0 : i32
    %2 = arith.cmpi ne, %1, %c0_i32_0 : i32
    scf.if %2 {
      %cst_10 = arith.constant 0.000000e+00 : f32
      %12 = vector.broadcast %cst_10 : f32 to vector<16x128xf32>
      %c0_11 = arith.constant 0 : index
      %c0_12 = arith.constant 0 : index
      %13 = vector.load %arg9[%c0_11, %c0_12] : memref<16x128xf32, #tpu.memory_space<vmem>>, vector<16x128xf32>
      tpu.vector_store %arg9[%c0_11, %c0_12], %12 {strides = array<i32>} : memref<16x128xf32, #tpu.memory_space<vmem>>, vector<16x128xf32>,
    } else {
    }
    %c0 = arith.constant 0 : index
    %c0_1 = arith.constant 0 : index
    %3 = vector.load %arg9[%c0, %c0_1] : memref<16x128xf32, #tpu.memory_space<vmem>>, vector<16x128xf32>
    %c0_2 = arith.constant 0 : index
    %c0_3 = arith.constant 0 : index
    %4 = vector.load %arg3[%c0_2, %c0_3] : memref<16x128xbf16, #tpu.memory_space<vmem>>, vector<16x128xbf16>
    %c0_4 = arith.constant 0 : index
    %c0_5 = arith.constant 0 : index
    %5 = vector.load %arg4[%c0_4, %c0_5] : memref<128x128xbf16, #tpu.memory_space<vmem>>, vector<128x128xbf16>
    %cst = arith.constant dense<0.000000e+00> : vector<16x128xf32>
    %6 = tpu.matmul %4, %5, %cst {dimension_numbers = #tpu.dot_dimension_numbers<[1], [0], [0], [1], [0, 0, 1, 1], [], []>} : vector<16x128xbf16>, vector<128x128xbf16>, vector<16x128xf32> -> vector<16x128xf32>
    %7 = arith.addf %3, %6 : vector<16x128xf32>
    %c0_6 = arith.constant 0 : index
    %c0_7 = arith.constant 0 : index
    %8 = vector.load %arg9[%c0_6, %c0_7] : memref<16x128xf32, #tpu.memory_space<vmem>>, vector<16x128xf32>
    tpu.vector_store %arg9[%c0_6, %c0_7], %7 {strides = array<i32>} : memref<16x128xf32, #tpu.memory_space<vmem>>, vector<16x128xf32>,
    %c0_i32_8 = arith.constant 0 : i32
    %9 = arith.cmpi eq, %arg2, %c0_i32_8 : i32
    %10 = arith.extui %9 : i1 to i32
    %c0_i32_9 = arith.constant 0 : i32
    %11 = arith.cmpi ne, %10, %c0_i32_9 : i32
    scf.if %11 {
      %c0_10 = arith.constant 0 : index
      %c0_11 = arith.constant 0 : index
      %12 = vector.load %arg9[%c0_10, %c0_11] : memref<16x128xf32, #tpu.memory_space<vmem>>, vector<16x128xf32>
      %c0_12 = arith.constant 0 : index
      %c0_13 = arith.constant 0 : index
      %13 = vector.load %arg5[%c0_12, %c0_13] : memref<1x128xf32, #tpu.memory_space<vmem>>, vector<1x128xf32>
      %14 = vector.broadcast %13 : vector<1x128xf32> to vector<16x128xf32>
      %15 = arith.mulf %12, %14 : vector<16x128xf32>
      %c0_14 = arith.constant 0 : index
      %c0_15 = arith.constant 0 : index
      %16 = vector.load %arg6[%c0_14, %c0_15] : memref<1x128xf32, #tpu.memory_space<vmem>>, vector<1x128xf32>
      %17 = vector.broadcast %16 : vector<1x128xf32> to vector<16x128xf32>
      %18 = arith.addf %15, %17 : vector<16x128xf32>
      %c0_16 = arith.constant 0 : index
      %c0_17 = arith.constant 0 : index
      %19 = vector.load %arg7[%c0_16, %c0_17] : memref<16x128xf32, #tpu.memory_space<vmem>>, vector<16x128xf32>
      %20 = arith.addf %18, %19 : vector<16x128xf32>
      %cst_18 = arith.constant 0.000000e+00 : f32
      %21 = vector.broadcast %cst_18 : f32 to vector<16x128xf32>
      %22 = arith.maximumf %20, %21 : vector<16x128xf32>
      %c0_19 = arith.constant 0 : index
      %c0_20 = arith.constant 0 : index
      %23 = vector.load %arg8[%c0_19, %c0_20] : memref<16x128xf32, #tpu.memory_space<vmem>>, vector<16x128xf32>
      tpu.vector_store %arg8[%c0_19, %c0_20], %22 {strides = array<i32>} : memref<16x128xf32, #tpu.memory_space<vmem>>, vector<16x128xf32>,
    } else {
    }
    return
  }
  func.func @transform_0(%arg0: i32, %arg1: i32, %arg2: i32) -> (i32, i32) {
    %c0_i32 = arith.constant 0 : i32
    return %arg0, %arg2 : i32, i32
  }
  func.func @transform_1(%arg0: i32, %arg1: i32, %arg2: i32) -> (i32, i32) {
    %c0_i32 = arith.constant 0 : i32
    return %arg2, %arg1 : i32, i32
  }
  func.func @transform_2(%arg0: i32, %arg1: i32, %arg2: i32) -> (i32, i32) {
    %c0_i32 = arith.constant 0 : i32
    %c0_i32_0 = arith.constant 0 : i32
    return %c0_i32, %arg1 : i32, i32
  }
  func.func @transform_3(%arg0: i32, %arg1: i32, %arg2: i32) -> (i32, i32) {
    %c0_i32 = arith.constant 0 : i32
    %c0_i32_0 = arith.constant 0 : i32
    return %c0_i32, %arg1 : i32, i32
  }
  func.func @transform_4(%arg0: i32, %arg1: i32, %arg2: i32) -> (i32, i32) {
    %c0_i32 = arith.constant 0 : i32
    return %arg0, %arg1 : i32, i32
  }
  func.func @transform_5(%arg0: i32, %arg1: i32, %arg2: i32) -> (i32, i32) {
    %c0_i32 = arith.constant 0 : i32
    return %arg0, %arg1 : i32, i32
  }
}

module attributes {stable_mosaic.version = 11 : i64} {
  func.func @_mm_affine_kernel(%arg0: i32, %arg1: i32, %arg2: i32, %arg3: memref<16x128xbf16, #tpu.memory_space<vmem>>, %arg4: memref<128x128xbf16, #tpu.memory_space<vmem>>, %arg5: memref<1x128xf32, #tpu.memory_space<vmem>>, %arg6: memref<1x128xf32, #tpu.memory_space<vmem>>, %arg7: memref<16x128xf32, #tpu.memory_space<vmem>>, %arg8: memref<16x128xf32, #tpu.memory_space<vmem>>) attributes {dimension_semantics = [#tpu.dimension_semantics<parallel>, #tpu.dimension_semantics<parallel>, #tpu.dimension_semantics<arbitrary>], iteration_bounds = array<i64: 1, 1, 1>, scalar_prefetch = 0 : i64, scratch_operands = 1 : i64, tpu.core_type = #tpu.core_type<tc>, window_params = [{transform_indices = @transform_0, window_bounds = array<i64: 16, 128>}, {transform_indices = @transform_1, window_bounds = array<i64: 128, 128>}, {transform_indices = @transform_2, window_bounds = array<i64: 1, 128>}, {transform_indices = @transform_3, window_bounds = array<i64: 1, 128>}, {transform_indices = @transform_4, window_bounds = array<i64: 16, 128>}]} {
    %c0_i32 = arith.constant 0 : i32
    %0 = arith.cmpi eq, %arg2, %c0_i32 : i32
    %1 = arith.extui %0 : i1 to i32
    %c0_i32_0 = arith.constant 0 : i32
    %2 = arith.cmpi ne, %1, %c0_i32_0 : i32
    scf.if %2 {
      %cst_10 = arith.constant 0.000000e+00 : f32
      %12 = vector.broadcast %cst_10 : f32 to vector<16x128xf32>
      %c0_11 = arith.constant 0 : index
      %c0_12 = arith.constant 0 : index
      %13 = vector.load %arg8[%c0_11, %c0_12] : memref<16x128xf32, #tpu.memory_space<vmem>>, vector<16x128xf32>
      tpu.vector_store %arg8[%c0_11, %c0_12], %12 {strides = array<i32>} : memref<16x128xf32, #tpu.memory_space<vmem>>, vector<16x128xf32>,
    } else {
    }
    %c0 = arith.constant 0 : index
    %c0_1 = arith.constant 0 : index
    %3 = vector.load %arg8[%c0, %c0_1] : memref<16x128xf32, #tpu.memory_space<vmem>>, vector<16x128xf32>
    %c0_2 = arith.constant 0 : index
    %c0_3 = arith.constant 0 : index
    %4 = vector.load %arg3[%c0_2, %c0_3] : memref<16x128xbf16, #tpu.memory_space<vmem>>, vector<16x128xbf16>
    %c0_4 = arith.constant 0 : index
    %c0_5 = arith.constant 0 : index
    %5 = vector.load %arg4[%c0_4, %c0_5] : memref<128x128xbf16, #tpu.memory_space<vmem>>, vector<128x128xbf16>
    %cst = arith.constant dense<0.000000e+00> : vector<16x128xf32>
    %6 = tpu.matmul %4, %5, %cst {dimension_numbers = #tpu.dot_dimension_numbers<[1], [0], [0], [1], [0, 0, 1, 1], [], []>} : vector<16x128xbf16>, vector<128x128xbf16>, vector<16x128xf32> -> vector<16x128xf32>
    %7 = arith.addf %3, %6 : vector<16x128xf32>
    %c0_6 = arith.constant 0 : index
    %c0_7 = arith.constant 0 : index
    %8 = vector.load %arg8[%c0_6, %c0_7] : memref<16x128xf32, #tpu.memory_space<vmem>>, vector<16x128xf32>
    tpu.vector_store %arg8[%c0_6, %c0_7], %7 {strides = array<i32>} : memref<16x128xf32, #tpu.memory_space<vmem>>, vector<16x128xf32>,
    %c0_i32_8 = arith.constant 0 : i32
    %9 = arith.cmpi eq, %arg2, %c0_i32_8 : i32
    %10 = arith.extui %9 : i1 to i32
    %c0_i32_9 = arith.constant 0 : i32
    %11 = arith.cmpi ne, %10, %c0_i32_9 : i32
    scf.if %11 {
      %c0_10 = arith.constant 0 : index
      %c0_11 = arith.constant 0 : index
      %12 = vector.load %arg8[%c0_10, %c0_11] : memref<16x128xf32, #tpu.memory_space<vmem>>, vector<16x128xf32>
      %c0_12 = arith.constant 0 : index
      %c0_13 = arith.constant 0 : index
      %13 = vector.load %arg5[%c0_12, %c0_13] : memref<1x128xf32, #tpu.memory_space<vmem>>, vector<1x128xf32>
      %14 = vector.broadcast %13 : vector<1x128xf32> to vector<16x128xf32>
      %15 = arith.mulf %12, %14 : vector<16x128xf32>
      %c0_14 = arith.constant 0 : index
      %c0_15 = arith.constant 0 : index
      %16 = vector.load %arg6[%c0_14, %c0_15] : memref<1x128xf32, #tpu.memory_space<vmem>>, vector<1x128xf32>
      %17 = vector.broadcast %16 : vector<1x128xf32> to vector<16x128xf32>
      %18 = arith.addf %15, %17 : vector<16x128xf32>
      %cst_16 = arith.constant 0.000000e+00 : f32
      %19 = vector.broadcast %cst_16 : f32 to vector<16x128xf32>
      %20 = arith.maximumf %18, %19 : vector<16x128xf32>
      %c0_17 = arith.constant 0 : index
      %c0_18 = arith.constant 0 : index
      %21 = vector.load %arg7[%c0_17, %c0_18] : memref<16x128xf32, #tpu.memory_space<vmem>>, vector<16x128xf32>
      tpu.vector_store %arg7[%c0_17, %c0_18], %20 {strides = array<i32>} : memref<16x128xf32, #tpu.memory_space<vmem>>, vector<16x128xf32>,
    } else {
    }
    return
  }
  func.func @transform_0(%arg0: i32, %arg1: i32, %arg2: i32) -> (i32, i32) {
    %c0_i32 = arith.constant 0 : i32
    return %arg0, %arg2 : i32, i32
  }
  func.func @transform_1(%arg0: i32, %arg1: i32, %arg2: i32) -> (i32, i32) {
    %c0_i32 = arith.constant 0 : i32
    return %arg2, %arg1 : i32, i32
  }
  func.func @transform_2(%arg0: i32, %arg1: i32, %arg2: i32) -> (i32, i32) {
    %c0_i32 = arith.constant 0 : i32
    %c0_i32_0 = arith.constant 0 : i32
    return %c0_i32, %arg1 : i32, i32
  }
  func.func @transform_3(%arg0: i32, %arg1: i32, %arg2: i32) -> (i32, i32) {
    %c0_i32 = arith.constant 0 : i32
    %c0_i32_0 = arith.constant 0 : i32
    return %c0_i32, %arg1 : i32, i32
  }
  func.func @transform_4(%arg0: i32, %arg1: i32, %arg2: i32) -> (i32, i32) {
    %c0_i32 = arith.constant 0 : i32
    return %arg0, %arg1 : i32, i32
  }
}

module attributes {stable_mosaic.version = 11 : i64} {
  func.func @_mm_affine_kernel(%arg0: i32, %arg1: i32, %arg2: i32, %arg3: memref<16x512xbf16, #tpu.memory_space<vmem>>, %arg4: memref<512x128xbf16, #tpu.memory_space<vmem>>, %arg5: memref<1x128xf32, #tpu.memory_space<vmem>>, %arg6: memref<1x128xf32, #tpu.memory_space<vmem>>, %arg7: memref<16x128xf32, #tpu.memory_space<vmem>>, %arg8: memref<16x128xf32, #tpu.memory_space<vmem>>) attributes {dimension_semantics = [#tpu.dimension_semantics<parallel>, #tpu.dimension_semantics<parallel>, #tpu.dimension_semantics<arbitrary>], iteration_bounds = array<i64: 1, 1, 2>, scalar_prefetch = 0 : i64, scratch_operands = 1 : i64, tpu.core_type = #tpu.core_type<tc>, window_params = [{transform_indices = @transform_0, window_bounds = array<i64: 16, 512>}, {transform_indices = @transform_1, window_bounds = array<i64: 512, 128>}, {transform_indices = @transform_2, window_bounds = array<i64: 1, 128>}, {transform_indices = @transform_3, window_bounds = array<i64: 1, 128>}, {transform_indices = @transform_4, window_bounds = array<i64: 16, 128>}]} {
    %c0_i32 = arith.constant 0 : i32
    %0 = arith.cmpi eq, %arg2, %c0_i32 : i32
    %1 = arith.extui %0 : i1 to i32
    %c0_i32_0 = arith.constant 0 : i32
    %2 = arith.cmpi ne, %1, %c0_i32_0 : i32
    scf.if %2 {
      %cst_9 = arith.constant 0.000000e+00 : f32
      %12 = vector.broadcast %cst_9 : f32 to vector<16x128xf32>
      %c0_10 = arith.constant 0 : index
      %c0_11 = arith.constant 0 : index
      %13 = vector.load %arg8[%c0_10, %c0_11] : memref<16x128xf32, #tpu.memory_space<vmem>>, vector<16x128xf32>
      tpu.vector_store %arg8[%c0_10, %c0_11], %12 {strides = array<i32>} : memref<16x128xf32, #tpu.memory_space<vmem>>, vector<16x128xf32>,
    } else {
    }
    %c0 = arith.constant 0 : index
    %c0_1 = arith.constant 0 : index
    %3 = vector.load %arg8[%c0, %c0_1] : memref<16x128xf32, #tpu.memory_space<vmem>>, vector<16x128xf32>
    %c0_2 = arith.constant 0 : index
    %c0_3 = arith.constant 0 : index
    %4 = vector.load %arg3[%c0_2, %c0_3] : memref<16x512xbf16, #tpu.memory_space<vmem>>, vector<16x512xbf16>
    %c0_4 = arith.constant 0 : index
    %c0_5 = arith.constant 0 : index
    %5 = vector.load %arg4[%c0_4, %c0_5] : memref<512x128xbf16, #tpu.memory_space<vmem>>, vector<512x128xbf16>
    %cst = arith.constant dense<0.000000e+00> : vector<16x128xf32>
    %6 = tpu.matmul %4, %5, %cst {dimension_numbers = #tpu.dot_dimension_numbers<[1], [0], [0], [1], [0, 0, 1, 1], [], []>} : vector<16x512xbf16>, vector<512x128xbf16>, vector<16x128xf32> -> vector<16x128xf32>
    %7 = arith.addf %3, %6 : vector<16x128xf32>
    %c0_6 = arith.constant 0 : index
    %c0_7 = arith.constant 0 : index
    %8 = vector.load %arg8[%c0_6, %c0_7] : memref<16x128xf32, #tpu.memory_space<vmem>>, vector<16x128xf32>
    tpu.vector_store %arg8[%c0_6, %c0_7], %7 {strides = array<i32>} : memref<16x128xf32, #tpu.memory_space<vmem>>, vector<16x128xf32>,
    %c1_i32 = arith.constant 1 : i32
    %9 = arith.cmpi eq, %arg2, %c1_i32 : i32
    %10 = arith.extui %9 : i1 to i32
    %c0_i32_8 = arith.constant 0 : i32
    %11 = arith.cmpi ne, %10, %c0_i32_8 : i32
    scf.if %11 {
      %c0_9 = arith.constant 0 : index
      %c0_10 = arith.constant 0 : index
      %12 = vector.load %arg8[%c0_9, %c0_10] : memref<16x128xf32, #tpu.memory_space<vmem>>, vector<16x128xf32>
      %c0_11 = arith.constant 0 : index
      %c0_12 = arith.constant 0 : index
      %13 = vector.load %arg5[%c0_11, %c0_12] : memref<1x128xf32, #tpu.memory_space<vmem>>, vector<1x128xf32>
      %14 = vector.broadcast %13 : vector<1x128xf32> to vector<16x128xf32>
      %15 = arith.mulf %12, %14 : vector<16x128xf32>
      %c0_13 = arith.constant 0 : index
      %c0_14 = arith.constant 0 : index
      %16 = vector.load %arg6[%c0_13, %c0_14] : memref<1x128xf32, #tpu.memory_space<vmem>>, vector<1x128xf32>
      %17 = vector.broadcast %16 : vector<1x128xf32> to vector<16x128xf32>
      %18 = arith.addf %15, %17 : vector<16x128xf32>
      %cst_15 = arith.constant 0.000000e+00 : f32
      %19 = vector.broadcast %cst_15 : f32 to vector<16x128xf32>
      %20 = arith.maximumf %18, %19 : vector<16x128xf32>
      %c0_16 = arith.constant 0 : index
      %c0_17 = arith.constant 0 : index
      %21 = vector.load %arg7[%c0_16, %c0_17] : memref<16x128xf32, #tpu.memory_space<vmem>>, vector<16x128xf32>
      tpu.vector_store %arg7[%c0_16, %c0_17], %20 {strides = array<i32>} : memref<16x128xf32, #tpu.memory_space<vmem>>, vector<16x128xf32>,
    } else {
    }
    return
  }
  func.func @transform_0(%arg0: i32, %arg1: i32, %arg2: i32) -> (i32, i32) {
    %c0_i32 = arith.constant 0 : i32
    return %arg0, %arg2 : i32, i32
  }
  func.func @transform_1(%arg0: i32, %arg1: i32, %arg2: i32) -> (i32, i32) {
    %c0_i32 = arith.constant 0 : i32
    return %arg2, %arg1 : i32, i32
  }
  func.func @transform_2(%arg0: i32, %arg1: i32, %arg2: i32) -> (i32, i32) {
    %c0_i32 = arith.constant 0 : i32
    %c0_i32_0 = arith.constant 0 : i32
    return %c0_i32, %arg1 : i32, i32
  }
  func.func @transform_3(%arg0: i32, %arg1: i32, %arg2: i32) -> (i32, i32) {
    %c0_i32 = arith.constant 0 : i32
    %c0_i32_0 = arith.constant 0 : i32
    return %c0_i32, %arg1 : i32, i32
  }
  func.func @transform_4(%arg0: i32, %arg1: i32, %arg2: i32) -> (i32, i32) {
    %c0_i32 = arith.constant 0 : i32
    return %arg0, %arg1 : i32, i32
  }
}

module attributes {stable_mosaic.version = 11 : i64} {
  func.func @_mm_affine_kernel(%arg0: i32, %arg1: i32, %arg2: i32, %arg3: memref<16x128xbf16, #tpu.memory_space<vmem>>, %arg4: memref<128x256xbf16, #tpu.memory_space<vmem>>, %arg5: memref<1x256xf32, #tpu.memory_space<vmem>>, %arg6: memref<1x256xf32, #tpu.memory_space<vmem>>, %arg7: memref<16x256xf32, #tpu.memory_space<vmem>>, %arg8: memref<16x256xf32, #tpu.memory_space<vmem>>) attributes {dimension_semantics = [#tpu.dimension_semantics<parallel>, #tpu.dimension_semantics<parallel>, #tpu.dimension_semantics<arbitrary>], iteration_bounds = array<i64: 1, 1, 1>, scalar_prefetch = 0 : i64, scratch_operands = 1 : i64, tpu.core_type = #tpu.core_type<tc>, window_params = [{transform_indices = @transform_0, window_bounds = array<i64: 16, 128>}, {transform_indices = @transform_1, window_bounds = array<i64: 128, 256>}, {transform_indices = @transform_2, window_bounds = array<i64: 1, 256>}, {transform_indices = @transform_3, window_bounds = array<i64: 1, 256>}, {transform_indices = @transform_4, window_bounds = array<i64: 16, 256>}]} {
    %c0_i32 = arith.constant 0 : i32
    %0 = arith.cmpi eq, %arg2, %c0_i32 : i32
    %1 = arith.extui %0 : i1 to i32
    %c0_i32_0 = arith.constant 0 : i32
    %2 = arith.cmpi ne, %1, %c0_i32_0 : i32
    scf.if %2 {
      %cst_10 = arith.constant 0.000000e+00 : f32
      %12 = vector.broadcast %cst_10 : f32 to vector<16x256xf32>
      %c0_11 = arith.constant 0 : index
      %c0_12 = arith.constant 0 : index
      %13 = vector.load %arg8[%c0_11, %c0_12] : memref<16x256xf32, #tpu.memory_space<vmem>>, vector<16x256xf32>
      tpu.vector_store %arg8[%c0_11, %c0_12], %12 {strides = array<i32>} : memref<16x256xf32, #tpu.memory_space<vmem>>, vector<16x256xf32>,
    } else {
    }
    %c0 = arith.constant 0 : index
    %c0_1 = arith.constant 0 : index
    %3 = vector.load %arg8[%c0, %c0_1] : memref<16x256xf32, #tpu.memory_space<vmem>>, vector<16x256xf32>
    %c0_2 = arith.constant 0 : index
    %c0_3 = arith.constant 0 : index
    %4 = vector.load %arg3[%c0_2, %c0_3] : memref<16x128xbf16, #tpu.memory_space<vmem>>, vector<16x128xbf16>
    %c0_4 = arith.constant 0 : index
    %c0_5 = arith.constant 0 : index
    %5 = vector.load %arg4[%c0_4, %c0_5] : memref<128x256xbf16, #tpu.memory_space<vmem>>, vector<128x256xbf16>
    %cst = arith.constant dense<0.000000e+00> : vector<16x256xf32>
    %6 = tpu.matmul %4, %5, %cst {dimension_numbers = #tpu.dot_dimension_numbers<[1], [0], [0], [1], [0, 0, 1, 1], [], []>} : vector<16x128xbf16>, vector<128x256xbf16>, vector<16x256xf32> -> vector<16x256xf32>
    %7 = arith.addf %3, %6 : vector<16x256xf32>
    %c0_6 = arith.constant 0 : index
    %c0_7 = arith.constant 0 : index
    %8 = vector.load %arg8[%c0_6, %c0_7] : memref<16x256xf32, #tpu.memory_space<vmem>>, vector<16x256xf32>
    tpu.vector_store %arg8[%c0_6, %c0_7], %7 {strides = array<i32>} : memref<16x256xf32, #tpu.memory_space<vmem>>, vector<16x256xf32>,
    %c0_i32_8 = arith.constant 0 : i32
    %9 = arith.cmpi eq, %arg2, %c0_i32_8 : i32
    %10 = arith.extui %9 : i1 to i32
    %c0_i32_9 = arith.constant 0 : i32
    %11 = arith.cmpi ne, %10, %c0_i32_9 : i32
    scf.if %11 {
      %c0_10 = arith.constant 0 : index
      %c0_11 = arith.constant 0 : index
      %12 = vector.load %arg8[%c0_10, %c0_11] : memref<16x256xf32, #tpu.memory_space<vmem>>, vector<16x256xf32>
      %c0_12 = arith.constant 0 : index
      %c0_13 = arith.constant 0 : index
      %13 = vector.load %arg5[%c0_12, %c0_13] : memref<1x256xf32, #tpu.memory_space<vmem>>, vector<1x256xf32>
      %14 = vector.broadcast %13 : vector<1x256xf32> to vector<16x256xf32>
      %15 = arith.mulf %12, %14 : vector<16x256xf32>
      %c0_14 = arith.constant 0 : index
      %c0_15 = arith.constant 0 : index
      %16 = vector.load %arg6[%c0_14, %c0_15] : memref<1x256xf32, #tpu.memory_space<vmem>>, vector<1x256xf32>
      %17 = vector.broadcast %16 : vector<1x256xf32> to vector<16x256xf32>
      %18 = arith.addf %15, %17 : vector<16x256xf32>
      %c0_16 = arith.constant 0 : index
      %c0_17 = arith.constant 0 : index
      %19 = vector.load %arg7[%c0_16, %c0_17] : memref<16x256xf32, #tpu.memory_space<vmem>>, vector<16x256xf32>
      tpu.vector_store %arg7[%c0_16, %c0_17], %18 {strides = array<i32>} : memref<16x256xf32, #tpu.memory_space<vmem>>, vector<16x256xf32>,
    } else {
    }
    return
  }
  func.func @transform_0(%arg0: i32, %arg1: i32, %arg2: i32) -> (i32, i32) {
    %c0_i32 = arith.constant 0 : i32
    return %arg0, %arg2 : i32, i32
  }
  func.func @transform_1(%arg0: i32, %arg1: i32, %arg2: i32) -> (i32, i32) {
    %c0_i32 = arith.constant 0 : i32
    return %arg2, %arg1 : i32, i32
  }
  func.func @transform_2(%arg0: i32, %arg1: i32, %arg2: i32) -> (i32, i32) {
    %c0_i32 = arith.constant 0 : i32
    %c0_i32_0 = arith.constant 0 : i32
    return %c0_i32, %arg1 : i32, i32
  }
  func.func @transform_3(%arg0: i32, %arg1: i32, %arg2: i32) -> (i32, i32) {
    %c0_i32 = arith.constant 0 : i32
    %c0_i32_0 = arith.constant 0 : i32
    return %c0_i32, %arg1 : i32, i32
  }
  func.func @transform_4(%arg0: i32, %arg1: i32, %arg2: i32) -> (i32, i32) {
    %c0_i32 = arith.constant 0 : i32
    return %arg0, %arg1 : i32, i32
  }
}

module attributes {stable_mosaic.version = 11 : i64} {
  func.func @_mm_affine_res_kernel(%arg0: i32, %arg1: i32, %arg2: i32, %arg3: memref<16x128xbf16, #tpu.memory_space<vmem>>, %arg4: memref<128x256xbf16, #tpu.memory_space<vmem>>, %arg5: memref<1x256xf32, #tpu.memory_space<vmem>>, %arg6: memref<1x256xf32, #tpu.memory_space<vmem>>, %arg7: memref<16x256xf32, #tpu.memory_space<vmem>>, %arg8: memref<16x256xf32, #tpu.memory_space<vmem>>, %arg9: memref<16x256xf32, #tpu.memory_space<vmem>>) attributes {dimension_semantics = [#tpu.dimension_semantics<parallel>, #tpu.dimension_semantics<parallel>, #tpu.dimension_semantics<arbitrary>], iteration_bounds = array<i64: 1, 1, 1>, scalar_prefetch = 0 : i64, scratch_operands = 1 : i64, tpu.core_type = #tpu.core_type<tc>, window_params = [{transform_indices = @transform_0, window_bounds = array<i64: 16, 128>}, {transform_indices = @transform_1, window_bounds = array<i64: 128, 256>}, {transform_indices = @transform_2, window_bounds = array<i64: 1, 256>}, {transform_indices = @transform_3, window_bounds = array<i64: 1, 256>}, {transform_indices = @transform_4, window_bounds = array<i64: 16, 256>}, {transform_indices = @transform_5, window_bounds = array<i64: 16, 256>}]} {
    %c0_i32 = arith.constant 0 : i32
    %0 = arith.cmpi eq, %arg2, %c0_i32 : i32
    %1 = arith.extui %0 : i1 to i32
    %c0_i32_0 = arith.constant 0 : i32
    %2 = arith.cmpi ne, %1, %c0_i32_0 : i32
    scf.if %2 {
      %cst_10 = arith.constant 0.000000e+00 : f32
      %12 = vector.broadcast %cst_10 : f32 to vector<16x256xf32>
      %c0_11 = arith.constant 0 : index
      %c0_12 = arith.constant 0 : index
      %13 = vector.load %arg9[%c0_11, %c0_12] : memref<16x256xf32, #tpu.memory_space<vmem>>, vector<16x256xf32>
      tpu.vector_store %arg9[%c0_11, %c0_12], %12 {strides = array<i32>} : memref<16x256xf32, #tpu.memory_space<vmem>>, vector<16x256xf32>,
    } else {
    }
    %c0 = arith.constant 0 : index
    %c0_1 = arith.constant 0 : index
    %3 = vector.load %arg9[%c0, %c0_1] : memref<16x256xf32, #tpu.memory_space<vmem>>, vector<16x256xf32>
    %c0_2 = arith.constant 0 : index
    %c0_3 = arith.constant 0 : index
    %4 = vector.load %arg3[%c0_2, %c0_3] : memref<16x128xbf16, #tpu.memory_space<vmem>>, vector<16x128xbf16>
    %c0_4 = arith.constant 0 : index
    %c0_5 = arith.constant 0 : index
    %5 = vector.load %arg4[%c0_4, %c0_5] : memref<128x256xbf16, #tpu.memory_space<vmem>>, vector<128x256xbf16>
    %cst = arith.constant dense<0.000000e+00> : vector<16x256xf32>
    %6 = tpu.matmul %4, %5, %cst {dimension_numbers = #tpu.dot_dimension_numbers<[1], [0], [0], [1], [0, 0, 1, 1], [], []>} : vector<16x128xbf16>, vector<128x256xbf16>, vector<16x256xf32> -> vector<16x256xf32>
    %7 = arith.addf %3, %6 : vector<16x256xf32>
    %c0_6 = arith.constant 0 : index
    %c0_7 = arith.constant 0 : index
    %8 = vector.load %arg9[%c0_6, %c0_7] : memref<16x256xf32, #tpu.memory_space<vmem>>, vector<16x256xf32>
    tpu.vector_store %arg9[%c0_6, %c0_7], %7 {strides = array<i32>} : memref<16x256xf32, #tpu.memory_space<vmem>>, vector<16x256xf32>,
    %c0_i32_8 = arith.constant 0 : i32
    %9 = arith.cmpi eq, %arg2, %c0_i32_8 : i32
    %10 = arith.extui %9 : i1 to i32
    %c0_i32_9 = arith.constant 0 : i32
    %11 = arith.cmpi ne, %10, %c0_i32_9 : i32
    scf.if %11 {
      %c0_10 = arith.constant 0 : index
      %c0_11 = arith.constant 0 : index
      %12 = vector.load %arg9[%c0_10, %c0_11] : memref<16x256xf32, #tpu.memory_space<vmem>>, vector<16x256xf32>
      %c0_12 = arith.constant 0 : index
      %c0_13 = arith.constant 0 : index
      %13 = vector.load %arg5[%c0_12, %c0_13] : memref<1x256xf32, #tpu.memory_space<vmem>>, vector<1x256xf32>
      %14 = vector.broadcast %13 : vector<1x256xf32> to vector<16x256xf32>
      %15 = arith.mulf %12, %14 : vector<16x256xf32>
      %c0_14 = arith.constant 0 : index
      %c0_15 = arith.constant 0 : index
      %16 = vector.load %arg6[%c0_14, %c0_15] : memref<1x256xf32, #tpu.memory_space<vmem>>, vector<1x256xf32>
      %17 = vector.broadcast %16 : vector<1x256xf32> to vector<16x256xf32>
      %18 = arith.addf %15, %17 : vector<16x256xf32>
      %c0_16 = arith.constant 0 : index
      %c0_17 = arith.constant 0 : index
      %19 = vector.load %arg7[%c0_16, %c0_17] : memref<16x256xf32, #tpu.memory_space<vmem>>, vector<16x256xf32>
      %20 = arith.addf %18, %19 : vector<16x256xf32>
      %cst_18 = arith.constant 0.000000e+00 : f32
      %21 = vector.broadcast %cst_18 : f32 to vector<16x256xf32>
      %22 = arith.maximumf %20, %21 : vector<16x256xf32>
      %c0_19 = arith.constant 0 : index
      %c0_20 = arith.constant 0 : index
      %23 = vector.load %arg8[%c0_19, %c0_20] : memref<16x256xf32, #tpu.memory_space<vmem>>, vector<16x256xf32>
      tpu.vector_store %arg8[%c0_19, %c0_20], %22 {strides = array<i32>} : memref<16x256xf32, #tpu.memory_space<vmem>>, vector<16x256xf32>,
    } else {
    }
    return
  }
  func.func @transform_0(%arg0: i32, %arg1: i32, %arg2: i32) -> (i32, i32) {
    %c0_i32 = arith.constant 0 : i32
    return %arg0, %arg2 : i32, i32
  }
  func.func @transform_1(%arg0: i32, %arg1: i32, %arg2: i32) -> (i32, i32) {
    %c0_i32 = arith.constant 0 : i32
    return %arg2, %arg1 : i32, i32
  }
  func.func @transform_2(%arg0: i32, %arg1: i32, %arg2: i32) -> (i32, i32) {
    %c0_i32 = arith.constant 0 : i32
    %c0_i32_0 = arith.constant 0 : i32
    return %c0_i32, %arg1 : i32, i32
  }
  func.func @transform_3(%arg0: i32, %arg1: i32, %arg2: i32) -> (i32, i32) {
    %c0_i32 = arith.constant 0 : i32
    %c0_i32_0 = arith.constant 0 : i32
    return %c0_i32, %arg1 : i32, i32
  }
  func.func @transform_4(%arg0: i32, %arg1: i32, %arg2: i32) -> (i32, i32) {
    %c0_i32 = arith.constant 0 : i32
    return %arg0, %arg1 : i32, i32
  }
  func.func @transform_5(%arg0: i32, %arg1: i32, %arg2: i32) -> (i32, i32) {
    %c0_i32 = arith.constant 0 : i32
    return %arg0, %arg1 : i32, i32
  }
}

module attributes {stable_mosaic.version = 11 : i64} {
  func.func @_mm_affine_kernel(%arg0: i32, %arg1: i32, %arg2: i32, %arg3: memref<16x256xbf16, #tpu.memory_space<vmem>>, %arg4: memref<256x256xbf16, #tpu.memory_space<vmem>>, %arg5: memref<1x256xf32, #tpu.memory_space<vmem>>, %arg6: memref<1x256xf32, #tpu.memory_space<vmem>>, %arg7: memref<16x256xf32, #tpu.memory_space<vmem>>, %arg8: memref<16x256xf32, #tpu.memory_space<vmem>>) attributes {dimension_semantics = [#tpu.dimension_semantics<parallel>, #tpu.dimension_semantics<parallel>, #tpu.dimension_semantics<arbitrary>], iteration_bounds = array<i64: 1, 1, 1>, scalar_prefetch = 0 : i64, scratch_operands = 1 : i64, tpu.core_type = #tpu.core_type<tc>, window_params = [{transform_indices = @transform_0, window_bounds = array<i64: 16, 256>}, {transform_indices = @transform_1, window_bounds = array<i64: 256, 256>}, {transform_indices = @transform_2, window_bounds = array<i64: 1, 256>}, {transform_indices = @transform_3, window_bounds = array<i64: 1, 256>}, {transform_indices = @transform_4, window_bounds = array<i64: 16, 256>}]} {
    %c0_i32 = arith.constant 0 : i32
    %0 = arith.cmpi eq, %arg2, %c0_i32 : i32
    %1 = arith.extui %0 : i1 to i32
    %c0_i32_0 = arith.constant 0 : i32
    %2 = arith.cmpi ne, %1, %c0_i32_0 : i32
    scf.if %2 {
      %cst_10 = arith.constant 0.000000e+00 : f32
      %12 = vector.broadcast %cst_10 : f32 to vector<16x256xf32>
      %c0_11 = arith.constant 0 : index
      %c0_12 = arith.constant 0 : index
      %13 = vector.load %arg8[%c0_11, %c0_12] : memref<16x256xf32, #tpu.memory_space<vmem>>, vector<16x256xf32>
      tpu.vector_store %arg8[%c0_11, %c0_12], %12 {strides = array<i32>} : memref<16x256xf32, #tpu.memory_space<vmem>>, vector<16x256xf32>,
    } else {
    }
    %c0 = arith.constant 0 : index
    %c0_1 = arith.constant 0 : index
    %3 = vector.load %arg8[%c0, %c0_1] : memref<16x256xf32, #tpu.memory_space<vmem>>, vector<16x256xf32>
    %c0_2 = arith.constant 0 : index
    %c0_3 = arith.constant 0 : index
    %4 = vector.load %arg3[%c0_2, %c0_3] : memref<16x256xbf16, #tpu.memory_space<vmem>>, vector<16x256xbf16>
    %c0_4 = arith.constant 0 : index
    %c0_5 = arith.constant 0 : index
    %5 = vector.load %arg4[%c0_4, %c0_5] : memref<256x256xbf16, #tpu.memory_space<vmem>>, vector<256x256xbf16>
    %cst = arith.constant dense<0.000000e+00> : vector<16x256xf32>
    %6 = tpu.matmul %4, %5, %cst {dimension_numbers = #tpu.dot_dimension_numbers<[1], [0], [0], [1], [0, 0, 1, 1], [], []>} : vector<16x256xbf16>, vector<256x256xbf16>, vector<16x256xf32> -> vector<16x256xf32>
    %7 = arith.addf %3, %6 : vector<16x256xf32>
    %c0_6 = arith.constant 0 : index
    %c0_7 = arith.constant 0 : index
    %8 = vector.load %arg8[%c0_6, %c0_7] : memref<16x256xf32, #tpu.memory_space<vmem>>, vector<16x256xf32>
    tpu.vector_store %arg8[%c0_6, %c0_7], %7 {strides = array<i32>} : memref<16x256xf32, #tpu.memory_space<vmem>>, vector<16x256xf32>,
    %c0_i32_8 = arith.constant 0 : i32
    %9 = arith.cmpi eq, %arg2, %c0_i32_8 : i32
    %10 = arith.extui %9 : i1 to i32
    %c0_i32_9 = arith.constant 0 : i32
    %11 = arith.cmpi ne, %10, %c0_i32_9 : i32
    scf.if %11 {
      %c0_10 = arith.constant 0 : index
      %c0_11 = arith.constant 0 : index
      %12 = vector.load %arg8[%c0_10, %c0_11] : memref<16x256xf32, #tpu.memory_space<vmem>>, vector<16x256xf32>
      %c0_12 = arith.constant 0 : index
      %c0_13 = arith.constant 0 : index
      %13 = vector.load %arg5[%c0_12, %c0_13] : memref<1x256xf32, #tpu.memory_space<vmem>>, vector<1x256xf32>
      %14 = vector.broadcast %13 : vector<1x256xf32> to vector<16x256xf32>
      %15 = arith.mulf %12, %14 : vector<16x256xf32>
      %c0_14 = arith.constant 0 : index
      %c0_15 = arith.constant 0 : index
      %16 = vector.load %arg6[%c0_14, %c0_15] : memref<1x256xf32, #tpu.memory_space<vmem>>, vector<1x256xf32>
      %17 = vector.broadcast %16 : vector<1x256xf32> to vector<16x256xf32>
      %18 = arith.addf %15, %17 : vector<16x256xf32>
      %c0_16 = arith.constant 0 : index
      %c0_17 = arith.constant 0 : index
      %19 = vector.load %arg7[%c0_16, %c0_17] : memref<16x256xf32, #tpu.memory_space<vmem>>, vector<16x256xf32>
      tpu.vector_store %arg7[%c0_16, %c0_17], %18 {strides = array<i32>} : memref<16x256xf32, #tpu.memory_space<vmem>>, vector<16x256xf32>,
    } else {
    }
    return
  }
  func.func @transform_0(%arg0: i32, %arg1: i32, %arg2: i32) -> (i32, i32) {
    %c0_i32 = arith.constant 0 : i32
    return %arg0, %arg2 : i32, i32
  }
  func.func @transform_1(%arg0: i32, %arg1: i32, %arg2: i32) -> (i32, i32) {
    %c0_i32 = arith.constant 0 : i32
    return %arg2, %arg1 : i32, i32
  }
  func.func @transform_2(%arg0: i32, %arg1: i32, %arg2: i32) -> (i32, i32) {
    %c0_i32 = arith.constant 0 : i32
    %c0_i32_0 = arith.constant 0 : i32
    return %c0_i32, %arg1 : i32, i32
  }
  func.func @transform_3(%arg0: i32, %arg1: i32, %arg2: i32) -> (i32, i32) {
    %c0_i32 = arith.constant 0 : i32
    %c0_i32_0 = arith.constant 0 : i32
    return %c0_i32, %arg1 : i32, i32
  }
  func.func @transform_4(%arg0: i32, %arg1: i32, %arg2: i32) -> (i32, i32) {
    %c0_i32 = arith.constant 0 : i32
    return %arg0, %arg1 : i32, i32
  }
}

module attributes {stable_mosaic.version = 11 : i64} {
  func.func @_attnpool_kernel(%arg0: i32, %arg1: memref<8x64xf32, #tpu.memory_space<vmem>>, %arg2: memref<8x2x64xf32, #tpu.memory_space<vmem>>, %arg3: memref<8x2x64xf32, #tpu.memory_space<vmem>>, %arg4: memref<8x64xf32, #tpu.memory_space<vmem>>) attributes {dimension_semantics = [#tpu.dimension_semantics<arbitrary>], iteration_bounds = array<i64: 1>, scalar_prefetch = 0 : i64, scratch_operands = 0 : i64, tpu.core_type = #tpu.core_type<tc>, window_params = [{pipeline_mode = #tpu.pipeline_mode<synchronous>, transform_indices = @transform_0, window_bounds = array<i64: 8, 64>}, {pipeline_mode = #tpu.pipeline_mode<synchronous>, transform_indices = @transform_1, window_bounds = array<i64: 8, 2, 64>}, {pipeline_mode = #tpu.pipeline_mode<synchronous>, transform_indices = @transform_2, window_bounds = array<i64: 8, 2, 64>}, {pipeline_mode = #tpu.pipeline_mode<synchronous>, transform_indices = @transform_3, window_bounds = array<i64: 8, 64>}]} {
    %c0 = arith.constant 0 : index
    %c0_0 = arith.constant 0 : index
    %0 = vector.load %arg1[%c0, %c0_0] : memref<8x64xf32, #tpu.memory_space<vmem>>, vector<8x64xf32>
    %c0_1 = arith.constant 0 : index
    %c0_2 = arith.constant 0 : index
    %c0_3 = arith.constant 0 : index
    %1 = vector.load %arg2[%c0_1, %c0_2, %c0_3] : memref<8x2x64xf32, #tpu.memory_space<vmem>>, vector<8x2x64xf32>
    %c0_4 = arith.constant 0 : index
    %c0_5 = arith.constant 0 : index
    %c0_6 = arith.constant 0 : index
    %2 = vector.load %arg3[%c0_4, %c0_5, %c0_6] : memref<8x2x64xf32, #tpu.memory_space<vmem>>, vector<8x2x64xf32>
    %3 = vector.shape_cast %0 : vector<8x64xf32> to vector<8x1x64xf32>
    %4 = vector.broadcast %3 : vector<8x1x64xf32> to vector<8x2x64xf32>
    %5 = arith.mulf %4, %1 : vector<8x2x64xf32>
    %cst = arith.constant dense<0.000000e+00> : vector<8x2xf32>
    %6 = vector.multi_reduction <add>, %5, %cst [2] : vector<8x2x64xf32> to vector<8x2xf32>
    %cst_7 = arith.constant dense<0xFF800000> : vector<8xf32>
    %7 = vector.multi_reduction <maximumf>, %6, %cst_7 [1] : vector<8x2xf32> to vector<8xf32>
    %8 = vector.shape_cast %7 : vector<8xf32> to vector<8x1xf32>
    %9 = vector.broadcast %8 : vector<8x1xf32> to vector<8x2xf32>
    %10 = arith.subf %6, %9 : vector<8x2xf32>
    %11 = math.exp %10 : vector<8x2xf32>
    %cst_8 = arith.constant dense<0.000000e+00> : vector<8xf32>
    %12 = vector.multi_reduction <add>, %11, %cst_8 [1] : vector<8x2xf32> to vector<8xf32>
    %13 = vector.shape_cast %12 : vector<8xf32> to vector<8x1xf32>
    %14 = tpu.reciprocal %13 {approx = true} : vector<8x1xf32> -> vector<8x1xf32>
    %15 = vector.broadcast %14 : vector<8x1xf32> to vector<8x2xf32>
    %16 = arith.mulf %11, %15 : vector<8x2xf32>
    %17 = vector.shape_cast %16 : vector<8x2xf32> to vector<8x2x1xf32>
    %18 = vector.broadcast %17 : vector<8x2x1xf32> to vector<8x2x64xf32>
    %19 = arith.mulf %18, %2 : vector<8x2x64xf32>
    %cst_9 = arith.constant dense<0.000000e+00> : vector<8x64xf32>
    %20 = vector.multi_reduction <add>, %19, %cst_9 [1] : vector<8x2x64xf32> to vector<8x64xf32>
    %c0_10 = arith.constant 0 : index
    %c0_11 = arith.constant 0 : index
    %21 = vector.load %arg4[%c0_10, %c0_11] : memref<8x64xf32, #tpu.memory_space<vmem>>, vector<8x64xf32>
    tpu.vector_store %arg4[%c0_10, %c0_11], %20 {strides = array<i32>} : memref<8x64xf32, #tpu.memory_space<vmem>>, vector<8x64xf32>,
    return
  }
  func.func @transform_0(%arg0: i32) -> (i32, i32) {
    %c0_i32 = arith.constant 0 : i32
    %c0_i32_0 = arith.constant 0 : i32
    %c0_i32_1 = arith.constant 0 : i32
    return %c0_i32, %c0_i32_0 : i32, i32
  }
  func.func @transform_1(%arg0: i32) -> (i32, i32, i32) {
    %c0_i32 = arith.constant 0 : i32
    %c0_i32_0 = arith.constant 0 : i32
    %c0_i32_1 = arith.constant 0 : i32
    %c0_i32_2 = arith.constant 0 : i32
    return %c0_i32, %c0_i32_0, %c0_i32_1 : i32, i32, i32
  }
  func.func @transform_2(%arg0: i32) -> (i32, i32, i32) {
    %c0_i32 = arith.constant 0 : i32
    %c0_i32_0 = arith.constant 0 : i32
    %c0_i32_1 = arith.constant 0 : i32
    %c0_i32_2 = arith.constant 0 : i32
    return %c0_i32, %c0_i32_0, %c0_i32_1 : i32, i32, i32
  }
  func.func @transform_3(%arg0: i32) -> (i32, i32) {
    %c0_i32 = arith.constant 0 : i32
    %c0_i32_0 = arith.constant 0 : i32
    %c0_i32_1 = arith.constant 0 : i32
    return %c0_i32, %c0_i32_0 : i32, i32
  }
}

module attributes {stable_mosaic.version = 11 : i64} {
  func.func @_mm_affine_kernel(%arg0: i32, %arg1: i32, %arg2: i32, %arg3: memref<16x256xbf16, #tpu.memory_space<vmem>>, %arg4: memref<256x128xbf16, #tpu.memory_space<vmem>>, %arg5: memref<1x128xf32, #tpu.memory_space<vmem>>, %arg6: memref<1x128xf32, #tpu.memory_space<vmem>>, %arg7: memref<16x128xf32, #tpu.memory_space<vmem>>, %arg8: memref<16x128xf32, #tpu.memory_space<vmem>>) attributes {dimension_semantics = [#tpu.dimension_semantics<parallel>, #tpu.dimension_semantics<parallel>, #tpu.dimension_semantics<arbitrary>], iteration_bounds = array<i64: 1, 1, 1>, scalar_prefetch = 0 : i64, scratch_operands = 1 : i64, tpu.core_type = #tpu.core_type<tc>, window_params = [{transform_indices = @transform_0, window_bounds = array<i64: 16, 256>}, {transform_indices = @transform_1, window_bounds = array<i64: 256, 128>}, {transform_indices = @transform_2, window_bounds = array<i64: 1, 128>}, {transform_indices = @transform_3, window_bounds = array<i64: 1, 128>}, {transform_indices = @transform_4, window_bounds = array<i64: 16, 128>}]} {
    %c0_i32 = arith.constant 0 : i32
    %0 = arith.cmpi eq, %arg2, %c0_i32 : i32
    %1 = arith.extui %0 : i1 to i32
    %c0_i32_0 = arith.constant 0 : i32
    %2 = arith.cmpi ne, %1, %c0_i32_0 : i32
    scf.if %2 {
      %cst_10 = arith.constant 0.000000e+00 : f32
      %12 = vector.broadcast %cst_10 : f32 to vector<16x128xf32>
      %c0_11 = arith.constant 0 : index
      %c0_12 = arith.constant 0 : index
      %13 = vector.load %arg8[%c0_11, %c0_12] : memref<16x128xf32, #tpu.memory_space<vmem>>, vector<16x128xf32>
      tpu.vector_store %arg8[%c0_11, %c0_12], %12 {strides = array<i32>} : memref<16x128xf32, #tpu.memory_space<vmem>>, vector<16x128xf32>,
    } else {
    }
    %c0 = arith.constant 0 : index
    %c0_1 = arith.constant 0 : index
    %3 = vector.load %arg8[%c0, %c0_1] : memref<16x128xf32, #tpu.memory_space<vmem>>, vector<16x128xf32>
    %c0_2 = arith.constant 0 : index
    %c0_3 = arith.constant 0 : index
    %4 = vector.load %arg3[%c0_2, %c0_3] : memref<16x256xbf16, #tpu.memory_space<vmem>>, vector<16x256xbf16>
    %c0_4 = arith.constant 0 : index
    %c0_5 = arith.constant 0 : index
    %5 = vector.load %arg4[%c0_4, %c0_5] : memref<256x128xbf16, #tpu.memory_space<vmem>>, vector<256x128xbf16>
    %cst = arith.constant dense<0.000000e+00> : vector<16x128xf32>
    %6 = tpu.matmul %4, %5, %cst {dimension_numbers = #tpu.dot_dimension_numbers<[1], [0], [0], [1], [0, 0, 1, 1], [], []>} : vector<16x256xbf16>, vector<256x128xbf16>, vector<16x128xf32> -> vector<16x128xf32>
    %7 = arith.addf %3, %6 : vector<16x128xf32>
    %c0_6 = arith.constant 0 : index
    %c0_7 = arith.constant 0 : index
    %8 = vector.load %arg8[%c0_6, %c0_7] : memref<16x128xf32, #tpu.memory_space<vmem>>, vector<16x128xf32>
    tpu.vector_store %arg8[%c0_6, %c0_7], %7 {strides = array<i32>} : memref<16x128xf32, #tpu.memory_space<vmem>>, vector<16x128xf32>,
    %c0_i32_8 = arith.constant 0 : i32
    %9 = arith.cmpi eq, %arg2, %c0_i32_8 : i32
    %10 = arith.extui %9 : i1 to i32
    %c0_i32_9 = arith.constant 0 : i32
    %11 = arith.cmpi ne, %10, %c0_i32_9 : i32
    scf.if %11 {
      %c0_10 = arith.constant 0 : index
      %c0_11 = arith.constant 0 : index
      %12 = vector.load %arg8[%c0_10, %c0_11] : memref<16x128xf32, #tpu.memory_space<vmem>>, vector<16x128xf32>
      %c0_12 = arith.constant 0 : index
      %c0_13 = arith.constant 0 : index
      %13 = vector.load %arg5[%c0_12, %c0_13] : memref<1x128xf32, #tpu.memory_space<vmem>>, vector<1x128xf32>
      %14 = vector.broadcast %13 : vector<1x128xf32> to vector<16x128xf32>
      %15 = arith.mulf %12, %14 : vector<16x128xf32>
      %c0_14 = arith.constant 0 : index
      %c0_15 = arith.constant 0 : index
      %16 = vector.load %arg6[%c0_14, %c0_15] : memref<1x128xf32, #tpu.memory_space<vmem>>, vector<1x128xf32>
      %17 = vector.broadcast %16 : vector<1x128xf32> to vector<16x128xf32>
      %18 = arith.addf %15, %17 : vector<16x128xf32>
      %c0_16 = arith.constant 0 : index
      %c0_17 = arith.constant 0 : index
      %19 = vector.load %arg7[%c0_16, %c0_17] : memref<16x128xf32, #tpu.memory_space<vmem>>, vector<16x128xf32>
      tpu.vector_store %arg7[%c0_16, %c0_17], %18 {strides = array<i32>} : memref<16x128xf32, #tpu.memory_space<vmem>>, vector<16x128xf32>,
    } else {
    }
    return
  }
  func.func @transform_0(%arg0: i32, %arg1: i32, %arg2: i32) -> (i32, i32) {
    %c0_i32 = arith.constant 0 : i32
    return %arg0, %arg2 : i32, i32
  }
  func.func @transform_1(%arg0: i32, %arg1: i32, %arg2: i32) -> (i32, i32) {
    %c0_i32 = arith.constant 0 : i32
    return %arg2, %arg1 : i32, i32
  }
  func.func @transform_2(%arg0: i32, %arg1: i32, %arg2: i32) -> (i32, i32) {
    %c0_i32 = arith.constant 0 : i32
    %c0_i32_0 = arith.constant 0 : i32
    return %c0_i32, %arg1 : i32, i32
  }
  func.func @transform_3(%arg0: i32, %arg1: i32, %arg2: i32) -> (i32, i32) {
    %c0_i32 = arith.constant 0 : i32
    %c0_i32_0 = arith.constant 0 : i32
    return %c0_i32, %arg1 : i32, i32
  }
  func.func @transform_4(%arg0: i32, %arg1: i32, %arg2: i32) -> (i32, i32) {
    %c0_i32 = arith.constant 0 : i32
    return %arg0, %arg1 : i32, i32
  }
}

</mosaic_0001>

<llo_original>
// kernel: modified_resnet_fwd.24
$region0: #{modified_resnet_fwd.24}
  #allocation0 [shape = 'u32[]', space=smem, size = 0x4, offset = 0x4, fixed_abs, tag = 'smem constant byte address 0x4 - core index']
  #allocation1 [shape = 'u32[144,128]{1,0:T(1,128)}', space=vmem, size = 0x12000, scoped, tag = 'internal scratch']
  #allocation2 [shape = 'f32[256,128]{1,0:T(8,128)}', space=vmem, size = 0x20000, scoped, tag = 'scratch operand']
  %s0 = inlined_call_operand.vmem [shape: bf16[512,128], index: 0, kind: input, shape index: {}]
  %s1 = inlined_call_operand.vmem [shape: bf16[128,128], index: 1, kind: input, shape index: {}]
  %s2 = inlined_call_operand.vmem [shape: f32[1,128], index: 2, kind: input, shape index: {}]
  %s3 = inlined_call_operand.vmem [shape: f32[1,128], index: 3, kind: input, shape index: {}]
  %s4 = inlined_call_operand.vmem [shape: f32[512,128], index: 4, kind: output, shape index: {}]
  %s5 = sld [smem:[#allocation0]]
  $region57: #{modified_resnet_fwd.24} parent=0
    _
  %s7 = ssub.s32 1, %s5
  %s8 = scalar_select 0, %s7, %s5
  loop: start=0, step=1, limit=4
  $region2: #{modified_resnet_fwd.24} parent=0 // loop_pre_header
    _
  $region3: #{modified_resnet_fwd.24} parent=0 // loop_header
    %s10 = sphi 0, %s14
    %p11 = scmp.ge.s32.totalorder %s10, 4
    %s17 = sphi 0, %s36
    %s18 = sphi 0, %s32
    %s19 = sphi 0, %s28
    %s20 = sphi 0, %s17
    %s21 = sphi 0, %s18
    %s22 = sphi 0, %s19
    %s23 = sphi 0, %s20
    %s24 = sphi 0, %s21
    %s25 = sphi 0, %s22
    %s41 = sphi 0, %s43
    %s44 = sphi 0, %s41
    %s45 = sphi 0, %s44
    %s61 = sphi 0, %s45
    %s69 = sphi 0, %s71
    %s72 = sphi 0, %s69
    %s73 = sphi 0, %s72
    %s89 = sphi 0, %s73
    %s95 = sphi 0, %s97
    %s98 = sphi 0, %s95
    %s99 = sphi 0, %s98
    %s115 = sphi 0, %s99
    %s121 = sphi 0, %s123
    %s124 = sphi 0, %s121
    %s125 = sphi 0, %s124
    %s141 = sphi 0, %s125
    %s149 = sphi 0, %s151
    %s152 = sphi 0, %s149
    %s153 = sphi 0, %s152
    %s169 = sphi 0, %s153
  $region4: #{modified_resnet_fwd.24} parent=0 // loop_header_branch
    %13 = sbr.rel (%p11) target = $region8
  $region5: #{modified_resnet_fwd.24} parent=0 // loop_body
    %s15 = ssub.s32 %s10, 1
    %s16 = ssub.s32 %s10, 2
    %s26 = sadd.s32 1, %s19
    %p27 = scmp.ge.s32.totalorder %s26, 1
    %s28 = scalar_select %p27, 0, %s26
    %s29 = sadd.s32 1, %s18
    %s30 = scalar_select %p27, %s29, %s18
    %p31 = scmp.ge.s32.totalorder %s30, 1
    %s32 = scalar_select %p31, 0, %s30
    %s33 = sadd.s32 1, %s17
    %s34 = scalar_select %p31, %s33, %s17
    %p35 = scmp.ge.s32.totalorder %s34, 2
    %s36 = scalar_select %p35, 0, %s34
    %s37 = ssub.s32 %s17, %s36
    %s38 = ssub.s32 %s19, %s28
    %s39 = sor.u32 %s37, %s38
    %p40 = scmp.eq.s32.totalorder %s39, 0
    %s42 = sadd.s32 %s41, 1
    %s43 = scalar_select %p40, %s41, %s42
    %p46 = pneg %p40
    %p47 = scmp.eq.s32.totalorder %s10, 1
    %p48 = por %p46, %p47
    %p49 = scmp.ne.s32.totalorder %s41, %s44
    %p50 = scmp.eq.s32.totalorder %s10, 0
    %p51 = por %p49, %p50
    %p52 = scmp.ne.s32.totalorder %s41, %s44
    %p53 = scmp.eq.s32.totalorder %s15, 1
    %p54 = por %p52, %p53
    %p55 = scmp.ne.s32.totalorder %s44, %s45
    %p56 = scmp.eq.s32.totalorder %s15, 0
    %p57 = por %p55, %p56
    %p58 = scmp.ne.s32.totalorder %s44, %s45
    %p59 = scmp.eq.s32.totalorder %s16, 1
    %p60 = por %p58, %p59
    %p62 = scmp.ne.s32.totalorder %s45, %s61
    %p63 = scmp.eq.s32.totalorder %s16, 0
    %p64 = por %p62, %p63
    %s65 = ssub.s32 %s19, %s28
    %s66 = ssub.s32 %s18, %s32
    %s67 = sor.u32 %s65, %s66
    %p68 = scmp.eq.s32.totalorder %s67, 0
    %s70 = sadd.s32 %s69, 1
    %s71 = scalar_select %p68, %s69, %s70
    %p74 = pneg %p68
    %p75 = scmp.eq.s32.totalorder %s10, 1
    %p76 = por %p74, %p75
    %p77 = scmp.ne.s32.totalorder %s69, %s72
    %p78 = scmp.eq.s32.totalorder %s10, 0
    %p79 = por %p77, %p78
    %p80 = scmp.ne.s32.totalorder %s69, %s72
    %p81 = scmp.eq.s32.totalorder %s15, 1
    %p82 = por %p80, %p81
    %p83 = scmp.ne.s32.totalorder %s72, %s73
    %p84 = scmp.eq.s32.totalorder %s15, 0
    %p85 = por %p83, %p84
    %p86 = scmp.ne.s32.totalorder %s72, %s73
    %p87 = scmp.eq.s32.totalorder %s16, 1
    %p88 = por %p86, %p87
    %p90 = scmp.ne.s32.totalorder %s73, %s89
    %p91 = scmp.eq.s32.totalorder %s16, 0
    %p92 = por %p90, %p91
    %s93 = ssub.s32 %s18, %s32
    %p94 = scmp.eq.s32.totalorder %s93, 0
    %s96 = sadd.s32 %s95, 1
    %s97 = scalar_select %p94, %s95, %s96
    %p100 = pneg %p94
    %p101 = scmp.eq.s32.totalorder %s10, 1
    %p102 = por %p100, %p101
    %p103 = scmp.ne.s32.totalorder %s95, %s98
    %p104 = scmp.eq.s32.totalorder %s10, 0
    %p105 = por %p103, %p104
    %p106 = scmp.ne.s32.totalorder %s95, %s98
    %p107 = scmp.eq.s32.totalorder %s15, 1
    %p108 = por %p106, %p107
    %p109 = scmp.ne.s32.totalorder %s98, %s99
    %p110 = scmp.eq.s32.totalorder %s15, 0
    %p111 = por %p109, %p110
    %p112 = scmp.ne.s32.totalorder %s98, %s99
    %p113 = scmp.eq.s32.totalorder %s16, 1
    %p114 = por %p112, %p113
    %p116 = scmp.ne.s32.totalorder %s99, %s115
    %p117 = scmp.eq.s32.totalorder %s16, 0
    %p118 = por %p116, %p117
    %s119 = ssub.s32 %s18, %s32
    %p120 = scmp.eq.s32.totalorder %s119, 0
    %s122 = sadd.s32 %s121, 1
    %s123 = scalar_select %p120, %s121, %s122
    %p126 = pneg %p120
    %p127 = scmp.eq.s32.totalorder %s10, 1
    %p128 = por %p126, %p127
    %p129 = scmp.ne.s32.totalorder %s121, %s124
    %p130 = scmp.eq.s32.totalorder %s10, 0
    %p131 = por %p129, %p130
    %p132 = scmp.ne.s32.totalorder %s121, %s124
    %p133 = scmp.eq.s32.totalorder %s15, 1
    %p134 = por %p132, %p133
    %p135 = scmp.ne.s32.totalorder %s124, %s125
    %p136 = scmp.eq.s32.totalorder %s15, 0
    %p137 = por %p135, %p136
    %p138 = scmp.ne.s32.totalorder %s124, %s125
    %p139 = scmp.eq.s32.totalorder %s16, 1
    %p140 = por %p138, %p139
    %p142 = scmp.ne.s32.totalorder %s125, %s141
    %p143 = scmp.eq.s32.totalorder %s16, 0
    %p144 = por %p142, %p143
    %s145 = ssub.s32 %s17, %s36
    %s146 = ssub.s32 %s18, %s32
    %s147 = sor.u32 %s145, %s146
    %p148 = scmp.eq.s32.totalorder %s147, 0
    %s150 = sadd.s32 %s149, 1
    %s151 = scalar_select %p148, %s149, %s150
    %p154 = pneg %p148
    %p155 = scmp.eq.s32.totalorder %s10, 1
    %p156 = por %p154, %p155
    %p157 = scmp.ne.s32.totalorder %s149, %s152
    %p158 = scmp.eq.s32.totalorder %s10, 0
    %p159 = por %p157, %p158
    %p160 = scmp.ne.s32.totalorder %s149, %s152
    %p161 = scmp.eq.s32.totalorder %s15, 1
    %p162 = por %p160, %p161
    %p163 = scmp.ne.s32.totalorder %s152, %s153
    %p164 = scmp.eq.s32.totalorder %s15, 0
    %p165 = por %p163, %p164
    %p166 = scmp.ne.s32.totalorder %s152, %s153
    %p167 = scmp.eq.s32.totalorder %s16, 1
    %p168 = por %p166, %p167
    %p170 = scmp.ne.s32.totalorder %s153, %s169
    %p171 = scmp.eq.s32.totalorder %s16, 0
    %p172 = por %p170, %p171
    %p173 = scmp.le.s32.totalorder 1, %s10
    %p174 = scmp.lt.s32.totalorder %s10, 3
    %p175 = pnand %p173, %p174
    %p176 = pneg %p175
    // Predicated region
    $region9: #{modified_resnet_fwd.24} parent=5 // pred_check
      _
    $region10: #{modified_resnet_fwd.24} parent=5 // pred_check_branch
      %178 = sbr.rel (%p175) target = $region12
    $region11: #{modified_resnet_fwd.24} parent=5 // pred_region
      %s179 = ssub.s32 %s10, 1
      // Predicated region
      $region13: #{modified_resnet_fwd.24} parent=11 // pred_check
        %p180 = pneg %p85
      $region14: #{modified_resnet_fwd.24} parent=11 // pred_check_branch
        %182 = sbr.rel (%p180) target = $region16
      $region15: #{modified_resnet_fwd.24} parent=11 // pred_region
        %s183 = smul.u32 16, %s22
        %p184 = scmp.lt.s32.totalorder %s183, 15
        %s185 = scalar_select %p184, %s183, 15
        %p186 = scmp.lt.s32.totalorder %s21, 0
        %s187 = scalar_select %p186, %s21, 0
        %s188 = sadd.s32 %s187, %s185
        %s189 = smul.addr %s188, 4
        %s190 = scalar_lea.vmem %s1, %s189
        %s191 = smul.u32 16, %s22
      $region16: #{modified_resnet_fwd.24} parent=11 // pred_fallthru
        _
      // Predicated region
      $region17: #{modified_resnet_fwd.24} parent=11 // pred_check
        %p192 = pneg %p111
      $region18: #{modified_resnet_fwd.24} parent=11 // pred_check_branch
        %194 = sbr.rel (%p192) target = $region20
      $region19: #{modified_resnet_fwd.24} parent=11 // pred_region
        %p195 = scmp.lt.s32.totalorder %s21, 0
        %s196 = scalar_select %p195, %s21, 0
        %s197 = scalar_lea.vmem %s2, %s196
      $region20: #{modified_resnet_fwd.24} parent=11 // pred_fallthru
        _
      // Predicated region
      $region21: #{modified_resnet_fwd.24} parent=11 // pred_check
        %p198 = pneg %p137
      $region22: #{modified_resnet_fwd.24} parent=11 // pred_check_branch
        %200 = sbr.rel (%p198) target = $region24
      $region23: #{modified_resnet_fwd.24} parent=11 // pred_region
        %p201 = scmp.lt.s32.totalorder %s21, 0
        %s202 = scalar_select %p201, %s21, 0
        %s203 = scalar_lea.vmem %s3, %s202
      $region24: #{modified_resnet_fwd.24} parent=11 // pred_fallthru
        _
    $region12: #{modified_resnet_fwd.24} parent=5 // pred_fallthru
      _
    %p204 = scmp.lt.s32.totalorder %s10, 2
    // Predicated region
    $region25: #{modified_resnet_fwd.24} parent=5 // pred_check
      %p205 = pneg %p204
    $region26: #{modified_resnet_fwd.24} parent=5 // pred_check_branch
      %207 = sbr.rel (%p205) target = $region28
    $region27: #{modified_resnet_fwd.24} parent=5 // pred_region
      // Predicated region
      $region29: #{modified_resnet_fwd.24} parent=27 // pred_check
        %p208 = pneg %p51
      $region30: #{modified_resnet_fwd.24} parent=27 // pred_check_branch
        %210 = sbr.rel (%p208) target = $region32
      $region31: #{modified_resnet_fwd.24} parent=27 // pred_region
        %s211 = smul.u32 32, %s17
        %p212 = scmp.lt.s32.totalorder %s211, 63
        %s213 = scalar_select %p212, %s211, 63
        %p214 = scmp.lt.s32.totalorder %s19, 0
        %s215 = scalar_select %p214, %s19, 0
        %s216 = sadd.s32 %s215, %s213
        %s217 = smul.addr %s216, 4
        %s218 = scalar_lea.vmem %s0, %s217
        %s219 = smul.u32 32, %s17
      $region32: #{modified_resnet_fwd.24} parent=27 // pred_fallthru
        _
    $region28: #{modified_resnet_fwd.24} parent=5 // pred_fallthru
      _
    %p220 = scmp.le.s32.totalorder 1, %s10
    %p221 = scmp.lt.s32.totalorder %s10, 3
    %p222 = pnand %p220, %p221
    %p223 = pneg %p222
    // Predicated region
    $region33: #{modified_resnet_fwd.24} parent=5 // pred_check
      _
    $region34: #{modified_resnet_fwd.24} parent=5 // pred_check_branch
      %225 = sbr.rel (%p222) target = $region36
    $region35: #{modified_resnet_fwd.24} parent=5 // pred_region
      %s226 = ssub.s32 %s10, 1
      %s227 = smul.u32 32, %s20
      %p228 = scmp.lt.s32.totalorder %s227, 63
      %s229 = scalar_select %p228, %s227, 63
      %p230 = scmp.lt.s32.totalorder %s22, 0
      %s231 = scalar_select %p230, %s22, 0
      %s232 = sadd.s32 %s231, %s229
      %s233 = smul.addr %s232, 4
      %s234 = scalar_lea.vmem %s0, %s233
      %p235 = pneg %p57
      %p236 = pneg %p54
      %s237 = smul.u32 16, %s22
      %p238 = scmp.lt.s32.totalorder %s237, 15
      %s239 = scalar_select %p238, %s237, 15
      %p240 = scmp.lt.s32.totalorder %s21, 0
      %s241 = scalar_select %p240, %s21, 0
      %s242 = sadd.s32 %s241, %s239
      %s243 = smul.addr %s242, 4
      %s244 = scalar_lea.vmem %s1, %s243
      %p245 = pneg %p85
      %p246 = pneg %p82
      %p247 = scmp.lt.s32.totalorder %s21, 0
      %s248 = scalar_select %p247, %s21, 0
      %s249 = scalar_lea.vmem %s2, %s248
      %p250 = pneg %p111
      %p251 = pneg %p108
      %p252 = scmp.lt.s32.totalorder %s21, 0
      %s253 = scalar_select %p252, %s21, 0
      %s254 = scalar_lea.vmem %s3, %s253
      %p255 = pneg %p137
      %p256 = pneg %p134
      %p257 = pneg %p165
      %p258 = pneg %p162
      %s259 = smul.u32 32, %s20
      %p260 = scmp.lt.s32.totalorder %s259, 63
      %s261 = scalar_select %p260, %s259, 63
      %p262 = scmp.lt.s32.totalorder %s21, 0
      %s263 = scalar_select %p262, %s21, 0
      %s264 = sadd.s32 %s263, %s261
      %s265 = smul.addr %s264, 8
      %s266 = scalar_lea.vmem %s4, %s265
      %s267 = smul.u32 32, %s20
      %p268 = scmp.lt.s32.totalorder %s267, 63
      %s269 = scalar_select %p268, %s267, 63
      %p270 = scmp.lt.s32.totalorder %s22, 0
      %s271 = scalar_select %p270, %s22, 0
      %s272 = sadd.s32 %s271, %s269
      %s273 = smul.addr %s272, 4
      %s274 = scalar_lea.vmem %s0, %s273
      %s275 = smul.u32 32, %s20
      %s276 = smul.u32 16, %s22
      %p277 = scmp.lt.s32.totalorder %s276, 15
      %s278 = scalar_select %p277, %s276, 15
      %p279 = scmp.lt.s32.totalorder %s21, 0
      %s280 = scalar_select %p279, %s21, 0
      %s281 = sadd.s32 %s280, %s278
      %s282 = smul.addr %s281, 4
      %s283 = scalar_lea.vmem %s1, %s282
      %s284 = smul.u32 16, %s22
      %p285 = scmp.lt.s32.totalorder %s21, 0
      %s286 = scalar_select %p285, %s21, 0
      %s287 = scalar_lea.vmem %s2, %s286
      %p288 = scmp.lt.s32.totalorder %s21, 0
      %s289 = scalar_select %p288, %s21, 0
      %s290 = scalar_lea.vmem %s3, %s289
      %s291 = smul.u32 32, %s20
      %p292 = scmp.lt.s32.totalorder %s291, 63
      %s293 = scalar_select %p292, %s291, 63
      %p294 = scmp.lt.s32.totalorder %s21, 0
      %s295 = scalar_select %p294, %s21, 0
      %s296 = sadd.s32 %s295, %s293
      %s297 = smul.addr %s296, 8
      %s298 = scalar_lea.vmem %s4, %s297
      %s299 = smul.u32 32, %s20
      %p301 = scmp.eq.s32.totalorder %s22, 0
      // Predicated region
      $region37: #{modified_resnet_fwd.24} parent=35 // pred_check
        %p302 = pneg %p301
      $region38: #{modified_resnet_fwd.24} parent=35 // pred_check_branch
        %304 = sbr.rel (%p302) target = $region40
      $region39: #{modified_resnet_fwd.24} parent=35 // pred_region
        %305 = vst [vmem:[#allocation2] sm:$0xff] 0.0
        %306 = vst [vmem:[#allocation2 + $0x8] sm:$0xff] 0.0
        %307 = vst [vmem:[#allocation2 + $0x10] sm:$0xff] 0.0
        %308 = vst [vmem:[#allocation2 + $0x18] sm:$0xff] 0.0
        %309 = vst [vmem:[#allocation2 + $0x20] sm:$0xff] 0.0
        %310 = vst [vmem:[#allocation2 + $0x28] sm:$0xff] 0.0
        %311 = vst [vmem:[#allocation2 + $0x30] sm:$0xff] 0.0
        %312 = vst [vmem:[#allocation2 + $0x38] sm:$0xff] 0.0
        %313 = vst [vmem:[#allocation2 + $0x40] sm:$0xff] 0.0
        %314 = vst [vmem:[#allocation2 + $0x48] sm:$0xff] 0.0
        %315 = vst [vmem:[#allocation2 + $0x50] sm:$0xff] 0.0
        %316 = vst [vmem:[#allocation2 + $0x58] sm:$0xff] 0.0
        %317 = vst [vmem:[#allocation2 + $0x60] sm:$0xff] 0.0
        %318 = vst [vmem:[#allocation2 + $0x68] sm:$0xff] 0.0
        %319 = vst [vmem:[#allocation2 + $0x70] sm:$0xff] 0.0
        %320 = vst [vmem:[#allocation2 + $0x78] sm:$0xff] 0.0
        %321 = vst [vmem:[#allocation2 + $0x80] sm:$0xff] 0.0
        %322 = vst [vmem:[#allocation2 + $0x88] sm:$0xff] 0.0
        %323 = vst [vmem:[#allocation2 + $0x90] sm:$0xff] 0.0
        %324 = vst [vmem:[#allocation2 + $0x98] sm:$0xff] 0.0
        %325 = vst [vmem:[#allocation2 + $0xa0] sm:$0xff] 0.0
        %326 = vst [vmem:[#allocation2 + $0xa8] sm:$0xff] 0.0
        %327 = vst [vmem:[#allocation2 + $0xb0] sm:$0xff] 0.0
        %328 = vst [vmem:[#allocation2 + $0xb8] sm:$0xff] 0.0
        %329 = vst [vmem:[#allocation2 + $0xc0] sm:$0xff] 0.0
        %330 = vst [vmem:[#allocation2 + $0xc8] sm:$0xff] 0.0
        %331 = vst [vmem:[#allocation2 + $0xd0] sm:$0xff] 0.0
        %332 = vst [vmem:[#allocation2 + $0xd8] sm:$0xff] 0.0
        %333 = vst [vmem:[#allocation2 + $0xe0] sm:$0xff] 0.0
        %334 = vst [vmem:[#allocation2 + $0xe8] sm:$0xff] 0.0
        %335 = vst [vmem:[#allocation2 + $0xf0] sm:$0xff] 0.0
        %336 = vst [vmem:[#allocation2 + $0xf8] sm:$0xff] 0.0
      $region40: #{modified_resnet_fwd.24} parent=35 // pred_fallthru
        _
      %v337 = vld [vmem:[#allocation2] sm:$0xff]
      %v338 = vld [vmem:[#allocation2 + $0x8] sm:$0xff]
      %v339 = vld [vmem:[#allocation2 + $0x10] sm:$0xff]
      %v340 = vld [vmem:[#allocation2 + $0x18] sm:$0xff]
      %v341 = vld [vmem:[#allocation2 + $0x20] sm:$0xff]
      %v342 = vld [vmem:[#allocation2 + $0x28] sm:$0xff]
      %v343 = vld [vmem:[#allocation2 + $0x30] sm:$0xff]
      %v344 = vld [vmem:[#allocation2 + $0x38] sm:$0xff]
      %v345 = vld [vmem:[#allocation2 + $0x40] sm:$0xff]
      %v346 = vld [vmem:[#allocation2 + $0x48] sm:$0xff]
      %v347 = vld [vmem:[#allocation2 + $0x50] sm:$0xff]
      %v348 = vld [vmem:[#allocation2 + $0x58] sm:$0xff]
      %v349 = vld [vmem:[#allocation2 + $0x60] sm:$0xff]
      %v350 = vld [vmem:[#allocation2 + $0x68] sm:$0xff]
      %v351 = vld [vmem:[#allocation2 + $0x70] sm:$0xff]
      %v352 = vld [vmem:[#allocation2 + $0x78] sm:$0xff]
      %v353 = vld [vmem:[#allocation2 + $0x80] sm:$0xff]
      %v354 = vld [vmem:[#allocation2 + $0x88] sm:$0xff]
      %v355 = vld [vmem:[#allocation2 + $0x90] sm:$0xff]
      %v356 = vld [vmem:[#allocation2 + $0x98] sm:$0xff]
      %v357 = vld [vmem:[#allocation2 + $0xa0] sm:$0xff]
      %v358 = vld [vmem:[#allocation2 + $0xa8] sm:$0xff]
      %v359 = vld [vmem:[#allocation2 + $0xb0] sm:$0xff]
      %v360 = vld [vmem:[#allocation2 + $0xb8] sm:$0xff]
      %v361 = vld [vmem:[#allocation2 + $0xc0] sm:$0xff]
      %v362 = vld [vmem:[#allocation2 + $0xc8] sm:$0xff]
      %v363 = vld [vmem:[#allocation2 + $0xd0] sm:$0xff]
      %v364 = vld [vmem:[#allocation2 + $0xd8] sm:$0xff]
      %v365 = vld [vmem:[#allocation2 + $0xe0] sm:$0xff]
      %v366 = vld [vmem:[#allocation2 + $0xe8] sm:$0xff]
      %v367 = vld [vmem:[#allocation2 + $0xf0] sm:$0xff]
      %v368 = vld [vmem:[#allocation2 + $0xf8] sm:$0xff]
      %v369 = vld [vmem:[%s274] sm:$0xf]
      %v370 = vld [vmem:[%s274 + $0x4] sm:$0xf]
      %v371 = vld [vmem:[%s274 + $0x8] sm:$0xf]
      %v372 = vld [vmem:[%s274 + $0xc] sm:$0xf]
      %v373 = vld [vmem:[%s274 + $0x10] sm:$0xf]
      %v374 = vld [vmem:[%s274 + $0x14] sm:$0xf]
      %v375 = vld [vmem:[%s274 + $0x18] sm:$0xf]
      %v376 = vld [vmem:[%s274 + $0x1c] sm:$0xf]
      %v377 = vld [vmem:[%s274 + $0x20] sm:$0xf]
      %v378 = vld [vmem:[%s274 + $0x24] sm:$0xf]
      %v379 = vld [vmem:[%s274 + $0x28] sm:$0xf]
      %v380 = vld [vmem:[%s274 + $0x2c] sm:$0xf]
      %v381 = vld [vmem:[%s274 + $0x30] sm:$0xf]
      %v382 = vld [vmem:[%s274 + $0x34] sm:$0xf]
      %v383 = vld [vmem:[%s274 + $0x38] sm:$0xf]
      %v384 = vld [vmem:[%s274 + $0x3c] sm:$0xf]
      %v385 = vld [vmem:[%s274 + $0x40] sm:$0xf]
      %v386 = vld [vmem:[%s274 + $0x44] sm:$0xf]
      %v387 = vld [vmem:[%s274 + $0x48] sm:$0xf]
      %v388 = vld [vmem:[%s274 + $0x4c] sm:$0xf]
      %v389 = vld [vmem:[%s274 + $0x50] sm:$0xf]
      %v390 = vld [vmem:[%s274 + $0x54] sm:$0xf]
      %v391 = vld [vmem:[%s274 + $0x58] sm:$0xf]
      %v392 = vld [vmem:[%s274 + $0x5c] sm:$0xf]
      %v393 = vld [vmem:[%s274 + $0x60] sm:$0xf]
      %v394 = vld [vmem:[%s274 + $0x64] sm:$0xf]
      %v395 = vld [vmem:[%s274 + $0x68] sm:$0xf]
      %v396 = vld [vmem:[%s274 + $0x6c] sm:$0xf]
      %v397 = vld [vmem:[%s274 + $0x70] sm:$0xf]
      %v398 = vld [vmem:[%s274 + $0x74] sm:$0xf]
      %v399 = vld [vmem:[%s274 + $0x78] sm:$0xf]
      %v400 = vld [vmem:[%s274 + $0x7c] sm:$0xf]
      %v401 = vld [vmem:[%s283] sm:$0xf]
      %v402 = vld [vmem:[%s283 + $0x4] sm:$0xf]
      %v403 = vld [vmem:[%s283 + $0x8] sm:$0xf]
      %v404 = vld [vmem:[%s283 + $0xc] sm:$0xf]
      %v405 = vld [vmem:[%s283 + $0x10] sm:$0xf]
      %v406 = vld [vmem:[%s283 + $0x14] sm:$0xf]
      %v407 = vld [vmem:[%s283 + $0x18] sm:$0xf]
      %v408 = vld [vmem:[%s283 + $0x1c] sm:$0xf]
      %v409 = vld [vmem:[%s283 + $0x20] sm:$0xf]
      %v410 = vld [vmem:[%s283 + $0x24] sm:$0xf]
      %v411 = vld [vmem:[%s283 + $0x28] sm:$0xf]
      %v412 = vld [vmem:[%s283 + $0x2c] sm:$0xf]
      %v413 = vld [vmem:[%s283 + $0x30] sm:$0xf]
      %v414 = vld [vmem:[%s283 + $0x34] sm:$0xf]
      %v415 = vld [vmem:[%s283 + $0x38] sm:$0xf]
      %v416 = vld [vmem:[%s283 + $0x3c] sm:$0xf]
      %v449 = vunpack.c.l.b16 %v369
      %v450 = vunpack.c.l.b16 %v370
      %v451 = vunpack.c.l.b16 %v371
      %v452 = vunpack.c.l.b16 %v372
      %v453 = vunpack.c.l.b16 %v373
      %v454 = vunpack.c.l.b16 %v374
      %v455 = vunpack.c.l.b16 %v375
      %v456 = vunpack.c.l.b16 %v376
      %v457 = vunpack.c.l.b16 %v377
      %v458 = vunpack.c.l.b16 %v378
      %v459 = vunpack.c.l.b16 %v379
      %v460 = vunpack.c.l.b16 %v380
      %v461 = vunpack.c.l.b16 %v381
      %v462 = vunpack.c.l.b16 %v382
      %v463 = vunpack.c.l.b16 %v383
      %v464 = vunpack.c.l.b16 %v384
      %v465 = vunpack.c.l.b16 %v385
      %v466 = vunpack.c.l.b16 %v386
      %v467 = vunpack.c.l.b16 %v387
      %v468 = vunpack.c.l.b16 %v388
      %v469 = vunpack.c.l.b16 %v389
      %v470 = vunpack.c.l.b16 %v390
      %v471 = vunpack.c.l.b16 %v391
      %v472 = vunpack.c.l.b16 %v392
      %v473 = vunpack.c.l.b16 %v393
      %v474 = vunpack.c.l.b16 %v394
      %v475 = vunpack.c.l.b16 %v395
      %v476 = vunpack.c.l.b16 %v396
      %v477 = vunpack.c.l.b16 %v397
      %v478 = vunpack.c.l.b16 %v398
      %v479 = vunpack.c.l.b16 %v399
      %v480 = vunpack.c.l.b16 %v400
      %v481 = vpack.c.b16 %v450, %v449
      %v482 = vpack.c.b16 %v452, %v451
      %v483 = vpack.c.b16 %v454, %v453
      %v484 = vpack.c.b16 %v456, %v455
      %v485 = vpack.c.b16 %v458, %v457
      %v486 = vpack.c.b16 %v460, %v459
      %v487 = vpack.c.b16 %v462, %v461
      %v488 = vpack.c.b16 %v464, %v463
      %v489 = vpack.c.b16 %v466, %v465
      %v490 = vpack.c.b16 %v468, %v467
      %v491 = vpack.c.b16 %v470, %v469
      %v492 = vpack.c.b16 %v472, %v471
      %v493 = vpack.c.b16 %v474, %v473
      %v494 = vpack.c.b16 %v476, %v475
      %v495 = vpack.c.b16 %v478, %v477
      %v496 = vpack.c.b16 %v480, %v479
      %v529 = vunpack.c.l.b16 %v401
      %v530 = vunpack.c.l.b16 %v402
      %v531 = vunpack.c.l.b16 %v403
      %v532 = vunpack.c.l.b16 %v404
      %v533 = vunpack.c.l.b16 %v405
      %v534 = vunpack.c.l.b16 %v406
      %v535 = vunpack.c.l.b16 %v407
      %v536 = vunpack.c.l.b16 %v408
      %v537 = vunpack.c.l.b16 %v409
      %v538 = vunpack.c.l.b16 %v410
      %v539 = vunpack.c.l.b16 %v411
      %v540 = vunpack.c.l.b16 %v412
      %v541 = vunpack.c.l.b16 %v413
      %v542 = vunpack.c.l.b16 %v414
      %v543 = vunpack.c.l.b16 %v415
      %v544 = vunpack.c.l.b16 %v416
      %v545 = vpack.c.b16 %v530, %v529
      %v546 = vpack.c.b16 %v532, %v531
      %v547 = vpack.c.b16 %v534, %v533
      %v548 = vpack.c.b16 %v536, %v535
      %v549 = vpack.c.b16 %v538, %v537
      %v550 = vpack.c.b16 %v540, %v539
      %v551 = vpack.c.b16 %v542, %v541
      %v552 = vpack.c.b16 %v544, %v543
      %561 = vmatprep.subr.bf16.mxu0 0
      %562 = vmatpush1.bf16.msra.mxu0 %v545
      %563 = vmatprep.subr.bf16.mxu0 0
      %564 = vmatpush1.bf16.msra.mxu0 %v546
      %565 = vmatprep.subr.bf16.mxu0 0
      %566 = vmatpush1.bf16.msra.mxu0 %v547
      %567 = vmatprep.subr.bf16.mxu0 0
      %568 = vmatpush1.bf16.msra.mxu0 %v548
      %569 = vmatprep.subr.bf16.mxu0 0
      %570 = vmatpush1.bf16.msra.mxu0 %v549
      %571 = vmatprep.subr.bf16.mxu0 0
      %572 = vmatpush1.bf16.msra.mxu0 %v550
      %573 = vmatprep.subr.bf16.mxu0 0
      %574 = vmatpush1.bf16.msra.mxu0 %v551
      %575 = vmatprep.subr.bf16.mxu0 0
      %576 = vmatpush1.bf16.msra.mxu0 %v552
      %577 = vmatprep.subr.bf16.mxu0 0
      %578 = vmatpush1.bf16.msra.mxu0 0
      %579 = vmatprep.subr.bf16.mxu0 0
      %580 = vmatpush1.bf16.msra.mxu0 0
      %581 = vmatprep.subr.bf16.mxu0 0
      %582 = vmatpush1.bf16.msra.mxu0 0
      %583 = vmatprep.subr.bf16.mxu0 0
      %584 = vmatpush1.bf16.msra.mxu0 0
      %585 = vmatprep.subr.bf16.mxu0 0
      %586 = vmatpush1.bf16.msra.mxu0 0
      %587 = vmatprep.subr.bf16.mxu0 0
      %588 = vmatpush1.bf16.msra.mxu0 0
      %589 = vmatprep.subr.bf16.mxu0 0
      %590 = vmatpush1.bf16.msra.mxu0 0
      %591 = vmatprep.subr.bf16.mxu0 0
      %592 = vmatpush1.bf16.msra.mxu0 0
      %593 = vmatprep.mubr.bf16.mxu0 0
      %594 = vmatmul.mubr.bf16.gmra.mrb[0].mxu0 %v481
      %v595 = vpop.f32.mrb[0].mxu0
      %v596 = vadd.f32 0.0, %v595
      %v597 = vpop.f32.mrb[0].mxu0
      %v598 = vpop.f32.mrb[0].mxu0
      %v599 = vadd.f32 0.0, %v598
      %v600 = vpop.f32.mrb[0].mxu0
      %601 = vmatprep.mubr.bf16.mxu0 0
      %602 = vmatmul.mubr.bf16.gmra.mrb[0].mxu0 %v482
      %v603 = vpop.f32.mrb[0].mxu0
      %v604 = vadd.f32 0.0, %v603
      %v605 = vpop.f32.mrb[0].mxu0
      %v606 = vpop.f32.mrb[0].mxu0
      %v607 = vadd.f32 0.0, %v606
      %v608 = vpop.f32.mrb[0].mxu0
      %609 = vmatprep.mubr.bf16.mxu0 0
      %610 = vmatmul.mubr.bf16.gmra.mrb[0].mxu0 %v483
      %v611 = vpop.f32.mrb[0].mxu0
      %v612 = vadd.f32 0.0, %v611
      %v613 = vpop.f32.mrb[0].mxu0
      %v614 = vpop.f32.mrb[0].mxu0
      %v615 = vadd.f32 0.0, %v614
      %v616 = vpop.f32.mrb[0].mxu0
      %617 = vmatprep.mubr.bf16.mxu0 0
      %618 = vmatmul.mubr.bf16.gmra.mrb[0].mxu0 %v484
      %v619 = vpop.f32.mrb[0].mxu0
      %v620 = vadd.f32 0.0, %v619
      %v621 = vpop.f32.mrb[0].mxu0
      %v622 = vpop.f32.mrb[0].mxu0
      %v623 = vadd.f32 0.0, %v622
      %v624 = vpop.f32.mrb[0].mxu0
      %625 = vmatprep.mubr.bf16.mxu0 0
      %626 = vmatmul.mubr.bf16.gmra.mrb[0].mxu0 %v485
      %v627 = vpop.f32.mrb[0].mxu0
      %v628 = vadd.f32 0.0, %v627
      %v629 = vpop.f32.mrb[0].mxu0
      %v630 = vpop.f32.mrb[0].mxu0
      %v631 = vadd.f32 0.0, %v630
      %v632 = vpop.f32.mrb[0].mxu0
      %633 = vmatprep.mubr.bf16.mxu0 0
      %634 = vmatmul.mubr.bf16.gmra.mrb[0].mxu0 %v486
      %v635 = vpop.f32.mrb[0].mxu0
      %v636 = vadd.f32 0.0, %v635
      %v637 = vpop.f32.mrb[0].mxu0
      %v638 = vpop.f32.mrb[0].mxu0
      %v639 = vadd.f32 0.0, %v638
      %v640 = vpop.f32.mrb[0].mxu0
      %641 = vmatprep.mubr.bf16.mxu0 0
      %642 = vmatmul.mubr.bf16.gmra.mrb[0].mxu0 %v487
      %v643 = vpop.f32.mrb[0].mxu0
      %v644 = vadd.f32 0.0, %v643
      %v645 = vpop.f32.mrb[0].mxu0
      %v646 = vpop.f32.mrb[0].mxu0
      %v647 = vadd.f32 0.0, %v646
      %v648 = vpop.f32.mrb[0].mxu0
      %649 = vmatprep.mubr.bf16.mxu0 0
      %650 = vmatmul.mubr.bf16.gmra.mrb[0].mxu0 %v488
      %v651 = vpop.f32.mrb[0].mxu0
      %v652 = vadd.f32 0.0, %v651
      %v653 = vpop.f32.mrb[0].mxu0
      %v654 = vpop.f32.mrb[0].mxu0
      %v655 = vadd.f32 0.0, %v654
      %v656 = vpop.f32.mrb[0].mxu0
      %657 = vmatprep.mubr.bf16.mxu0 0
      %658 = vmatmul.mubr.bf16.gmra.mrb[0].mxu0 %v489
      %v659 = vpop.f32.mrb[0].mxu0
      %v660 = vadd.f32 0.0, %v659
      %v661 = vpop.f32.mrb[0].mxu0
      %v662 = vpop.f32.mrb[0].mxu0
      %v663 = vadd.f32 0.0, %v662
      %v664 = vpop.f32.mrb[0].mxu0
      %665 = vmatprep.mubr.bf16.mxu0 0
      %666 = vmatmul.mubr.bf16.gmra.mrb[0].mxu0 %v490
      %v667 = vpop.f32.mrb[0].mxu0
      %v668 = vadd.f32 0.0, %v667
      %v669 = vpop.f32.mrb[0].mxu0
      %v670 = vpop.f32.mrb[0].mxu0
      %v671 = vadd.f32 0.0, %v670
      %v672 = vpop.f32.mrb[0].mxu0
      %673 = vmatprep.mubr.bf16.mxu0 0
      %674 = vmatmul.mubr.bf16.gmra.mrb[0].mxu0 %v491
      %v675 = vpop.f32.mrb[0].mxu0
      %v676 = vadd.f32 0.0, %v675
      %v677 = vpop.f32.mrb[0].mxu0
      %v678 = vpop.f32.mrb[0].mxu0
      %v679 = vadd.f32 0.0, %v678
      %v680 = vpop.f32.mrb[0].mxu0
      %681 = vmatprep.mubr.bf16.mxu0 0
      %682 = vmatmul.mubr.bf16.gmra.mrb[0].mxu0 %v492
      %v683 = vpop.f32.mrb[0].mxu0
      %v684 = vadd.f32 0.0, %v683
      %v685 = vpop.f32.mrb[0].mxu0
      %v686 = vpop.f32.mrb[0].mxu0
      %v687 = vadd.f32 0.0, %v686
      %v688 = vpop.f32.mrb[0].mxu0
      %689 = vmatprep.mubr.bf16.mxu0 0
      %690 = vmatmul.mubr.bf16.gmra.mrb[0].mxu0 %v493
      %v691 = vpop.f32.mrb[0].mxu0
      %v692 = vadd.f32 0.0, %v691
      %v693 = vpop.f32.mrb[0].mxu0
      %v694 = vpop.f32.mrb[0].mxu0
      %v695 = vadd.f32 0.0, %v694
      %v696 = vpop.f32.mrb[0].mxu0
      %697 = vmatprep.mubr.bf16.mxu0 0
      %698 = vmatmul.mubr.bf16.gmra.mrb[0].mxu0 %v494
      %v699 = vpop.f32.mrb[0].mxu0
      %v700 = vadd.f32 0.0, %v699
      %v701 = vpop.f32.mrb[0].mxu0
      %v702 = vpop.f32.mrb[0].mxu0
      %v703 = vadd.f32 0.0, %v702
      %v704 = vpop.f32.mrb[0].mxu0
      %705 = vmatprep.mubr.bf16.mxu0 0
      %706 = vmatmul.mubr.bf16.gmra.mrb[0].mxu0 %v495
      %v707 = vpop.f32.mrb[0].mxu0
      %v708 = vadd.f32 0.0, %v707
      %v709 = vpop.f32.mrb[0].mxu0
      %v710 = vpop.f32.mrb[0].mxu0
      %v711 = vadd.f32 0.0, %v710
      %v712 = vpop.f32.mrb[0].mxu0
      %713 = vmatprep.mubr.bf16.mxu0 0
      %714 = vmatmul.mubr.bf16.gmra.mrb[0].mxu0 %v496
      %v715 = vpop.f32.mrb[0].mxu0
      %v716 = vadd.f32 0.0, %v715
      %v717 = vpop.f32.mrb[0].mxu0
      %v718 = vpop.f32.mrb[0].mxu0
      %v719 = vadd.f32 0.0, %v718
      %v720 = vpop.f32.mrb[0].mxu0
      %721 = vdwg.mxu0
      %v722 = vadd.f32 %v337, %v596
      %v723 = vadd.f32 %v338, %v599
      %v724 = vadd.f32 %v339, %v604
      %v725 = vadd.f32 %v340, %v607
      %v726 = vadd.f32 %v341, %v612
      %v727 = vadd.f32 %v342, %v615
      %v728 = vadd.f32 %v343, %v620
      %v729 = vadd.f32 %v344, %v623
      %v730 = vadd.f32 %v345, %v628
      %v731 = vadd.f32 %v346, %v631
      %v732 = vadd.f32 %v347, %v636
      %v733 = vadd.f32 %v348, %v639
      %v734 = vadd.f32 %v349, %v644
      %v735 = vadd.f32 %v350, %v647
      %v736 = vadd.f32 %v351, %v652
      %v737 = vadd.f32 %v352, %v655
      %v738 = vadd.f32 %v353, %v660
      %v739 = vadd.f32 %v354, %v663
      %v740 = vadd.f32 %v355, %v668
      %v741 = vadd.f32 %v356, %v671
      %v742 = vadd.f32 %v357, %v676
      %v743 = vadd.f32 %v358, %v679
      %v744 = vadd.f32 %v359, %v684
      %v745 = vadd.f32 %v360, %v687
      %v746 = vadd.f32 %v361, %v692
      %v747 = vadd.f32 %v362, %v695
      %v748 = vadd.f32 %v363, %v700
      %v749 = vadd.f32 %v364, %v703
      %v750 = vadd.f32 %v365, %v708
      %v751 = vadd.f32 %v366, %v711
      %v752 = vadd.f32 %v367, %v716
      %v753 = vadd.f32 %v368, %v719
      %754 = vst [vmem:[#allocation2] sm:$0xff] %v722
      %755 = vst [vmem:[#allocation2 + $0x8] sm:$0xff] %v723
      %756 = vst [vmem:[#allocation2 + $0x10] sm:$0xff] %v724
      %757 = vst [vmem:[#allocation2 + $0x18] sm:$0xff] %v725
      %758 = vst [vmem:[#allocation2 + $0x20] sm:$0xff] %v726
      %759 = vst [vmem:[#allocation2 + $0x28] sm:$0xff] %v727
      %760 = vst [vmem:[#allocation2 + $0x30] sm:$0xff] %v728
      %761 = vst [vmem:[#allocation2 + $0x38] sm:$0xff] %v729
      %762 = vst [vmem:[#allocation2 + $0x40] sm:$0xff] %v730
      %763 = vst [vmem:[#allocation2 + $0x48] sm:$0xff] %v731
      %764 = vst [vmem:[#allocation2 + $0x50] sm:$0xff] %v732
      %765 = vst [vmem:[#allocation2 + $0x58] sm:$0xff] %v733
      %766 = vst [vmem:[#allocation2 + $0x60] sm:$0xff] %v734
      %767 = vst [vmem:[#allocation2 + $0x68] sm:$0xff] %v735
      %768 = vst [vmem:[#allocation2 + $0x70] sm:$0xff] %v736
      %769 = vst [vmem:[#allocation2 + $0x78] sm:$0xff] %v737
      %770 = vst [vmem:[#allocation2 + $0x80] sm:$0xff] %v738
      %771 = vst [vmem:[#allocation2 + $0x88] sm:$0xff] %v739
      %772 = vst [vmem:[#allocation2 + $0x90] sm:$0xff] %v740
      %773 = vst [vmem:[#allocation2 + $0x98] sm:$0xff] %v741
      %774 = vst [vmem:[#allocation2 + $0xa0] sm:$0xff] %v742
      %775 = vst [vmem:[#allocation2 + $0xa8] sm:$0xff] %v743
      %776 = vst [vmem:[#allocation2 + $0xb0] sm:$0xff] %v744
      %777 = vst [vmem:[#allocation2 + $0xb8] sm:$0xff] %v745
      %778 = vst [vmem:[#allocation2 + $0xc0] sm:$0xff] %v746
      %779 = vst [vmem:[#allocation2 + $0xc8] sm:$0xff] %v747
      %780 = vst [vmem:[#allocation2 + $0xd0] sm:$0xff] %v748
      %781 = vst [vmem:[#allocation2 + $0xd8] sm:$0xff] %v749
      %782 = vst [vmem:[#allocation2 + $0xe0] sm:$0xff] %v750
      %783 = vst [vmem:[#allocation2 + $0xe8] sm:$0xff] %v751
      %784 = vst [vmem:[#allocation2 + $0xf0] sm:$0xff] %v752
      %785 = vst [vmem:[#allocation2 + $0xf8] sm:$0xff] %v753
      // Predicated region
      $region41: #{modified_resnet_fwd.24} parent=35 // pred_check
        %p786 = pneg %p301
      $region42: #{modified_resnet_fwd.24} parent=35 // pred_check_branch
        %788 = sbr.rel (%p786) target = $region44
      $region43: #{modified_resnet_fwd.24} parent=35 // pred_region
        %v789 = vld [vmem:[#allocation2] sm:$0xff]
        %v790 = vld [vmem:[#allocation2 + $0x8] sm:$0xff]
        %v791 = vld [vmem:[#allocation2 + $0x10] sm:$0xff]
        %v792 = vld [vmem:[#allocation2 + $0x18] sm:$0xff]
        %v793 = vld [vmem:[#allocation2 + $0x20] sm:$0xff]
        %v794 = vld [vmem:[#allocation2 + $0x28] sm:$0xff]
        %v795 = vld [vmem:[#allocation2 + $0x30] sm:$0xff]
        %v796 = vld [vmem:[#allocation2 + $0x38] sm:$0xff]
        %v797 = vld [vmem:[#allocation2 + $0x40] sm:$0xff]
        %v798 = vld [vmem:[#allocation2 + $0x48] sm:$0xff]
        %v799 = vld [vmem:[#allocation2 + $0x50] sm:$0xff]
        %v800 = vld [vmem:[#allocation2 + $0x58] sm:$0xff]
        %v801 = vld [vmem:[#allocation2 + $0x60] sm:$0xff]
        %v802 = vld [vmem:[#allocation2 + $0x68] sm:$0xff]
        %v803 = vld [vmem:[#allocation2 + $0x70] sm:$0xff]
        %v804 = vld [vmem:[#allocation2 + $0x78] sm:$0xff]
        %v805 = vld [vmem:[#allocation2 + $0x80] sm:$0xff]
        %v806 = vld [vmem:[#allocation2 + $0x88] sm:$0xff]
        %v807 = vld [vmem:[#allocation2 + $0x90] sm:$0xff]
        %v808 = vld [vmem:[#allocation2 + $0x98] sm:$0xff]
        %v809 = vld [vmem:[#allocation2 + $0xa0] sm:$0xff]
        %v810 = vld [vmem:[#allocation2 + $0xa8] sm:$0xff]
        %v811 = vld [vmem:[#allocation2 + $0xb0] sm:$0xff]
        %v812 = vld [vmem:[#allocation2 + $0xb8] sm:$0xff]
        %v813 = vld [vmem:[#allocation2 + $0xc0] sm:$0xff]
        %v814 = vld [vmem:[#allocation2 + $0xc8] sm:$0xff]
        %v815 = vld [vmem:[#allocation2 + $0xd0] sm:$0xff]
        %v816 = vld [vmem:[#allocation2 + $0xd8] sm:$0xff]
        %v817 = vld [vmem:[#allocation2 + $0xe0] sm:$0xff]
        %v818 = vld [vmem:[#allocation2 + $0xe8] sm:$0xff]
        %v819 = vld [vmem:[#allocation2 + $0xf0] sm:$0xff]
        %v820 = vld [vmem:[#allocation2 + $0xf8] sm:$0xff]
        %v821 = vld [vmem:[%s287] sm:$0x1]
        %v823 = vlaneseq
        %v824 = vshrl.u32 %v823, 7
        %v825 = vsub.s32 0, %v824
        %v826 = vrot.slane %v821, %v825
        %v828 = vmul.f32 %v789, %v826
        %v829 = vmul.f32 %v790, %v826
        %v830 = vmul.f32 %v791, %v826
        %v831 = vmul.f32 %v792, %v826
        %v832 = vmul.f32 %v793, %v826
        %v833 = vmul.f32 %v794, %v826
        %v834 = vmul.f32 %v795, %v826
        %v835 = vmul.f32 %v796, %v826
        %v836 = vmul.f32 %v797, %v826
        %v837 = vmul.f32 %v798, %v826
        %v838 = vmul.f32 %v799, %v826
        %v839 = vmul.f32 %v800, %v826
        %v840 = vmul.f32 %v801, %v826
        %v841 = vmul.f32 %v802, %v826
        %v842 = vmul.f32 %v803, %v826
        %v843 = vmul.f32 %v804, %v826
        %v844 = vmul.f32 %v805, %v826
        %v845 = vmul.f32 %v806, %v826
        %v846 = vmul.f32 %v807, %v826
        %v847 = vmul.f32 %v808, %v826
        %v848 = vmul.f32 %v809, %v826
        %v849 = vmul.f32 %v810, %v826
        %v850 = vmul.f32 %v811, %v826
        %v851 = vmul.f32 %v812, %v826
        %v852 = vmul.f32 %v813, %v826
        %v853 = vmul.f32 %v814, %v826
        %v854 = vmul.f32 %v815, %v826
        %v855 = vmul.f32 %v816, %v826
        %v856 = vmul.f32 %v817, %v826
        %v857 = vmul.f32 %v818, %v826
        %v858 = vmul.f32 %v819, %v826
        %v859 = vmul.f32 %v820, %v826
        %v860 = vld [vmem:[%s290] sm:$0x1]
        %v862 = vlaneseq
        %v863 = vshrl.u32 %v862, 7
        %v864 = vsub.s32 0, %v863
        %v865 = vrot.slane %v860, %v864
        %v867 = vadd.f32 %v828, %v865
        %v868 = vadd.f32 %v829, %v865
        %v869 = vadd.f32 %v830, %v865
        %v870 = vadd.f32 %v831, %v865
        %v871 = vadd.f32 %v832, %v865
        %v872 = vadd.f32 %v833, %v865
        %v873 = vadd.f32 %v834, %v865
        %v874 = vadd.f32 %v835, %v865
        %v875 = vadd.f32 %v836, %v865
        %v876 = vadd.f32 %v837, %v865
        %v877 = vadd.f32 %v838, %v865
        %v878 = vadd.f32 %v839, %v865
        %v879 = vadd.f32 %v840, %v865
        %v880 = vadd.f32 %v841, %v865
        %v881 = vadd.f32 %v842, %v865
        %v882 = vadd.f32 %v843, %v865
        %v883 = vadd.f32 %v844, %v865
        %v884 = vadd.f32 %v845, %v865
        %v885 = vadd.f32 %v846, %v865
        %v886 = vadd.f32 %v847, %v865
        %v887 = vadd.f32 %v848, %v865
        %v888 = vadd.f32 %v849, %v865
        %v889 = vadd.f32 %v850, %v865
        %v890 = vadd.f32 %v851, %v865
        %v891 = vadd.f32 %v852, %v865
        %v892 = vadd.f32 %v853, %v865
        %v893 = vadd.f32 %v854, %v865
        %v894 = vadd.f32 %v855, %v865
        %v895 = vadd.f32 %v856, %v865
        %v896 = vadd.f32 %v857, %v865
        %v897 = vadd.f32 %v858, %v865
        %v898 = vadd.f32 %v859, %v865
        %v899 = vmax.f32 %v867, 0.0
        %v900 = vmax.f32 %v868, 0.0
        %v901 = vmax.f32 %v869, 0.0
        %v902 = vmax.f32 %v870, 0.0
        %v903 = vmax.f32 %v871, 0.0
        %v904 = vmax.f32 %v872, 0.0
        %v905 = vmax.f32 %v873, 0.0
        %v906 = vmax.f32 %v874, 0.0
        %v907 = vmax.f32 %v875, 0.0
        %v908 = vmax.f32 %v876, 0.0
        %v909 = vmax.f32 %v877, 0.0
        %v910 = vmax.f32 %v878, 0.0
        %v911 = vmax.f32 %v879, 0.0
        %v912 = vmax.f32 %v880, 0.0
        %v913 = vmax.f32 %v881, 0.0
        %v914 = vmax.f32 %v882, 0.0
        %v915 = vmax.f32 %v883, 0.0
        %v916 = vmax.f32 %v884, 0.0
        %v917 = vmax.f32 %v885, 0.0
        %v918 = vmax.f32 %v886, 0.0
        %v919 = vmax.f32 %v887, 0.0
        %v920 = vmax.f32 %v888, 0.0
        %v921 = vmax.f32 %v889, 0.0
        %v922 = vmax.f32 %v890, 0.0
        %v923 = vmax.f32 %v891, 0.0
        %v924 = vmax.f32 %v892, 0.0
        %v925 = vmax.f32 %v893, 0.0
        %v926 = vmax.f32 %v894, 0.0
        %v927 = vmax.f32 %v895, 0.0
        %v928 = vmax.f32 %v896, 0.0
        %v929 = vmax.f32 %v897, 0.0
        %v930 = vmax.f32 %v898, 0.0
        %931 = vst [vmem:[%s298] sm:$0xff] %v899
        %932 = vst [vmem:[%s298 + $0x8] sm:$0xff] %v900
        %933 = vst [vmem:[%s298 + $0x10] sm:$0xff] %v901
        %934 = vst [vmem:[%s298 + $0x18] sm:$0xff] %v902
        %935 = vst [vmem:[%s298 + $0x20] sm:$0xff] %v903
        %936 = vst [vmem:[%s298 + $0x28] sm:$0xff] %v904
        %937 = vst [vmem:[%s298 + $0x30] sm:$0xff] %v905
        %938 = vst [vmem:[%s298 + $0x38] sm:$0xff] %v906
        %939 = vst [vmem:[%s298 + $0x40] sm:$0xff] %v907
        %940 = vst [vmem:[%s298 + $0x48] sm:$0xff] %v908
        %941 = vst [vmem:[%s298 + $0x50] sm:$0xff] %v909
        %942 = vst [vmem:[%s298 + $0x58] sm:$0xff] %v910
        %943 = vst [vmem:[%s298 + $0x60] sm:$0xff] %v911
        %944 = vst [vmem:[%s298 + $0x68] sm:$0xff] %v912
        %945 = vst [vmem:[%s298 + $0x70] sm:$0xff] %v913
        %946 = vst [vmem:[%s298 + $0x78] sm:$0xff] %v914
        %947 = vst [vmem:[%s298 + $0x80] sm:$0xff] %v915
        %948 = vst [vmem:[%s298 + $0x88] sm:$0xff] %v916
        %949 = vst [vmem:[%s298 + $0x90] sm:$0xff] %v917
        %950 = vst [vmem:[%s298 + $0x98] sm:$0xff] %v918
        %951 = vst [vmem:[%s298 + $0xa0] sm:$0xff] %v919
        %952 = vst [vmem:[%s298 + $0xa8] sm:$0xff] %v920
        %953 = vst [vmem:[%s298 + $0xb0] sm:$0xff] %v921
        %954 = vst [vmem:[%s298 + $0xb8] sm:$0xff] %v922
        %955 = vst [vmem:[%s298 + $0xc0] sm:$0xff] %v923
        %956 = vst [vmem:[%s298 + $0xc8] sm:$0xff] %v924
        %957 = vst [vmem:[%s298 + $0xd0] sm:$0xff] %v925
        %958 = vst [vmem:[%s298 + $0xd8] sm:$0xff] %v926
        %959 = vst [vmem:[%s298 + $0xe0] sm:$0xff] %v927
        %960 = vst [vmem:[%s298 + $0xe8] sm:$0xff] %v928
        %961 = vst [vmem:[%s298 + $0xf0] sm:$0xff] %v929
        %962 = vst [vmem:[%s298 + $0xf8] sm:$0xff] %v930
      $region44: #{modified_resnet_fwd.24} parent=35 // pred_fallthru
        _
      %s963 = smul.u32 32, %s20
      %p964 = scmp.lt.s32.totalorder %s963, 63
      %s965 = scalar_select %p964, %s963, 63
      %p966 = scmp.lt.s32.totalorder %s21, 0
      %s967 = scalar_select %p966, %s21, 0
      %s968 = sadd.s32 %s967, %s965
      %s969 = smul.addr %s968, 8
      %s970 = scalar_lea.vmem %s4, %s969
      // Predicated region
      $region45: #{modified_resnet_fwd.24} parent=35 // pred_check
        %p971 = pneg %p162
      $region46: #{modified_resnet_fwd.24} parent=35 // pred_check_branch
        %973 = sbr.rel (%p971) target = $region48
      $region47: #{modified_resnet_fwd.24} parent=35 // pred_region
        %s974 = smul.u32 32, %s20
      $region48: #{modified_resnet_fwd.24} parent=35 // pred_fallthru
        _
    $region36: #{modified_resnet_fwd.24} parent=5 // pred_fallthru
      _
    %p975 = scmp.le.s32.totalorder 2, %s10
    // Predicated region
    $region49: #{modified_resnet_fwd.24} parent=5 // pred_check
      %p976 = pneg %p975
    $region50: #{modified_resnet_fwd.24} parent=5 // pred_check_branch
      %978 = sbr.rel (%p976) target = $region52
    $region51: #{modified_resnet_fwd.24} parent=5 // pred_region
      %s979 = ssub.s32 %s10, 2
      // Predicated region
      $region53: #{modified_resnet_fwd.24} parent=51 // pred_check
        %p980 = pneg %p168
      $region54: #{modified_resnet_fwd.24} parent=51 // pred_check_branch
        %982 = sbr.rel (%p980) target = $region56
      $region55: #{modified_resnet_fwd.24} parent=51 // pred_region
        %s983 = smul.u32 32, %s23
        %p984 = scmp.lt.s32.totalorder %s983, 63
        %s985 = scalar_select %p984, %s983, 63
        %p986 = scmp.lt.s32.totalorder %s24, 0
        %s987 = scalar_select %p986, %s24, 0
        %s988 = sadd.s32 %s987, %s985
        %s989 = smul.addr %s988, 8
        %s990 = scalar_lea.vmem %s4, %s989
      $region56: #{modified_resnet_fwd.24} parent=51 // pred_fallthru
        _
    $region52: #{modified_resnet_fwd.24} parent=5 // pred_fallthru
      _
  $region6: #{modified_resnet_fwd.24} parent=0 // loop_footer
    %s14 = sadd.s32 1, %s10
  $region7: #{modified_resnet_fwd.24} parent=0 // loop_footer_branch
    %9 = sbr.rel target = $region3
  $region8: #{modified_resnet_fwd.24} parent=0 // loop_exit
    _

// kernel: modified_resnet_fwd.27
$region0: #{modified_resnet_fwd.27}
  #allocation0 [shape = 'u32[]', space=smem, size = 0x4, offset = 0x4, fixed_abs, tag = 'smem constant byte address 0x4 - core index']
  #allocation1 [shape = 'u32[144,128]{1,0:T(1,128)}', space=vmem, size = 0x12000, scoped, tag = 'internal scratch']
  #allocation2 [shape = 'f32[128,128]{1,0:T(8,128)}', space=vmem, size = 0x10000, scoped, tag = 'scratch operand']
  %s0 = inlined_call_operand.vmem [shape: bf16[128,128], index: 0, kind: input, shape index: {}]
  %s1 = inlined_call_operand.vmem [shape: bf16[128,128], index: 1, kind: input, shape index: {}]
  %s2 = inlined_call_operand.vmem [shape: f32[1,128], index: 2, kind: input, shape index: {}]
  %s3 = inlined_call_operand.vmem [shape: f32[1,128], index: 3, kind: input, shape index: {}]
  %s4 = inlined_call_operand.vmem [shape: f32[128,128], index: 4, kind: output, shape index: {}]
  %s5 = sld [smem:[#allocation0]]
  $region34: #{modified_resnet_fwd.27} parent=0
    _
  %s7 = ssub.s32 1, %s5
  %s8 = scalar_select 0, %s7, %s5
  // Predicated region
  $region2: #{modified_resnet_fwd.27} parent=0 // pred_check
    _
  $region3: #{modified_resnet_fwd.27} parent=0 // pred_check_branch
    %10 = sbr.rel (0) target = $region5
  $region4: #{modified_resnet_fwd.27} parent=0 // pred_region
    _
  $region5: #{modified_resnet_fwd.27} parent=0 // pred_fallthru
    _
  // Predicated region
  $region6: #{modified_resnet_fwd.27} parent=0 // pred_check
    _
  $region7: #{modified_resnet_fwd.27} parent=0 // pred_check_branch
    %12 = sbr.rel (0) target = $region9
  $region8: #{modified_resnet_fwd.27} parent=0 // pred_region
    _
  $region9: #{modified_resnet_fwd.27} parent=0 // pred_fallthru
    _
  // Predicated region
  $region10: #{modified_resnet_fwd.27} parent=0 // pred_check
    _
  $region11: #{modified_resnet_fwd.27} parent=0 // pred_check_branch
    %14 = sbr.rel (0) target = $region13
  $region12: #{modified_resnet_fwd.27} parent=0 // pred_region
    _
  $region13: #{modified_resnet_fwd.27} parent=0 // pred_fallthru
    _
  // Predicated region
  $region14: #{modified_resnet_fwd.27} parent=0 // pred_check
    _
  $region15: #{modified_resnet_fwd.27} parent=0 // pred_check_branch
    %16 = sbr.rel (0) target = $region17
  $region16: #{modified_resnet_fwd.27} parent=0 // pred_region
    _
  $region17: #{modified_resnet_fwd.27} parent=0 // pred_fallthru
    _
  %p18 = scmp.eq.s32.totalorder 0, 0
  // Predicated region
  $region18: #{modified_resnet_fwd.27} parent=0 // pred_check
    %p19 = pneg %p18
  $region19: #{modified_resnet_fwd.27} parent=0 // pred_check_branch
    %21 = sbr.rel (%p19) target = $region21
  $region20: #{modified_resnet_fwd.27} parent=0 // pred_region
    %22 = vst [vmem:[#allocation2] sm:$0xff] 0.0
    %23 = vst [vmem:[#allocation2 + $0x8] sm:$0xff] 0.0
    %24 = vst [vmem:[#allocation2 + $0x10] sm:$0xff] 0.0
    %25 = vst [vmem:[#allocation2 + $0x18] sm:$0xff] 0.0
    %26 = vst [vmem:[#allocation2 + $0x20] sm:$0xff] 0.0
    %27 = vst [vmem:[#allocation2 + $0x28] sm:$0xff] 0.0
    %28 = vst [vmem:[#allocation2 + $0x30] sm:$0xff] 0.0
    %29 = vst [vmem:[#allocation2 + $0x38] sm:$0xff] 0.0
    %30 = vst [vmem:[#allocation2 + $0x40] sm:$0xff] 0.0
    %31 = vst [vmem:[#allocation2 + $0x48] sm:$0xff] 0.0
    %32 = vst [vmem:[#allocation2 + $0x50] sm:$0xff] 0.0
    %33 = vst [vmem:[#allocation2 + $0x58] sm:$0xff] 0.0
    %34 = vst [vmem:[#allocation2 + $0x60] sm:$0xff] 0.0
    %35 = vst [vmem:[#allocation2 + $0x68] sm:$0xff] 0.0
    %36 = vst [vmem:[#allocation2 + $0x70] sm:$0xff] 0.0
    %37 = vst [vmem:[#allocation2 + $0x78] sm:$0xff] 0.0
  $region21: #{modified_resnet_fwd.27} parent=0 // pred_fallthru
    _
  %v38 = vld [vmem:[#allocation2] sm:$0xff]
  %v39 = vld [vmem:[#allocation2 + $0x8] sm:$0xff]
  %v40 = vld [vmem:[#allocation2 + $0x10] sm:$0xff]
  %v41 = vld [vmem:[#allocation2 + $0x18] sm:$0xff]
  %v42 = vld [vmem:[#allocation2 + $0x20] sm:$0xff]
  %v43 = vld [vmem:[#allocation2 + $0x28] sm:$0xff]
  %v44 = vld [vmem:[#allocation2 + $0x30] sm:$0xff]
  %v45 = vld [vmem:[#allocation2 + $0x38] sm:$0xff]
  %v46 = vld [vmem:[#allocation2 + $0x40] sm:$0xff]
  %v47 = vld [vmem:[#allocation2 + $0x48] sm:$0xff]
  %v48 = vld [vmem:[#allocation2 + $0x50] sm:$0xff]
  %v49 = vld [vmem:[#allocation2 + $0x58] sm:$0xff]
  %v50 = vld [vmem:[#allocation2 + $0x60] sm:$0xff]
  %v51 = vld [vmem:[#allocation2 + $0x68] sm:$0xff]
  %v52 = vld [vmem:[#allocation2 + $0x70] sm:$0xff]
  %v53 = vld [vmem:[#allocation2 + $0x78] sm:$0xff]
  %v54 = vld [vmem:[%s0] sm:$0xf]
  %v55 = vld [vmem:[%s0 + $0x4] sm:$0xf]
  %v56 = vld [vmem:[%s0 + $0x8] sm:$0xf]
  %v57 = vld [vmem:[%s0 + $0xc] sm:$0xf]
  %v58 = vld [vmem:[%s0 + $0x10] sm:$0xf]
  %v59 = vld [vmem:[%s0 + $0x14] sm:$0xf]
  %v60 = vld [vmem:[%s0 + $0x18] sm:$0xf]
  %v61 = vld [vmem:[%s0 + $0x1c] sm:$0xf]
  %v62 = vld [vmem:[%s0 + $0x20] sm:$0xf]
  %v63 = vld [vmem:[%s0 + $0x24] sm:$0xf]
  %v64 = vld [vmem:[%s0 + $0x28] sm:$0xf]
  %v65 = vld [vmem:[%s0 + $0x2c] sm:$0xf]
  %v66 = vld [vmem:[%s0 + $0x30] sm:$0xf]
  %v67 = vld [vmem:[%s0 + $0x34] sm:$0xf]
  %v68 = vld [vmem:[%s0 + $0x38] sm:$0xf]
  %v69 = vld [vmem:[%s0 + $0x3c] sm:$0xf]
  %v70 = vld [vmem:[%s1] sm:$0xf]
  %v71 = vld [vmem:[%s1 + $0x4] sm:$0xf]
  %v72 = vld [vmem:[%s1 + $0x8] sm:$0xf]
  %v73 = vld [vmem:[%s1 + $0xc] sm:$0xf]
  %v74 = vld [vmem:[%s1 + $0x10] sm:$0xf]
  %v75 = vld [vmem:[%s1 + $0x14] sm:$0xf]
  %v76 = vld [vmem:[%s1 + $0x18] sm:$0xf]
  %v77 = vld [vmem:[%s1 + $0x1c] sm:$0xf]
  %v78 = vld [vmem:[%s1 + $0x20] sm:$0xf]
  %v79 = vld [vmem:[%s1 + $0x24] sm:$0xf]
  %v80 = vld [vmem:[%s1 + $0x28] sm:$0xf]
  %v81 = vld [vmem:[%s1 + $0x2c] sm:$0xf]
  %v82 = vld [vmem:[%s1 + $0x30] sm:$0xf]
  %v83 = vld [vmem:[%s1 + $0x34] sm:$0xf]
  %v84 = vld [vmem:[%s1 + $0x38] sm:$0xf]
  %v85 = vld [vmem:[%s1 + $0x3c] sm:$0xf]
  %v102 = vunpack.c.l.b16 %v54
  %v103 = vunpack.c.l.b16 %v55
  %v104 = vunpack.c.l.b16 %v56
  %v105 = vunpack.c.l.b16 %v57
  %v106 = vunpack.c.l.b16 %v58
  %v107 = vunpack.c.l.b16 %v59
  %v108 = vunpack.c.l.b16 %v60
  %v109 = vunpack.c.l.b16 %v61
  %v110 = vunpack.c.l.b16 %v62
  %v111 = vunpack.c.l.b16 %v63
  %v112 = vunpack.c.l.b16 %v64
  %v113 = vunpack.c.l.b16 %v65
  %v114 = vunpack.c.l.b16 %v66
  %v115 = vunpack.c.l.b16 %v67
  %v116 = vunpack.c.l.b16 %v68
  %v117 = vunpack.c.l.b16 %v69
  %v118 = vpack.c.b16 %v103, %v102
  %v119 = vpack.c.b16 %v105, %v104
  %v120 = vpack.c.b16 %v107, %v106
  %v121 = vpack.c.b16 %v109, %v108
  %v122 = vpack.c.b16 %v111, %v110
  %v123 = vpack.c.b16 %v113, %v112
  %v124 = vpack.c.b16 %v115, %v114
  %v125 = vpack.c.b16 %v117, %v116
  %v150 = vunpack.c.l.b16 %v70
  %v151 = vunpack.c.l.b16 %v71
  %v152 = vunpack.c.l.b16 %v72
  %v153 = vunpack.c.l.b16 %v73
  %v154 = vunpack.c.l.b16 %v74
  %v155 = vunpack.c.l.b16 %v75
  %v156 = vunpack.c.l.b16 %v76
  %v157 = vunpack.c.l.b16 %v77
  %v158 = vunpack.c.l.b16 %v78
  %v159 = vunpack.c.l.b16 %v79
  %v160 = vunpack.c.l.b16 %v80
  %v161 = vunpack.c.l.b16 %v81
  %v162 = vunpack.c.l.b16 %v82
  %v163 = vunpack.c.l.b16 %v83
  %v164 = vunpack.c.l.b16 %v84
  %v165 = vunpack.c.l.b16 %v85
  %v166 = vpack.c.b16 %v151, %v150
  %v167 = vpack.c.b16 %v153, %v152
  %v168 = vpack.c.b16 %v155, %v154
  %v169 = vpack.c.b16 %v157, %v156
  %v170 = vpack.c.b16 %v159, %v158
  %v171 = vpack.c.b16 %v161, %v160
  %v172 = vpack.c.b16 %v163, %v162
  %v173 = vpack.c.b16 %v165, %v164
  %182 = vmatprep.subr.bf16.mxu0 0
  %183 = vmatpush1.bf16.msra.mxu0 %v166
  %184 = vmatprep.subr.bf16.mxu0 0
  %185 = vmatpush1.bf16.msra.mxu0 %v167
  %186 = vmatprep.subr.bf16.mxu0 0
  %187 = vmatpush1.bf16.msra.mxu0 %v168
  %188 = vmatprep.subr.bf16.mxu0 0
  %189 = vmatpush1.bf16.msra.mxu0 %v169
  %190 = vmatprep.subr.bf16.mxu0 0
  %191 = vmatpush1.bf16.msra.mxu0 %v170
  %192 = vmatprep.subr.bf16.mxu0 0
  %193 = vmatpush1.bf16.msra.mxu0 %v171
  %194 = vmatprep.subr.bf16.mxu0 0
  %195 = vmatpush1.bf16.msra.mxu0 %v172
  %196 = vmatprep.subr.bf16.mxu0 0
  %197 = vmatpush1.bf16.msra.mxu0 %v173
  %198 = vmatprep.subr.bf16.mxu0 0
  %199 = vmatpush1.bf16.msra.mxu0 0
  %200 = vmatprep.subr.bf16.mxu0 0
  %201 = vmatpush1.bf16.msra.mxu0 0
  %202 = vmatprep.subr.bf16.mxu0 0
  %203 = vmatpush1.bf16.msra.mxu0 0
  %204 = vmatprep.subr.bf16.mxu0 0
  %205 = vmatpush1.bf16.msra.mxu0 0
  %206 = vmatprep.subr.bf16.mxu0 0
  %207 = vmatpush1.bf16.msra.mxu0 0
  %208 = vmatprep.subr.bf16.mxu0 0
  %209 = vmatpush1.bf16.msra.mxu0 0
  %210 = vmatprep.subr.bf16.mxu0 0
  %211 = vmatpush1.bf16.msra.mxu0 0
  %212 = vmatprep.subr.bf16.mxu0 0
  %213 = vmatpush1.bf16.msra.mxu0 0
  %214 = vmatprep.mubr.bf16.mxu0 0
  %215 = vmatmul.mubr.bf16.gmra.mrb[0].mxu0 %v118
  %v216 = vpop.f32.mrb[0].mxu0
  %v217 = vadd.f32 0.0, %v216
  %v218 = vpop.f32.mrb[0].mxu0
  %v219 = vpop.f32.mrb[0].mxu0
  %v220 = vadd.f32 0.0, %v219
  %v221 = vpop.f32.mrb[0].mxu0
  %222 = vmatprep.mubr.bf16.mxu0 0
  %223 = vmatmul.mubr.bf16.gmra.mrb[0].mxu0 %v119
  %v224 = vpop.f32.mrb[0].mxu0
  %v225 = vadd.f32 0.0, %v224
  %v226 = vpop.f32.mrb[0].mxu0
  %v227 = vpop.f32.mrb[0].mxu0
  %v228 = vadd.f32 0.0, %v227
  %v229 = vpop.f32.mrb[0].mxu0
  %230 = vmatprep.mubr.bf16.mxu0 0
  %231 = vmatmul.mubr.bf16.gmra.mrb[0].mxu0 %v120
  %v232 = vpop.f32.mrb[0].mxu0
  %v233 = vadd.f32 0.0, %v232
  %v234 = vpop.f32.mrb[0].mxu0
  %v235 = vpop.f32.mrb[0].mxu0
  %v236 = vadd.f32 0.0, %v235
  %v237 = vpop.f32.mrb[0].mxu0
  %238 = vmatprep.mubr.bf16.mxu0 0
  %239 = vmatmul.mubr.bf16.gmra.mrb[0].mxu0 %v121
  %v240 = vpop.f32.mrb[0].mxu0
  %v241 = vadd.f32 0.0, %v240
  %v242 = vpop.f32.mrb[0].mxu0
  %v243 = vpop.f32.mrb[0].mxu0
  %v244 = vadd.f32 0.0, %v243
  %v245 = vpop.f32.mrb[0].mxu0
  %246 = vmatprep.mubr.bf16.mxu0 0
  %247 = vmatmul.mubr.bf16.gmra.mrb[0].mxu0 %v122
  %v248 = vpop.f32.mrb[0].mxu0
  %v249 = vadd.f32 0.0, %v248
  %v250 = vpop.f32.mrb[0].mxu0
  %v251 = vpop.f32.mrb[0].mxu0
  %v252 = vadd.f32 0.0, %v251
  %v253 = vpop.f32.mrb[0].mxu0
  %254 = vmatprep.mubr.bf16.mxu0 0
  %255 = vmatmul.mubr.bf16.gmra.mrb[0].mxu0 %v123
  %v256 = vpop.f32.mrb[0].mxu0
  %v257 = vadd.f32 0.0, %v256
  %v258 = vpop.f32.mrb[0].mxu0
  %v259 = vpop.f32.mrb[0].mxu0
  %v260 = vadd.f32 0.0, %v259
  %v261 = vpop.f32.mrb[0].mxu0
  %262 = vmatprep.mubr.bf16.mxu0 0
  %263 = vmatmul.mubr.bf16.gmra.mrb[0].mxu0 %v124
  %v264 = vpop.f32.mrb[0].mxu0
  %v265 = vadd.f32 0.0, %v264
  %v266 = vpop.f32.mrb[0].mxu0
  %v267 = vpop.f32.mrb[0].mxu0
  %v268 = vadd.f32 0.0, %v267
  %v269 = vpop.f32.mrb[0].mxu0
  %270 = vmatprep.mubr.bf16.mxu0 0
  %271 = vmatmul.mubr.bf16.gmra.mrb[0].mxu0 %v125
  %v272 = vpop.f32.mrb[0].mxu0
  %v273 = vadd.f32 0.0, %v272
  %v274 = vpop.f32.mrb[0].mxu0
  %v275 = vpop.f32.mrb[0].mxu0
  %v276 = vadd.f32 0.0, %v275
  %v277 = vpop.f32.mrb[0].mxu0
  %278 = vdwg.mxu0
  %v279 = vadd.f32 %v38, %v217
  %v280 = vadd.f32 %v39, %v220
  %v281 = vadd.f32 %v40, %v225
  %v282 = vadd.f32 %v41, %v228
  %v283 = vadd.f32 %v42, %v233
  %v284 = vadd.f32 %v43, %v236
  %v285 = vadd.f32 %v44, %v241
  %v286 = vadd.f32 %v45, %v244
  %v287 = vadd.f32 %v46, %v249
  %v288 = vadd.f32 %v47, %v252
  %v289 = vadd.f32 %v48, %v257
  %v290 = vadd.f32 %v49, %v260
  %v291 = vadd.f32 %v50, %v265
  %v292 = vadd.f32 %v51, %v268
  %v293 = vadd.f32 %v52, %v273
  %v294 = vadd.f32 %v53, %v276
  %295 = vst [vmem:[#allocation2] sm:$0xff] %v279
  %296 = vst [vmem:[#allocation2 + $0x8] sm:$0xff] %v280
  %297 = vst [vmem:[#allocation2 + $0x10] sm:$0xff] %v281
  %298 = vst [vmem:[#allocation2 + $0x18] sm:$0xff] %v282
  %299 = vst [vmem:[#allocation2 + $0x20] sm:$0xff] %v283
  %300 = vst [vmem:[#allocation2 + $0x28] sm:$0xff] %v284
  %301 = vst [vmem:[#allocation2 + $0x30] sm:$0xff] %v285
  %302 = vst [vmem:[#allocation2 + $0x38] sm:$0xff] %v286
  %303 = vst [vmem:[#allocation2 + $0x40] sm:$0xff] %v287
  %304 = vst [vmem:[#allocation2 + $0x48] sm:$0xff] %v288
  %305 = vst [vmem:[#allocation2 + $0x50] sm:$0xff] %v289
  %306 = vst [vmem:[#allocation2 + $0x58] sm:$0xff] %v290
  %307 = vst [vmem:[#allocation2 + $0x60] sm:$0xff] %v291
  %308 = vst [vmem:[#allocation2 + $0x68] sm:$0xff] %v292
  %309 = vst [vmem:[#allocation2 + $0x70] sm:$0xff] %v293
  %310 = vst [vmem:[#allocation2 + $0x78] sm:$0xff] %v294
  // Predicated region
  $region22: #{modified_resnet_fwd.27} parent=0 // pred_check
    %p311 = pneg %p18
  $region23: #{modified_resnet_fwd.27} parent=0 // pred_check_branch
    %313 = sbr.rel (%p311) target = $region25
  $region24: #{modified_resnet_fwd.27} parent=0 // pred_region
    %v314 = vld [vmem:[#allocation2] sm:$0xff]
    %v315 = vld [vmem:[#allocation2 + $0x8] sm:$0xff]
    %v316 = vld [vmem:[#allocation2 + $0x10] sm:$0xff]
    %v317 = vld [vmem:[#allocation2 + $0x18] sm:$0xff]
    %v318 = vld [vmem:[#allocation2 + $0x20] sm:$0xff]
    %v319 = vld [vmem:[#allocation2 + $0x28] sm:$0xff]
    %v320 = vld [vmem:[#allocation2 + $0x30] sm:$0xff]
    %v321 = vld [vmem:[#allocation2 + $0x38] sm:$0xff]
    %v322 = vld [vmem:[#allocation2 + $0x40] sm:$0xff]
    %v323 = vld [vmem:[#allocation2 + $0x48] sm:$0xff]
    %v324 = vld [vmem:[#allocation2 + $0x50] sm:$0xff]
    %v325 = vld [vmem:[#allocation2 + $0x58] sm:$0xff]
    %v326 = vld [vmem:[#allocation2 + $0x60] sm:$0xff]
    %v327 = vld [vmem:[#allocation2 + $0x68] sm:$0xff]
    %v328 = vld [vmem:[#allocation2 + $0x70] sm:$0xff]
    %v329 = vld [vmem:[#allocation2 + $0x78] sm:$0xff]
    %v330 = vld [vmem:[%s2] sm:$0x1]
    %v332 = vlaneseq
    %v333 = vshrl.u32 %v332, 7
    %v334 = vsub.s32 0, %v333
    %v335 = vrot.slane %v330, %v334
    %v337 = vmul.f32 %v314, %v335
    %v338 = vmul.f32 %v315, %v335
    %v339 = vmul.f32 %v316, %v335
    %v340 = vmul.f32 %v317, %v335
    %v341 = vmul.f32 %v318, %v335
    %v342 = vmul.f32 %v319, %v335
    %v343 = vmul.f32 %v320, %v335
    %v344 = vmul.f32 %v321, %v335
    %v345 = vmul.f32 %v322, %v335
    %v346 = vmul.f32 %v323, %v335
    %v347 = vmul.f32 %v324, %v335
    %v348 = vmul.f32 %v325, %v335
    %v349 = vmul.f32 %v326, %v335
    %v350 = vmul.f32 %v327, %v335
    %v351 = vmul.f32 %v328, %v335
    %v352 = vmul.f32 %v329, %v335
    %v353 = vld [vmem:[%s3] sm:$0x1]
    %v355 = vlaneseq
    %v356 = vshrl.u32 %v355, 7
    %v357 = vsub.s32 0, %v356
    %v358 = vrot.slane %v353, %v357
    %v360 = vadd.f32 %v337, %v358
    %v361 = vadd.f32 %v338, %v358
    %v362 = vadd.f32 %v339, %v358
    %v363 = vadd.f32 %v340, %v358
    %v364 = vadd.f32 %v341, %v358
    %v365 = vadd.f32 %v342, %v358
    %v366 = vadd.f32 %v343, %v358
    %v367 = vadd.f32 %v344, %v358
    %v368 = vadd.f32 %v345, %v358
    %v369 = vadd.f32 %v346, %v358
    %v370 = vadd.f32 %v347, %v358
    %v371 = vadd.f32 %v348, %v358
    %v372 = vadd.f32 %v349, %v358
    %v373 = vadd.f32 %v350, %v358
    %v374 = vadd.f32 %v351, %v358
    %v375 = vadd.f32 %v352, %v358
    %v376 = vmax.f32 %v360, 0.0
    %v377 = vmax.f32 %v361, 0.0
    %v378 = vmax.f32 %v362, 0.0
    %v379 = vmax.f32 %v363, 0.0
    %v380 = vmax.f32 %v364, 0.0
    %v381 = vmax.f32 %v365, 0.0
    %v382 = vmax.f32 %v366, 0.0
    %v383 = vmax.f32 %v367, 0.0
    %v384 = vmax.f32 %v368, 0.0
    %v385 = vmax.f32 %v369, 0.0
    %v386 = vmax.f32 %v370, 0.0
    %v387 = vmax.f32 %v371, 0.0
    %v388 = vmax.f32 %v372, 0.0
    %v389 = vmax.f32 %v373, 0.0
    %v390 = vmax.f32 %v374, 0.0
    %v391 = vmax.f32 %v375, 0.0
    %392 = vst [vmem:[%s4] sm:$0xff] %v376
    %393 = vst [vmem:[%s4 + $0x8] sm:$0xff] %v377
    %394 = vst [vmem:[%s4 + $0x10] sm:$0xff] %v378
    %395 = vst [vmem:[%s4 + $0x18] sm:$0xff] %v379
    %396 = vst [vmem:[%s4 + $0x20] sm:$0xff] %v380
    %397 = vst [vmem:[%s4 + $0x28] sm:$0xff] %v381
    %398 = vst [vmem:[%s4 + $0x30] sm:$0xff] %v382
    %399 = vst [vmem:[%s4 + $0x38] sm:$0xff] %v383
    %400 = vst [vmem:[%s4 + $0x40] sm:$0xff] %v384
    %401 = vst [vmem:[%s4 + $0x48] sm:$0xff] %v385
    %402 = vst [vmem:[%s4 + $0x50] sm:$0xff] %v386
    %403 = vst [vmem:[%s4 + $0x58] sm:$0xff] %v387
    %404 = vst [vmem:[%s4 + $0x60] sm:$0xff] %v388
    %405 = vst [vmem:[%s4 + $0x68] sm:$0xff] %v389
    %406 = vst [vmem:[%s4 + $0x70] sm:$0xff] %v390
    %407 = vst [vmem:[%s4 + $0x78] sm:$0xff] %v391
  $region25: #{modified_resnet_fwd.27} parent=0 // pred_fallthru
    _
  // Predicated region
  $region26: #{modified_resnet_fwd.27} parent=0 // pred_check
    _
  $region27: #{modified_resnet_fwd.27} parent=0 // pred_check_branch
    %409 = sbr.rel (0) target = $region29
  $region28: #{modified_resnet_fwd.27} parent=0 // pred_region
    _
  $region29: #{modified_resnet_fwd.27} parent=0 // pred_fallthru
    _
  // Predicated region
  $region30: #{modified_resnet_fwd.27} parent=0 // pred_check
    _
  $region31: #{modified_resnet_fwd.27} parent=0 // pred_check_branch
    %411 = sbr.rel (0) target = $region33
  $region32: #{modified_resnet_fwd.27} parent=0 // pred_region
    _
  $region33: #{modified_resnet_fwd.27} parent=0 // pred_fallthru
    _

// kernel: modified_resnet_fwd.29
$region0: #{modified_resnet_fwd.29}
  #allocation0 [shape = 'u32[]', space=smem, size = 0x4, offset = 0x4, fixed_abs, tag = 'smem constant byte address 0x4 - core index']
  #allocation1 [shape = 'u32[144,128]{1,0:T(1,128)}', space=vmem, size = 0x12000, scoped, tag = 'internal scratch']
  #allocation2 [shape = 'f32[128,128]{1,0:T(8,128)}', space=vmem, size = 0x10000, scoped, tag = 'scratch operand']
  %s0 = inlined_call_operand.vmem [shape: bf16[128,128], index: 0, kind: input, shape index: {}]
  %s1 = inlined_call_operand.vmem [shape: bf16[128,128], index: 1, kind: input, shape index: {}]
  %s2 = inlined_call_operand.vmem [shape: f32[1,128], index: 2, kind: input, shape index: {}]
  %s3 = inlined_call_operand.vmem [shape: f32[1,128], index: 3, kind: input, shape index: {}]
  %s4 = inlined_call_operand.vmem [shape: f32[128,128], index: 4, kind: output, shape index: {}]
  %s5 = sld [smem:[#allocation0]]
  $region34: #{modified_resnet_fwd.29} parent=0
    _
  %s7 = ssub.s32 1, %s5
  %s8 = scalar_select 0, %s7, %s5
  // Predicated region
  $region2: #{modified_resnet_fwd.29} parent=0 // pred_check
    _
  $region3: #{modified_resnet_fwd.29} parent=0 // pred_check_branch
    %10 = sbr.rel (0) target = $region5
  $region4: #{modified_resnet_fwd.29} parent=0 // pred_region
    _
  $region5: #{modified_resnet_fwd.29} parent=0 // pred_fallthru
    _
  // Predicated region
  $region6: #{modified_resnet_fwd.29} parent=0 // pred_check
    _
  $region7: #{modified_resnet_fwd.29} parent=0 // pred_check_branch
    %12 = sbr.rel (0) target = $region9
  $region8: #{modified_resnet_fwd.29} parent=0 // pred_region
    _
  $region9: #{modified_resnet_fwd.29} parent=0 // pred_fallthru
    _
  // Predicated region
  $region10: #{modified_resnet_fwd.29} parent=0 // pred_check
    _
  $region11: #{modified_resnet_fwd.29} parent=0 // pred_check_branch
    %14 = sbr.rel (0) target = $region13
  $region12: #{modified_resnet_fwd.29} parent=0 // pred_region
    _
  $region13: #{modified_resnet_fwd.29} parent=0 // pred_fallthru
    _
  // Predicated region
  $region14: #{modified_resnet_fwd.29} parent=0 // pred_check
    _
  $region15: #{modified_resnet_fwd.29} parent=0 // pred_check_branch
    %16 = sbr.rel (0) target = $region17
  $region16: #{modified_resnet_fwd.29} parent=0 // pred_region
    _
  $region17: #{modified_resnet_fwd.29} parent=0 // pred_fallthru
    _
  %p18 = scmp.eq.s32.totalorder 0, 0
  // Predicated region
  $region18: #{modified_resnet_fwd.29} parent=0 // pred_check
    %p19 = pneg %p18
  $region19: #{modified_resnet_fwd.29} parent=0 // pred_check_branch
    %21 = sbr.rel (%p19) target = $region21
  $region20: #{modified_resnet_fwd.29} parent=0 // pred_region
    %22 = vst [vmem:[#allocation2] sm:$0xff] 0.0
    %23 = vst [vmem:[#allocation2 + $0x8] sm:$0xff] 0.0
    %24 = vst [vmem:[#allocation2 + $0x10] sm:$0xff] 0.0
    %25 = vst [vmem:[#allocation2 + $0x18] sm:$0xff] 0.0
    %26 = vst [vmem:[#allocation2 + $0x20] sm:$0xff] 0.0
    %27 = vst [vmem:[#allocation2 + $0x28] sm:$0xff] 0.0
    %28 = vst [vmem:[#allocation2 + $0x30] sm:$0xff] 0.0
    %29 = vst [vmem:[#allocation2 + $0x38] sm:$0xff] 0.0
    %30 = vst [vmem:[#allocation2 + $0x40] sm:$0xff] 0.0
    %31 = vst [vmem:[#allocation2 + $0x48] sm:$0xff] 0.0
    %32 = vst [vmem:[#allocation2 + $0x50] sm:$0xff] 0.0
    %33 = vst [vmem:[#allocation2 + $0x58] sm:$0xff] 0.0
    %34 = vst [vmem:[#allocation2 + $0x60] sm:$0xff] 0.0
    %35 = vst [vmem:[#allocation2 + $0x68] sm:$0xff] 0.0
    %36 = vst [vmem:[#allocation2 + $0x70] sm:$0xff] 0.0
    %37 = vst [vmem:[#allocation2 + $0x78] sm:$0xff] 0.0
  $region21: #{modified_resnet_fwd.29} parent=0 // pred_fallthru
    _
  %v38 = vld [vmem:[#allocation2] sm:$0xff]
  %v39 = vld [vmem:[#allocation2 + $0x8] sm:$0xff]
  %v40 = vld [vmem:[#allocation2 + $0x10] sm:$0xff]
  %v41 = vld [vmem:[#allocation2 + $0x18] sm:$0xff]
  %v42 = vld [vmem:[#allocation2 + $0x20] sm:$0xff]
  %v43 = vld [vmem:[#allocation2 + $0x28] sm:$0xff]
  %v44 = vld [vmem:[#allocation2 + $0x30] sm:$0xff]
  %v45 = vld [vmem:[#allocation2 + $0x38] sm:$0xff]
  %v46 = vld [vmem:[#allocation2 + $0x40] sm:$0xff]
  %v47 = vld [vmem:[#allocation2 + $0x48] sm:$0xff]
  %v48 = vld [vmem:[#allocation2 + $0x50] sm:$0xff]
  %v49 = vld [vmem:[#allocation2 + $0x58] sm:$0xff]
  %v50 = vld [vmem:[#allocation2 + $0x60] sm:$0xff]
  %v51 = vld [vmem:[#allocation2 + $0x68] sm:$0xff]
  %v52 = vld [vmem:[#allocation2 + $0x70] sm:$0xff]
  %v53 = vld [vmem:[#allocation2 + $0x78] sm:$0xff]
  %v54 = vld [vmem:[%s0] sm:$0xf]
  %v55 = vld [vmem:[%s0 + $0x4] sm:$0xf]
  %v56 = vld [vmem:[%s0 + $0x8] sm:$0xf]
  %v57 = vld [vmem:[%s0 + $0xc] sm:$0xf]
  %v58 = vld [vmem:[%s0 + $0x10] sm:$0xf]
  %v59 = vld [vmem:[%s0 + $0x14] sm:$0xf]
  %v60 = vld [vmem:[%s0 + $0x18] sm:$0xf]
  %v61 = vld [vmem:[%s0 + $0x1c] sm:$0xf]
  %v62 = vld [vmem:[%s0 + $0x20] sm:$0xf]
  %v63 = vld [vmem:[%s0 + $0x24] sm:$0xf]
  %v64 = vld [vmem:[%s0 + $0x28] sm:$0xf]
  %v65 = vld [vmem:[%s0 + $0x2c] sm:$0xf]
  %v66 = vld [vmem:[%s0 + $0x30] sm:$0xf]
  %v67 = vld [vmem:[%s0 + $0x34] sm:$0xf]
  %v68 = vld [vmem:[%s0 + $0x38] sm:$0xf]
  %v69 = vld [vmem:[%s0 + $0x3c] sm:$0xf]
  %v70 = vld [vmem:[%s1] sm:$0xf]
  %v71 = vld [vmem:[%s1 + $0x4] sm:$0xf]
  %v72 = vld [vmem:[%s1 + $0x8] sm:$0xf]
  %v73 = vld [vmem:[%s1 + $0xc] sm:$0xf]
  %v74 = vld [vmem:[%s1 + $0x10] sm:$0xf]
  %v75 = vld [vmem:[%s1 + $0x14] sm:$0xf]
  %v76 = vld [vmem:[%s1 + $0x18] sm:$0xf]
  %v77 = vld [vmem:[%s1 + $0x1c] sm:$0xf]
  %v78 = vld [vmem:[%s1 + $0x20] sm:$0xf]
  %v79 = vld [vmem:[%s1 + $0x24] sm:$0xf]
  %v80 = vld [vmem:[%s1 + $0x28] sm:$0xf]
  %v81 = vld [vmem:[%s1 + $0x2c] sm:$0xf]
  %v82 = vld [vmem:[%s1 + $0x30] sm:$0xf]
  %v83 = vld [vmem:[%s1 + $0x34] sm:$0xf]
  %v84 = vld [vmem:[%s1 + $0x38] sm:$0xf]
  %v85 = vld [vmem:[%s1 + $0x3c] sm:$0xf]
  %v102 = vunpack.c.l.b16 %v54
  %v103 = vunpack.c.l.b16 %v55
  %v104 = vunpack.c.l.b16 %v56
  %v105 = vunpack.c.l.b16 %v57
  %v106 = vunpack.c.l.b16 %v58
  %v107 = vunpack.c.l.b16 %v59
  %v108 = vunpack.c.l.b16 %v60
  %v109 = vunpack.c.l.b16 %v61
  %v110 = vunpack.c.l.b16 %v62
  %v111 = vunpack.c.l.b16 %v63
  %v112 = vunpack.c.l.b16 %v64
  %v113 = vunpack.c.l.b16 %v65
  %v114 = vunpack.c.l.b16 %v66
  %v115 = vunpack.c.l.b16 %v67
  %v116 = vunpack.c.l.b16 %v68
  %v117 = vunpack.c.l.b16 %v69
  %v118 = vpack.c.b16 %v103, %v102
  %v119 = vpack.c.b16 %v105, %v104
  %v120 = vpack.c.b16 %v107, %v106
  %v121 = vpack.c.b16 %v109, %v108
  %v122 = vpack.c.b16 %v111, %v110
  %v123 = vpack.c.b16 %v113, %v112
  %v124 = vpack.c.b16 %v115, %v114
  %v125 = vpack.c.b16 %v117, %v116
  %v150 = vunpack.c.l.b16 %v70
  %v151 = vunpack.c.l.b16 %v71
  %v152 = vunpack.c.l.b16 %v72
  %v153 = vunpack.c.l.b16 %v73
  %v154 = vunpack.c.l.b16 %v74
  %v155 = vunpack.c.l.b16 %v75
  %v156 = vunpack.c.l.b16 %v76
  %v157 = vunpack.c.l.b16 %v77
  %v158 = vunpack.c.l.b16 %v78
  %v159 = vunpack.c.l.b16 %v79
  %v160 = vunpack.c.l.b16 %v80
  %v161 = vunpack.c.l.b16 %v81
  %v162 = vunpack.c.l.b16 %v82
  %v163 = vunpack.c.l.b16 %v83
  %v164 = vunpack.c.l.b16 %v84
  %v165 = vunpack.c.l.b16 %v85
  %v166 = vpack.c.b16 %v151, %v150
  %v167 = vpack.c.b16 %v153, %v152
  %v168 = vpack.c.b16 %v155, %v154
  %v169 = vpack.c.b16 %v157, %v156
  %v170 = vpack.c.b16 %v159, %v158
  %v171 = vpack.c.b16 %v161, %v160
  %v172 = vpack.c.b16 %v163, %v162
  %v173 = vpack.c.b16 %v165, %v164
  %182 = vmatprep.subr.bf16.mxu0 0
  %183 = vmatpush1.bf16.msra.mxu0 %v166
  %184 = vmatprep.subr.bf16.mxu0 0
  %185 = vmatpush1.bf16.msra.mxu0 %v167
  %186 = vmatprep.subr.bf16.mxu0 0
  %187 = vmatpush1.bf16.msra.mxu0 %v168
  %188 = vmatprep.subr.bf16.mxu0 0
  %189 = vmatpush1.bf16.msra.mxu0 %v169
  %190 = vmatprep.subr.bf16.mxu0 0
  %191 = vmatpush1.bf16.msra.mxu0 %v170
  %192 = vmatprep.subr.bf16.mxu0 0
  %193 = vmatpush1.bf16.msra.mxu0 %v171
  %194 = vmatprep.subr.bf16.mxu0 0
  %195 = vmatpush1.bf16.msra.mxu0 %v172
  %196 = vmatprep.subr.bf16.mxu0 0
  %197 = vmatpush1.bf16.msra.mxu0 %v173
  %198 = vmatprep.subr.bf16.mxu0 0
  %199 = vmatpush1.bf16.msra.mxu0 0
  %200 = vmatprep.subr.bf16.mxu0 0
  %201 = vmatpush1.bf16.msra.mxu0 0
  %202 = vmatprep.subr.bf16.mxu0 0
  %203 = vmatpush1.bf16.msra.mxu0 0
  %204 = vmatprep.subr.bf16.mxu0 0
  %205 = vmatpush1.bf16.msra.mxu0 0
  %206 = vmatprep.subr.bf16.mxu0 0
  %207 = vmatpush1.bf16.msra.mxu0 0
  %208 = vmatprep.subr.bf16.mxu0 0
  %209 = vmatpush1.bf16.msra.mxu0 0
  %210 = vmatprep.subr.bf16.mxu0 0
  %211 = vmatpush1.bf16.msra.mxu0 0
  %212 = vmatprep.subr.bf16.mxu0 0
  %213 = vmatpush1.bf16.msra.mxu0 0
  %214 = vmatprep.mubr.bf16.mxu0 0
  %215 = vmatmul.mubr.bf16.gmra.mrb[0].mxu0 %v118
  %v216 = vpop.f32.mrb[0].mxu0
  %v217 = vadd.f32 0.0, %v216
  %v218 = vpop.f32.mrb[0].mxu0
  %v219 = vpop.f32.mrb[0].mxu0
  %v220 = vadd.f32 0.0, %v219
  %v221 = vpop.f32.mrb[0].mxu0
  %222 = vmatprep.mubr.bf16.mxu0 0
  %223 = vmatmul.mubr.bf16.gmra.mrb[0].mxu0 %v119
  %v224 = vpop.f32.mrb[0].mxu0
  %v225 = vadd.f32 0.0, %v224
  %v226 = vpop.f32.mrb[0].mxu0
  %v227 = vpop.f32.mrb[0].mxu0
  %v228 = vadd.f32 0.0, %v227
  %v229 = vpop.f32.mrb[0].mxu0
  %230 = vmatprep.mubr.bf16.mxu0 0
  %231 = vmatmul.mubr.bf16.gmra.mrb[0].mxu0 %v120
  %v232 = vpop.f32.mrb[0].mxu0
  %v233 = vadd.f32 0.0, %v232
  %v234 = vpop.f32.mrb[0].mxu0
  %v235 = vpop.f32.mrb[0].mxu0
  %v236 = vadd.f32 0.0, %v235
  %v237 = vpop.f32.mrb[0].mxu0
  %238 = vmatprep.mubr.bf16.mxu0 0
  %239 = vmatmul.mubr.bf16.gmra.mrb[0].mxu0 %v121
  %v240 = vpop.f32.mrb[0].mxu0
  %v241 = vadd.f32 0.0, %v240
  %v242 = vpop.f32.mrb[0].mxu0
  %v243 = vpop.f32.mrb[0].mxu0
  %v244 = vadd.f32 0.0, %v243
  %v245 = vpop.f32.mrb[0].mxu0
  %246 = vmatprep.mubr.bf16.mxu0 0
  %247 = vmatmul.mubr.bf16.gmra.mrb[0].mxu0 %v122
  %v248 = vpop.f32.mrb[0].mxu0
  %v249 = vadd.f32 0.0, %v248
  %v250 = vpop.f32.mrb[0].mxu0
  %v251 = vpop.f32.mrb[0].mxu0
  %v252 = vadd.f32 0.0, %v251
  %v253 = vpop.f32.mrb[0].mxu0
  %254 = vmatprep.mubr.bf16.mxu0 0
  %255 = vmatmul.mubr.bf16.gmra.mrb[0].mxu0 %v123
  %v256 = vpop.f32.mrb[0].mxu0
  %v257 = vadd.f32 0.0, %v256
  %v258 = vpop.f32.mrb[0].mxu0
  %v259 = vpop.f32.mrb[0].mxu0
  %v260 = vadd.f32 0.0, %v259
  %v261 = vpop.f32.mrb[0].mxu0
  %262 = vmatprep.mubr.bf16.mxu0 0
  %263 = vmatmul.mubr.bf16.gmra.mrb[0].mxu0 %v124
  %v264 = vpop.f32.mrb[0].mxu0
  %v265 = vadd.f32 0.0, %v264
  %v266 = vpop.f32.mrb[0].mxu0
  %v267 = vpop.f32.mrb[0].mxu0
  %v268 = vadd.f32 0.0, %v267
  %v269 = vpop.f32.mrb[0].mxu0
  %270 = vmatprep.mubr.bf16.mxu0 0
  %271 = vmatmul.mubr.bf16.gmra.mrb[0].mxu0 %v125
  %v272 = vpop.f32.mrb[0].mxu0
  %v273 = vadd.f32 0.0, %v272
  %v274 = vpop.f32.mrb[0].mxu0
  %v275 = vpop.f32.mrb[0].mxu0
  %v276 = vadd.f32 0.0, %v275
  %v277 = vpop.f32.mrb[0].mxu0
  %278 = vdwg.mxu0
  %v279 = vadd.f32 %v38, %v217
  %v280 = vadd.f32 %v39, %v220
  %v281 = vadd.f32 %v40, %v225
  %v282 = vadd.f32 %v41, %v228
  %v283 = vadd.f32 %v42, %v233
  %v284 = vadd.f32 %v43, %v236
  %v285 = vadd.f32 %v44, %v241
  %v286 = vadd.f32 %v45, %v244
  %v287 = vadd.f32 %v46, %v249
  %v288 = vadd.f32 %v47, %v252
  %v289 = vadd.f32 %v48, %v257
  %v290 = vadd.f32 %v49, %v260
  %v291 = vadd.f32 %v50, %v265
  %v292 = vadd.f32 %v51, %v268
  %v293 = vadd.f32 %v52, %v273
  %v294 = vadd.f32 %v53, %v276
  %295 = vst [vmem:[#allocation2] sm:$0xff] %v279
  %296 = vst [vmem:[#allocation2 + $0x8] sm:$0xff] %v280
  %297 = vst [vmem:[#allocation2 + $0x10] sm:$0xff] %v281
  %298 = vst [vmem:[#allocation2 + $0x18] sm:$0xff] %v282
  %299 = vst [vmem:[#allocation2 + $0x20] sm:$0xff] %v283
  %300 = vst [vmem:[#allocation2 + $0x28] sm:$0xff] %v284
  %301 = vst [vmem:[#allocation2 + $0x30] sm:$0xff] %v285
  %302 = vst [vmem:[#allocation2 + $0x38] sm:$0xff] %v286
  %303 = vst [vmem:[#allocation2 + $0x40] sm:$0xff] %v287
  %304 = vst [vmem:[#allocation2 + $0x48] sm:$0xff] %v288
  %305 = vst [vmem:[#allocation2 + $0x50] sm:$0xff] %v289
  %306 = vst [vmem:[#allocation2 + $0x58] sm:$0xff] %v290
  %307 = vst [vmem:[#allocation2 + $0x60] sm:$0xff] %v291
  %308 = vst [vmem:[#allocation2 + $0x68] sm:$0xff] %v292
  %309 = vst [vmem:[#allocation2 + $0x70] sm:$0xff] %v293
  %310 = vst [vmem:[#allocation2 + $0x78] sm:$0xff] %v294
  // Predicated region
  $region22: #{modified_resnet_fwd.29} parent=0 // pred_check
    %p311 = pneg %p18
  $region23: #{modified_resnet_fwd.29} parent=0 // pred_check_branch
    %313 = sbr.rel (%p311) target = $region25
  $region24: #{modified_resnet_fwd.29} parent=0 // pred_region
    %v314 = vld [vmem:[#allocation2] sm:$0xff]
    %v315 = vld [vmem:[#allocation2 + $0x8] sm:$0xff]
    %v316 = vld [vmem:[#allocation2 + $0x10] sm:$0xff]
    %v317 = vld [vmem:[#allocation2 + $0x18] sm:$0xff]
    %v318 = vld [vmem:[#allocation2 + $0x20] sm:$0xff]
    %v319 = vld [vmem:[#allocation2 + $0x28] sm:$0xff]
    %v320 = vld [vmem:[#allocation2 + $0x30] sm:$0xff]
    %v321 = vld [vmem:[#allocation2 + $0x38] sm:$0xff]
    %v322 = vld [vmem:[#allocation2 + $0x40] sm:$0xff]
    %v323 = vld [vmem:[#allocation2 + $0x48] sm:$0xff]
    %v324 = vld [vmem:[#allocation2 + $0x50] sm:$0xff]
    %v325 = vld [vmem:[#allocation2 + $0x58] sm:$0xff]
    %v326 = vld [vmem:[#allocation2 + $0x60] sm:$0xff]
    %v327 = vld [vmem:[#allocation2 + $0x68] sm:$0xff]
    %v328 = vld [vmem:[#allocation2 + $0x70] sm:$0xff]
    %v329 = vld [vmem:[#allocation2 + $0x78] sm:$0xff]
    %v330 = vld [vmem:[%s2] sm:$0x1]
    %v332 = vlaneseq
    %v333 = vshrl.u32 %v332, 7
    %v334 = vsub.s32 0, %v333
    %v335 = vrot.slane %v330, %v334
    %v337 = vmul.f32 %v314, %v335
    %v338 = vmul.f32 %v315, %v335
    %v339 = vmul.f32 %v316, %v335
    %v340 = vmul.f32 %v317, %v335
    %v341 = vmul.f32 %v318, %v335
    %v342 = vmul.f32 %v319, %v335
    %v343 = vmul.f32 %v320, %v335
    %v344 = vmul.f32 %v321, %v335
    %v345 = vmul.f32 %v322, %v335
    %v346 = vmul.f32 %v323, %v335
    %v347 = vmul.f32 %v324, %v335
    %v348 = vmul.f32 %v325, %v335
    %v349 = vmul.f32 %v326, %v335
    %v350 = vmul.f32 %v327, %v335
    %v351 = vmul.f32 %v328, %v335
    %v352 = vmul.f32 %v329, %v335
    %v353 = vld [vmem:[%s3] sm:$0x1]
    %v355 = vlaneseq
    %v356 = vshrl.u32 %v355, 7
    %v357 = vsub.s32 0, %v356
    %v358 = vrot.slane %v353, %v357
    %v360 = vadd.f32 %v337, %v358
    %v361 = vadd.f32 %v338, %v358
    %v362 = vadd.f32 %v339, %v358
    %v363 = vadd.f32 %v340, %v358
    %v364 = vadd.f32 %v341, %v358
    %v365 = vadd.f32 %v342, %v358
    %v366 = vadd.f32 %v343, %v358
    %v367 = vadd.f32 %v344, %v358
    %v368 = vadd.f32 %v345, %v358
    %v369 = vadd.f32 %v346, %v358
    %v370 = vadd.f32 %v347, %v358
    %v371 = vadd.f32 %v348, %v358
    %v372 = vadd.f32 %v349, %v358
    %v373 = vadd.f32 %v350, %v358
    %v374 = vadd.f32 %v351, %v358
    %v375 = vadd.f32 %v352, %v358
    %376 = vst [vmem:[%s4] sm:$0xff] %v360
    %377 = vst [vmem:[%s4 + $0x8] sm:$0xff] %v361
    %378 = vst [vmem:[%s4 + $0x10] sm:$0xff] %v362
    %379 = vst [vmem:[%s4 + $0x18] sm:$0xff] %v363
    %380 = vst [vmem:[%s4 + $0x20] sm:$0xff] %v364
    %381 = vst [vmem:[%s4 + $0x28] sm:$0xff] %v365
    %382 = vst [vmem:[%s4 + $0x30] sm:$0xff] %v366
    %383 = vst [vmem:[%s4 + $0x38] sm:$0xff] %v367
    %384 = vst [vmem:[%s4 + $0x40] sm:$0xff] %v368
    %385 = vst [vmem:[%s4 + $0x48] sm:$0xff] %v369
    %386 = vst [vmem:[%s4 + $0x50] sm:$0xff] %v370
    %387 = vst [vmem:[%s4 + $0x58] sm:$0xff] %v371
    %388 = vst [vmem:[%s4 + $0x60] sm:$0xff] %v372
    %389 = vst [vmem:[%s4 + $0x68] sm:$0xff] %v373
    %390 = vst [vmem:[%s4 + $0x70] sm:$0xff] %v374
    %391 = vst [vmem:[%s4 + $0x78] sm:$0xff] %v375
  $region25: #{modified_resnet_fwd.29} parent=0 // pred_fallthru
    _
  // Predicated region
  $region26: #{modified_resnet_fwd.29} parent=0 // pred_check
    _
  $region27: #{modified_resnet_fwd.29} parent=0 // pred_check_branch
    %393 = sbr.rel (0) target = $region29
  $region28: #{modified_resnet_fwd.29} parent=0 // pred_region
    _
  $region29: #{modified_resnet_fwd.29} parent=0 // pred_fallthru
    _
  // Predicated region
  $region30: #{modified_resnet_fwd.29} parent=0 // pred_check
    _
  $region31: #{modified_resnet_fwd.29} parent=0 // pred_check_branch
    %395 = sbr.rel (0) target = $region33
  $region32: #{modified_resnet_fwd.29} parent=0 // pred_region
    _
  $region33: #{modified_resnet_fwd.29} parent=0 // pred_fallthru
    _

// kernel: modified_resnet_fwd.30
$region0: #{modified_resnet_fwd.30}
  #allocation0 [shape = 'u32[]', space=smem, size = 0x4, offset = 0x4, fixed_abs, tag = 'smem constant byte address 0x4 - core index']
  #allocation1 [shape = 'u32[144,128]{1,0:T(1,128)}', space=vmem, size = 0x12000, scoped, tag = 'internal scratch']
  #allocation2 [shape = 'f32[128,128]{1,0:T(8,128)}', space=vmem, size = 0x10000, scoped, tag = 'scratch operand']
  %s0 = inlined_call_operand.vmem [shape: bf16[128,128], index: 0, kind: input, shape index: {}]
  %s1 = inlined_call_operand.vmem [shape: bf16[128,128], index: 1, kind: input, shape index: {}]
  %s2 = inlined_call_operand.vmem [shape: f32[1,128], index: 2, kind: input, shape index: {}]
  %s3 = inlined_call_operand.vmem [shape: f32[1,128], index: 3, kind: input, shape index: {}]
  %s4 = inlined_call_operand.vmem [shape: f32[128,128], index: 4, kind: input, shape index: {}]
  %s5 = inlined_call_operand.vmem [shape: f32[128,128], index: 5, kind: output, shape index: {}]
  %s6 = sld [smem:[#allocation0]]
  $region38: #{modified_resnet_fwd.30} parent=0
    _
  %s8 = ssub.s32 1, %s6
  %s9 = scalar_select 0, %s8, %s6
  // Predicated region
  $region2: #{modified_resnet_fwd.30} parent=0 // pred_check
    _
  $region3: #{modified_resnet_fwd.30} parent=0 // pred_check_branch
    %11 = sbr.rel (0) target = $region5
  $region4: #{modified_resnet_fwd.30} parent=0 // pred_region
    _
  $region5: #{modified_resnet_fwd.30} parent=0 // pred_fallthru
    _
  // Predicated region
  $region6: #{modified_resnet_fwd.30} parent=0 // pred_check
    _
  $region7: #{modified_resnet_fwd.30} parent=0 // pred_check_branch
    %13 = sbr.rel (0) target = $region9
  $region8: #{modified_resnet_fwd.30} parent=0 // pred_region
    _
  $region9: #{modified_resnet_fwd.30} parent=0 // pred_fallthru
    _
  // Predicated region
  $region10: #{modified_resnet_fwd.30} parent=0 // pred_check
    _
  $region11: #{modified_resnet_fwd.30} parent=0 // pred_check_branch
    %15 = sbr.rel (0) target = $region13
  $region12: #{modified_resnet_fwd.30} parent=0 // pred_region
    _
  $region13: #{modified_resnet_fwd.30} parent=0 // pred_fallthru
    _
  // Predicated region
  $region14: #{modified_resnet_fwd.30} parent=0 // pred_check
    _
  $region15: #{modified_resnet_fwd.30} parent=0 // pred_check_branch
    %17 = sbr.rel (0) target = $region17
  $region16: #{modified_resnet_fwd.30} parent=0 // pred_region
    _
  $region17: #{modified_resnet_fwd.30} parent=0 // pred_fallthru
    _
  // Predicated region
  $region18: #{modified_resnet_fwd.30} parent=0 // pred_check
    _
  $region19: #{modified_resnet_fwd.30} parent=0 // pred_check_branch
    %19 = sbr.rel (0) target = $region21
  $region20: #{modified_resnet_fwd.30} parent=0 // pred_region
    _
  $region21: #{modified_resnet_fwd.30} parent=0 // pred_fallthru
    _
  %p21 = scmp.eq.s32.totalorder 0, 0
  // Predicated region
  $region22: #{modified_resnet_fwd.30} parent=0 // pred_check
    %p22 = pneg %p21
  $region23: #{modified_resnet_fwd.30} parent=0 // pred_check_branch
    %24 = sbr.rel (%p22) target = $region25
  $region24: #{modified_resnet_fwd.30} parent=0 // pred_region
    %25 = vst [vmem:[#allocation2] sm:$0xff] 0.0
    %26 = vst [vmem:[#allocation2 + $0x8] sm:$0xff] 0.0
    %27 = vst [vmem:[#allocation2 + $0x10] sm:$0xff] 0.0
    %28 = vst [vmem:[#allocation2 + $0x18] sm:$0xff] 0.0
    %29 = vst [vmem:[#allocation2 + $0x20] sm:$0xff] 0.0
    %30 = vst [vmem:[#allocation2 + $0x28] sm:$0xff] 0.0
    %31 = vst [vmem:[#allocation2 + $0x30] sm:$0xff] 0.0
    %32 = vst [vmem:[#allocation2 + $0x38] sm:$0xff] 0.0
    %33 = vst [vmem:[#allocation2 + $0x40] sm:$0xff] 0.0
    %34 = vst [vmem:[#allocation2 + $0x48] sm:$0xff] 0.0
    %35 = vst [vmem:[#allocation2 + $0x50] sm:$0xff] 0.0
    %36 = vst [vmem:[#allocation2 + $0x58] sm:$0xff] 0.0
    %37 = vst [vmem:[#allocation2 + $0x60] sm:$0xff] 0.0
    %38 = vst [vmem:[#allocation2 + $0x68] sm:$0xff] 0.0
    %39 = vst [vmem:[#allocation2 + $0x70] sm:$0xff] 0.0
    %40 = vst [vmem:[#allocation2 + $0x78] sm:$0xff] 0.0
  $region25: #{modified_resnet_fwd.30} parent=0 // pred_fallthru
    _
  %v41 = vld [vmem:[#allocation2] sm:$0xff]
  %v42 = vld [vmem:[#allocation2 + $0x8] sm:$0xff]
  %v43 = vld [vmem:[#allocation2 + $0x10] sm:$0xff]
  %v44 = vld [vmem:[#allocation2 + $0x18] sm:$0xff]
  %v45 = vld [vmem:[#allocation2 + $0x20] sm:$0xff]
  %v46 = vld [vmem:[#allocation2 + $0x28] sm:$0xff]
  %v47 = vld [vmem:[#allocation2 + $0x30] sm:$0xff]
  %v48 = vld [vmem:[#allocation2 + $0x38] sm:$0xff]
  %v49 = vld [vmem:[#allocation2 + $0x40] sm:$0xff]
  %v50 = vld [vmem:[#allocation2 + $0x48] sm:$0xff]
  %v51 = vld [vmem:[#allocation2 + $0x50] sm:$0xff]
  %v52 = vld [vmem:[#allocation2 + $0x58] sm:$0xff]
  %v53 = vld [vmem:[#allocation2 + $0x60] sm:$0xff]
  %v54 = vld [vmem:[#allocation2 + $0x68] sm:$0xff]
  %v55 = vld [vmem:[#allocation2 + $0x70] sm:$0xff]
  %v56 = vld [vmem:[#allocation2 + $0x78] sm:$0xff]
  %v57 = vld [vmem:[%s0] sm:$0xf]
  %v58 = vld [vmem:[%s0 + $0x4] sm:$0xf]
  %v59 = vld [vmem:[%s0 + $0x8] sm:$0xf]
  %v60 = vld [vmem:[%s0 + $0xc] sm:$0xf]
  %v61 = vld [vmem:[%s0 + $0x10] sm:$0xf]
  %v62 = vld [vmem:[%s0 + $0x14] sm:$0xf]
  %v63 = vld [vmem:[%s0 + $0x18] sm:$0xf]
  %v64 = vld [vmem:[%s0 + $0x1c] sm:$0xf]
  %v65 = vld [vmem:[%s0 + $0x20] sm:$0xf]
  %v66 = vld [vmem:[%s0 + $0x24] sm:$0xf]
  %v67 = vld [vmem:[%s0 + $0x28] sm:$0xf]
  %v68 = vld [vmem:[%s0 + $0x2c] sm:$0xf]
  %v69 = vld [vmem:[%s0 + $0x30] sm:$0xf]
  %v70 = vld [vmem:[%s0 + $0x34] sm:$0xf]
  %v71 = vld [vmem:[%s0 + $0x38] sm:$0xf]
  %v72 = vld [vmem:[%s0 + $0x3c] sm:$0xf]
  %v73 = vld [vmem:[%s1] sm:$0xf]
  %v74 = vld [vmem:[%s1 + $0x4] sm:$0xf]
  %v75 = vld [vmem:[%s1 + $0x8] sm:$0xf]
  %v76 = vld [vmem:[%s1 + $0xc] sm:$0xf]
  %v77 = vld [vmem:[%s1 + $0x10] sm:$0xf]
  %v78 = vld [vmem:[%s1 + $0x14] sm:$0xf]
  %v79 = vld [vmem:[%s1 + $0x18] sm:$0xf]
  %v80 = vld [vmem:[%s1 + $0x1c] sm:$0xf]
  %v81 = vld [vmem:[%s1 + $0x20] sm:$0xf]
  %v82 = vld [vmem:[%s1 + $0x24] sm:$0xf]
  %v83 = vld [vmem:[%s1 + $0x28] sm:$0xf]
  %v84 = vld [vmem:[%s1 + $0x2c] sm:$0xf]
  %v85 = vld [vmem:[%s1 + $0x30] sm:$0xf]
  %v86 = vld [vmem:[%s1 + $0x34] sm:$0xf]
  %v87 = vld [vmem:[%s1 + $0x38] sm:$0xf]
  %v88 = vld [vmem:[%s1 + $0x3c] sm:$0xf]
  %v105 = vunpack.c.l.b16 %v57
  %v106 = vunpack.c.l.b16 %v58
  %v107 = vunpack.c.l.b16 %v59
  %v108 = vunpack.c.l.b16 %v60
  %v109 = vunpack.c.l.b16 %v61
  %v110 = vunpack.c.l.b16 %v62
  %v111 = vunpack.c.l.b16 %v63
  %v112 = vunpack.c.l.b16 %v64
  %v113 = vunpack.c.l.b16 %v65
  %v114 = vunpack.c.l.b16 %v66
  %v115 = vunpack.c.l.b16 %v67
  %v116 = vunpack.c.l.b16 %v68
  %v117 = vunpack.c.l.b16 %v69
  %v118 = vunpack.c.l.b16 %v70
  %v119 = vunpack.c.l.b16 %v71
  %v120 = vunpack.c.l.b16 %v72
  %v121 = vpack.c.b16 %v106, %v105
  %v122 = vpack.c.b16 %v108, %v107
  %v123 = vpack.c.b16 %v110, %v109
  %v124 = vpack.c.b16 %v112, %v111
  %v125 = vpack.c.b16 %v114, %v113
  %v126 = vpack.c.b16 %v116, %v115
  %v127 = vpack.c.b16 %v118, %v117
  %v128 = vpack.c.b16 %v120, %v119
  %v153 = vunpack.c.l.b16 %v73
  %v154 = vunpack.c.l.b16 %v74
  %v155 = vunpack.c.l.b16 %v75
  %v156 = vunpack.c.l.b16 %v76
  %v157 = vunpack.c.l.b16 %v77
  %v158 = vunpack.c.l.b16 %v78
  %v159 = vunpack.c.l.b16 %v79
  %v160 = vunpack.c.l.b16 %v80
  %v161 = vunpack.c.l.b16 %v81
  %v162 = vunpack.c.l.b16 %v82
  %v163 = vunpack.c.l.b16 %v83
  %v164 = vunpack.c.l.b16 %v84
  %v165 = vunpack.c.l.b16 %v85
  %v166 = vunpack.c.l.b16 %v86
  %v167 = vunpack.c.l.b16 %v87
  %v168 = vunpack.c.l.b16 %v88
  %v169 = vpack.c.b16 %v154, %v153
  %v170 = vpack.c.b16 %v156, %v155
  %v171 = vpack.c.b16 %v158, %v157
  %v172 = vpack.c.b16 %v160, %v159
  %v173 = vpack.c.b16 %v162, %v161
  %v174 = vpack.c.b16 %v164, %v163
  %v175 = vpack.c.b16 %v166, %v165
  %v176 = vpack.c.b16 %v168, %v167
  %185 = vmatprep.subr.bf16.mxu0 0
  %186 = vmatpush1.bf16.msra.mxu0 %v169
  %187 = vmatprep.subr.bf16.mxu0 0
  %188 = vmatpush1.bf16.msra.mxu0 %v170
  %189 = vmatprep.subr.bf16.mxu0 0
  %190 = vmatpush1.bf16.msra.mxu0 %v171
  %191 = vmatprep.subr.bf16.mxu0 0
  %192 = vmatpush1.bf16.msra.mxu0 %v172
  %193 = vmatprep.subr.bf16.mxu0 0
  %194 = vmatpush1.bf16.msra.mxu0 %v173
  %195 = vmatprep.subr.bf16.mxu0 0
  %196 = vmatpush1.bf16.msra.mxu0 %v174
  %197 = vmatprep.subr.bf16.mxu0 0
  %198 = vmatpush1.bf16.msra.mxu0 %v175
  %199 = vmatprep.subr.bf16.mxu0 0
  %200 = vmatpush1.bf16.msra.mxu0 %v176
  %201 = vmatprep.subr.bf16.mxu0 0
  %202 = vmatpush1.bf16.msra.mxu0 0
  %203 = vmatprep.subr.bf16.mxu0 0
  %204 = vmatpush1.bf16.msra.mxu0 0
  %205 = vmatprep.subr.bf16.mxu0 0
  %206 = vmatpush1.bf16.msra.mxu0 0
  %207 = vmatprep.subr.bf16.mxu0 0
  %208 = vmatpush1.bf16.msra.mxu0 0
  %209 = vmatprep.subr.bf16.mxu0 0
  %210 = vmatpush1.bf16.msra.mxu0 0
  %211 = vmatprep.subr.bf16.mxu0 0
  %212 = vmatpush1.bf16.msra.mxu0 0
  %213 = vmatprep.subr.bf16.mxu0 0
  %214 = vmatpush1.bf16.msra.mxu0 0
  %215 = vmatprep.subr.bf16.mxu0 0
  %216 = vmatpush1.bf16.msra.mxu0 0
  %217 = vmatprep.mubr.bf16.mxu0 0
  %218 = vmatmul.mubr.bf16.gmra.mrb[0].mxu0 %v121
  %v219 = vpop.f32.mrb[0].mxu0
  %v220 = vadd.f32 0.0, %v219
  %v221 = vpop.f32.mrb[0].mxu0
  %v222 = vpop.f32.mrb[0].mxu0
  %v223 = vadd.f32 0.0, %v222
  %v224 = vpop.f32.mrb[0].mxu0
  %225 = vmatprep.mubr.bf16.mxu0 0
  %226 = vmatmul.mubr.bf16.gmra.mrb[0].mxu0 %v122
  %v227 = vpop.f32.mrb[0].mxu0
  %v228 = vadd.f32 0.0, %v227
  %v229 = vpop.f32.mrb[0].mxu0
  %v230 = vpop.f32.mrb[0].mxu0
  %v231 = vadd.f32 0.0, %v230
  %v232 = vpop.f32.mrb[0].mxu0
  %233 = vmatprep.mubr.bf16.mxu0 0
  %234 = vmatmul.mubr.bf16.gmra.mrb[0].mxu0 %v123
  %v235 = vpop.f32.mrb[0].mxu0
  %v236 = vadd.f32 0.0, %v235
  %v237 = vpop.f32.mrb[0].mxu0
  %v238 = vpop.f32.mrb[0].mxu0
  %v239 = vadd.f32 0.0, %v238
  %v240 = vpop.f32.mrb[0].mxu0
  %241 = vmatprep.mubr.bf16.mxu0 0
  %242 = vmatmul.mubr.bf16.gmra.mrb[0].mxu0 %v124
  %v243 = vpop.f32.mrb[0].mxu0
  %v244 = vadd.f32 0.0, %v243
  %v245 = vpop.f32.mrb[0].mxu0
  %v246 = vpop.f32.mrb[0].mxu0
  %v247 = vadd.f32 0.0, %v246
  %v248 = vpop.f32.mrb[0].mxu0
  %249 = vmatprep.mubr.bf16.mxu0 0
  %250 = vmatmul.mubr.bf16.gmra.mrb[0].mxu0 %v125
  %v251 = vpop.f32.mrb[0].mxu0
  %v252 = vadd.f32 0.0, %v251
  %v253 = vpop.f32.mrb[0].mxu0
  %v254 = vpop.f32.mrb[0].mxu0
  %v255 = vadd.f32 0.0, %v254
  %v256 = vpop.f32.mrb[0].mxu0
  %257 = vmatprep.mubr.bf16.mxu0 0
  %258 = vmatmul.mubr.bf16.gmra.mrb[0].mxu0 %v126
  %v259 = vpop.f32.mrb[0].mxu0
  %v260 = vadd.f32 0.0, %v259
  %v261 = vpop.f32.mrb[0].mxu0
  %v262 = vpop.f32.mrb[0].mxu0
  %v263 = vadd.f32 0.0, %v262
  %v264 = vpop.f32.mrb[0].mxu0
  %265 = vmatprep.mubr.bf16.mxu0 0
  %266 = vmatmul.mubr.bf16.gmra.mrb[0].mxu0 %v127
  %v267 = vpop.f32.mrb[0].mxu0
  %v268 = vadd.f32 0.0, %v267
  %v269 = vpop.f32.mrb[0].mxu0
  %v270 = vpop.f32.mrb[0].mxu0
  %v271 = vadd.f32 0.0, %v270
  %v272 = vpop.f32.mrb[0].mxu0
  %273 = vmatprep.mubr.bf16.mxu0 0
  %274 = vmatmul.mubr.bf16.gmra.mrb[0].mxu0 %v128
  %v275 = vpop.f32.mrb[0].mxu0
  %v276 = vadd.f32 0.0, %v275
  %v277 = vpop.f32.mrb[0].mxu0
  %v278 = vpop.f32.mrb[0].mxu0
  %v279 = vadd.f32 0.0, %v278
  %v280 = vpop.f32.mrb[0].mxu0
  %281 = vdwg.mxu0
  %v282 = vadd.f32 %v41, %v220
  %v283 = vadd.f32 %v42, %v223
  %v284 = vadd.f32 %v43, %v228
  %v285 = vadd.f32 %v44, %v231
  %v286 = vadd.f32 %v45, %v236
  %v287 = vadd.f32 %v46, %v239
  %v288 = vadd.f32 %v47, %v244
  %v289 = vadd.f32 %v48, %v247
  %v290 = vadd.f32 %v49, %v252
  %v291 = vadd.f32 %v50, %v255
  %v292 = vadd.f32 %v51, %v260
  %v293 = vadd.f32 %v52, %v263
  %v294 = vadd.f32 %v53, %v268
  %v295 = vadd.f32 %v54, %v271
  %v296 = vadd.f32 %v55, %v276
  %v297 = vadd.f32 %v56, %v279
  %298 = vst [vmem:[#allocation2] sm:$0xff] %v282
  %299 = vst [vmem:[#allocation2 + $0x8] sm:$0xff] %v283
  %300 = vst [vmem:[#allocation2 + $0x10] sm:$0xff] %v284
  %301 = vst [vmem:[#allocation2 + $0x18] sm:$0xff] %v285
  %302 = vst [vmem:[#allocation2 + $0x20] sm:$0xff] %v286
  %303 = vst [vmem:[#allocation2 + $0x28] sm:$0xff] %v287
  %304 = vst [vmem:[#allocation2 + $0x30] sm:$0xff] %v288
  %305 = vst [vmem:[#allocation2 + $0x38] sm:$0xff] %v289
  %306 = vst [vmem:[#allocation2 + $0x40] sm:$0xff] %v290
  %307 = vst [vmem:[#allocation2 + $0x48] sm:$0xff] %v291
  %308 = vst [vmem:[#allocation2 + $0x50] sm:$0xff] %v292
  %309 = vst [vmem:[#allocation2 + $0x58] sm:$0xff] %v293
  %310 = vst [vmem:[#allocation2 + $0x60] sm:$0xff] %v294
  %311 = vst [vmem:[#allocation2 + $0x68] sm:$0xff] %v295
  %312 = vst [vmem:[#allocation2 + $0x70] sm:$0xff] %v296
  %313 = vst [vmem:[#allocation2 + $0x78] sm:$0xff] %v297
  // Predicated region
  $region26: #{modified_resnet_fwd.30} parent=0 // pred_check
    %p314 = pneg %p21
  $region27: #{modified_resnet_fwd.30} parent=0 // pred_check_branch
    %316 = sbr.rel (%p314) target = $region29
  $region28: #{modified_resnet_fwd.30} parent=0 // pred_region
    %v317 = vld [vmem:[#allocation2] sm:$0xff]
    %v318 = vld [vmem:[#allocation2 + $0x8] sm:$0xff]
    %v319 = vld [vmem:[#allocation2 + $0x10] sm:$0xff]
    %v320 = vld [vmem:[#allocation2 + $0x18] sm:$0xff]
    %v321 = vld [vmem:[#allocation2 + $0x20] sm:$0xff]
    %v322 = vld [vmem:[#allocation2 + $0x28] sm:$0xff]
    %v323 = vld [vmem:[#allocation2 + $0x30] sm:$0xff]
    %v324 = vld [vmem:[#allocation2 + $0x38] sm:$0xff]
    %v325 = vld [vmem:[#allocation2 + $0x40] sm:$0xff]
    %v326 = vld [vmem:[#allocation2 + $0x48] sm:$0xff]
    %v327 = vld [vmem:[#allocation2 + $0x50] sm:$0xff]
    %v328 = vld [vmem:[#allocation2 + $0x58] sm:$0xff]
    %v329 = vld [vmem:[#allocation2 + $0x60] sm:$0xff]
    %v330 = vld [vmem:[#allocation2 + $0x68] sm:$0xff]
    %v331 = vld [vmem:[#allocation2 + $0x70] sm:$0xff]
    %v332 = vld [vmem:[#allocation2 + $0x78] sm:$0xff]
    %v333 = vld [vmem:[%s2] sm:$0x1]
    %v335 = vlaneseq
    %v336 = vshrl.u32 %v335, 7
    %v337 = vsub.s32 0, %v336
    %v338 = vrot.slane %v333, %v337
    %v340 = vmul.f32 %v317, %v338
    %v341 = vmul.f32 %v318, %v338
    %v342 = vmul.f32 %v319, %v338
    %v343 = vmul.f32 %v320, %v338
    %v344 = vmul.f32 %v321, %v338
    %v345 = vmul.f32 %v322, %v338
    %v346 = vmul.f32 %v323, %v338
    %v347 = vmul.f32 %v324, %v338
    %v348 = vmul.f32 %v325, %v338
    %v349 = vmul.f32 %v326, %v338
    %v350 = vmul.f32 %v327, %v338
    %v351 = vmul.f32 %v328, %v338
    %v352 = vmul.f32 %v329, %v338
    %v353 = vmul.f32 %v330, %v338
    %v354 = vmul.f32 %v331, %v338
    %v355 = vmul.f32 %v332, %v338
    %v356 = vld [vmem:[%s3] sm:$0x1]
    %v358 = vlaneseq
    %v359 = vshrl.u32 %v358, 7
    %v360 = vsub.s32 0, %v359
    %v361 = vrot.slane %v356, %v360
    %v363 = vadd.f32 %v340, %v361
    %v364 = vadd.f32 %v341, %v361
    %v365 = vadd.f32 %v342, %v361
    %v366 = vadd.f32 %v343, %v361
    %v367 = vadd.f32 %v344, %v361
    %v368 = vadd.f32 %v345, %v361
    %v369 = vadd.f32 %v346, %v361
    %v370 = vadd.f32 %v347, %v361
    %v371 = vadd.f32 %v348, %v361
    %v372 = vadd.f32 %v349, %v361
    %v373 = vadd.f32 %v350, %v361
    %v374 = vadd.f32 %v351, %v361
    %v375 = vadd.f32 %v352, %v361
    %v376 = vadd.f32 %v353, %v361
    %v377 = vadd.f32 %v354, %v361
    %v378 = vadd.f32 %v355, %v361
    %v379 = vld [vmem:[%s4] sm:$0xff]
    %v380 = vld [vmem:[%s4 + $0x8] sm:$0xff]
    %v381 = vld [vmem:[%s4 + $0x10] sm:$0xff]
    %v382 = vld [vmem:[%s4 + $0x18] sm:$0xff]
    %v383 = vld [vmem:[%s4 + $0x20] sm:$0xff]
    %v384 = vld [vmem:[%s4 + $0x28] sm:$0xff]
    %v385 = vld [vmem:[%s4 + $0x30] sm:$0xff]
    %v386 = vld [vmem:[%s4 + $0x38] sm:$0xff]
    %v387 = vld [vmem:[%s4 + $0x40] sm:$0xff]
    %v388 = vld [vmem:[%s4 + $0x48] sm:$0xff]
    %v389 = vld [vmem:[%s4 + $0x50] sm:$0xff]
    %v390 = vld [vmem:[%s4 + $0x58] sm:$0xff]
    %v391 = vld [vmem:[%s4 + $0x60] sm:$0xff]
    %v392 = vld [vmem:[%s4 + $0x68] sm:$0xff]
    %v393 = vld [vmem:[%s4 + $0x70] sm:$0xff]
    %v394 = vld [vmem:[%s4 + $0x78] sm:$0xff]
    %v395 = vadd.f32 %v363, %v379
    %v396 = vadd.f32 %v364, %v380
    %v397 = vadd.f32 %v365, %v381
    %v398 = vadd.f32 %v366, %v382
    %v399 = vadd.f32 %v367, %v383
    %v400 = vadd.f32 %v368, %v384
    %v401 = vadd.f32 %v369, %v385
    %v402 = vadd.f32 %v370, %v386
    %v403 = vadd.f32 %v371, %v387
    %v404 = vadd.f32 %v372, %v388
    %v405 = vadd.f32 %v373, %v389
    %v406 = vadd.f32 %v374, %v390
    %v407 = vadd.f32 %v375, %v391
    %v408 = vadd.f32 %v376, %v392
    %v409 = vadd.f32 %v377, %v393
    %v410 = vadd.f32 %v378, %v394
    %v411 = vmax.f32 %v395, 0.0
    %v412 = vmax.f32 %v396, 0.0
    %v413 = vmax.f32 %v397, 0.0
    %v414 = vmax.f32 %v398, 0.0
    %v415 = vmax.f32 %v399, 0.0
    %v416 = vmax.f32 %v400, 0.0
    %v417 = vmax.f32 %v401, 0.0
    %v418 = vmax.f32 %v402, 0.0
    %v419 = vmax.f32 %v403, 0.0
    %v420 = vmax.f32 %v404, 0.0
    %v421 = vmax.f32 %v405, 0.0
    %v422 = vmax.f32 %v406, 0.0
    %v423 = vmax.f32 %v407, 0.0
    %v424 = vmax.f32 %v408, 0.0
    %v425 = vmax.f32 %v409, 0.0
    %v426 = vmax.f32 %v410, 0.0
    %427 = vst [vmem:[%s5] sm:$0xff] %v411
    %428 = vst [vmem:[%s5 + $0x8] sm:$0xff] %v412
    %429 = vst [vmem:[%s5 + $0x10] sm:$0xff] %v413
    %430 = vst [vmem:[%s5 + $0x18] sm:$0xff] %v414
    %431 = vst [vmem:[%s5 + $0x20] sm:$0xff] %v415
    %432 = vst [vmem:[%s5 + $0x28] sm:$0xff] %v416
    %433 = vst [vmem:[%s5 + $0x30] sm:$0xff] %v417
    %434 = vst [vmem:[%s5 + $0x38] sm:$0xff] %v418
    %435 = vst [vmem:[%s5 + $0x40] sm:$0xff] %v419
    %436 = vst [vmem:[%s5 + $0x48] sm:$0xff] %v420
    %437 = vst [vmem:[%s5 + $0x50] sm:$0xff] %v421
    %438 = vst [vmem:[%s5 + $0x58] sm:$0xff] %v422
    %439 = vst [vmem:[%s5 + $0x60] sm:$0xff] %v423
    %440 = vst [vmem:[%s5 + $0x68] sm:$0xff] %v424
    %441 = vst [vmem:[%s5 + $0x70] sm:$0xff] %v425
    %442 = vst [vmem:[%s5 + $0x78] sm:$0xff] %v426
  $region29: #{modified_resnet_fwd.30} parent=0 // pred_fallthru
    _
  // Predicated region
  $region30: #{modified_resnet_fwd.30} parent=0 // pred_check
    _
  $region31: #{modified_resnet_fwd.30} parent=0 // pred_check_branch
    %444 = sbr.rel (0) target = $region33
  $region32: #{modified_resnet_fwd.30} parent=0 // pred_region
    _
  $region33: #{modified_resnet_fwd.30} parent=0 // pred_fallthru
    _
  // Predicated region
  $region34: #{modified_resnet_fwd.30} parent=0 // pred_check
    _
  $region35: #{modified_resnet_fwd.30} parent=0 // pred_check_branch
    %446 = sbr.rel (0) target = $region37
  $region36: #{modified_resnet_fwd.30} parent=0 // pred_region
    _
  $region37: #{modified_resnet_fwd.30} parent=0 // pred_fallthru
    _

// kernel: modified_resnet_fwd.32
$region0: #{modified_resnet_fwd.32}
  #allocation0 [shape = 'u32[]', space=smem, size = 0x4, offset = 0x4, fixed_abs, tag = 'smem constant byte address 0x4 - core index']
  #allocation1 [shape = 'u32[144,128]{1,0:T(1,128)}', space=vmem, size = 0x12000, scoped, tag = 'internal scratch']
  #allocation2 [shape = 'f32[128,128]{1,0:T(8,128)}', space=vmem, size = 0x10000, scoped, tag = 'scratch operand']
  %s0 = inlined_call_operand.vmem [shape: bf16[128,256], index: 0, kind: input, shape index: {}]
  %s1 = inlined_call_operand.vmem [shape: bf16[256,128], index: 1, kind: input, shape index: {}]
  %s2 = inlined_call_operand.vmem [shape: f32[1,128], index: 2, kind: input, shape index: {}]
  %s3 = inlined_call_operand.vmem [shape: f32[1,128], index: 3, kind: input, shape index: {}]
  %s4 = inlined_call_operand.vmem [shape: f32[128,128], index: 4, kind: output, shape index: {}]
  %s5 = sld [smem:[#allocation0]]
  $region34: #{modified_resnet_fwd.32} parent=0
    _
  %s7 = ssub.s32 1, %s5
  %s8 = scalar_select 0, %s7, %s5
  // Predicated region
  $region2: #{modified_resnet_fwd.32} parent=0 // pred_check
    _
  $region3: #{modified_resnet_fwd.32} parent=0 // pred_check_branch
    %10 = sbr.rel (0) target = $region5
  $region4: #{modified_resnet_fwd.32} parent=0 // pred_region
    _
  $region5: #{modified_resnet_fwd.32} parent=0 // pred_fallthru
    _
  // Predicated region
  $region6: #{modified_resnet_fwd.32} parent=0 // pred_check
    _
  $region7: #{modified_resnet_fwd.32} parent=0 // pred_check_branch
    %12 = sbr.rel (0) target = $region9
  $region8: #{modified_resnet_fwd.32} parent=0 // pred_region
    _
  $region9: #{modified_resnet_fwd.32} parent=0 // pred_fallthru
    _
  // Predicated region
  $region10: #{modified_resnet_fwd.32} parent=0 // pred_check
    _
  $region11: #{modified_resnet_fwd.32} parent=0 // pred_check_branch
    %14 = sbr.rel (0) target = $region13
  $region12: #{modified_resnet_fwd.32} parent=0 // pred_region
    _
  $region13: #{modified_resnet_fwd.32} parent=0 // pred_fallthru
    _
  // Predicated region
  $region14: #{modified_resnet_fwd.32} parent=0 // pred_check
    _
  $region15: #{modified_resnet_fwd.32} parent=0 // pred_check_branch
    %16 = sbr.rel (0) target = $region17
  $region16: #{modified_resnet_fwd.32} parent=0 // pred_region
    _
  $region17: #{modified_resnet_fwd.32} parent=0 // pred_fallthru
    _
  %p18 = scmp.eq.s32.totalorder 0, 0
  // Predicated region
  $region18: #{modified_resnet_fwd.32} parent=0 // pred_check
    %p19 = pneg %p18
  $region19: #{modified_resnet_fwd.32} parent=0 // pred_check_branch
    %21 = sbr.rel (%p19) target = $region21
  $region20: #{modified_resnet_fwd.32} parent=0 // pred_region
    %22 = vst [vmem:[#allocation2] sm:$0xff] 0.0
    %23 = vst [vmem:[#allocation2 + $0x8] sm:$0xff] 0.0
    %24 = vst [vmem:[#allocation2 + $0x10] sm:$0xff] 0.0
    %25 = vst [vmem:[#allocation2 + $0x18] sm:$0xff] 0.0
    %26 = vst [vmem:[#allocation2 + $0x20] sm:$0xff] 0.0
    %27 = vst [vmem:[#allocation2 + $0x28] sm:$0xff] 0.0
    %28 = vst [vmem:[#allocation2 + $0x30] sm:$0xff] 0.0
    %29 = vst [vmem:[#allocation2 + $0x38] sm:$0xff] 0.0
    %30 = vst [vmem:[#allocation2 + $0x40] sm:$0xff] 0.0
    %31 = vst [vmem:[#allocation2 + $0x48] sm:$0xff] 0.0
    %32 = vst [vmem:[#allocation2 + $0x50] sm:$0xff] 0.0
    %33 = vst [vmem:[#allocation2 + $0x58] sm:$0xff] 0.0
    %34 = vst [vmem:[#allocation2 + $0x60] sm:$0xff] 0.0
    %35 = vst [vmem:[#allocation2 + $0x68] sm:$0xff] 0.0
    %36 = vst [vmem:[#allocation2 + $0x70] sm:$0xff] 0.0
    %37 = vst [vmem:[#allocation2 + $0x78] sm:$0xff] 0.0
  $region21: #{modified_resnet_fwd.32} parent=0 // pred_fallthru
    _
  %v38 = vld [vmem:[#allocation2] sm:$0xff]
  %v39 = vld [vmem:[#allocation2 + $0x8] sm:$0xff]
  %v40 = vld [vmem:[#allocation2 + $0x10] sm:$0xff]
  %v41 = vld [vmem:[#allocation2 + $0x18] sm:$0xff]
  %v42 = vld [vmem:[#allocation2 + $0x20] sm:$0xff]
  %v43 = vld [vmem:[#allocation2 + $0x28] sm:$0xff]
  %v44 = vld [vmem:[#allocation2 + $0x30] sm:$0xff]
  %v45 = vld [vmem:[#allocation2 + $0x38] sm:$0xff]
  %v46 = vld [vmem:[#allocation2 + $0x40] sm:$0xff]
  %v47 = vld [vmem:[#allocation2 + $0x48] sm:$0xff]
  %v48 = vld [vmem:[#allocation2 + $0x50] sm:$0xff]
  %v49 = vld [vmem:[#allocation2 + $0x58] sm:$0xff]
  %v50 = vld [vmem:[#allocation2 + $0x60] sm:$0xff]
  %v51 = vld [vmem:[#allocation2 + $0x68] sm:$0xff]
  %v52 = vld [vmem:[#allocation2 + $0x70] sm:$0xff]
  %v53 = vld [vmem:[#allocation2 + $0x78] sm:$0xff]
  %v54 = vld [vmem:[%s0] sm:$0xff]
  %v55 = vld [vmem:[%s0 + $0x8] sm:$0xff]
  %v56 = vld [vmem:[%s0 + $0x10] sm:$0xff]
  %v57 = vld [vmem:[%s0 + $0x18] sm:$0xff]
  %v58 = vld [vmem:[%s0 + $0x20] sm:$0xff]
  %v59 = vld [vmem:[%s0 + $0x28] sm:$0xff]
  %v60 = vld [vmem:[%s0 + $0x30] sm:$0xff]
  %v61 = vld [vmem:[%s0 + $0x38] sm:$0xff]
  %v62 = vld [vmem:[%s0 + $0x40] sm:$0xff]
  %v63 = vld [vmem:[%s0 + $0x48] sm:$0xff]
  %v64 = vld [vmem:[%s0 + $0x50] sm:$0xff]
  %v65 = vld [vmem:[%s0 + $0x58] sm:$0xff]
  %v66 = vld [vmem:[%s0 + $0x60] sm:$0xff]
  %v67 = vld [vmem:[%s0 + $0x68] sm:$0xff]
  %v68 = vld [vmem:[%s0 + $0x70] sm:$0xff]
  %v69 = vld [vmem:[%s0 + $0x78] sm:$0xff]
  %v70 = vld [vmem:[%s1] sm:$0xf]
  %v71 = vld [vmem:[%s1 + $0x4] sm:$0xf]
  %v72 = vld [vmem:[%s1 + $0x8] sm:$0xf]
  %v73 = vld [vmem:[%s1 + $0xc] sm:$0xf]
  %v74 = vld [vmem:[%s1 + $0x10] sm:$0xf]
  %v75 = vld [vmem:[%s1 + $0x14] sm:$0xf]
  %v76 = vld [vmem:[%s1 + $0x18] sm:$0xf]
  %v77 = vld [vmem:[%s1 + $0x1c] sm:$0xf]
  %v78 = vld [vmem:[%s1 + $0x20] sm:$0xf]
  %v79 = vld [vmem:[%s1 + $0x24] sm:$0xf]
  %v80 = vld [vmem:[%s1 + $0x28] sm:$0xf]
  %v81 = vld [vmem:[%s1 + $0x2c] sm:$0xf]
  %v82 = vld [vmem:[%s1 + $0x30] sm:$0xf]
  %v83 = vld [vmem:[%s1 + $0x34] sm:$0xf]
  %v84 = vld [vmem:[%s1 + $0x38] sm:$0xf]
  %v85 = vld [vmem:[%s1 + $0x3c] sm:$0xf]
  %v86 = vld [vmem:[%s1 + $0x40] sm:$0xf]
  %v87 = vld [vmem:[%s1 + $0x44] sm:$0xf]
  %v88 = vld [vmem:[%s1 + $0x48] sm:$0xf]
  %v89 = vld [vmem:[%s1 + $0x4c] sm:$0xf]
  %v90 = vld [vmem:[%s1 + $0x50] sm:$0xf]
  %v91 = vld [vmem:[%s1 + $0x54] sm:$0xf]
  %v92 = vld [vmem:[%s1 + $0x58] sm:$0xf]
  %v93 = vld [vmem:[%s1 + $0x5c] sm:$0xf]
  %v94 = vld [vmem:[%s1 + $0x60] sm:$0xf]
  %v95 = vld [vmem:[%s1 + $0x64] sm:$0xf]
  %v96 = vld [vmem:[%s1 + $0x68] sm:$0xf]
  %v97 = vld [vmem:[%s1 + $0x6c] sm:$0xf]
  %v98 = vld [vmem:[%s1 + $0x70] sm:$0xf]
  %v99 = vld [vmem:[%s1 + $0x74] sm:$0xf]
  %v100 = vld [vmem:[%s1 + $0x78] sm:$0xf]
  %v101 = vld [vmem:[%s1 + $0x7c] sm:$0xf]
  %v118 = vunpack.c.l.b16 %v54
  %v119 = vunpack.c.h.b16 %v54
  %v120 = vunpack.c.l.b16 %v55
  %v121 = vunpack.c.h.b16 %v55
  %v122 = vunpack.c.l.b16 %v56
  %v123 = vunpack.c.h.b16 %v56
  %v124 = vunpack.c.l.b16 %v57
  %v125 = vunpack.c.h.b16 %v57
  %v126 = vunpack.c.l.b16 %v58
  %v127 = vunpack.c.h.b16 %v58
  %v128 = vunpack.c.l.b16 %v59
  %v129 = vunpack.c.h.b16 %v59
  %v130 = vunpack.c.l.b16 %v60
  %v131 = vunpack.c.h.b16 %v60
  %v132 = vunpack.c.l.b16 %v61
  %v133 = vunpack.c.h.b16 %v61
  %v134 = vunpack.c.l.b16 %v62
  %v135 = vunpack.c.h.b16 %v62
  %v136 = vunpack.c.l.b16 %v63
  %v137 = vunpack.c.h.b16 %v63
  %v138 = vunpack.c.l.b16 %v64
  %v139 = vunpack.c.h.b16 %v64
  %v140 = vunpack.c.l.b16 %v65
  %v141 = vunpack.c.h.b16 %v65
  %v142 = vunpack.c.l.b16 %v66
  %v143 = vunpack.c.h.b16 %v66
  %v144 = vunpack.c.l.b16 %v67
  %v145 = vunpack.c.h.b16 %v67
  %v146 = vunpack.c.l.b16 %v68
  %v147 = vunpack.c.h.b16 %v68
  %v148 = vunpack.c.l.b16 %v69
  %v149 = vunpack.c.h.b16 %v69
  %v150 = vpack.c.b16 %v120, %v118
  %v151 = vpack.c.b16 %v121, %v119
  %v152 = vpack.c.b16 %v124, %v122
  %v153 = vpack.c.b16 %v125, %v123
  %v154 = vpack.c.b16 %v128, %v126
  %v155 = vpack.c.b16 %v129, %v127
  %v156 = vpack.c.b16 %v132, %v130
  %v157 = vpack.c.b16 %v133, %v131
  %v158 = vpack.c.b16 %v136, %v134
  %v159 = vpack.c.b16 %v137, %v135
  %v160 = vpack.c.b16 %v140, %v138
  %v161 = vpack.c.b16 %v141, %v139
  %v162 = vpack.c.b16 %v144, %v142
  %v163 = vpack.c.b16 %v145, %v143
  %v164 = vpack.c.b16 %v148, %v146
  %v165 = vpack.c.b16 %v149, %v147
  %v214 = vunpack.c.l.b16 %v70
  %v215 = vunpack.c.l.b16 %v71
  %v216 = vunpack.c.l.b16 %v72
  %v217 = vunpack.c.l.b16 %v73
  %v218 = vunpack.c.l.b16 %v74
  %v219 = vunpack.c.l.b16 %v75
  %v220 = vunpack.c.l.b16 %v76
  %v221 = vunpack.c.l.b16 %v77
  %v222 = vunpack.c.l.b16 %v78
  %v223 = vunpack.c.l.b16 %v79
  %v224 = vunpack.c.l.b16 %v80
  %v225 = vunpack.c.l.b16 %v81
  %v226 = vunpack.c.l.b16 %v82
  %v227 = vunpack.c.l.b16 %v83
  %v228 = vunpack.c.l.b16 %v84
  %v229 = vunpack.c.l.b16 %v85
  %v230 = vunpack.c.l.b16 %v86
  %v231 = vunpack.c.l.b16 %v87
  %v232 = vunpack.c.l.b16 %v88
  %v233 = vunpack.c.l.b16 %v89
  %v234 = vunpack.c.l.b16 %v90
  %v235 = vunpack.c.l.b16 %v91
  %v236 = vunpack.c.l.b16 %v92
  %v237 = vunpack.c.l.b16 %v93
  %v238 = vunpack.c.l.b16 %v94
  %v239 = vunpack.c.l.b16 %v95
  %v240 = vunpack.c.l.b16 %v96
  %v241 = vunpack.c.l.b16 %v97
  %v242 = vunpack.c.l.b16 %v98
  %v243 = vunpack.c.l.b16 %v99
  %v244 = vunpack.c.l.b16 %v100
  %v245 = vunpack.c.l.b16 %v101
  %v246 = vpack.c.b16 %v215, %v214
  %v247 = vpack.c.b16 %v217, %v216
  %v248 = vpack.c.b16 %v219, %v218
  %v249 = vpack.c.b16 %v221, %v220
  %v250 = vpack.c.b16 %v223, %v222
  %v251 = vpack.c.b16 %v225, %v224
  %v252 = vpack.c.b16 %v227, %v226
  %v253 = vpack.c.b16 %v229, %v228
  %v254 = vpack.c.b16 %v231, %v230
  %v255 = vpack.c.b16 %v233, %v232
  %v256 = vpack.c.b16 %v235, %v234
  %v257 = vpack.c.b16 %v237, %v236
  %v258 = vpack.c.b16 %v239, %v238
  %v259 = vpack.c.b16 %v241, %v240
  %v260 = vpack.c.b16 %v243, %v242
  %v261 = vpack.c.b16 %v245, %v244
  %278 = vmatprep.subr.bf16.mxu0 0
  %279 = vmatpush1.bf16.msra.mxu0 %v246
  %280 = vmatprep.subr.bf16.mxu0 0
  %281 = vmatpush1.bf16.msra.mxu0 %v247
  %282 = vmatprep.subr.bf16.mxu0 0
  %283 = vmatpush1.bf16.msra.mxu0 %v248
  %284 = vmatprep.subr.bf16.mxu0 0
  %285 = vmatpush1.bf16.msra.mxu0 %v249
  %286 = vmatprep.subr.bf16.mxu0 0
  %287 = vmatpush1.bf16.msra.mxu0 %v250
  %288 = vmatprep.subr.bf16.mxu0 0
  %289 = vmatpush1.bf16.msra.mxu0 %v251
  %290 = vmatprep.subr.bf16.mxu0 0
  %291 = vmatpush1.bf16.msra.mxu0 %v252
  %292 = vmatprep.subr.bf16.mxu0 0
  %293 = vmatpush1.bf16.msra.mxu0 %v253
  %294 = vmatprep.subr.bf16.mxu0 0
  %295 = vmatpush1.bf16.msra.mxu0 %v254
  %296 = vmatprep.subr.bf16.mxu0 0
  %297 = vmatpush1.bf16.msra.mxu0 %v255
  %298 = vmatprep.subr.bf16.mxu0 0
  %299 = vmatpush1.bf16.msra.mxu0 %v256
  %300 = vmatprep.subr.bf16.mxu0 0
  %301 = vmatpush1.bf16.msra.mxu0 %v257
  %302 = vmatprep.subr.bf16.mxu0 0
  %303 = vmatpush1.bf16.msra.mxu0 %v258
  %304 = vmatprep.subr.bf16.mxu0 0
  %305 = vmatpush1.bf16.msra.mxu0 %v259
  %306 = vmatprep.subr.bf16.mxu0 0
  %307 = vmatpush1.bf16.msra.mxu0 %v260
  %308 = vmatprep.subr.bf16.mxu0 0
  %309 = vmatpush1.bf16.msra.mxu0 %v261
  %310 = vmatprep.mubr.bf16.mxu0 %v151
  %311 = vmatmul.mubr.bf16.gmra.mrb[0].mxu0 %v150
  %v312 = vpop.f32.mrb[0].mxu0
  %v313 = vadd.f32 0.0, %v312
  %v314 = vpop.f32.mrb[0].mxu0
  %v315 = vpop.f32.mrb[0].mxu0
  %v316 = vadd.f32 0.0, %v315
  %v317 = vpop.f32.mrb[0].mxu0
  %318 = vmatprep.mubr.bf16.mxu0 %v153
  %319 = vmatmul.mubr.bf16.gmra.mrb[0].mxu0 %v152
  %v320 = vpop.f32.mrb[0].mxu0
  %v321 = vadd.f32 0.0, %v320
  %v322 = vpop.f32.mrb[0].mxu0
  %v323 = vpop.f32.mrb[0].mxu0
  %v324 = vadd.f32 0.0, %v323
  %v325 = vpop.f32.mrb[0].mxu0
  %326 = vmatprep.mubr.bf16.mxu0 %v155
  %327 = vmatmul.mubr.bf16.gmra.mrb[0].mxu0 %v154
  %v328 = vpop.f32.mrb[0].mxu0
  %v329 = vadd.f32 0.0, %v328
  %v330 = vpop.f32.mrb[0].mxu0
  %v331 = vpop.f32.mrb[0].mxu0
  %v332 = vadd.f32 0.0, %v331
  %v333 = vpop.f32.mrb[0].mxu0
  %334 = vmatprep.mubr.bf16.mxu0 %v157
  %335 = vmatmul.mubr.bf16.gmra.mrb[0].mxu0 %v156
  %v336 = vpop.f32.mrb[0].mxu0
  %v337 = vadd.f32 0.0, %v336
  %v338 = vpop.f32.mrb[0].mxu0
  %v339 = vpop.f32.mrb[0].mxu0
  %v340 = vadd.f32 0.0, %v339
  %v341 = vpop.f32.mrb[0].mxu0
  %342 = vmatprep.mubr.bf16.mxu0 %v159
  %343 = vmatmul.mubr.bf16.gmra.mrb[0].mxu0 %v158
  %v344 = vpop.f32.mrb[0].mxu0
  %v345 = vadd.f32 0.0, %v344
  %v346 = vpop.f32.mrb[0].mxu0
  %v347 = vpop.f32.mrb[0].mxu0
  %v348 = vadd.f32 0.0, %v347
  %v349 = vpop.f32.mrb[0].mxu0
  %350 = vmatprep.mubr.bf16.mxu0 %v161
  %351 = vmatmul.mubr.bf16.gmra.mrb[0].mxu0 %v160
  %v352 = vpop.f32.mrb[0].mxu0
  %v353 = vadd.f32 0.0, %v352
  %v354 = vpop.f32.mrb[0].mxu0
  %v355 = vpop.f32.mrb[0].mxu0
  %v356 = vadd.f32 0.0, %v355
  %v357 = vpop.f32.mrb[0].mxu0
  %358 = vmatprep.mubr.bf16.mxu0 %v163
  %359 = vmatmul.mubr.bf16.gmra.mrb[0].mxu0 %v162
  %v360 = vpop.f32.mrb[0].mxu0
  %v361 = vadd.f32 0.0, %v360
  %v362 = vpop.f32.mrb[0].mxu0
  %v363 = vpop.f32.mrb[0].mxu0
  %v364 = vadd.f32 0.0, %v363
  %v365 = vpop.f32.mrb[0].mxu0
  %366 = vmatprep.mubr.bf16.mxu0 %v165
  %367 = vmatmul.mubr.bf16.gmra.mrb[0].mxu0 %v164
  %v368 = vpop.f32.mrb[0].mxu0
  %v369 = vadd.f32 0.0, %v368
  %v370 = vpop.f32.mrb[0].mxu0
  %v371 = vpop.f32.mrb[0].mxu0
  %v372 = vadd.f32 0.0, %v371
  %v373 = vpop.f32.mrb[0].mxu0
  %374 = vdwg.mxu0
  %v375 = vadd.f32 %v38, %v313
  %v376 = vadd.f32 %v39, %v316
  %v377 = vadd.f32 %v40, %v321
  %v378 = vadd.f32 %v41, %v324
  %v379 = vadd.f32 %v42, %v329
  %v380 = vadd.f32 %v43, %v332
  %v381 = vadd.f32 %v44, %v337
  %v382 = vadd.f32 %v45, %v340
  %v383 = vadd.f32 %v46, %v345
  %v384 = vadd.f32 %v47, %v348
  %v385 = vadd.f32 %v48, %v353
  %v386 = vadd.f32 %v49, %v356
  %v387 = vadd.f32 %v50, %v361
  %v388 = vadd.f32 %v51, %v364
  %v389 = vadd.f32 %v52, %v369
  %v390 = vadd.f32 %v53, %v372
  %391 = vst [vmem:[#allocation2] sm:$0xff] %v375
  %392 = vst [vmem:[#allocation2 + $0x8] sm:$0xff] %v376
  %393 = vst [vmem:[#allocation2 + $0x10] sm:$0xff] %v377
  %394 = vst [vmem:[#allocation2 + $0x18] sm:$0xff] %v378
  %395 = vst [vmem:[#allocation2 + $0x20] sm:$0xff] %v379
  %396 = vst [vmem:[#allocation2 + $0x28] sm:$0xff] %v380
  %397 = vst [vmem:[#allocation2 + $0x30] sm:$0xff] %v381
  %398 = vst [vmem:[#allocation2 + $0x38] sm:$0xff] %v382
  %399 = vst [vmem:[#allocation2 + $0x40] sm:$0xff] %v383
  %400 = vst [vmem:[#allocation2 + $0x48] sm:$0xff] %v384
  %401 = vst [vmem:[#allocation2 + $0x50] sm:$0xff] %v385
  %402 = vst [vmem:[#allocation2 + $0x58] sm:$0xff] %v386
  %403 = vst [vmem:[#allocation2 + $0x60] sm:$0xff] %v387
  %404 = vst [vmem:[#allocation2 + $0x68] sm:$0xff] %v388
  %405 = vst [vmem:[#allocation2 + $0x70] sm:$0xff] %v389
  %406 = vst [vmem:[#allocation2 + $0x78] sm:$0xff] %v390
  // Predicated region
  $region22: #{modified_resnet_fwd.32} parent=0 // pred_check
    %p407 = pneg %p18
  $region23: #{modified_resnet_fwd.32} parent=0 // pred_check_branch
    %409 = sbr.rel (%p407) target = $region25
  $region24: #{modified_resnet_fwd.32} parent=0 // pred_region
    %v410 = vld [vmem:[#allocation2] sm:$0xff]
    %v411 = vld [vmem:[#allocation2 + $0x8] sm:$0xff]
    %v412 = vld [vmem:[#allocation2 + $0x10] sm:$0xff]
    %v413 = vld [vmem:[#allocation2 + $0x18] sm:$0xff]
    %v414 = vld [vmem:[#allocation2 + $0x20] sm:$0xff]
    %v415 = vld [vmem:[#allocation2 + $0x28] sm:$0xff]
    %v416 = vld [vmem:[#allocation2 + $0x30] sm:$0xff]
    %v417 = vld [vmem:[#allocation2 + $0x38] sm:$0xff]
    %v418 = vld [vmem:[#allocation2 + $0x40] sm:$0xff]
    %v419 = vld [vmem:[#allocation2 + $0x48] sm:$0xff]
    %v420 = vld [vmem:[#allocation2 + $0x50] sm:$0xff]
    %v421 = vld [vmem:[#allocation2 + $0x58] sm:$0xff]
    %v422 = vld [vmem:[#allocation2 + $0x60] sm:$0xff]
    %v423 = vld [vmem:[#allocation2 + $0x68] sm:$0xff]
    %v424 = vld [vmem:[#allocation2 + $0x70] sm:$0xff]
    %v425 = vld [vmem:[#allocation2 + $0x78] sm:$0xff]
    %v426 = vld [vmem:[%s2] sm:$0x1]
    %v428 = vlaneseq
    %v429 = vshrl.u32 %v428, 7
    %v430 = vsub.s32 0, %v429
    %v431 = vrot.slane %v426, %v430
    %v433 = vmul.f32 %v410, %v431
    %v434 = vmul.f32 %v411, %v431
    %v435 = vmul.f32 %v412, %v431
    %v436 = vmul.f32 %v413, %v431
    %v437 = vmul.f32 %v414, %v431
    %v438 = vmul.f32 %v415, %v431
    %v439 = vmul.f32 %v416, %v431
    %v440 = vmul.f32 %v417, %v431
    %v441 = vmul.f32 %v418, %v431
    %v442 = vmul.f32 %v419, %v431
    %v443 = vmul.f32 %v420, %v431
    %v444 = vmul.f32 %v421, %v431
    %v445 = vmul.f32 %v422, %v431
    %v446 = vmul.f32 %v423, %v431
    %v447 = vmul.f32 %v424, %v431
    %v448 = vmul.f32 %v425, %v431
    %v449 = vld [vmem:[%s3] sm:$0x1]
    %v451 = vlaneseq
    %v452 = vshrl.u32 %v451, 7
    %v453 = vsub.s32 0, %v452
    %v454 = vrot.slane %v449, %v453
    %v456 = vadd.f32 %v433, %v454
    %v457 = vadd.f32 %v434, %v454
    %v458 = vadd.f32 %v435, %v454
    %v459 = vadd.f32 %v436, %v454
    %v460 = vadd.f32 %v437, %v454
    %v461 = vadd.f32 %v438, %v454
    %v462 = vadd.f32 %v439, %v454
    %v463 = vadd.f32 %v440, %v454
    %v464 = vadd.f32 %v441, %v454
    %v465 = vadd.f32 %v442, %v454
    %v466 = vadd.f32 %v443, %v454
    %v467 = vadd.f32 %v444, %v454
    %v468 = vadd.f32 %v445, %v454
    %v469 = vadd.f32 %v446, %v454
    %v470 = vadd.f32 %v447, %v454
    %v471 = vadd.f32 %v448, %v454
    %v472 = vmax.f32 %v456, 0.0
    %v473 = vmax.f32 %v457, 0.0
    %v474 = vmax.f32 %v458, 0.0
    %v475 = vmax.f32 %v459, 0.0
    %v476 = vmax.f32 %v460, 0.0
    %v477 = vmax.f32 %v461, 0.0
    %v478 = vmax.f32 %v462, 0.0
    %v479 = vmax.f32 %v463, 0.0
    %v480 = vmax.f32 %v464, 0.0
    %v481 = vmax.f32 %v465, 0.0
    %v482 = vmax.f32 %v466, 0.0
    %v483 = vmax.f32 %v467, 0.0
    %v484 = vmax.f32 %v468, 0.0
    %v485 = vmax.f32 %v469, 0.0
    %v486 = vmax.f32 %v470, 0.0
    %v487 = vmax.f32 %v471, 0.0
    %488 = vst [vmem:[%s4] sm:$0xff] %v472
    %489 = vst [vmem:[%s4 + $0x8] sm:$0xff] %v473
    %490 = vst [vmem:[%s4 + $0x10] sm:$0xff] %v474
    %491 = vst [vmem:[%s4 + $0x18] sm:$0xff] %v475
    %492 = vst [vmem:[%s4 + $0x20] sm:$0xff] %v476
    %493 = vst [vmem:[%s4 + $0x28] sm:$0xff] %v477
    %494 = vst [vmem:[%s4 + $0x30] sm:$0xff] %v478
    %495 = vst [vmem:[%s4 + $0x38] sm:$0xff] %v479
    %496 = vst [vmem:[%s4 + $0x40] sm:$0xff] %v480
    %497 = vst [vmem:[%s4 + $0x48] sm:$0xff] %v481
    %498 = vst [vmem:[%s4 + $0x50] sm:$0xff] %v482
    %499 = vst [vmem:[%s4 + $0x58] sm:$0xff] %v483
    %500 = vst [vmem:[%s4 + $0x60] sm:$0xff] %v484
    %501 = vst [vmem:[%s4 + $0x68] sm:$0xff] %v485
    %502 = vst [vmem:[%s4 + $0x70] sm:$0xff] %v486
    %503 = vst [vmem:[%s4 + $0x78] sm:$0xff] %v487
  $region25: #{modified_resnet_fwd.32} parent=0 // pred_fallthru
    _
  // Predicated region
  $region26: #{modified_resnet_fwd.32} parent=0 // pred_check
    _
  $region27: #{modified_resnet_fwd.32} parent=0 // pred_check_branch
    %505 = sbr.rel (0) target = $region29
  $region28: #{modified_resnet_fwd.32} parent=0 // pred_region
    _
  $region29: #{modified_resnet_fwd.32} parent=0 // pred_fallthru
    _
  // Predicated region
  $region30: #{modified_resnet_fwd.32} parent=0 // pred_check
    _
  $region31: #{modified_resnet_fwd.32} parent=0 // pred_check_branch
    %507 = sbr.rel (0) target = $region33
  $region32: #{modified_resnet_fwd.32} parent=0 // pred_region
    _
  $region33: #{modified_resnet_fwd.32} parent=0 // pred_fallthru
    _

// kernel: modified_resnet_fwd.33
$region0: #{modified_resnet_fwd.33}
  #allocation0 [shape = 'u32[]', space=smem, size = 0x4, offset = 0x4, fixed_abs, tag = 'smem constant byte address 0x4 - core index']
  #allocation1 [shape = 'u32[144,128]{1,0:T(1,128)}', space=vmem, size = 0x12000, scoped, tag = 'internal scratch']
  #allocation2 [shape = 'f32[32,128]{1,0:T(8,128)}', space=vmem, size = 0x4000, scoped, tag = 'scratch operand']
  %s0 = inlined_call_operand.vmem [shape: bf16[32,128], index: 0, kind: input, shape index: {}]
  %s1 = inlined_call_operand.vmem [shape: bf16[128,128], index: 1, kind: input, shape index: {}]
  %s2 = inlined_call_operand.vmem [shape: f32[1,128], index: 2, kind: input, shape index: {}]
  %s3 = inlined_call_operand.vmem [shape: f32[1,128], index: 3, kind: input, shape index: {}]
  %s4 = inlined_call_operand.vmem [shape: f32[32,128], index: 4, kind: output, shape index: {}]
  %s5 = sld [smem:[#allocation0]]
  $region34: #{modified_resnet_fwd.33} parent=0
    _
  %s7 = ssub.s32 1, %s5
  %s8 = scalar_select 0, %s7, %s5
  // Predicated region
  $region2: #{modified_resnet_fwd.33} parent=0 // pred_check
    _
  $region3: #{modified_resnet_fwd.33} parent=0 // pred_check_branch
    %10 = sbr.rel (0) target = $region5
  $region4: #{modified_resnet_fwd.33} parent=0 // pred_region
    _
  $region5: #{modified_resnet_fwd.33} parent=0 // pred_fallthru
    _
  // Predicated region
  $region6: #{modified_resnet_fwd.33} parent=0 // pred_check
    _
  $region7: #{modified_resnet_fwd.33} parent=0 // pred_check_branch
    %12 = sbr.rel (0) target = $region9
  $region8: #{modified_resnet_fwd.33} parent=0 // pred_region
    _
  $region9: #{modified_resnet_fwd.33} parent=0 // pred_fallthru
    _
  // Predicated region
  $region10: #{modified_resnet_fwd.33} parent=0 // pred_check
    _
  $region11: #{modified_resnet_fwd.33} parent=0 // pred_check_branch
    %14 = sbr.rel (0) target = $region13
  $region12: #{modified_resnet_fwd.33} parent=0 // pred_region
    _
  $region13: #{modified_resnet_fwd.33} parent=0 // pred_fallthru
    _
  // Predicated region
  $region14: #{modified_resnet_fwd.33} parent=0 // pred_check
    _
  $region15: #{modified_resnet_fwd.33} parent=0 // pred_check_branch
    %16 = sbr.rel (0) target = $region17
  $region16: #{modified_resnet_fwd.33} parent=0 // pred_region
    _
  $region17: #{modified_resnet_fwd.33} parent=0 // pred_fallthru
    _
  %p18 = scmp.eq.s32.totalorder 0, 0
  // Predicated region
  $region18: #{modified_resnet_fwd.33} parent=0 // pred_check
    %p19 = pneg %p18
  $region19: #{modified_resnet_fwd.33} parent=0 // pred_check_branch
    %21 = sbr.rel (%p19) target = $region21
  $region20: #{modified_resnet_fwd.33} parent=0 // pred_region
    %22 = vst [vmem:[#allocation2] sm:$0xff] 0.0
    %23 = vst [vmem:[#allocation2 + $0x8] sm:$0xff] 0.0
    %24 = vst [vmem:[#allocation2 + $0x10] sm:$0xff] 0.0
    %25 = vst [vmem:[#allocation2 + $0x18] sm:$0xff] 0.0
  $region21: #{modified_resnet_fwd.33} parent=0 // pred_fallthru
    _
  %v26 = vld [vmem:[#allocation2] sm:$0xff]
  %v27 = vld [vmem:[#allocation2 + $0x8] sm:$0xff]
  %v28 = vld [vmem:[#allocation2 + $0x10] sm:$0xff]
  %v29 = vld [vmem:[#allocation2 + $0x18] sm:$0xff]
  %v30 = vld [vmem:[%s0] sm:$0xf]
  %v31 = vld [vmem:[%s0 + $0x4] sm:$0xf]
  %v32 = vld [vmem:[%s0 + $0x8] sm:$0xf]
  %v33 = vld [vmem:[%s0 + $0xc] sm:$0xf]
  %v34 = vld [vmem:[%s1] sm:$0xf]
  %v35 = vld [vmem:[%s1 + $0x4] sm:$0xf]
  %v36 = vld [vmem:[%s1 + $0x8] sm:$0xf]
  %v37 = vld [vmem:[%s1 + $0xc] sm:$0xf]
  %v38 = vld [vmem:[%s1 + $0x10] sm:$0xf]
  %v39 = vld [vmem:[%s1 + $0x14] sm:$0xf]
  %v40 = vld [vmem:[%s1 + $0x18] sm:$0xf]
  %v41 = vld [vmem:[%s1 + $0x1c] sm:$0xf]
  %v42 = vld [vmem:[%s1 + $0x20] sm:$0xf]
  %v43 = vld [vmem:[%s1 + $0x24] sm:$0xf]
  %v44 = vld [vmem:[%s1 + $0x28] sm:$0xf]
  %v45 = vld [vmem:[%s1 + $0x2c] sm:$0xf]
  %v46 = vld [vmem:[%s1 + $0x30] sm:$0xf]
  %v47 = vld [vmem:[%s1 + $0x34] sm:$0xf]
  %v48 = vld [vmem:[%s1 + $0x38] sm:$0xf]
  %v49 = vld [vmem:[%s1 + $0x3c] sm:$0xf]
  %v54 = vunpack.c.l.b16 %v30
  %v55 = vunpack.c.l.b16 %v31
  %v56 = vunpack.c.l.b16 %v32
  %v57 = vunpack.c.l.b16 %v33
  %v58 = vpack.c.b16 %v55, %v54
  %v59 = vpack.c.b16 %v57, %v56
  %v78 = vunpack.c.l.b16 %v34
  %v79 = vunpack.c.l.b16 %v35
  %v80 = vunpack.c.l.b16 %v36
  %v81 = vunpack.c.l.b16 %v37
  %v82 = vunpack.c.l.b16 %v38
  %v83 = vunpack.c.l.b16 %v39
  %v84 = vunpack.c.l.b16 %v40
  %v85 = vunpack.c.l.b16 %v41
  %v86 = vunpack.c.l.b16 %v42
  %v87 = vunpack.c.l.b16 %v43
  %v88 = vunpack.c.l.b16 %v44
  %v89 = vunpack.c.l.b16 %v45
  %v90 = vunpack.c.l.b16 %v46
  %v91 = vunpack.c.l.b16 %v47
  %v92 = vunpack.c.l.b16 %v48
  %v93 = vunpack.c.l.b16 %v49
  %v94 = vpack.c.b16 %v79, %v78
  %v95 = vpack.c.b16 %v81, %v80
  %v96 = vpack.c.b16 %v83, %v82
  %v97 = vpack.c.b16 %v85, %v84
  %v98 = vpack.c.b16 %v87, %v86
  %v99 = vpack.c.b16 %v89, %v88
  %v100 = vpack.c.b16 %v91, %v90
  %v101 = vpack.c.b16 %v93, %v92
  %110 = vmatprep.subr.bf16.mxu0 0
  %111 = vmatpush1.bf16.msra.mxu0 %v94
  %112 = vmatprep.subr.bf16.mxu0 0
  %113 = vmatpush1.bf16.msra.mxu0 %v95
  %114 = vmatprep.subr.bf16.mxu0 0
  %115 = vmatpush1.bf16.msra.mxu0 %v96
  %116 = vmatprep.subr.bf16.mxu0 0
  %117 = vmatpush1.bf16.msra.mxu0 %v97
  %118 = vmatprep.subr.bf16.mxu0 0
  %119 = vmatpush1.bf16.msra.mxu0 %v98
  %120 = vmatprep.subr.bf16.mxu0 0
  %121 = vmatpush1.bf16.msra.mxu0 %v99
  %122 = vmatprep.subr.bf16.mxu0 0
  %123 = vmatpush1.bf16.msra.mxu0 %v100
  %124 = vmatprep.subr.bf16.mxu0 0
  %125 = vmatpush1.bf16.msra.mxu0 %v101
  %126 = vmatprep.subr.bf16.mxu0 0
  %127 = vmatpush1.bf16.msra.mxu0 0
  %128 = vmatprep.subr.bf16.mxu0 0
  %129 = vmatpush1.bf16.msra.mxu0 0
  %130 = vmatprep.subr.bf16.mxu0 0
  %131 = vmatpush1.bf16.msra.mxu0 0
  %132 = vmatprep.subr.bf16.mxu0 0
  %133 = vmatpush1.bf16.msra.mxu0 0
  %134 = vmatprep.subr.bf16.mxu0 0
  %135 = vmatpush1.bf16.msra.mxu0 0
  %136 = vmatprep.subr.bf16.mxu0 0
  %137 = vmatpush1.bf16.msra.mxu0 0
  %138 = vmatprep.subr.bf16.mxu0 0
  %139 = vmatpush1.bf16.msra.mxu0 0
  %140 = vmatprep.subr.bf16.mxu0 0
  %141 = vmatpush1.bf16.msra.mxu0 0
  %142 = vmatprep.mubr.bf16.mxu0 0
  %143 = vmatmul.mubr.bf16.gmra.mrb[0].mxu0 %v58
  %v144 = vpop.f32.mrb[0].mxu0
  %v145 = vadd.f32 0.0, %v144
  %v146 = vpop.f32.mrb[0].mxu0
  %v147 = vpop.f32.mrb[0].mxu0
  %v148 = vadd.f32 0.0, %v147
  %v149 = vpop.f32.mrb[0].mxu0
  %150 = vmatprep.mubr.bf16.mxu0 0
  %151 = vmatmul.mubr.bf16.gmra.mrb[0].mxu0 %v59
  %v152 = vpop.f32.mrb[0].mxu0
  %v153 = vadd.f32 0.0, %v152
  %v154 = vpop.f32.mrb[0].mxu0
  %v155 = vpop.f32.mrb[0].mxu0
  %v156 = vadd.f32 0.0, %v155
  %v157 = vpop.f32.mrb[0].mxu0
  %158 = vdwg.mxu0
  %v159 = vadd.f32 %v26, %v145
  %v160 = vadd.f32 %v27, %v148
  %v161 = vadd.f32 %v28, %v153
  %v162 = vadd.f32 %v29, %v156
  %163 = vst [vmem:[#allocation2] sm:$0xff] %v159
  %164 = vst [vmem:[#allocation2 + $0x8] sm:$0xff] %v160
  %165 = vst [vmem:[#allocation2 + $0x10] sm:$0xff] %v161
  %166 = vst [vmem:[#allocation2 + $0x18] sm:$0xff] %v162
  // Predicated region
  $region22: #{modified_resnet_fwd.33} parent=0 // pred_check
    %p167 = pneg %p18
  $region23: #{modified_resnet_fwd.33} parent=0 // pred_check_branch
    %169 = sbr.rel (%p167) target = $region25
  $region24: #{modified_resnet_fwd.33} parent=0 // pred_region
    %v170 = vld [vmem:[#allocation2] sm:$0xff]
    %v171 = vld [vmem:[#allocation2 + $0x8] sm:$0xff]
    %v172 = vld [vmem:[#allocation2 + $0x10] sm:$0xff]
    %v173 = vld [vmem:[#allocation2 + $0x18] sm:$0xff]
    %v174 = vld [vmem:[%s2] sm:$0x1]
    %v176 = vlaneseq
    %v177 = vshrl.u32 %v176, 7
    %v178 = vsub.s32 0, %v177
    %v179 = vrot.slane %v174, %v178
    %v181 = vmul.f32 %v170, %v179
    %v182 = vmul.f32 %v171, %v179
    %v183 = vmul.f32 %v172, %v179
    %v184 = vmul.f32 %v173, %v179
    %v185 = vld [vmem:[%s3] sm:$0x1]
    %v187 = vlaneseq
    %v188 = vshrl.u32 %v187, 7
    %v189 = vsub.s32 0, %v188
    %v190 = vrot.slane %v185, %v189
    %v192 = vadd.f32 %v181, %v190
    %v193 = vadd.f32 %v182, %v190
    %v194 = vadd.f32 %v183, %v190
    %v195 = vadd.f32 %v184, %v190
    %196 = vst [vmem:[%s4] sm:$0xff] %v192
    %197 = vst [vmem:[%s4 + $0x8] sm:$0xff] %v193
    %198 = vst [vmem:[%s4 + $0x10] sm:$0xff] %v194
    %199 = vst [vmem:[%s4 + $0x18] sm:$0xff] %v195
  $region25: #{modified_resnet_fwd.33} parent=0 // pred_fallthru
    _
  // Predicated region
  $region26: #{modified_resnet_fwd.33} parent=0 // pred_check
    _
  $region27: #{modified_resnet_fwd.33} parent=0 // pred_check_branch
    %201 = sbr.rel (0) target = $region29
  $region28: #{modified_resnet_fwd.33} parent=0 // pred_region
    _
  $region29: #{modified_resnet_fwd.33} parent=0 // pred_fallthru
    _
  // Predicated region
  $region30: #{modified_resnet_fwd.33} parent=0 // pred_check
    _
  $region31: #{modified_resnet_fwd.33} parent=0 // pred_check_branch
    %203 = sbr.rel (0) target = $region33
  $region32: #{modified_resnet_fwd.33} parent=0 // pred_region
    _
  $region33: #{modified_resnet_fwd.33} parent=0 // pred_fallthru
    _

// kernel: modified_resnet_fwd.34
$region0: #{modified_resnet_fwd.34}
  #allocation0 [shape = 'u32[]', space=smem, size = 0x4, offset = 0x4, fixed_abs, tag = 'smem constant byte address 0x4 - core index']
  #allocation1 [shape = 'u32[144,128]{1,0:T(1,128)}', space=vmem, size = 0x12000, scoped, tag = 'internal scratch']
  #allocation2 [shape = 'f32[32,128]{1,0:T(8,128)}', space=vmem, size = 0x4000, scoped, tag = 'scratch operand']
  %s0 = inlined_call_operand.vmem [shape: bf16[32,128], index: 0, kind: input, shape index: {}]
  %s1 = inlined_call_operand.vmem [shape: bf16[128,128], index: 1, kind: input, shape index: {}]
  %s2 = inlined_call_operand.vmem [shape: f32[1,128], index: 2, kind: input, shape index: {}]
  %s3 = inlined_call_operand.vmem [shape: f32[1,128], index: 3, kind: input, shape index: {}]
  %s4 = inlined_call_operand.vmem [shape: f32[32,128], index: 4, kind: input, shape index: {}]
  %s5 = inlined_call_operand.vmem [shape: f32[32,128], index: 5, kind: output, shape index: {}]
  %s6 = sld [smem:[#allocation0]]
  $region38: #{modified_resnet_fwd.34} parent=0
    _
  %s8 = ssub.s32 1, %s6
  %s9 = scalar_select 0, %s8, %s6
  // Predicated region
  $region2: #{modified_resnet_fwd.34} parent=0 // pred_check
    _
  $region3: #{modified_resnet_fwd.34} parent=0 // pred_check_branch
    %11 = sbr.rel (0) target = $region5
  $region4: #{modified_resnet_fwd.34} parent=0 // pred_region
    _
  $region5: #{modified_resnet_fwd.34} parent=0 // pred_fallthru
    _
  // Predicated region
  $region6: #{modified_resnet_fwd.34} parent=0 // pred_check
    _
  $region7: #{modified_resnet_fwd.34} parent=0 // pred_check_branch
    %13 = sbr.rel (0) target = $region9
  $region8: #{modified_resnet_fwd.34} parent=0 // pred_region
    _
  $region9: #{modified_resnet_fwd.34} parent=0 // pred_fallthru
    _
  // Predicated region
  $region10: #{modified_resnet_fwd.34} parent=0 // pred_check
    _
  $region11: #{modified_resnet_fwd.34} parent=0 // pred_check_branch
    %15 = sbr.rel (0) target = $region13
  $region12: #{modified_resnet_fwd.34} parent=0 // pred_region
    _
  $region13: #{modified_resnet_fwd.34} parent=0 // pred_fallthru
    _
  // Predicated region
  $region14: #{modified_resnet_fwd.34} parent=0 // pred_check
    _
  $region15: #{modified_resnet_fwd.34} parent=0 // pred_check_branch
    %17 = sbr.rel (0) target = $region17
  $region16: #{modified_resnet_fwd.34} parent=0 // pred_region
    _
  $region17: #{modified_resnet_fwd.34} parent=0 // pred_fallthru
    _
  // Predicated region
  $region18: #{modified_resnet_fwd.34} parent=0 // pred_check
    _
  $region19: #{modified_resnet_fwd.34} parent=0 // pred_check_branch
    %19 = sbr.rel (0) target = $region21
  $region20: #{modified_resnet_fwd.34} parent=0 // pred_region
    _
  $region21: #{modified_resnet_fwd.34} parent=0 // pred_fallthru
    _
  %p21 = scmp.eq.s32.totalorder 0, 0
  // Predicated region
  $region22: #{modified_resnet_fwd.34} parent=0 // pred_check
    %p22 = pneg %p21
  $region23: #{modified_resnet_fwd.34} parent=0 // pred_check_branch
    %24 = sbr.rel (%p22) target = $region25
  $region24: #{modified_resnet_fwd.34} parent=0 // pred_region
    %25 = vst [vmem:[#allocation2] sm:$0xff] 0.0
    %26 = vst [vmem:[#allocation2 + $0x8] sm:$0xff] 0.0
    %27 = vst [vmem:[#allocation2 + $0x10] sm:$0xff] 0.0
    %28 = vst [vmem:[#allocation2 + $0x18] sm:$0xff] 0.0
  $region25: #{modified_resnet_fwd.34} parent=0 // pred_fallthru
    _
  %v29 = vld [vmem:[#allocation2] sm:$0xff]
  %v30 = vld [vmem:[#allocation2 + $0x8] sm:$0xff]
  %v31 = vld [vmem:[#allocation2 + $0x10] sm:$0xff]
  %v32 = vld [vmem:[#allocation2 + $0x18] sm:$0xff]
  %v33 = vld [vmem:[%s0] sm:$0xf]
  %v34 = vld [vmem:[%s0 + $0x4] sm:$0xf]
  %v35 = vld [vmem:[%s0 + $0x8] sm:$0xf]
  %v36 = vld [vmem:[%s0 + $0xc] sm:$0xf]
  %v37 = vld [vmem:[%s1] sm:$0xf]
  %v38 = vld [vmem:[%s1 + $0x4] sm:$0xf]
  %v39 = vld [vmem:[%s1 + $0x8] sm:$0xf]
  %v40 = vld [vmem:[%s1 + $0xc] sm:$0xf]
  %v41 = vld [vmem:[%s1 + $0x10] sm:$0xf]
  %v42 = vld [vmem:[%s1 + $0x14] sm:$0xf]
  %v43 = vld [vmem:[%s1 + $0x18] sm:$0xf]
  %v44 = vld [vmem:[%s1 + $0x1c] sm:$0xf]
  %v45 = vld [vmem:[%s1 + $0x20] sm:$0xf]
  %v46 = vld [vmem:[%s1 + $0x24] sm:$0xf]
  %v47 = vld [vmem:[%s1 + $0x28] sm:$0xf]
  %v48 = vld [vmem:[%s1 + $0x2c] sm:$0xf]
  %v49 = vld [vmem:[%s1 + $0x30] sm:$0xf]
  %v50 = vld [vmem:[%s1 + $0x34] sm:$0xf]
  %v51 = vld [vmem:[%s1 + $0x38] sm:$0xf]
  %v52 = vld [vmem:[%s1 + $0x3c] sm:$0xf]
  %v57 = vunpack.c.l.b16 %v33
  %v58 = vunpack.c.l.b16 %v34
  %v59 = vunpack.c.l.b16 %v35
  %v60 = vunpack.c.l.b16 %v36
  %v61 = vpack.c.b16 %v58, %v57
  %v62 = vpack.c.b16 %v60, %v59
  %v81 = vunpack.c.l.b16 %v37
  %v82 = vunpack.c.l.b16 %v38
  %v83 = vunpack.c.l.b16 %v39
  %v84 = vunpack.c.l.b16 %v40
  %v85 = vunpack.c.l.b16 %v41
  %v86 = vunpack.c.l.b16 %v42
  %v87 = vunpack.c.l.b16 %v43
  %v88 = vunpack.c.l.b16 %v44
  %v89 = vunpack.c.l.b16 %v45
  %v90 = vunpack.c.l.b16 %v46
  %v91 = vunpack.c.l.b16 %v47
  %v92 = vunpack.c.l.b16 %v48
  %v93 = vunpack.c.l.b16 %v49
  %v94 = vunpack.c.l.b16 %v50
  %v95 = vunpack.c.l.b16 %v51
  %v96 = vunpack.c.l.b16 %v52
  %v97 = vpack.c.b16 %v82, %v81
  %v98 = vpack.c.b16 %v84, %v83
  %v99 = vpack.c.b16 %v86, %v85
  %v100 = vpack.c.b16 %v88, %v87
  %v101 = vpack.c.b16 %v90, %v89
  %v102 = vpack.c.b16 %v92, %v91
  %v103 = vpack.c.b16 %v94, %v93
  %v104 = vpack.c.b16 %v96, %v95
  %113 = vmatprep.subr.bf16.mxu0 0
  %114 = vmatpush1.bf16.msra.mxu0 %v97
  %115 = vmatprep.subr.bf16.mxu0 0
  %116 = vmatpush1.bf16.msra.mxu0 %v98
  %117 = vmatprep.subr.bf16.mxu0 0
  %118 = vmatpush1.bf16.msra.mxu0 %v99
  %119 = vmatprep.subr.bf16.mxu0 0
  %120 = vmatpush1.bf16.msra.mxu0 %v100
  %121 = vmatprep.subr.bf16.mxu0 0
  %122 = vmatpush1.bf16.msra.mxu0 %v101
  %123 = vmatprep.subr.bf16.mxu0 0
  %124 = vmatpush1.bf16.msra.mxu0 %v102
  %125 = vmatprep.subr.bf16.mxu0 0
  %126 = vmatpush1.bf16.msra.mxu0 %v103
  %127 = vmatprep.subr.bf16.mxu0 0
  %128 = vmatpush1.bf16.msra.mxu0 %v104
  %129 = vmatprep.subr.bf16.mxu0 0
  %130 = vmatpush1.bf16.msra.mxu0 0
  %131 = vmatprep.subr.bf16.mxu0 0
  %132 = vmatpush1.bf16.msra.mxu0 0
  %133 = vmatprep.subr.bf16.mxu0 0
  %134 = vmatpush1.bf16.msra.mxu0 0
  %135 = vmatprep.subr.bf16.mxu0 0
  %136 = vmatpush1.bf16.msra.mxu0 0
  %137 = vmatprep.subr.bf16.mxu0 0
  %138 = vmatpush1.bf16.msra.mxu0 0
  %139 = vmatprep.subr.bf16.mxu0 0
  %140 = vmatpush1.bf16.msra.mxu0 0
  %141 = vmatprep.subr.bf16.mxu0 0
  %142 = vmatpush1.bf16.msra.mxu0 0
  %143 = vmatprep.subr.bf16.mxu0 0
  %144 = vmatpush1.bf16.msra.mxu0 0
  %145 = vmatprep.mubr.bf16.mxu0 0
  %146 = vmatmul.mubr.bf16.gmra.mrb[0].mxu0 %v61
  %v147 = vpop.f32.mrb[0].mxu0
  %v148 = vadd.f32 0.0, %v147
  %v149 = vpop.f32.mrb[0].mxu0
  %v150 = vpop.f32.mrb[0].mxu0
  %v151 = vadd.f32 0.0, %v150
  %v152 = vpop.f32.mrb[0].mxu0
  %153 = vmatprep.mubr.bf16.mxu0 0
  %154 = vmatmul.mubr.bf16.gmra.mrb[0].mxu0 %v62
  %v155 = vpop.f32.mrb[0].mxu0
  %v156 = vadd.f32 0.0, %v155
  %v157 = vpop.f32.mrb[0].mxu0
  %v158 = vpop.f32.mrb[0].mxu0
  %v159 = vadd.f32 0.0, %v158
  %v160 = vpop.f32.mrb[0].mxu0
  %161 = vdwg.mxu0
  %v162 = vadd.f32 %v29, %v148
  %v163 = vadd.f32 %v30, %v151
  %v164 = vadd.f32 %v31, %v156
  %v165 = vadd.f32 %v32, %v159
  %166 = vst [vmem:[#allocation2] sm:$0xff] %v162
  %167 = vst [vmem:[#allocation2 + $0x8] sm:$0xff] %v163
  %168 = vst [vmem:[#allocation2 + $0x10] sm:$0xff] %v164
  %169 = vst [vmem:[#allocation2 + $0x18] sm:$0xff] %v165
  // Predicated region
  $region26: #{modified_resnet_fwd.34} parent=0 // pred_check
    %p170 = pneg %p21
  $region27: #{modified_resnet_fwd.34} parent=0 // pred_check_branch
    %172 = sbr.rel (%p170) target = $region29
  $region28: #{modified_resnet_fwd.34} parent=0 // pred_region
    %v173 = vld [vmem:[#allocation2] sm:$0xff]
    %v174 = vld [vmem:[#allocation2 + $0x8] sm:$0xff]
    %v175 = vld [vmem:[#allocation2 + $0x10] sm:$0xff]
    %v176 = vld [vmem:[#allocation2 + $0x18] sm:$0xff]
    %v177 = vld [vmem:[%s2] sm:$0x1]
    %v179 = vlaneseq
    %v180 = vshrl.u32 %v179, 7
    %v181 = vsub.s32 0, %v180
    %v182 = vrot.slane %v177, %v181
    %v184 = vmul.f32 %v173, %v182
    %v185 = vmul.f32 %v174, %v182
    %v186 = vmul.f32 %v175, %v182
    %v187 = vmul.f32 %v176, %v182
    %v188 = vld [vmem:[%s3] sm:$0x1]
    %v190 = vlaneseq
    %v191 = vshrl.u32 %v190, 7
    %v192 = vsub.s32 0, %v191
    %v193 = vrot.slane %v188, %v192
    %v195 = vadd.f32 %v184, %v193
    %v196 = vadd.f32 %v185, %v193
    %v197 = vadd.f32 %v186, %v193
    %v198 = vadd.f32 %v187, %v193
    %v199 = vld [vmem:[%s4] sm:$0xff]
    %v200 = vld [vmem:[%s4 + $0x8] sm:$0xff]
    %v201 = vld [vmem:[%s4 + $0x10] sm:$0xff]
    %v202 = vld [vmem:[%s4 + $0x18] sm:$0xff]
    %v203 = vadd.f32 %v195, %v199
    %v204 = vadd.f32 %v196, %v200
    %v205 = vadd.f32 %v197, %v201
    %v206 = vadd.f32 %v198, %v202
    %v207 = vmax.f32 %v203, 0.0
    %v208 = vmax.f32 %v204, 0.0
    %v209 = vmax.f32 %v205, 0.0
    %v210 = vmax.f32 %v206, 0.0
    %211 = vst [vmem:[%s5] sm:$0xff] %v207
    %212 = vst [vmem:[%s5 + $0x8] sm:$0xff] %v208
    %213 = vst [vmem:[%s5 + $0x10] sm:$0xff] %v209
    %214 = vst [vmem:[%s5 + $0x18] sm:$0xff] %v210
  $region29: #{modified_resnet_fwd.34} parent=0 // pred_fallthru
    _
  // Predicated region
  $region30: #{modified_resnet_fwd.34} parent=0 // pred_check
    _
  $region31: #{modified_resnet_fwd.34} parent=0 // pred_check_branch
    %216 = sbr.rel (0) target = $region33
  $region32: #{modified_resnet_fwd.34} parent=0 // pred_region
    _
  $region33: #{modified_resnet_fwd.34} parent=0 // pred_fallthru
    _
  // Predicated region
  $region34: #{modified_resnet_fwd.34} parent=0 // pred_check
    _
  $region35: #{modified_resnet_fwd.34} parent=0 // pred_check_branch
    %218 = sbr.rel (0) target = $region37
  $region36: #{modified_resnet_fwd.34} parent=0 // pred_region
    _
  $region37: #{modified_resnet_fwd.34} parent=0 // pred_fallthru
    _

// kernel: modified_resnet_fwd.35
$region0: #{modified_resnet_fwd.35}
  #allocation0 [shape = 'u32[]', space=smem, size = 0x4, offset = 0x4, fixed_abs, tag = 'smem constant byte address 0x4 - core index']
  #allocation1 [shape = 'u32[144,128]{1,0:T(1,128)}', space=vmem, size = 0x12000, scoped, tag = 'internal scratch']
  #allocation2 [shape = 'f32[32,128]{1,0:T(8,128)}', space=vmem, size = 0x4000, scoped, tag = 'scratch operand']
  %s0 = inlined_call_operand.vmem [shape: bf16[32,128], index: 0, kind: input, shape index: {}]
  %s1 = inlined_call_operand.vmem [shape: bf16[128,128], index: 1, kind: input, shape index: {}]
  %s2 = inlined_call_operand.vmem [shape: f32[1,128], index: 2, kind: input, shape index: {}]
  %s3 = inlined_call_operand.vmem [shape: f32[1,128], index: 3, kind: input, shape index: {}]
  %s4 = inlined_call_operand.vmem [shape: f32[32,128], index: 4, kind: output, shape index: {}]
  %s5 = sld [smem:[#allocation0]]
  $region34: #{modified_resnet_fwd.35} parent=0
    _
  %s7 = ssub.s32 1, %s5
  %s8 = scalar_select 0, %s7, %s5
  // Predicated region
  $region2: #{modified_resnet_fwd.35} parent=0 // pred_check
    _
  $region3: #{modified_resnet_fwd.35} parent=0 // pred_check_branch
    %10 = sbr.rel (0) target = $region5
  $region4: #{modified_resnet_fwd.35} parent=0 // pred_region
    _
  $region5: #{modified_resnet_fwd.35} parent=0 // pred_fallthru
    _
  // Predicated region
  $region6: #{modified_resnet_fwd.35} parent=0 // pred_check
    _
  $region7: #{modified_resnet_fwd.35} parent=0 // pred_check_branch
    %12 = sbr.rel (0) target = $region9
  $region8: #{modified_resnet_fwd.35} parent=0 // pred_region
    _
  $region9: #{modified_resnet_fwd.35} parent=0 // pred_fallthru
    _
  // Predicated region
  $region10: #{modified_resnet_fwd.35} parent=0 // pred_check
    _
  $region11: #{modified_resnet_fwd.35} parent=0 // pred_check_branch
    %14 = sbr.rel (0) target = $region13
  $region12: #{modified_resnet_fwd.35} parent=0 // pred_region
    _
  $region13: #{modified_resnet_fwd.35} parent=0 // pred_fallthru
    _
  // Predicated region
  $region14: #{modified_resnet_fwd.35} parent=0 // pred_check
    _
  $region15: #{modified_resnet_fwd.35} parent=0 // pred_check_branch
    %16 = sbr.rel (0) target = $region17
  $region16: #{modified_resnet_fwd.35} parent=0 // pred_region
    _
  $region17: #{modified_resnet_fwd.35} parent=0 // pred_fallthru
    _
  %p18 = scmp.eq.s32.totalorder 0, 0
  // Predicated region
  $region18: #{modified_resnet_fwd.35} parent=0 // pred_check
    %p19 = pneg %p18
  $region19: #{modified_resnet_fwd.35} parent=0 // pred_check_branch
    %21 = sbr.rel (%p19) target = $region21
  $region20: #{modified_resnet_fwd.35} parent=0 // pred_region
    %22 = vst [vmem:[#allocation2] sm:$0xff] 0.0
    %23 = vst [vmem:[#allocation2 + $0x8] sm:$0xff] 0.0
    %24 = vst [vmem:[#allocation2 + $0x10] sm:$0xff] 0.0
    %25 = vst [vmem:[#allocation2 + $0x18] sm:$0xff] 0.0
  $region21: #{modified_resnet_fwd.35} parent=0 // pred_fallthru
    _
  %v26 = vld [vmem:[#allocation2] sm:$0xff]
  %v27 = vld [vmem:[#allocation2 + $0x8] sm:$0xff]
  %v28 = vld [vmem:[#allocation2 + $0x10] sm:$0xff]
  %v29 = vld [vmem:[#allocation2 + $0x18] sm:$0xff]
  %v30 = vld [vmem:[%s0] sm:$0xf]
  %v31 = vld [vmem:[%s0 + $0x4] sm:$0xf]
  %v32 = vld [vmem:[%s0 + $0x8] sm:$0xf]
  %v33 = vld [vmem:[%s0 + $0xc] sm:$0xf]
  %v34 = vld [vmem:[%s1] sm:$0xf]
  %v35 = vld [vmem:[%s1 + $0x4] sm:$0xf]
  %v36 = vld [vmem:[%s1 + $0x8] sm:$0xf]
  %v37 = vld [vmem:[%s1 + $0xc] sm:$0xf]
  %v38 = vld [vmem:[%s1 + $0x10] sm:$0xf]
  %v39 = vld [vmem:[%s1 + $0x14] sm:$0xf]
  %v40 = vld [vmem:[%s1 + $0x18] sm:$0xf]
  %v41 = vld [vmem:[%s1 + $0x1c] sm:$0xf]
  %v42 = vld [vmem:[%s1 + $0x20] sm:$0xf]
  %v43 = vld [vmem:[%s1 + $0x24] sm:$0xf]
  %v44 = vld [vmem:[%s1 + $0x28] sm:$0xf]
  %v45 = vld [vmem:[%s1 + $0x2c] sm:$0xf]
  %v46 = vld [vmem:[%s1 + $0x30] sm:$0xf]
  %v47 = vld [vmem:[%s1 + $0x34] sm:$0xf]
  %v48 = vld [vmem:[%s1 + $0x38] sm:$0xf]
  %v49 = vld [vmem:[%s1 + $0x3c] sm:$0xf]
  %v54 = vunpack.c.l.b16 %v30
  %v55 = vunpack.c.l.b16 %v31
  %v56 = vunpack.c.l.b16 %v32
  %v57 = vunpack.c.l.b16 %v33
  %v58 = vpack.c.b16 %v55, %v54
  %v59 = vpack.c.b16 %v57, %v56
  %v78 = vunpack.c.l.b16 %v34
  %v79 = vunpack.c.l.b16 %v35
  %v80 = vunpack.c.l.b16 %v36
  %v81 = vunpack.c.l.b16 %v37
  %v82 = vunpack.c.l.b16 %v38
  %v83 = vunpack.c.l.b16 %v39
  %v84 = vunpack.c.l.b16 %v40
  %v85 = vunpack.c.l.b16 %v41
  %v86 = vunpack.c.l.b16 %v42
  %v87 = vunpack.c.l.b16 %v43
  %v88 = vunpack.c.l.b16 %v44
  %v89 = vunpack.c.l.b16 %v45
  %v90 = vunpack.c.l.b16 %v46
  %v91 = vunpack.c.l.b16 %v47
  %v92 = vunpack.c.l.b16 %v48
  %v93 = vunpack.c.l.b16 %v49
  %v94 = vpack.c.b16 %v79, %v78
  %v95 = vpack.c.b16 %v81, %v80
  %v96 = vpack.c.b16 %v83, %v82
  %v97 = vpack.c.b16 %v85, %v84
  %v98 = vpack.c.b16 %v87, %v86
  %v99 = vpack.c.b16 %v89, %v88
  %v100 = vpack.c.b16 %v91, %v90
  %v101 = vpack.c.b16 %v93, %v92
  %110 = vmatprep.subr.bf16.mxu0 0
  %111 = vmatpush1.bf16.msra.mxu0 %v94
  %112 = vmatprep.subr.bf16.mxu0 0
  %113 = vmatpush1.bf16.msra.mxu0 %v95
  %114 = vmatprep.subr.bf16.mxu0 0
  %115 = vmatpush1.bf16.msra.mxu0 %v96
  %116 = vmatprep.subr.bf16.mxu0 0
  %117 = vmatpush1.bf16.msra.mxu0 %v97
  %118 = vmatprep.subr.bf16.mxu0 0
  %119 = vmatpush1.bf16.msra.mxu0 %v98
  %120 = vmatprep.subr.bf16.mxu0 0
  %121 = vmatpush1.bf16.msra.mxu0 %v99
  %122 = vmatprep.subr.bf16.mxu0 0
  %123 = vmatpush1.bf16.msra.mxu0 %v100
  %124 = vmatprep.subr.bf16.mxu0 0
  %125 = vmatpush1.bf16.msra.mxu0 %v101
  %126 = vmatprep.subr.bf16.mxu0 0
  %127 = vmatpush1.bf16.msra.mxu0 0
  %128 = vmatprep.subr.bf16.mxu0 0
  %129 = vmatpush1.bf16.msra.mxu0 0
  %130 = vmatprep.subr.bf16.mxu0 0
  %131 = vmatpush1.bf16.msra.mxu0 0
  %132 = vmatprep.subr.bf16.mxu0 0
  %133 = vmatpush1.bf16.msra.mxu0 0
  %134 = vmatprep.subr.bf16.mxu0 0
  %135 = vmatpush1.bf16.msra.mxu0 0
  %136 = vmatprep.subr.bf16.mxu0 0
  %137 = vmatpush1.bf16.msra.mxu0 0
  %138 = vmatprep.subr.bf16.mxu0 0
  %139 = vmatpush1.bf16.msra.mxu0 0
  %140 = vmatprep.subr.bf16.mxu0 0
  %141 = vmatpush1.bf16.msra.mxu0 0
  %142 = vmatprep.mubr.bf16.mxu0 0
  %143 = vmatmul.mubr.bf16.gmra.mrb[0].mxu0 %v58
  %v144 = vpop.f32.mrb[0].mxu0
  %v145 = vadd.f32 0.0, %v144
  %v146 = vpop.f32.mrb[0].mxu0
  %v147 = vpop.f32.mrb[0].mxu0
  %v148 = vadd.f32 0.0, %v147
  %v149 = vpop.f32.mrb[0].mxu0
  %150 = vmatprep.mubr.bf16.mxu0 0
  %151 = vmatmul.mubr.bf16.gmra.mrb[0].mxu0 %v59
  %v152 = vpop.f32.mrb[0].mxu0
  %v153 = vadd.f32 0.0, %v152
  %v154 = vpop.f32.mrb[0].mxu0
  %v155 = vpop.f32.mrb[0].mxu0
  %v156 = vadd.f32 0.0, %v155
  %v157 = vpop.f32.mrb[0].mxu0
  %158 = vdwg.mxu0
  %v159 = vadd.f32 %v26, %v145
  %v160 = vadd.f32 %v27, %v148
  %v161 = vadd.f32 %v28, %v153
  %v162 = vadd.f32 %v29, %v156
  %163 = vst [vmem:[#allocation2] sm:$0xff] %v159
  %164 = vst [vmem:[#allocation2 + $0x8] sm:$0xff] %v160
  %165 = vst [vmem:[#allocation2 + $0x10] sm:$0xff] %v161
  %166 = vst [vmem:[#allocation2 + $0x18] sm:$0xff] %v162
  // Predicated region
  $region22: #{modified_resnet_fwd.35} parent=0 // pred_check
    %p167 = pneg %p18
  $region23: #{modified_resnet_fwd.35} parent=0 // pred_check_branch
    %169 = sbr.rel (%p167) target = $region25
  $region24: #{modified_resnet_fwd.35} parent=0 // pred_region
    %v170 = vld [vmem:[#allocation2] sm:$0xff]
    %v171 = vld [vmem:[#allocation2 + $0x8] sm:$0xff]
    %v172 = vld [vmem:[#allocation2 + $0x10] sm:$0xff]
    %v173 = vld [vmem:[#allocation2 + $0x18] sm:$0xff]
    %v174 = vld [vmem:[%s2] sm:$0x1]
    %v176 = vlaneseq
    %v177 = vshrl.u32 %v176, 7
    %v178 = vsub.s32 0, %v177
    %v179 = vrot.slane %v174, %v178
    %v181 = vmul.f32 %v170, %v179
    %v182 = vmul.f32 %v171, %v179
    %v183 = vmul.f32 %v172, %v179
    %v184 = vmul.f32 %v173, %v179
    %v185 = vld [vmem:[%s3] sm:$0x1]
    %v187 = vlaneseq
    %v188 = vshrl.u32 %v187, 7
    %v189 = vsub.s32 0, %v188
    %v190 = vrot.slane %v185, %v189
    %v192 = vadd.f32 %v181, %v190
    %v193 = vadd.f32 %v182, %v190
    %v194 = vadd.f32 %v183, %v190
    %v195 = vadd.f32 %v184, %v190
    %v196 = vmax.f32 %v192, 0.0
    %v197 = vmax.f32 %v193, 0.0
    %v198 = vmax.f32 %v194, 0.0
    %v199 = vmax.f32 %v195, 0.0
    %200 = vst [vmem:[%s4] sm:$0xff] %v196
    %201 = vst [vmem:[%s4 + $0x8] sm:$0xff] %v197
    %202 = vst [vmem:[%s4 + $0x10] sm:$0xff] %v198
    %203 = vst [vmem:[%s4 + $0x18] sm:$0xff] %v199
  $region25: #{modified_resnet_fwd.35} parent=0 // pred_fallthru
    _
  // Predicated region
  $region26: #{modified_resnet_fwd.35} parent=0 // pred_check
    _
  $region27: #{modified_resnet_fwd.35} parent=0 // pred_check_branch
    %205 = sbr.rel (0) target = $region29
  $region28: #{modified_resnet_fwd.35} parent=0 // pred_region
    _
  $region29: #{modified_resnet_fwd.35} parent=0 // pred_fallthru
    _
  // Predicated region
  $region30: #{modified_resnet_fwd.35} parent=0 // pred_check
    _
  $region31: #{modified_resnet_fwd.35} parent=0 // pred_check_branch
    %207 = sbr.rel (0) target = $region33
  $region32: #{modified_resnet_fwd.35} parent=0 // pred_region
    _
  $region33: #{modified_resnet_fwd.35} parent=0 // pred_fallthru
    _

// kernel: modified_resnet_fwd.36
$region0: #{modified_resnet_fwd.36}
  #allocation0 [shape = 'u32[]', space=smem, size = 0x4, offset = 0x4, fixed_abs, tag = 'smem constant byte address 0x4 - core index']
  #allocation1 [shape = 'u32[144,128]{1,0:T(1,128)}', space=vmem, size = 0x12000, scoped, tag = 'internal scratch']
  #allocation2 [shape = 'f32[32,128]{1,0:T(8,128)}', space=vmem, size = 0x4000, scoped, tag = 'scratch operand']
  %s0 = inlined_call_operand.vmem [shape: bf16[32,384], index: 0, kind: input, shape index: {}]
  %s1 = inlined_call_operand.vmem [shape: bf16[384,128], index: 1, kind: input, shape index: {}]
  %s2 = inlined_call_operand.vmem [shape: f32[1,128], index: 2, kind: input, shape index: {}]
  %s3 = inlined_call_operand.vmem [shape: f32[1,128], index: 3, kind: input, shape index: {}]
  %s4 = inlined_call_operand.vmem [shape: f32[32,128], index: 4, kind: output, shape index: {}]
  %s5 = sld [smem:[#allocation0]]
  $region34: #{modified_resnet_fwd.36} parent=0
    _
  %s7 = ssub.s32 1, %s5
  %s8 = scalar_select 0, %s7, %s5
  // Predicated region
  $region2: #{modified_resnet_fwd.36} parent=0 // pred_check
    _
  $region3: #{modified_resnet_fwd.36} parent=0 // pred_check_branch
    %10 = sbr.rel (0) target = $region5
  $region4: #{modified_resnet_fwd.36} parent=0 // pred_region
    _
  $region5: #{modified_resnet_fwd.36} parent=0 // pred_fallthru
    _
  // Predicated region
  $region6: #{modified_resnet_fwd.36} parent=0 // pred_check
    _
  $region7: #{modified_resnet_fwd.36} parent=0 // pred_check_branch
    %12 = sbr.rel (0) target = $region9
  $region8: #{modified_resnet_fwd.36} parent=0 // pred_region
    _
  $region9: #{modified_resnet_fwd.36} parent=0 // pred_fallthru
    _
  // Predicated region
  $region10: #{modified_resnet_fwd.36} parent=0 // pred_check
    _
  $region11: #{modified_resnet_fwd.36} parent=0 // pred_check_branch
    %14 = sbr.rel (0) target = $region13
  $region12: #{modified_resnet_fwd.36} parent=0 // pred_region
    _
  $region13: #{modified_resnet_fwd.36} parent=0 // pred_fallthru
    _
  // Predicated region
  $region14: #{modified_resnet_fwd.36} parent=0 // pred_check
    _
  $region15: #{modified_resnet_fwd.36} parent=0 // pred_check_branch
    %16 = sbr.rel (0) target = $region17
  $region16: #{modified_resnet_fwd.36} parent=0 // pred_region
    _
  $region17: #{modified_resnet_fwd.36} parent=0 // pred_fallthru
    _
  %p18 = scmp.eq.s32.totalorder 0, 0
  // Predicated region
  $region18: #{modified_resnet_fwd.36} parent=0 // pred_check
    %p19 = pneg %p18
  $region19: #{modified_resnet_fwd.36} parent=0 // pred_check_branch
    %21 = sbr.rel (%p19) target = $region21
  $region20: #{modified_resnet_fwd.36} parent=0 // pred_region
    %22 = vst [vmem:[#allocation2] sm:$0xff] 0.0
    %23 = vst [vmem:[#allocation2 + $0x8] sm:$0xff] 0.0
    %24 = vst [vmem:[#allocation2 + $0x10] sm:$0xff] 0.0
    %25 = vst [vmem:[#allocation2 + $0x18] sm:$0xff] 0.0
  $region21: #{modified_resnet_fwd.36} parent=0 // pred_fallthru
    _
  %v26 = vld [vmem:[#allocation2] sm:$0xff]
  %v27 = vld [vmem:[#allocation2 + $0x8] sm:$0xff]
  %v28 = vld [vmem:[#allocation2 + $0x10] sm:$0xff]
  %v29 = vld [vmem:[#allocation2 + $0x18] sm:$0xff]
  %v30 = vld [vmem:[%s0] sm:$0xff]
  %v31 = vld [vmem:[%s0 + $0x8] sm:$0xf]
  %v32 = vld [vmem:[%s0 + $0xc] sm:$0xff]
  %v33 = vld [vmem:[%s0 + $0x14] sm:$0xf]
  %v34 = vld [vmem:[%s0 + $0x18] sm:$0xff]
  %v35 = vld [vmem:[%s0 + $0x20] sm:$0xf]
  %v36 = vld [vmem:[%s0 + $0x24] sm:$0xff]
  %v37 = vld [vmem:[%s0 + $0x2c] sm:$0xf]
  %v38 = vld [vmem:[%s1] sm:$0xf]
  %v39 = vld [vmem:[%s1 + $0x4] sm:$0xf]
  %v40 = vld [vmem:[%s1 + $0x8] sm:$0xf]
  %v41 = vld [vmem:[%s1 + $0xc] sm:$0xf]
  %v42 = vld [vmem:[%s1 + $0x10] sm:$0xf]
  %v43 = vld [vmem:[%s1 + $0x14] sm:$0xf]
  %v44 = vld [vmem:[%s1 + $0x18] sm:$0xf]
  %v45 = vld [vmem:[%s1 + $0x1c] sm:$0xf]
  %v46 = vld [vmem:[%s1 + $0x20] sm:$0xf]
  %v47 = vld [vmem:[%s1 + $0x24] sm:$0xf]
  %v48 = vld [vmem:[%s1 + $0x28] sm:$0xf]
  %v49 = vld [vmem:[%s1 + $0x2c] sm:$0xf]
  %v50 = vld [vmem:[%s1 + $0x30] sm:$0xf]
  %v51 = vld [vmem:[%s1 + $0x34] sm:$0xf]
  %v52 = vld [vmem:[%s1 + $0x38] sm:$0xf]
  %v53 = vld [vmem:[%s1 + $0x3c] sm:$0xf]
  %v54 = vld [vmem:[%s1 + $0x40] sm:$0xf]
  %v55 = vld [vmem:[%s1 + $0x44] sm:$0xf]
  %v56 = vld [vmem:[%s1 + $0x48] sm:$0xf]
  %v57 = vld [vmem:[%s1 + $0x4c] sm:$0xf]
  %v58 = vld [vmem:[%s1 + $0x50] sm:$0xf]
  %v59 = vld [vmem:[%s1 + $0x54] sm:$0xf]
  %v60 = vld [vmem:[%s1 + $0x58] sm:$0xf]
  %v61 = vld [vmem:[%s1 + $0x5c] sm:$0xf]
  %v62 = vld [vmem:[%s1 + $0x60] sm:$0xf]
  %v63 = vld [vmem:[%s1 + $0x64] sm:$0xf]
  %v64 = vld [vmem:[%s1 + $0x68] sm:$0xf]
  %v65 = vld [vmem:[%s1 + $0x6c] sm:$0xf]
  %v66 = vld [vmem:[%s1 + $0x70] sm:$0xf]
  %v67 = vld [vmem:[%s1 + $0x74] sm:$0xf]
  %v68 = vld [vmem:[%s1 + $0x78] sm:$0xf]
  %v69 = vld [vmem:[%s1 + $0x7c] sm:$0xf]
  %v70 = vld [vmem:[%s1 + $0x80] sm:$0xf]
  %v71 = vld [vmem:[%s1 + $0x84] sm:$0xf]
  %v72 = vld [vmem:[%s1 + $0x88] sm:$0xf]
  %v73 = vld [vmem:[%s1 + $0x8c] sm:$0xf]
  %v74 = vld [vmem:[%s1 + $0x90] sm:$0xf]
  %v75 = vld [vmem:[%s1 + $0x94] sm:$0xf]
  %v76 = vld [vmem:[%s1 + $0x98] sm:$0xf]
  %v77 = vld [vmem:[%s1 + $0x9c] sm:$0xf]
  %v78 = vld [vmem:[%s1 + $0xa0] sm:$0xf]
  %v79 = vld [vmem:[%s1 + $0xa4] sm:$0xf]
  %v80 = vld [vmem:[%s1 + $0xa8] sm:$0xf]
  %v81 = vld [vmem:[%s1 + $0xac] sm:$0xf]
  %v82 = vld [vmem:[%s1 + $0xb0] sm:$0xf]
  %v83 = vld [vmem:[%s1 + $0xb4] sm:$0xf]
  %v84 = vld [vmem:[%s1 + $0xb8] sm:$0xf]
  %v85 = vld [vmem:[%s1 + $0xbc] sm:$0xf]
  %v94 = vunpack.c.l.b16 %v30
  %v95 = vunpack.c.h.b16 %v30
  %v96 = vunpack.c.l.b16 %v31
  %v97 = vunpack.c.l.b16 %v32
  %v98 = vunpack.c.h.b16 %v32
  %v99 = vunpack.c.l.b16 %v33
  %v100 = vunpack.c.l.b16 %v34
  %v101 = vunpack.c.h.b16 %v34
  %v102 = vunpack.c.l.b16 %v35
  %v103 = vunpack.c.l.b16 %v36
  %v104 = vunpack.c.h.b16 %v36
  %v105 = vunpack.c.l.b16 %v37
  %v106 = vpack.c.b16 %v97, %v94
  %v107 = vpack.c.b16 %v98, %v95
  %v108 = vpack.c.b16 %v99, %v96
  %v109 = vpack.c.b16 %v103, %v100
  %v110 = vpack.c.b16 %v104, %v101
  %v111 = vpack.c.b16 %v105, %v102
  %v166 = vunpack.c.l.b16 %v38
  %v167 = vunpack.c.l.b16 %v39
  %v168 = vunpack.c.l.b16 %v40
  %v169 = vunpack.c.l.b16 %v41
  %v170 = vunpack.c.l.b16 %v42
  %v171 = vunpack.c.l.b16 %v43
  %v172 = vunpack.c.l.b16 %v44
  %v173 = vunpack.c.l.b16 %v45
  %v174 = vunpack.c.l.b16 %v46
  %v175 = vunpack.c.l.b16 %v47
  %v176 = vunpack.c.l.b16 %v48
  %v177 = vunpack.c.l.b16 %v49
  %v178 = vunpack.c.l.b16 %v50
  %v179 = vunpack.c.l.b16 %v51
  %v180 = vunpack.c.l.b16 %v52
  %v181 = vunpack.c.l.b16 %v53
  %v182 = vunpack.c.l.b16 %v54
  %v183 = vunpack.c.l.b16 %v55
  %v184 = vunpack.c.l.b16 %v56
  %v185 = vunpack.c.l.b16 %v57
  %v186 = vunpack.c.l.b16 %v58
  %v187 = vunpack.c.l.b16 %v59
  %v188 = vunpack.c.l.b16 %v60
  %v189 = vunpack.c.l.b16 %v61
  %v190 = vunpack.c.l.b16 %v62
  %v191 = vunpack.c.l.b16 %v63
  %v192 = vunpack.c.l.b16 %v64
  %v193 = vunpack.c.l.b16 %v65
  %v194 = vunpack.c.l.b16 %v66
  %v195 = vunpack.c.l.b16 %v67
  %v196 = vunpack.c.l.b16 %v68
  %v197 = vunpack.c.l.b16 %v69
  %v198 = vunpack.c.l.b16 %v70
  %v199 = vunpack.c.l.b16 %v71
  %v200 = vunpack.c.l.b16 %v72
  %v201 = vunpack.c.l.b16 %v73
  %v202 = vunpack.c.l.b16 %v74
  %v203 = vunpack.c.l.b16 %v75
  %v204 = vunpack.c.l.b16 %v76
  %v205 = vunpack.c.l.b16 %v77
  %v206 = vunpack.c.l.b16 %v78
  %v207 = vunpack.c.l.b16 %v79
  %v208 = vunpack.c.l.b16 %v80
  %v209 = vunpack.c.l.b16 %v81
  %v210 = vunpack.c.l.b16 %v82
  %v211 = vunpack.c.l.b16 %v83
  %v212 = vunpack.c.l.b16 %v84
  %v213 = vunpack.c.l.b16 %v85
  %v214 = vpack.c.b16 %v167, %v166
  %v215 = vpack.c.b16 %v169, %v168
  %v216 = vpack.c.b16 %v171, %v170
  %v217 = vpack.c.b16 %v173, %v172
  %v218 = vpack.c.b16 %v175, %v174
  %v219 = vpack.c.b16 %v177, %v176
  %v220 = vpack.c.b16 %v179, %v178
  %v221 = vpack.c.b16 %v181, %v180
  %v222 = vpack.c.b16 %v183, %v182
  %v223 = vpack.c.b16 %v185, %v184
  %v224 = vpack.c.b16 %v187, %v186
  %v225 = vpack.c.b16 %v189, %v188
  %v226 = vpack.c.b16 %v191, %v190
  %v227 = vpack.c.b16 %v193, %v192
  %v228 = vpack.c.b16 %v195, %v194
  %v229 = vpack.c.b16 %v197, %v196
  %v230 = vpack.c.b16 %v199, %v198
  %v231 = vpack.c.b16 %v201, %v200
  %v232 = vpack.c.b16 %v203, %v202
  %v233 = vpack.c.b16 %v205, %v204
  %v234 = vpack.c.b16 %v207, %v206
  %v235 = vpack.c.b16 %v209, %v208
  %v236 = vpack.c.b16 %v211, %v210
  %v237 = vpack.c.b16 %v213, %v212
  %262 = vmatprep.subr.bf16.mxu0 0
  %263 = vmatpush1.bf16.msra.mxu0 %v214
  %264 = vmatprep.subr.bf16.mxu0 0
  %265 = vmatpush1.bf16.msra.mxu0 %v215
  %266 = vmatprep.subr.bf16.mxu0 0
  %267 = vmatpush1.bf16.msra.mxu0 %v216
  %268 = vmatprep.subr.bf16.mxu0 0
  %269 = vmatpush1.bf16.msra.mxu0 %v217
  %270 = vmatprep.subr.bf16.mxu0 0
  %271 = vmatpush1.bf16.msra.mxu0 %v218
  %272 = vmatprep.subr.bf16.mxu0 0
  %273 = vmatpush1.bf16.msra.mxu0 %v219
  %274 = vmatprep.subr.bf16.mxu0 0
  %275 = vmatpush1.bf16.msra.mxu0 %v220
  %276 = vmatprep.subr.bf16.mxu0 0
  %277 = vmatpush1.bf16.msra.mxu0 %v221
  %278 = vmatprep.subr.bf16.mxu0 0
  %279 = vmatpush1.bf16.msra.mxu0 %v222
  %280 = vmatprep.subr.bf16.mxu0 0
  %281 = vmatpush1.bf16.msra.mxu0 %v223
  %282 = vmatprep.subr.bf16.mxu0 0
  %283 = vmatpush1.bf16.msra.mxu0 %v224
  %284 = vmatprep.subr.bf16.mxu0 0
  %285 = vmatpush1.bf16.msra.mxu0 %v225
  %286 = vmatprep.subr.bf16.mxu0 0
  %287 = vmatpush1.bf16.msra.mxu0 %v226
  %288 = vmatprep.subr.bf16.mxu0 0
  %289 = vmatpush1.bf16.msra.mxu0 %v227
  %290 = vmatprep.subr.bf16.mxu0 0
  %291 = vmatpush1.bf16.msra.mxu0 %v228
  %292 = vmatprep.subr.bf16.mxu0 0
  %293 = vmatpush1.bf16.msra.mxu0 %v229
  %294 = vmatprep.mubr.bf16.mxu0 %v107
  %295 = vmatmul.mubr.bf16.gmra.mrb[0].mxu0 %v106
  %v296 = vpop.f32.mrb[0].mxu0
  %v297 = vadd.f32 0.0, %v296
  %v298 = vpop.f32.mrb[0].mxu0
  %v299 = vpop.f32.mrb[0].mxu0
  %v300 = vadd.f32 0.0, %v299
  %v301 = vpop.f32.mrb[0].mxu0
  %302 = vmatprep.mubr.bf16.mxu0 %v110
  %303 = vmatmul.mubr.bf16.gmra.mrb[0].mxu0 %v109
  %v304 = vpop.f32.mrb[0].mxu0
  %v305 = vadd.f32 0.0, %v304
  %v306 = vpop.f32.mrb[0].mxu0
  %v307 = vpop.f32.mrb[0].mxu0
  %v308 = vadd.f32 0.0, %v307
  %v309 = vpop.f32.mrb[0].mxu0
  %310 = vdwg.mxu0
  %311 = vmatprep.subr.bf16.mxu0 0
  %312 = vmatpush1.bf16.msra.mxu0 %v230
  %313 = vmatprep.subr.bf16.mxu0 0
  %314 = vmatpush1.bf16.msra.mxu0 %v231
  %315 = vmatprep.subr.bf16.mxu0 0
  %316 = vmatpush1.bf16.msra.mxu0 %v232
  %317 = vmatprep.subr.bf16.mxu0 0
  %318 = vmatpush1.bf16.msra.mxu0 %v233
  %319 = vmatprep.subr.bf16.mxu0 0
  %320 = vmatpush1.bf16.msra.mxu0 %v234
  %321 = vmatprep.subr.bf16.mxu0 0
  %322 = vmatpush1.bf16.msra.mxu0 %v235
  %323 = vmatprep.subr.bf16.mxu0 0
  %324 = vmatpush1.bf16.msra.mxu0 %v236
  %325 = vmatprep.subr.bf16.mxu0 0
  %326 = vmatpush1.bf16.msra.mxu0 %v237
  %327 = vmatprep.subr.bf16.mxu0 0
  %328 = vmatpush1.bf16.msra.mxu0 0
  %329 = vmatprep.subr.bf16.mxu0 0
  %330 = vmatpush1.bf16.msra.mxu0 0
  %331 = vmatprep.subr.bf16.mxu0 0
  %332 = vmatpush1.bf16.msra.mxu0 0
  %333 = vmatprep.subr.bf16.mxu0 0
  %334 = vmatpush1.bf16.msra.mxu0 0
  %335 = vmatprep.subr.bf16.mxu0 0
  %336 = vmatpush1.bf16.msra.mxu0 0
  %337 = vmatprep.subr.bf16.mxu0 0
  %338 = vmatpush1.bf16.msra.mxu0 0
  %339 = vmatprep.subr.bf16.mxu0 0
  %340 = vmatpush1.bf16.msra.mxu0 0
  %341 = vmatprep.subr.bf16.mxu0 0
  %342 = vmatpush1.bf16.msra.mxu0 0
  %343 = vmatprep.mubr.bf16.mxu0 0
  %344 = vmatmul.mubr.bf16.gmra.mrb[0].mxu0 %v108
  %v345 = vpop.f32.mrb[0].mxu0
  %v346 = vadd.f32 %v297, %v345
  %v347 = vpop.f32.mrb[0].mxu0
  %v348 = vpop.f32.mrb[0].mxu0
  %v349 = vadd.f32 %v300, %v348
  %v350 = vpop.f32.mrb[0].mxu0
  %351 = vmatprep.mubr.bf16.mxu0 0
  %352 = vmatmul.mubr.bf16.gmra.mrb[0].mxu0 %v111
  %v353 = vpop.f32.mrb[0].mxu0
  %v354 = vadd.f32 %v305, %v353
  %v355 = vpop.f32.mrb[0].mxu0
  %v356 = vpop.f32.mrb[0].mxu0
  %v357 = vadd.f32 %v308, %v356
  %v358 = vpop.f32.mrb[0].mxu0
  %359 = vdwg.mxu0
  %v360 = vadd.f32 %v26, %v346
  %v361 = vadd.f32 %v27, %v349
  %v362 = vadd.f32 %v28, %v354
  %v363 = vadd.f32 %v29, %v357
  %364 = vst [vmem:[#allocation2] sm:$0xff] %v360
  %365 = vst [vmem:[#allocation2 + $0x8] sm:$0xff] %v361
  %366 = vst [vmem:[#allocation2 + $0x10] sm:$0xff] %v362
  %367 = vst [vmem:[#allocation2 + $0x18] sm:$0xff] %v363
  // Predicated region
  $region22: #{modified_resnet_fwd.36} parent=0 // pred_check
    %p368 = pneg %p18
  $region23: #{modified_resnet_fwd.36} parent=0 // pred_check_branch
    %370 = sbr.rel (%p368) target = $region25
  $region24: #{modified_resnet_fwd.36} parent=0 // pred_region
    %v371 = vld [vmem:[#allocation2] sm:$0xff]
    %v372 = vld [vmem:[#allocation2 + $0x8] sm:$0xff]
    %v373 = vld [vmem:[#allocation2 + $0x10] sm:$0xff]
    %v374 = vld [vmem:[#allocation2 + $0x18] sm:$0xff]
    %v375 = vld [vmem:[%s2] sm:$0x1]
    %v377 = vlaneseq
    %v378 = vshrl.u32 %v377, 7
    %v379 = vsub.s32 0, %v378
    %v380 = vrot.slane %v375, %v379
    %v382 = vmul.f32 %v371, %v380
    %v383 = vmul.f32 %v372, %v380
    %v384 = vmul.f32 %v373, %v380
    %v385 = vmul.f32 %v374, %v380
    %v386 = vld [vmem:[%s3] sm:$0x1]
    %v388 = vlaneseq
    %v389 = vshrl.u32 %v388, 7
    %v390 = vsub.s32 0, %v389
    %v391 = vrot.slane %v386, %v390
    %v393 = vadd.f32 %v382, %v391
    %v394 = vadd.f32 %v383, %v391
    %v395 = vadd.f32 %v384, %v391
    %v396 = vadd.f32 %v385, %v391
    %v397 = vmax.f32 %v393, 0.0
    %v398 = vmax.f32 %v394, 0.0
    %v399 = vmax.f32 %v395, 0.0
    %v400 = vmax.f32 %v396, 0.0
    %401 = vst [vmem:[%s4] sm:$0xff] %v397
    %402 = vst [vmem:[%s4 + $0x8] sm:$0xff] %v398
    %403 = vst [vmem:[%s4 + $0x10] sm:$0xff] %v399
    %404 = vst [vmem:[%s4 + $0x18] sm:$0xff] %v400
  $region25: #{modified_resnet_fwd.36} parent=0 // pred_fallthru
    _
  // Predicated region
  $region26: #{modified_resnet_fwd.36} parent=0 // pred_check
    _
  $region27: #{modified_resnet_fwd.36} parent=0 // pred_check_branch
    %406 = sbr.rel (0) target = $region29
  $region28: #{modified_resnet_fwd.36} parent=0 // pred_region
    _
  $region29: #{modified_resnet_fwd.36} parent=0 // pred_fallthru
    _
  // Predicated region
  $region30: #{modified_resnet_fwd.36} parent=0 // pred_check
    _
  $region31: #{modified_resnet_fwd.36} parent=0 // pred_check_branch
    %408 = sbr.rel (0) target = $region33
  $region32: #{modified_resnet_fwd.36} parent=0 // pred_region
    _
  $region33: #{modified_resnet_fwd.36} parent=0 // pred_fallthru
    _

// kernel: modified_resnet_fwd.37
$region0: #{modified_resnet_fwd.37}
  #allocation0 [shape = 'u32[]', space=smem, size = 0x4, offset = 0x4, fixed_abs, tag = 'smem constant byte address 0x4 - core index']
  #allocation1 [shape = 'u32[144,128]{1,0:T(1,128)}', space=vmem, size = 0x12000, scoped, tag = 'internal scratch']
  #allocation2 [shape = 'f32[16,128]{1,0:T(8,128)}', space=vmem, size = 0x2000, scoped, tag = 'scratch operand']
  %s0 = inlined_call_operand.vmem [shape: bf16[16,128], index: 0, kind: input, shape index: {}]
  %s1 = inlined_call_operand.vmem [shape: bf16[128,128], index: 1, kind: input, shape index: {}]
  %s2 = inlined_call_operand.vmem [shape: f32[1,128], index: 2, kind: input, shape index: {}]
  %s3 = inlined_call_operand.vmem [shape: f32[1,128], index: 3, kind: input, shape index: {}]
  %s4 = inlined_call_operand.vmem [shape: f32[16,128], index: 4, kind: output, shape index: {}]
  %s5 = sld [smem:[#allocation0]]
  $region34: #{modified_resnet_fwd.37} parent=0
    _
  %s7 = ssub.s32 1, %s5
  %s8 = scalar_select 0, %s7, %s5
  // Predicated region
  $region2: #{modified_resnet_fwd.37} parent=0 // pred_check
    _
  $region3: #{modified_resnet_fwd.37} parent=0 // pred_check_branch
    %10 = sbr.rel (0) target = $region5
  $region4: #{modified_resnet_fwd.37} parent=0 // pred_region
    _
  $region5: #{modified_resnet_fwd.37} parent=0 // pred_fallthru
    _
  // Predicated region
  $region6: #{modified_resnet_fwd.37} parent=0 // pred_check
    _
  $region7: #{modified_resnet_fwd.37} parent=0 // pred_check_branch
    %12 = sbr.rel (0) target = $region9
  $region8: #{modified_resnet_fwd.37} parent=0 // pred_region
    _
  $region9: #{modified_resnet_fwd.37} parent=0 // pred_fallthru
    _
  // Predicated region
  $region10: #{modified_resnet_fwd.37} parent=0 // pred_check
    _
  $region11: #{modified_resnet_fwd.37} parent=0 // pred_check_branch
    %14 = sbr.rel (0) target = $region13
  $region12: #{modified_resnet_fwd.37} parent=0 // pred_region
    _
  $region13: #{modified_resnet_fwd.37} parent=0 // pred_fallthru
    _
  // Predicated region
  $region14: #{modified_resnet_fwd.37} parent=0 // pred_check
    _
  $region15: #{modified_resnet_fwd.37} parent=0 // pred_check_branch
    %16 = sbr.rel (0) target = $region17
  $region16: #{modified_resnet_fwd.37} parent=0 // pred_region
    _
  $region17: #{modified_resnet_fwd.37} parent=0 // pred_fallthru
    _
  %p18 = scmp.eq.s32.totalorder 0, 0
  // Predicated region
  $region18: #{modified_resnet_fwd.37} parent=0 // pred_check
    %p19 = pneg %p18
  $region19: #{modified_resnet_fwd.37} parent=0 // pred_check_branch
    %21 = sbr.rel (%p19) target = $region21
  $region20: #{modified_resnet_fwd.37} parent=0 // pred_region
    %22 = vst [vmem:[#allocation2] sm:$0xff] 0.0
    %23 = vst [vmem:[#allocation2 + $0x8] sm:$0xff] 0.0
  $region21: #{modified_resnet_fwd.37} parent=0 // pred_fallthru
    _
  %v24 = vld [vmem:[#allocation2] sm:$0xff]
  %v25 = vld [vmem:[#allocation2 + $0x8] sm:$0xff]
  %v26 = vld [vmem:[%s0] sm:$0xf]
  %v27 = vld [vmem:[%s0 + $0x4] sm:$0xf]
  %v28 = vld [vmem:[%s1] sm:$0xf]
  %v29 = vld [vmem:[%s1 + $0x4] sm:$0xf]
  %v30 = vld [vmem:[%s1 + $0x8] sm:$0xf]
  %v31 = vld [vmem:[%s1 + $0xc] sm:$0xf]
  %v32 = vld [vmem:[%s1 + $0x10] sm:$0xf]
  %v33 = vld [vmem:[%s1 + $0x14] sm:$0xf]
  %v34 = vld [vmem:[%s1 + $0x18] sm:$0xf]
  %v35 = vld [vmem:[%s1 + $0x1c] sm:$0xf]
  %v36 = vld [vmem:[%s1 + $0x20] sm:$0xf]
  %v37 = vld [vmem:[%s1 + $0x24] sm:$0xf]
  %v38 = vld [vmem:[%s1 + $0x28] sm:$0xf]
  %v39 = vld [vmem:[%s1 + $0x2c] sm:$0xf]
  %v40 = vld [vmem:[%s1 + $0x30] sm:$0xf]
  %v41 = vld [vmem:[%s1 + $0x34] sm:$0xf]
  %v42 = vld [vmem:[%s1 + $0x38] sm:$0xf]
  %v43 = vld [vmem:[%s1 + $0x3c] sm:$0xf]
  %v46 = vunpack.c.l.b16 %v26
  %v47 = vunpack.c.l.b16 %v27
  %v48 = vpack.c.b16 %v47, %v46
  %v66 = vunpack.c.l.b16 %v28
  %v67 = vunpack.c.l.b16 %v29
  %v68 = vunpack.c.l.b16 %v30
  %v69 = vunpack.c.l.b16 %v31
  %v70 = vunpack.c.l.b16 %v32
  %v71 = vunpack.c.l.b16 %v33
  %v72 = vunpack.c.l.b16 %v34
  %v73 = vunpack.c.l.b16 %v35
  %v74 = vunpack.c.l.b16 %v36
  %v75 = vunpack.c.l.b16 %v37
  %v76 = vunpack.c.l.b16 %v38
  %v77 = vunpack.c.l.b16 %v39
  %v78 = vunpack.c.l.b16 %v40
  %v79 = vunpack.c.l.b16 %v41
  %v80 = vunpack.c.l.b16 %v42
  %v81 = vunpack.c.l.b16 %v43
  %v82 = vpack.c.b16 %v67, %v66
  %v83 = vpack.c.b16 %v69, %v68
  %v84 = vpack.c.b16 %v71, %v70
  %v85 = vpack.c.b16 %v73, %v72
  %v86 = vpack.c.b16 %v75, %v74
  %v87 = vpack.c.b16 %v77, %v76
  %v88 = vpack.c.b16 %v79, %v78
  %v89 = vpack.c.b16 %v81, %v80
  %98 = vmatprep.subr.bf16.mxu0 0
  %99 = vmatpush1.bf16.msra.mxu0 %v82
  %100 = vmatprep.subr.bf16.mxu0 0
  %101 = vmatpush1.bf16.msra.mxu0 %v83
  %102 = vmatprep.subr.bf16.mxu0 0
  %103 = vmatpush1.bf16.msra.mxu0 %v84
  %104 = vmatprep.subr.bf16.mxu0 0
  %105 = vmatpush1.bf16.msra.mxu0 %v85
  %106 = vmatprep.subr.bf16.mxu0 0
  %107 = vmatpush1.bf16.msra.mxu0 %v86
  %108 = vmatprep.subr.bf16.mxu0 0
  %109 = vmatpush1.bf16.msra.mxu0 %v87
  %110 = vmatprep.subr.bf16.mxu0 0
  %111 = vmatpush1.bf16.msra.mxu0 %v88
  %112 = vmatprep.subr.bf16.mxu0 0
  %113 = vmatpush1.bf16.msra.mxu0 %v89
  %114 = vmatprep.subr.bf16.mxu0 0
  %115 = vmatpush1.bf16.msra.mxu0 0
  %116 = vmatprep.subr.bf16.mxu0 0
  %117 = vmatpush1.bf16.msra.mxu0 0
  %118 = vmatprep.subr.bf16.mxu0 0
  %119 = vmatpush1.bf16.msra.mxu0 0
  %120 = vmatprep.subr.bf16.mxu0 0
  %121 = vmatpush1.bf16.msra.mxu0 0
  %122 = vmatprep.subr.bf16.mxu0 0
  %123 = vmatpush1.bf16.msra.mxu0 0
  %124 = vmatprep.subr.bf16.mxu0 0
  %125 = vmatpush1.bf16.msra.mxu0 0
  %126 = vmatprep.subr.bf16.mxu0 0
  %127 = vmatpush1.bf16.msra.mxu0 0
  %128 = vmatprep.subr.bf16.mxu0 0
  %129 = vmatpush1.bf16.msra.mxu0 0
  %130 = vmatprep.mubr.bf16.mxu0 0
  %131 = vmatmul.mubr.bf16.gmra.mrb[0].mxu0 %v48
  %v132 = vpop.f32.mrb[0].mxu0
  %v133 = vadd.f32 0.0, %v132
  %v134 = vpop.f32.mrb[0].mxu0
  %v135 = vpop.f32.mrb[0].mxu0
  %v136 = vadd.f32 0.0, %v135
  %v137 = vpop.f32.mrb[0].mxu0
  %138 = vdwg.mxu0
  %v139 = vadd.f32 %v24, %v133
  %v140 = vadd.f32 %v25, %v136
  %141 = vst [vmem:[#allocation2] sm:$0xff] %v139
  %142 = vst [vmem:[#allocation2 + $0x8] sm:$0xff] %v140
  // Predicated region
  $region22: #{modified_resnet_fwd.37} parent=0 // pred_check
    %p143 = pneg %p18
  $region23: #{modified_resnet_fwd.37} parent=0 // pred_check_branch
    %145 = sbr.rel (%p143) target = $region25
  $region24: #{modified_resnet_fwd.37} parent=0 // pred_region
    %v146 = vld [vmem:[#allocation2] sm:$0xff]
    %v147 = vld [vmem:[#allocation2 + $0x8] sm:$0xff]
    %v148 = vld [vmem:[%s2] sm:$0x1]
    %v150 = vlaneseq
    %v151 = vshrl.u32 %v150, 7
    %v152 = vsub.s32 0, %v151
    %v153 = vrot.slane %v148, %v152
    %v155 = vmul.f32 %v146, %v153
    %v156 = vmul.f32 %v147, %v153
    %v157 = vld [vmem:[%s3] sm:$0x1]
    %v159 = vlaneseq
    %v160 = vshrl.u32 %v159, 7
    %v161 = vsub.s32 0, %v160
    %v162 = vrot.slane %v157, %v161
    %v164 = vadd.f32 %v155, %v162
    %v165 = vadd.f32 %v156, %v162
    %166 = vst [vmem:[%s4] sm:$0xff] %v164
    %167 = vst [vmem:[%s4 + $0x8] sm:$0xff] %v165
  $region25: #{modified_resnet_fwd.37} parent=0 // pred_fallthru
    _
  // Predicated region
  $region26: #{modified_resnet_fwd.37} parent=0 // pred_check
    _
  $region27: #{modified_resnet_fwd.37} parent=0 // pred_check_branch
    %169 = sbr.rel (0) target = $region29
  $region28: #{modified_resnet_fwd.37} parent=0 // pred_region
    _
  $region29: #{modified_resnet_fwd.37} parent=0 // pred_fallthru
    _
  // Predicated region
  $region30: #{modified_resnet_fwd.37} parent=0 // pred_check
    _
  $region31: #{modified_resnet_fwd.37} parent=0 // pred_check_branch
    %171 = sbr.rel (0) target = $region33
  $region32: #{modified_resnet_fwd.37} parent=0 // pred_region
    _
  $region33: #{modified_resnet_fwd.37} parent=0 // pred_fallthru
    _

// kernel: modified_resnet_fwd.38
$region0: #{modified_resnet_fwd.38}
  #allocation0 [shape = 'u32[]', space=smem, size = 0x4, offset = 0x4, fixed_abs, tag = 'smem constant byte address 0x4 - core index']
  #allocation1 [shape = 'u32[144,128]{1,0:T(1,128)}', space=vmem, size = 0x12000, scoped, tag = 'internal scratch']
  #allocation2 [shape = 'f32[16,128]{1,0:T(8,128)}', space=vmem, size = 0x2000, scoped, tag = 'scratch operand']
  %s0 = inlined_call_operand.vmem [shape: bf16[16,128], index: 0, kind: input, shape index: {}]
  %s1 = inlined_call_operand.vmem [shape: bf16[128,128], index: 1, kind: input, shape index: {}]
  %s2 = inlined_call_operand.vmem [shape: f32[1,128], index: 2, kind: input, shape index: {}]
  %s3 = inlined_call_operand.vmem [shape: f32[1,128], index: 3, kind: input, shape index: {}]
  %s4 = inlined_call_operand.vmem [shape: f32[16,128], index: 4, kind: input, shape index: {}]
  %s5 = inlined_call_operand.vmem [shape: f32[16,128], index: 5, kind: output, shape index: {}]
  %s6 = sld [smem:[#allocation0]]
  $region38: #{modified_resnet_fwd.38} parent=0
    _
  %s8 = ssub.s32 1, %s6
  %s9 = scalar_select 0, %s8, %s6
  // Predicated region
  $region2: #{modified_resnet_fwd.38} parent=0 // pred_check
    _
  $region3: #{modified_resnet_fwd.38} parent=0 // pred_check_branch
    %11 = sbr.rel (0) target = $region5
  $region4: #{modified_resnet_fwd.38} parent=0 // pred_region
    _
  $region5: #{modified_resnet_fwd.38} parent=0 // pred_fallthru
    _
  // Predicated region
  $region6: #{modified_resnet_fwd.38} parent=0 // pred_check
    _
  $region7: #{modified_resnet_fwd.38} parent=0 // pred_check_branch
    %13 = sbr.rel (0) target = $region9
  $region8: #{modified_resnet_fwd.38} parent=0 // pred_region
    _
  $region9: #{modified_resnet_fwd.38} parent=0 // pred_fallthru
    _
  // Predicated region
  $region10: #{modified_resnet_fwd.38} parent=0 // pred_check
    _
  $region11: #{modified_resnet_fwd.38} parent=0 // pred_check_branch
    %15 = sbr.rel (0) target = $region13
  $region12: #{modified_resnet_fwd.38} parent=0 // pred_region
    _
  $region13: #{modified_resnet_fwd.38} parent=0 // pred_fallthru
    _
  // Predicated region
  $region14: #{modified_resnet_fwd.38} parent=0 // pred_check
    _
  $region15: #{modified_resnet_fwd.38} parent=0 // pred_check_branch
    %17 = sbr.rel (0) target = $region17
  $region16: #{modified_resnet_fwd.38} parent=0 // pred_region
    _
  $region17: #{modified_resnet_fwd.38} parent=0 // pred_fallthru
    _
  // Predicated region
  $region18: #{modified_resnet_fwd.38} parent=0 // pred_check
    _
  $region19: #{modified_resnet_fwd.38} parent=0 // pred_check_branch
    %19 = sbr.rel (0) target = $region21
  $region20: #{modified_resnet_fwd.38} parent=0 // pred_region
    _
  $region21: #{modified_resnet_fwd.38} parent=0 // pred_fallthru
    _
  %p21 = scmp.eq.s32.totalorder 0, 0
  // Predicated region
  $region22: #{modified_resnet_fwd.38} parent=0 // pred_check
    %p22 = pneg %p21
  $region23: #{modified_resnet_fwd.38} parent=0 // pred_check_branch
    %24 = sbr.rel (%p22) target = $region25
  $region24: #{modified_resnet_fwd.38} parent=0 // pred_region
    %25 = vst [vmem:[#allocation2] sm:$0xff] 0.0
    %26 = vst [vmem:[#allocation2 + $0x8] sm:$0xff] 0.0
  $region25: #{modified_resnet_fwd.38} parent=0 // pred_fallthru
    _
  %v27 = vld [vmem:[#allocation2] sm:$0xff]
  %v28 = vld [vmem:[#allocation2 + $0x8] sm:$0xff]
  %v29 = vld [vmem:[%s0] sm:$0xf]
  %v30 = vld [vmem:[%s0 + $0x4] sm:$0xf]
  %v31 = vld [vmem:[%s1] sm:$0xf]
  %v32 = vld [vmem:[%s1 + $0x4] sm:$0xf]
  %v33 = vld [vmem:[%s1 + $0x8] sm:$0xf]
  %v34 = vld [vmem:[%s1 + $0xc] sm:$0xf]
  %v35 = vld [vmem:[%s1 + $0x10] sm:$0xf]
  %v36 = vld [vmem:[%s1 + $0x14] sm:$0xf]
  %v37 = vld [vmem:[%s1 + $0x18] sm:$0xf]
  %v38 = vld [vmem:[%s1 + $0x1c] sm:$0xf]
  %v39 = vld [vmem:[%s1 + $0x20] sm:$0xf]
  %v40 = vld [vmem:[%s1 + $0x24] sm:$0xf]
  %v41 = vld [vmem:[%s1 + $0x28] sm:$0xf]
  %v42 = vld [vmem:[%s1 + $0x2c] sm:$0xf]
  %v43 = vld [vmem:[%s1 + $0x30] sm:$0xf]
  %v44 = vld [vmem:[%s1 + $0x34] sm:$0xf]
  %v45 = vld [vmem:[%s1 + $0x38] sm:$0xf]
  %v46 = vld [vmem:[%s1 + $0x3c] sm:$0xf]
  %v49 = vunpack.c.l.b16 %v29
  %v50 = vunpack.c.l.b16 %v30
  %v51 = vpack.c.b16 %v50, %v49
  %v69 = vunpack.c.l.b16 %v31
  %v70 = vunpack.c.l.b16 %v32
  %v71 = vunpack.c.l.b16 %v33
  %v72 = vunpack.c.l.b16 %v34
  %v73 = vunpack.c.l.b16 %v35
  %v74 = vunpack.c.l.b16 %v36
  %v75 = vunpack.c.l.b16 %v37
  %v76 = vunpack.c.l.b16 %v38
  %v77 = vunpack.c.l.b16 %v39
  %v78 = vunpack.c.l.b16 %v40
  %v79 = vunpack.c.l.b16 %v41
  %v80 = vunpack.c.l.b16 %v42
  %v81 = vunpack.c.l.b16 %v43
  %v82 = vunpack.c.l.b16 %v44
  %v83 = vunpack.c.l.b16 %v45
  %v84 = vunpack.c.l.b16 %v46
  %v85 = vpack.c.b16 %v70, %v69
  %v86 = vpack.c.b16 %v72, %v71
  %v87 = vpack.c.b16 %v74, %v73
  %v88 = vpack.c.b16 %v76, %v75
  %v89 = vpack.c.b16 %v78, %v77
  %v90 = vpack.c.b16 %v80, %v79
  %v91 = vpack.c.b16 %v82, %v81
  %v92 = vpack.c.b16 %v84, %v83
  %101 = vmatprep.subr.bf16.mxu0 0
  %102 = vmatpush1.bf16.msra.mxu0 %v85
  %103 = vmatprep.subr.bf16.mxu0 0
  %104 = vmatpush1.bf16.msra.mxu0 %v86
  %105 = vmatprep.subr.bf16.mxu0 0
  %106 = vmatpush1.bf16.msra.mxu0 %v87
  %107 = vmatprep.subr.bf16.mxu0 0
  %108 = vmatpush1.bf16.msra.mxu0 %v88
  %109 = vmatprep.subr.bf16.mxu0 0
  %110 = vmatpush1.bf16.msra.mxu0 %v89
  %111 = vmatprep.subr.bf16.mxu0 0
  %112 = vmatpush1.bf16.msra.mxu0 %v90
  %113 = vmatprep.subr.bf16.mxu0 0
  %114 = vmatpush1.bf16.msra.mxu0 %v91
  %115 = vmatprep.subr.bf16.mxu0 0
  %116 = vmatpush1.bf16.msra.mxu0 %v92
  %117 = vmatprep.subr.bf16.mxu0 0
  %118 = vmatpush1.bf16.msra.mxu0 0
  %119 = vmatprep.subr.bf16.mxu0 0
  %120 = vmatpush1.bf16.msra.mxu0 0
  %121 = vmatprep.subr.bf16.mxu0 0
  %122 = vmatpush1.bf16.msra.mxu0 0
  %123 = vmatprep.subr.bf16.mxu0 0
  %124 = vmatpush1.bf16.msra.mxu0 0
  %125 = vmatprep.subr.bf16.mxu0 0
  %126 = vmatpush1.bf16.msra.mxu0 0
  %127 = vmatprep.subr.bf16.mxu0 0
  %128 = vmatpush1.bf16.msra.mxu0 0
  %129 = vmatprep.subr.bf16.mxu0 0
  %130 = vmatpush1.bf16.msra.mxu0 0
  %131 = vmatprep.subr.bf16.mxu0 0
  %132 = vmatpush1.bf16.msra.mxu0 0
  %133 = vmatprep.mubr.bf16.mxu0 0
  %134 = vmatmul.mubr.bf16.gmra.mrb[0].mxu0 %v51
  %v135 = vpop.f32.mrb[0].mxu0
  %v136 = vadd.f32 0.0, %v135
  %v137 = vpop.f32.mrb[0].mxu0
  %v138 = vpop.f32.mrb[0].mxu0
  %v139 = vadd.f32 0.0, %v138
  %v140 = vpop.f32.mrb[0].mxu0
  %141 = vdwg.mxu0
  %v142 = vadd.f32 %v27, %v136
  %v143 = vadd.f32 %v28, %v139
  %144 = vst [vmem:[#allocation2] sm:$0xff] %v142
  %145 = vst [vmem:[#allocation2 + $0x8] sm:$0xff] %v143
  // Predicated region
  $region26: #{modified_resnet_fwd.38} parent=0 // pred_check
    %p146 = pneg %p21
  $region27: #{modified_resnet_fwd.38} parent=0 // pred_check_branch
    %148 = sbr.rel (%p146) target = $region29
  $region28: #{modified_resnet_fwd.38} parent=0 // pred_region
    %v149 = vld [vmem:[#allocation2] sm:$0xff]
    %v150 = vld [vmem:[#allocation2 + $0x8] sm:$0xff]
    %v151 = vld [vmem:[%s2] sm:$0x1]
    %v153 = vlaneseq
    %v154 = vshrl.u32 %v153, 7
    %v155 = vsub.s32 0, %v154
    %v156 = vrot.slane %v151, %v155
    %v158 = vmul.f32 %v149, %v156
    %v159 = vmul.f32 %v150, %v156
    %v160 = vld [vmem:[%s3] sm:$0x1]
    %v162 = vlaneseq
    %v163 = vshrl.u32 %v162, 7
    %v164 = vsub.s32 0, %v163
    %v165 = vrot.slane %v160, %v164
    %v167 = vadd.f32 %v158, %v165
    %v168 = vadd.f32 %v159, %v165
    %v169 = vld [vmem:[%s4] sm:$0xff]
    %v170 = vld [vmem:[%s4 + $0x8] sm:$0xff]
    %v171 = vadd.f32 %v167, %v169
    %v172 = vadd.f32 %v168, %v170
    %v173 = vmax.f32 %v171, 0.0
    %v174 = vmax.f32 %v172, 0.0
    %175 = vst [vmem:[%s5] sm:$0xff] %v173
    %176 = vst [vmem:[%s5 + $0x8] sm:$0xff] %v174
  $region29: #{modified_resnet_fwd.38} parent=0 // pred_fallthru
    _
  // Predicated region
  $region30: #{modified_resnet_fwd.38} parent=0 // pred_check
    _
  $region31: #{modified_resnet_fwd.38} parent=0 // pred_check_branch
    %178 = sbr.rel (0) target = $region33
  $region32: #{modified_resnet_fwd.38} parent=0 // pred_region
    _
  $region33: #{modified_resnet_fwd.38} parent=0 // pred_fallthru
    _
  // Predicated region
  $region34: #{modified_resnet_fwd.38} parent=0 // pred_check
    _
  $region35: #{modified_resnet_fwd.38} parent=0 // pred_check_branch
    %180 = sbr.rel (0) target = $region37
  $region36: #{modified_resnet_fwd.38} parent=0 // pred_region
    _
  $region37: #{modified_resnet_fwd.38} parent=0 // pred_fallthru
    _

// kernel: modified_resnet_fwd.39
$region0: #{modified_resnet_fwd.39}
  #allocation0 [shape = 'u32[]', space=smem, size = 0x4, offset = 0x4, fixed_abs, tag = 'smem constant byte address 0x4 - core index']
  #allocation1 [shape = 'u32[144,128]{1,0:T(1,128)}', space=vmem, size = 0x12000, scoped, tag = 'internal scratch']
  #allocation2 [shape = 'f32[16,128]{1,0:T(8,128)}', space=vmem, size = 0x2000, scoped, tag = 'scratch operand']
  %s0 = inlined_call_operand.vmem [shape: bf16[16,128], index: 0, kind: input, shape index: {}]
  %s1 = inlined_call_operand.vmem [shape: bf16[128,128], index: 1, kind: input, shape index: {}]
  %s2 = inlined_call_operand.vmem [shape: f32[1,128], index: 2, kind: input, shape index: {}]
  %s3 = inlined_call_operand.vmem [shape: f32[1,128], index: 3, kind: input, shape index: {}]
  %s4 = inlined_call_operand.vmem [shape: f32[16,128], index: 4, kind: output, shape index: {}]
  %s5 = sld [smem:[#allocation0]]
  $region34: #{modified_resnet_fwd.39} parent=0
    _
  %s7 = ssub.s32 1, %s5
  %s8 = scalar_select 0, %s7, %s5
  // Predicated region
  $region2: #{modified_resnet_fwd.39} parent=0 // pred_check
    _
  $region3: #{modified_resnet_fwd.39} parent=0 // pred_check_branch
    %10 = sbr.rel (0) target = $region5
  $region4: #{modified_resnet_fwd.39} parent=0 // pred_region
    _
  $region5: #{modified_resnet_fwd.39} parent=0 // pred_fallthru
    _
  // Predicated region
  $region6: #{modified_resnet_fwd.39} parent=0 // pred_check
    _
  $region7: #{modified_resnet_fwd.39} parent=0 // pred_check_branch
    %12 = sbr.rel (0) target = $region9
  $region8: #{modified_resnet_fwd.39} parent=0 // pred_region
    _
  $region9: #{modified_resnet_fwd.39} parent=0 // pred_fallthru
    _
  // Predicated region
  $region10: #{modified_resnet_fwd.39} parent=0 // pred_check
    _
  $region11: #{modified_resnet_fwd.39} parent=0 // pred_check_branch
    %14 = sbr.rel (0) target = $region13
  $region12: #{modified_resnet_fwd.39} parent=0 // pred_region
    _
  $region13: #{modified_resnet_fwd.39} parent=0 // pred_fallthru
    _
  // Predicated region
  $region14: #{modified_resnet_fwd.39} parent=0 // pred_check
    _
  $region15: #{modified_resnet_fwd.39} parent=0 // pred_check_branch
    %16 = sbr.rel (0) target = $region17
  $region16: #{modified_resnet_fwd.39} parent=0 // pred_region
    _
  $region17: #{modified_resnet_fwd.39} parent=0 // pred_fallthru
    _
  %p18 = scmp.eq.s32.totalorder 0, 0
  // Predicated region
  $region18: #{modified_resnet_fwd.39} parent=0 // pred_check
    %p19 = pneg %p18
  $region19: #{modified_resnet_fwd.39} parent=0 // pred_check_branch
    %21 = sbr.rel (%p19) target = $region21
  $region20: #{modified_resnet_fwd.39} parent=0 // pred_region
    %22 = vst [vmem:[#allocation2] sm:$0xff] 0.0
    %23 = vst [vmem:[#allocation2 + $0x8] sm:$0xff] 0.0
  $region21: #{modified_resnet_fwd.39} parent=0 // pred_fallthru
    _
  %v24 = vld [vmem:[#allocation2] sm:$0xff]
  %v25 = vld [vmem:[#allocation2 + $0x8] sm:$0xff]
  %v26 = vld [vmem:[%s0] sm:$0xf]
  %v27 = vld [vmem:[%s0 + $0x4] sm:$0xf]
  %v28 = vld [vmem:[%s1] sm:$0xf]
  %v29 = vld [vmem:[%s1 + $0x4] sm:$0xf]
  %v30 = vld [vmem:[%s1 + $0x8] sm:$0xf]
  %v31 = vld [vmem:[%s1 + $0xc] sm:$0xf]
  %v32 = vld [vmem:[%s1 + $0x10] sm:$0xf]
  %v33 = vld [vmem:[%s1 + $0x14] sm:$0xf]
  %v34 = vld [vmem:[%s1 + $0x18] sm:$0xf]
  %v35 = vld [vmem:[%s1 + $0x1c] sm:$0xf]
  %v36 = vld [vmem:[%s1 + $0x20] sm:$0xf]
  %v37 = vld [vmem:[%s1 + $0x24] sm:$0xf]
  %v38 = vld [vmem:[%s1 + $0x28] sm:$0xf]
  %v39 = vld [vmem:[%s1 + $0x2c] sm:$0xf]
  %v40 = vld [vmem:[%s1 + $0x30] sm:$0xf]
  %v41 = vld [vmem:[%s1 + $0x34] sm:$0xf]
  %v42 = vld [vmem:[%s1 + $0x38] sm:$0xf]
  %v43 = vld [vmem:[%s1 + $0x3c] sm:$0xf]
  %v46 = vunpack.c.l.b16 %v26
  %v47 = vunpack.c.l.b16 %v27
  %v48 = vpack.c.b16 %v47, %v46
  %v66 = vunpack.c.l.b16 %v28
  %v67 = vunpack.c.l.b16 %v29
  %v68 = vunpack.c.l.b16 %v30
  %v69 = vunpack.c.l.b16 %v31
  %v70 = vunpack.c.l.b16 %v32
  %v71 = vunpack.c.l.b16 %v33
  %v72 = vunpack.c.l.b16 %v34
  %v73 = vunpack.c.l.b16 %v35
  %v74 = vunpack.c.l.b16 %v36
  %v75 = vunpack.c.l.b16 %v37
  %v76 = vunpack.c.l.b16 %v38
  %v77 = vunpack.c.l.b16 %v39
  %v78 = vunpack.c.l.b16 %v40
  %v79 = vunpack.c.l.b16 %v41
  %v80 = vunpack.c.l.b16 %v42
  %v81 = vunpack.c.l.b16 %v43
  %v82 = vpack.c.b16 %v67, %v66
  %v83 = vpack.c.b16 %v69, %v68
  %v84 = vpack.c.b16 %v71, %v70
  %v85 = vpack.c.b16 %v73, %v72
  %v86 = vpack.c.b16 %v75, %v74
  %v87 = vpack.c.b16 %v77, %v76
  %v88 = vpack.c.b16 %v79, %v78
  %v89 = vpack.c.b16 %v81, %v80
  %98 = vmatprep.subr.bf16.mxu0 0
  %99 = vmatpush1.bf16.msra.mxu0 %v82
  %100 = vmatprep.subr.bf16.mxu0 0
  %101 = vmatpush1.bf16.msra.mxu0 %v83
  %102 = vmatprep.subr.bf16.mxu0 0
  %103 = vmatpush1.bf16.msra.mxu0 %v84
  %104 = vmatprep.subr.bf16.mxu0 0
  %105 = vmatpush1.bf16.msra.mxu0 %v85
  %106 = vmatprep.subr.bf16.mxu0 0
  %107 = vmatpush1.bf16.msra.mxu0 %v86
  %108 = vmatprep.subr.bf16.mxu0 0
  %109 = vmatpush1.bf16.msra.mxu0 %v87
  %110 = vmatprep.subr.bf16.mxu0 0
  %111 = vmatpush1.bf16.msra.mxu0 %v88
  %112 = vmatprep.subr.bf16.mxu0 0
  %113 = vmatpush1.bf16.msra.mxu0 %v89
  %114 = vmatprep.subr.bf16.mxu0 0
  %115 = vmatpush1.bf16.msra.mxu0 0
  %116 = vmatprep.subr.bf16.mxu0 0
  %117 = vmatpush1.bf16.msra.mxu0 0
  %118 = vmatprep.subr.bf16.mxu0 0
  %119 = vmatpush1.bf16.msra.mxu0 0
  %120 = vmatprep.subr.bf16.mxu0 0
  %121 = vmatpush1.bf16.msra.mxu0 0
  %122 = vmatprep.subr.bf16.mxu0 0
  %123 = vmatpush1.bf16.msra.mxu0 0
  %124 = vmatprep.subr.bf16.mxu0 0
  %125 = vmatpush1.bf16.msra.mxu0 0
  %126 = vmatprep.subr.bf16.mxu0 0
  %127 = vmatpush1.bf16.msra.mxu0 0
  %128 = vmatprep.subr.bf16.mxu0 0
  %129 = vmatpush1.bf16.msra.mxu0 0
  %130 = vmatprep.mubr.bf16.mxu0 0
  %131 = vmatmul.mubr.bf16.gmra.mrb[0].mxu0 %v48
  %v132 = vpop.f32.mrb[0].mxu0
  %v133 = vadd.f32 0.0, %v132
  %v134 = vpop.f32.mrb[0].mxu0
  %v135 = vpop.f32.mrb[0].mxu0
  %v136 = vadd.f32 0.0, %v135
  %v137 = vpop.f32.mrb[0].mxu0
  %138 = vdwg.mxu0
  %v139 = vadd.f32 %v24, %v133
  %v140 = vadd.f32 %v25, %v136
  %141 = vst [vmem:[#allocation2] sm:$0xff] %v139
  %142 = vst [vmem:[#allocation2 + $0x8] sm:$0xff] %v140
  // Predicated region
  $region22: #{modified_resnet_fwd.39} parent=0 // pred_check
    %p143 = pneg %p18
  $region23: #{modified_resnet_fwd.39} parent=0 // pred_check_branch
    %145 = sbr.rel (%p143) target = $region25
  $region24: #{modified_resnet_fwd.39} parent=0 // pred_region
    %v146 = vld [vmem:[#allocation2] sm:$0xff]
    %v147 = vld [vmem:[#allocation2 + $0x8] sm:$0xff]
    %v148 = vld [vmem:[%s2] sm:$0x1]
    %v150 = vlaneseq
    %v151 = vshrl.u32 %v150, 7
    %v152 = vsub.s32 0, %v151
    %v153 = vrot.slane %v148, %v152
    %v155 = vmul.f32 %v146, %v153
    %v156 = vmul.f32 %v147, %v153
    %v157 = vld [vmem:[%s3] sm:$0x1]
    %v159 = vlaneseq
    %v160 = vshrl.u32 %v159, 7
    %v161 = vsub.s32 0, %v160
    %v162 = vrot.slane %v157, %v161
    %v164 = vadd.f32 %v155, %v162
    %v165 = vadd.f32 %v156, %v162
    %v166 = vmax.f32 %v164, 0.0
    %v167 = vmax.f32 %v165, 0.0
    %168 = vst [vmem:[%s4] sm:$0xff] %v166
    %169 = vst [vmem:[%s4 + $0x8] sm:$0xff] %v167
  $region25: #{modified_resnet_fwd.39} parent=0 // pred_fallthru
    _
  // Predicated region
  $region26: #{modified_resnet_fwd.39} parent=0 // pred_check
    _
  $region27: #{modified_resnet_fwd.39} parent=0 // pred_check_branch
    %171 = sbr.rel (0) target = $region29
  $region28: #{modified_resnet_fwd.39} parent=0 // pred_region
    _
  $region29: #{modified_resnet_fwd.39} parent=0 // pred_fallthru
    _
  // Predicated region
  $region30: #{modified_resnet_fwd.39} parent=0 // pred_check
    _
  $region31: #{modified_resnet_fwd.39} parent=0 // pred_check_branch
    %173 = sbr.rel (0) target = $region33
  $region32: #{modified_resnet_fwd.39} parent=0 // pred_region
    _
  $region33: #{modified_resnet_fwd.39} parent=0 // pred_fallthru
    _

// kernel: modified_resnet_fwd.40
$region0: #{modified_resnet_fwd.40}
  #allocation0 [shape = 'u32[]', space=smem, size = 0x4, offset = 0x4, fixed_abs, tag = 'smem constant byte address 0x4 - core index']
  #allocation1 [shape = 'u32[144,128]{1,0:T(1,128)}', space=vmem, size = 0x12000, scoped, tag = 'internal scratch']
  #allocation2 [shape = 'f32[16,128]{1,0:T(8,128)}', space=vmem, size = 0x2000, scoped, tag = 'scratch operand']
  %s0 = inlined_call_operand.vmem [shape: bf16[16,1024], index: 0, kind: input, shape index: {}]
  %s1 = inlined_call_operand.vmem [shape: bf16[1024,128], index: 1, kind: input, shape index: {}]
  %s2 = inlined_call_operand.vmem [shape: f32[1,128], index: 2, kind: input, shape index: {}]
  %s3 = inlined_call_operand.vmem [shape: f32[1,128], index: 3, kind: input, shape index: {}]
  %s4 = inlined_call_operand.vmem [shape: f32[16,128], index: 4, kind: output, shape index: {}]
  %s5 = sld [smem:[#allocation0]]
  $region80: #{modified_resnet_fwd.40} parent=0
    _
  %s7 = ssub.s32 1, %s5
  %s8 = scalar_select 0, %s7, %s5
  $region1: #{modified_resnet_fwd.40} parent=0
    #allocation3 [shape = 'u8[32768]{0}', space=vmem, size = 0x8000, scoped, tag = 'input window, operand 0']
    loop: start=0, step=1, limit=4
    $region2: #{modified_resnet_fwd.40} parent=1 // loop_pre_header
      _
    $region3: #{modified_resnet_fwd.40} parent=1 // loop_header
      %s10 = sphi 0, %s14
      %p11 = scmp.ge.s32.totalorder %s10, 4
      %s17 = sphi 0, %s36
      %s18 = sphi 0, %s32
      %s19 = sphi 0, %s28
      %s20 = sphi 0, %s17
      %s21 = sphi 0, %s18
      %s22 = sphi 0, %s19
      %s23 = sphi 0, %s20
      %s24 = sphi 0, %s21
      %s25 = sphi 0, %s22
      %s41 = sphi 0, %s43
      %s44 = sphi 0, %s41
      %s45 = sphi 0, %s44
      %s61 = sphi 0, %s45
      %s69 = sphi 0, %s71
      %s72 = sphi 0, %s69
      %s73 = sphi 0, %s72
      %s89 = sphi 0, %s73
      %s95 = sphi 0, %s97
      %s98 = sphi 0, %s95
      %s99 = sphi 0, %s98
      %s115 = sphi 0, %s99
      %s121 = sphi 0, %s123
      %s124 = sphi 0, %s121
      %s125 = sphi 0, %s124
      %s141 = sphi 0, %s125
      %s149 = sphi 0, %s151
      %s152 = sphi 0, %s149
      %s153 = sphi 0, %s152
      %s169 = sphi 0, %s153
    $region4: #{modified_resnet_fwd.40} parent=1 // loop_header_branch
      %13 = sbr.rel (%p11) target = $region8
    $region5: #{modified_resnet_fwd.40} parent=1 // loop_body
      %s15 = ssub.s32 %s10, 1
      %s16 = ssub.s32 %s10, 2
      %s26 = sadd.s32 1, %s19
      %p27 = scmp.ge.s32.totalorder %s26, 2
      %s28 = scalar_select %p27, 0, %s26
      %s29 = sadd.s32 1, %s18
      %s30 = scalar_select %p27, %s29, %s18
      %p31 = scmp.ge.s32.totalorder %s30, 1
      %s32 = scalar_select %p31, 0, %s30
      %s33 = sadd.s32 1, %s17
      %s34 = scalar_select %p31, %s33, %s17
      %p35 = scmp.ge.s32.totalorder %s34, 1
      %s36 = scalar_select %p35, 0, %s34
      %s37 = ssub.s32 %s17, %s36
      %s38 = ssub.s32 %s19, %s28
      %s39 = sor.u32 %s37, %s38
      %p40 = scmp.eq.s32.totalorder %s39, 0
      %s42 = sadd.s32 %s41, 1
      %s43 = scalar_select %p40, %s41, %s42
      %p46 = pneg %p40
      %p47 = scmp.eq.s32.totalorder %s10, 1
      %p48 = por %p46, %p47
      %p49 = scmp.ne.s32.totalorder %s41, %s44
      %p50 = scmp.eq.s32.totalorder %s10, 0
      %p51 = por %p49, %p50
      %p52 = scmp.ne.s32.totalorder %s41, %s44
      %p53 = scmp.eq.s32.totalorder %s15, 1
      %p54 = por %p52, %p53
      %p55 = scmp.ne.s32.totalorder %s44, %s45
      %p56 = scmp.eq.s32.totalorder %s15, 0
      %p57 = por %p55, %p56
      %p58 = scmp.ne.s32.totalorder %s44, %s45
      %p59 = scmp.eq.s32.totalorder %s16, 1
      %p60 = por %p58, %p59
      %p62 = scmp.ne.s32.totalorder %s45, %s61
      %p63 = scmp.eq.s32.totalorder %s16, 0
      %p64 = por %p62, %p63
      %s65 = ssub.s32 %s19, %s28
      %s66 = ssub.s32 %s18, %s32
      %s67 = sor.u32 %s65, %s66
      %p68 = scmp.eq.s32.totalorder %s67, 0
      %s70 = sadd.s32 %s69, 1
      %s71 = scalar_select %p68, %s69, %s70
      %p74 = pneg %p68
      %p75 = scmp.eq.s32.totalorder %s10, 1
      %p76 = por %p74, %p75
      %p77 = scmp.ne.s32.totalorder %s69, %s72
      %p78 = scmp.eq.s32.totalorder %s10, 0
      %p79 = por %p77, %p78
      %p80 = scmp.ne.s32.totalorder %s69, %s72
      %p81 = scmp.eq.s32.totalorder %s15, 1
      %p82 = por %p80, %p81
      %p83 = scmp.ne.s32.totalorder %s72, %s73
      %p84 = scmp.eq.s32.totalorder %s15, 0
      %p85 = por %p83, %p84
      %p86 = scmp.ne.s32.totalorder %s72, %s73
      %p87 = scmp.eq.s32.totalorder %s16, 1
      %p88 = por %p86, %p87
      %p90 = scmp.ne.s32.totalorder %s73, %s89
      %p91 = scmp.eq.s32.totalorder %s16, 0
      %p92 = por %p90, %p91
      %s93 = ssub.s32 %s18, %s32
      %p94 = scmp.eq.s32.totalorder %s93, 0
      %s96 = sadd.s32 %s95, 1
      %s97 = scalar_select %p94, %s95, %s96
      %p100 = pneg %p94
      %p101 = scmp.eq.s32.totalorder %s10, 1
      %p102 = por %p100, %p101
      %p103 = scmp.ne.s32.totalorder %s95, %s98
      %p104 = scmp.eq.s32.totalorder %s10, 0
      %p105 = por %p103, %p104
      %p106 = scmp.ne.s32.totalorder %s95, %s98
      %p107 = scmp.eq.s32.totalorder %s15, 1
      %p108 = por %p106, %p107
      %p109 = scmp.ne.s32.totalorder %s98, %s99
      %p110 = scmp.eq.s32.totalorder %s15, 0
      %p111 = por %p109, %p110
      %p112 = scmp.ne.s32.totalorder %s98, %s99
      %p113 = scmp.eq.s32.totalorder %s16, 1
      %p114 = por %p112, %p113
      %p116 = scmp.ne.s32.totalorder %s99, %s115
      %p117 = scmp.eq.s32.totalorder %s16, 0
      %p118 = por %p116, %p117
      %s119 = ssub.s32 %s18, %s32
      %p120 = scmp.eq.s32.totalorder %s119, 0
      %s122 = sadd.s32 %s121, 1
      %s123 = scalar_select %p120, %s121, %s122
      %p126 = pneg %p120
      %p127 = scmp.eq.s32.totalorder %s10, 1
      %p128 = por %p126, %p127
      %p129 = scmp.ne.s32.totalorder %s121, %s124
      %p130 = scmp.eq.s32.totalorder %s10, 0
      %p131 = por %p129, %p130
      %p132 = scmp.ne.s32.totalorder %s121, %s124
      %p133 = scmp.eq.s32.totalorder %s15, 1
      %p134 = por %p132, %p133
      %p135 = scmp.ne.s32.totalorder %s124, %s125
      %p136 = scmp.eq.s32.totalorder %s15, 0
      %p137 = por %p135, %p136
      %p138 = scmp.ne.s32.totalorder %s124, %s125
      %p139 = scmp.eq.s32.totalorder %s16, 1
      %p140 = por %p138, %p139
      %p142 = scmp.ne.s32.totalorder %s125, %s141
      %p143 = scmp.eq.s32.totalorder %s16, 0
      %p144 = por %p142, %p143
      %s145 = ssub.s32 %s17, %s36
      %s146 = ssub.s32 %s18, %s32
      %s147 = sor.u32 %s145, %s146
      %p148 = scmp.eq.s32.totalorder %s147, 0
      %s150 = sadd.s32 %s149, 1
      %s151 = scalar_select %p148, %s149, %s150
      %p154 = pneg %p148
      %p155 = scmp.eq.s32.totalorder %s10, 1
      %p156 = por %p154, %p155
      %p157 = scmp.ne.s32.totalorder %s149, %s152
      %p158 = scmp.eq.s32.totalorder %s10, 0
      %p159 = por %p157, %p158
      %p160 = scmp.ne.s32.totalorder %s149, %s152
      %p161 = scmp.eq.s32.totalorder %s15, 1
      %p162 = por %p160, %p161
      %p163 = scmp.ne.s32.totalorder %s152, %s153
      %p164 = scmp.eq.s32.totalorder %s15, 0
      %p165 = por %p163, %p164
      %p166 = scmp.ne.s32.totalorder %s152, %s153
      %p167 = scmp.eq.s32.totalorder %s16, 1
      %p168 = por %p166, %p167
      %p170 = scmp.ne.s32.totalorder %s153, %s169
      %p171 = scmp.eq.s32.totalorder %s16, 0
      %p172 = por %p170, %p171
      %p173 = scmp.le.s32.totalorder 1, %s10
      %p174 = scmp.lt.s32.totalorder %s10, 3
      %p175 = pnand %p173, %p174
      %p176 = pneg %p175
      // Predicated region
      $region9: #{modified_resnet_fwd.40} parent=5 // pred_check
        _
      $region10: #{modified_resnet_fwd.40} parent=5 // pred_check_branch
        %178 = sbr.rel (%p175) target = $region12
      $region11: #{modified_resnet_fwd.40} parent=5 // pred_region
        %s179 = ssub.s32 %s10, 1
        // Predicated region
        $region13: #{modified_resnet_fwd.40} parent=11 // pred_check
          %p180 = pneg %p111
        $region14: #{modified_resnet_fwd.40} parent=11 // pred_check_branch
          %182 = sbr.rel (%p180) target = $region16
        $region15: #{modified_resnet_fwd.40} parent=11 // pred_region
          %p183 = scmp.lt.s32.totalorder %s21, 0
          %s184 = scalar_select %p183, %s21, 0
          %s185 = scalar_lea.vmem %s2, %s184
        $region16: #{modified_resnet_fwd.40} parent=11 // pred_fallthru
          _
        // Predicated region
        $region17: #{modified_resnet_fwd.40} parent=11 // pred_check
          %p186 = pneg %p137
        $region18: #{modified_resnet_fwd.40} parent=11 // pred_check_branch
          %188 = sbr.rel (%p186) target = $region20
        $region19: #{modified_resnet_fwd.40} parent=11 // pred_region
          %p189 = scmp.lt.s32.totalorder %s21, 0
          %s190 = scalar_select %p189, %s21, 0
          %s191 = scalar_lea.vmem %s3, %s190
        $region20: #{modified_resnet_fwd.40} parent=11 // pred_fallthru
          _
      $region12: #{modified_resnet_fwd.40} parent=5 // pred_fallthru
        _
      %p192 = scmp.lt.s32.totalorder %s10, 2
      // Predicated region
      $region21: #{modified_resnet_fwd.40} parent=5 // pred_check
        %p193 = pneg %p192
      $region22: #{modified_resnet_fwd.40} parent=5 // pred_check_branch
        %195 = sbr.rel (%p193) target = $region24
      $region23: #{modified_resnet_fwd.40} parent=5 // pred_region
        // Predicated region
        $region25: #{modified_resnet_fwd.40} parent=23 // pred_check
          %p196 = pneg %p51
        $region26: #{modified_resnet_fwd.40} parent=23 // pred_check_branch
          %198 = sbr.rel (%p196) target = $region28
        $region27: #{modified_resnet_fwd.40} parent=23 // pred_region
          %s199 = sand.u32 %s41, 1
          %s200 = sand.u32 %s41, 1
          %s201 = smul.addr %s200, 32
          %s202 = scalar_lea.vmem [#allocation3], %s201
          %s203 = smul.u32 2, %s17
          %s204 = smul.u32 4, %s19
          %s205 = smul.addr %s203, 8
          %s206 = sadd.s32 %s204, %s205
          %s207 = smul.addr %s206, 4
          %s208 = scalar_lea.vmem %s0, %s207
          // Predicated region
          $region29: #{modified_resnet_fwd.40} parent=27 // pred_check
            _
          $region30: #{modified_resnet_fwd.40} parent=27 // pred_check_branch
            %210 = sbr.rel (0) target = $region32
          $region31: #{modified_resnet_fwd.40} parent=27 // pred_region
            // Predicated region
            $region33: #{modified_resnet_fwd.40} parent=31 // pred_check
              _
            $region34: #{modified_resnet_fwd.40} parent=31 // pred_check_branch
              %212 = sbr.rel (0) target = $region36
            $region35: #{modified_resnet_fwd.40} parent=31 // pred_region
              loop: start=0, step=1, limit=1
              $region37: #{modified_resnet_fwd.40} parent=35 // loop_pre_header
                _
              $region38: #{modified_resnet_fwd.40} parent=35 // loop_header
                %s214 = sphi 0, %s218
                %p215 = scmp.ge.s32.totalorder %s214, 1
                %s219 = sphi %s208, %s208
                %s220 = sphi %s202, %s202
              $region39: #{modified_resnet_fwd.40} parent=35 // loop_header_branch
                %217 = sbr.rel (%p215) target = $region43
              $region40: #{modified_resnet_fwd.40} parent=35 // loop_body
                %v221 = vld [vmem:[%s219] sm:$0xff]
                %222 = vst [vmem:[%s220] sm:$0xff] %v221
                %v223 = vld [vmem:[%s219 + $0x8] sm:$0xff]
                %224 = vst [vmem:[%s220 + $0x8] sm:$0xff] %v223
                %v225 = vld [vmem:[%s219 + $0x20] sm:$0xff]
                %226 = vst [vmem:[%s220 + $0x10] sm:$0xff] %v225
                %v227 = vld [vmem:[%s219 + $0x28] sm:$0xff]
                %228 = vst [vmem:[%s220 + $0x18] sm:$0xff] %v227
              $region41: #{modified_resnet_fwd.40} parent=35 // loop_footer
                %s218 = sadd.s32 1, %s214
              $region42: #{modified_resnet_fwd.40} parent=35 // loop_footer_branch
                %213 = sbr.rel target = $region38
              $region43: #{modified_resnet_fwd.40} parent=35 // loop_exit
                _
            $region36: #{modified_resnet_fwd.40} parent=31 // pred_fallthru
              _
            // Predicated region
            $region44: #{modified_resnet_fwd.40} parent=31 // pred_check
              _
            $region45: #{modified_resnet_fwd.40} parent=31 // pred_check_branch
              %230 = sbr.rel target = $region47
            $region46: #{modified_resnet_fwd.40} parent=31 // pred_region
              _
            $region47: #{modified_resnet_fwd.40} parent=31 // pred_fallthru
              _
          $region32: #{modified_resnet_fwd.40} parent=27 // pred_fallthru
            _
          %231 = vnop
        $region28: #{modified_resnet_fwd.40} parent=23 // pred_fallthru
          _
        // Predicated region
        $region48: #{modified_resnet_fwd.40} parent=23 // pred_check
          %p232 = pneg %p79
        $region49: #{modified_resnet_fwd.40} parent=23 // pred_check_branch
          %234 = sbr.rel (%p232) target = $region51
        $region50: #{modified_resnet_fwd.40} parent=23 // pred_region
          %s235 = smul.u32 64, %s19
          %p236 = scmp.lt.s32.totalorder %s235, 127
          %s237 = scalar_select %p236, %s235, 127
          %p238 = scmp.lt.s32.totalorder %s18, 0
          %s239 = scalar_select %p238, %s18, 0
          %s240 = sadd.s32 %s239, %s237
          %s241 = smul.addr %s240, 4
          %s242 = scalar_lea.vmem %s1, %s241
          %s243 = smul.u32 64, %s19
        $region51: #{modified_resnet_fwd.40} parent=23 // pred_fallthru
          _
      $region24: #{modified_resnet_fwd.40} parent=5 // pred_fallthru
        _
      %p244 = scmp.le.s32.totalorder 1, %s10
      %p245 = scmp.lt.s32.totalorder %s10, 3
      %p246 = pnand %p244, %p245
      %p247 = pneg %p246
      // Predicated region
      $region52: #{modified_resnet_fwd.40} parent=5 // pred_check
        _
      $region53: #{modified_resnet_fwd.40} parent=5 // pred_check_branch
        %249 = sbr.rel (%p246) target = $region55
      $region54: #{modified_resnet_fwd.40} parent=5 // pred_region
        %s250 = ssub.s32 %s10, 1
        %s251 = sand.u32 %s44, 1
        %s252 = sand.u32 %s44, 1
        %s253 = smul.addr %s252, 32
        %s254 = scalar_lea.vmem [#allocation3], %s253
        // Predicated region
        $region56: #{modified_resnet_fwd.40} parent=54 // pred_check
          %p255 = pneg %p57
        $region57: #{modified_resnet_fwd.40} parent=54 // pred_check_branch
          %257 = sbr.rel (%p255) target = $region59
        $region58: #{modified_resnet_fwd.40} parent=54 // pred_region
          _
        $region59: #{modified_resnet_fwd.40} parent=54 // pred_fallthru
          _
        %s258 = sand.u32 %s44, 1
        %s259 = sand.u32 %s44, 1
        %s260 = smul.addr %s259, 32
        %s261 = scalar_lea.vmem [#allocation3], %s260
        %p262 = pneg %p57
        %p263 = pneg %p54
        %s264 = smul.u32 64, %s22
        %p265 = scmp.lt.s32.totalorder %s264, 127
        %s266 = scalar_select %p265, %s264, 127
        %p267 = scmp.lt.s32.totalorder %s21, 0
        %s268 = scalar_select %p267, %s21, 0
        %s269 = sadd.s32 %s268, %s266
        %s270 = smul.addr %s269, 4
        %s271 = scalar_lea.vmem %s1, %s270
        %p272 = pneg %p85
        %p273 = pneg %p82
        %p274 = scmp.lt.s32.totalorder %s21, 0
        %s275 = scalar_select %p274, %s21, 0
        %s276 = scalar_lea.vmem %s2, %s275
        %p277 = pneg %p111
        %p278 = pneg %p108
        %p279 = scmp.lt.s32.totalorder %s21, 0
        %s280 = scalar_select %p279, %s21, 0
        %s281 = scalar_lea.vmem %s3, %s280
        %p282 = pneg %p137
        %p283 = pneg %p134
        %p284 = pneg %p165
        %p285 = pneg %p162
        %s286 = smul.u32 2, %s20
        %p287 = scmp.lt.s32.totalorder %s286, 1
        %s288 = scalar_select %p287, %s286, 1
        %p289 = scmp.lt.s32.totalorder %s21, 0
        %s290 = scalar_select %p289, %s21, 0
        %s291 = sadd.s32 %s290, %s288
        %s292 = smul.addr %s291, 8
        %s293 = scalar_lea.vmem %s4, %s292
        %s294 = smul.u32 2, %s20
        %s295 = smul.u32 4, %s22
        %s296 = smul.u32 64, %s22
        %p297 = scmp.lt.s32.totalorder %s296, 127
        %s298 = scalar_select %p297, %s296, 127
        %p299 = scmp.lt.s32.totalorder %s21, 0
        %s300 = scalar_select %p299, %s21, 0
        %s301 = sadd.s32 %s300, %s298
        %s302 = smul.addr %s301, 4
        %s303 = scalar_lea.vmem %s1, %s302
        %s304 = smul.u32 64, %s22
        %p305 = scmp.lt.s32.totalorder %s21, 0
        %s306 = scalar_select %p305, %s21, 0
        %s307 = scalar_lea.vmem %s2, %s306
        %p308 = scmp.lt.s32.totalorder %s21, 0
        %s309 = scalar_select %p308, %s21, 0
        %s310 = scalar_lea.vmem %s3, %s309
        %s311 = smul.u32 2, %s20
        %p312 = scmp.lt.s32.totalorder %s311, 1
        %s313 = scalar_select %p312, %s311, 1
        %p314 = scmp.lt.s32.totalorder %s21, 0
        %s315 = scalar_select %p314, %s21, 0
        %s316 = sadd.s32 %s315, %s313
        %s317 = smul.addr %s316, 8
        %s318 = scalar_lea.vmem %s4, %s317
        %s319 = smul.u32 2, %s20
        %p321 = scmp.eq.s32.totalorder %s22, 0
        // Predicated region
        $region60: #{modified_resnet_fwd.40} parent=54 // pred_check
          %p322 = pneg %p321
        $region61: #{modified_resnet_fwd.40} parent=54 // pred_check_branch
          %324 = sbr.rel (%p322) target = $region63
        $region62: #{modified_resnet_fwd.40} parent=54 // pred_region
          %325 = vst [vmem:[#allocation2] sm:$0xff] 0.0
          %326 = vst [vmem:[#allocation2 + $0x8] sm:$0xff] 0.0
        $region63: #{modified_resnet_fwd.40} parent=54 // pred_fallthru
          _
        %v327 = vld [vmem:[#allocation2] sm:$0xff]
        %v328 = vld [vmem:[#allocation2 + $0x8] sm:$0xff]
        %v329 = vld [vmem:[%s254] sm:$0xff]
        %v330 = vld [vmem:[%s254 + $0x8] sm:$0xff]
        %v331 = vld [vmem:[%s254 + $0x10] sm:$0xff]
        %v332 = vld [vmem:[%s254 + $0x18] sm:$0xff]
        %v333 = vld [vmem:[%s303] sm:$0xf]
        %v334 = vld [vmem:[%s303 + $0x4] sm:$0xf]
        %v335 = vld [vmem:[%s303 + $0x8] sm:$0xf]
        %v336 = vld [vmem:[%s303 + $0xc] sm:$0xf]
        %v337 = vld [vmem:[%s303 + $0x10] sm:$0xf]
        %v338 = vld [vmem:[%s303 + $0x14] sm:$0xf]
        %v339 = vld [vmem:[%s303 + $0x18] sm:$0xf]
        %v340 = vld [vmem:[%s303 + $0x1c] sm:$0xf]
        %v341 = vld [vmem:[%s303 + $0x20] sm:$0xf]
        %v342 = vld [vmem:[%s303 + $0x24] sm:$0xf]
        %v343 = vld [vmem:[%s303 + $0x28] sm:$0xf]
        %v344 = vld [vmem:[%s303 + $0x2c] sm:$0xf]
        %v345 = vld [vmem:[%s303 + $0x30] sm:$0xf]
        %v346 = vld [vmem:[%s303 + $0x34] sm:$0xf]
        %v347 = vld [vmem:[%s303 + $0x38] sm:$0xf]
        %v348 = vld [vmem:[%s303 + $0x3c] sm:$0xf]
        %v349 = vld [vmem:[%s303 + $0x40] sm:$0xf]
        %v350 = vld [vmem:[%s303 + $0x44] sm:$0xf]
        %v351 = vld [vmem:[%s303 + $0x48] sm:$0xf]
        %v352 = vld [vmem:[%s303 + $0x4c] sm:$0xf]
        %v353 = vld [vmem:[%s303 + $0x50] sm:$0xf]
        %v354 = vld [vmem:[%s303 + $0x54] sm:$0xf]
        %v355 = vld [vmem:[%s303 + $0x58] sm:$0xf]
        %v356 = vld [vmem:[%s303 + $0x5c] sm:$0xf]
        %v357 = vld [vmem:[%s303 + $0x60] sm:$0xf]
        %v358 = vld [vmem:[%s303 + $0x64] sm:$0xf]
        %v359 = vld [vmem:[%s303 + $0x68] sm:$0xf]
        %v360 = vld [vmem:[%s303 + $0x6c] sm:$0xf]
        %v361 = vld [vmem:[%s303 + $0x70] sm:$0xf]
        %v362 = vld [vmem:[%s303 + $0x74] sm:$0xf]
        %v363 = vld [vmem:[%s303 + $0x78] sm:$0xf]
        %v364 = vld [vmem:[%s303 + $0x7c] sm:$0xf]
        %v365 = vld [vmem:[%s303 + $0x80] sm:$0xf]
        %v366 = vld [vmem:[%s303 + $0x84] sm:$0xf]
        %v367 = vld [vmem:[%s303 + $0x88] sm:$0xf]
        %v368 = vld [vmem:[%s303 + $0x8c] sm:$0xf]
        %v369 = vld [vmem:[%s303 + $0x90] sm:$0xf]
        %v370 = vld [vmem:[%s303 + $0x94] sm:$0xf]
        %v371 = vld [vmem:[%s303 + $0x98] sm:$0xf]
        %v372 = vld [vmem:[%s303 + $0x9c] sm:$0xf]
        %v373 = vld [vmem:[%s303 + $0xa0] sm:$0xf]
        %v374 = vld [vmem:[%s303 + $0xa4] sm:$0xf]
        %v375 = vld [vmem:[%s303 + $0xa8] sm:$0xf]
        %v376 = vld [vmem:[%s303 + $0xac] sm:$0xf]
        %v377 = vld [vmem:[%s303 + $0xb0] sm:$0xf]
        %v378 = vld [vmem:[%s303 + $0xb4] sm:$0xf]
        %v379 = vld [vmem:[%s303 + $0xb8] sm:$0xf]
        %v380 = vld [vmem:[%s303 + $0xbc] sm:$0xf]
        %v381 = vld [vmem:[%s303 + $0xc0] sm:$0xf]
        %v382 = vld [vmem:[%s303 + $0xc4] sm:$0xf]
        %v383 = vld [vmem:[%s303 + $0xc8] sm:$0xf]
        %v384 = vld [vmem:[%s303 + $0xcc] sm:$0xf]
        %v385 = vld [vmem:[%s303 + $0xd0] sm:$0xf]
        %v386 = vld [vmem:[%s303 + $0xd4] sm:$0xf]
        %v387 = vld [vmem:[%s303 + $0xd8] sm:$0xf]
        %v388 = vld [vmem:[%s303 + $0xdc] sm:$0xf]
        %v389 = vld [vmem:[%s303 + $0xe0] sm:$0xf]
        %v390 = vld [vmem:[%s303 + $0xe4] sm:$0xf]
        %v391 = vld [vmem:[%s303 + $0xe8] sm:$0xf]
        %v392 = vld [vmem:[%s303 + $0xec] sm:$0xf]
        %v393 = vld [vmem:[%s303 + $0xf0] sm:$0xf]
        %v394 = vld [vmem:[%s303 + $0xf4] sm:$0xf]
        %v395 = vld [vmem:[%s303 + $0xf8] sm:$0xf]
        %v396 = vld [vmem:[%s303 + $0xfc] sm:$0xf]
        %v401 = vunpack.c.l.b16 %v329
        %v402 = vunpack.c.h.b16 %v329
        %v403 = vunpack.c.l.b16 %v330
        %v404 = vunpack.c.h.b16 %v330
        %v405 = vunpack.c.l.b16 %v331
        %v406 = vunpack.c.h.b16 %v331
        %v407 = vunpack.c.l.b16 %v332
        %v408 = vunpack.c.h.b16 %v332
        %v409 = vpack.c.b16 %v405, %v401
        %v410 = vpack.c.b16 %v406, %v402
        %v411 = vpack.c.b16 %v407, %v403
        %v412 = vpack.c.b16 %v408, %v404
        %v481 = vunpack.c.l.b16 %v333
        %v482 = vunpack.c.l.b16 %v334
        %v483 = vunpack.c.l.b16 %v335
        %v484 = vunpack.c.l.b16 %v336
        %v485 = vunpack.c.l.b16 %v337
        %v486 = vunpack.c.l.b16 %v338
        %v487 = vunpack.c.l.b16 %v339
        %v488 = vunpack.c.l.b16 %v340
        %v489 = vunpack.c.l.b16 %v341
        %v490 = vunpack.c.l.b16 %v342
        %v491 = vunpack.c.l.b16 %v343
        %v492 = vunpack.c.l.b16 %v344
        %v493 = vunpack.c.l.b16 %v345
        %v494 = vunpack.c.l.b16 %v346
        %v495 = vunpack.c.l.b16 %v347
        %v496 = vunpack.c.l.b16 %v348
        %v497 = vunpack.c.l.b16 %v349
        %v498 = vunpack.c.l.b16 %v350
        %v499 = vunpack.c.l.b16 %v351
        %v500 = vunpack.c.l.b16 %v352
        %v501 = vunpack.c.l.b16 %v353
        %v502 = vunpack.c.l.b16 %v354
        %v503 = vunpack.c.l.b16 %v355
        %v504 = vunpack.c.l.b16 %v356
        %v505 = vunpack.c.l.b16 %v357
        %v506 = vunpack.c.l.b16 %v358
        %v507 = vunpack.c.l.b16 %v359
        %v508 = vunpack.c.l.b16 %v360
        %v509 = vunpack.c.l.b16 %v361
        %v510 = vunpack.c.l.b16 %v362
        %v511 = vunpack.c.l.b16 %v363
        %v512 = vunpack.c.l.b16 %v364
        %v513 = vunpack.c.l.b16 %v365
        %v514 = vunpack.c.l.b16 %v366
        %v515 = vunpack.c.l.b16 %v367
        %v516 = vunpack.c.l.b16 %v368
        %v517 = vunpack.c.l.b16 %v369
        %v518 = vunpack.c.l.b16 %v370
        %v519 = vunpack.c.l.b16 %v371
        %v520 = vunpack.c.l.b16 %v372
        %v521 = vunpack.c.l.b16 %v373
        %v522 = vunpack.c.l.b16 %v374
        %v523 = vunpack.c.l.b16 %v375
        %v524 = vunpack.c.l.b16 %v376
        %v525 = vunpack.c.l.b16 %v377
        %v526 = vunpack.c.l.b16 %v378
        %v527 = vunpack.c.l.b16 %v379
        %v528 = vunpack.c.l.b16 %v380
        %v529 = vunpack.c.l.b16 %v381
        %v530 = vunpack.c.l.b16 %v382
        %v531 = vunpack.c.l.b16 %v383
        %v532 = vunpack.c.l.b16 %v384
        %v533 = vunpack.c.l.b16 %v385
        %v534 = vunpack.c.l.b16 %v386
        %v535 = vunpack.c.l.b16 %v387
        %v536 = vunpack.c.l.b16 %v388
        %v537 = vunpack.c.l.b16 %v389
        %v538 = vunpack.c.l.b16 %v390
        %v539 = vunpack.c.l.b16 %v391
        %v540 = vunpack.c.l.b16 %v392
        %v541 = vunpack.c.l.b16 %v393
        %v542 = vunpack.c.l.b16 %v394
        %v543 = vunpack.c.l.b16 %v395
        %v544 = vunpack.c.l.b16 %v396
        %v545 = vpack.c.b16 %v482, %v481
        %v546 = vpack.c.b16 %v484, %v483
        %v547 = vpack.c.b16 %v486, %v485
        %v548 = vpack.c.b16 %v488, %v487
        %v549 = vpack.c.b16 %v490, %v489
        %v550 = vpack.c.b16 %v492, %v491
        %v551 = vpack.c.b16 %v494, %v493
        %v552 = vpack.c.b16 %v496, %v495
        %v553 = vpack.c.b16 %v498, %v497
        %v554 = vpack.c.b16 %v500, %v499
        %v555 = vpack.c.b16 %v502, %v501
        %v556 = vpack.c.b16 %v504, %v503
        %v557 = vpack.c.b16 %v506, %v505
        %v558 = vpack.c.b16 %v508, %v507
        %v559 = vpack.c.b16 %v510, %v509
        %v560 = vpack.c.b16 %v512, %v511
        %v561 = vpack.c.b16 %v514, %v513
        %v562 = vpack.c.b16 %v516, %v515
        %v563 = vpack.c.b16 %v518, %v517
        %v564 = vpack.c.b16 %v520, %v519
        %v565 = vpack.c.b16 %v522, %v521
        %v566 = vpack.c.b16 %v524, %v523
        %v567 = vpack.c.b16 %v526, %v525
        %v568 = vpack.c.b16 %v528, %v527
        %v569 = vpack.c.b16 %v530, %v529
        %v570 = vpack.c.b16 %v532, %v531
        %v571 = vpack.c.b16 %v534, %v533
        %v572 = vpack.c.b16 %v536, %v535
        %v573 = vpack.c.b16 %v538, %v537
        %v574 = vpack.c.b16 %v540, %v539
        %v575 = vpack.c.b16 %v542, %v541
        %v576 = vpack.c.b16 %v544, %v543
        %609 = vmatprep.subr.bf16.mxu0 0
        %610 = vmatpush1.bf16.msra.mxu0 %v545
        %611 = vmatprep.subr.bf16.mxu0 0
        %612 = vmatpush1.bf16.msra.mxu0 %v546
        %613 = vmatprep.subr.bf16.mxu0 0
        %614 = vmatpush1.bf16.msra.mxu0 %v547
        %615 = vmatprep.subr.bf16.mxu0 0
        %616 = vmatpush1.bf16.msra.mxu0 %v548
        %617 = vmatprep.subr.bf16.mxu0 0
        %618 = vmatpush1.bf16.msra.mxu0 %v549
        %619 = vmatprep.subr.bf16.mxu0 0
        %620 = vmatpush1.bf16.msra.mxu0 %v550
        %621 = vmatprep.subr.bf16.mxu0 0
        %622 = vmatpush1.bf16.msra.mxu0 %v551
        %623 = vmatprep.subr.bf16.mxu0 0
        %624 = vmatpush1.bf16.msra.mxu0 %v552
        %625 = vmatprep.subr.bf16.mxu0 0
        %626 = vmatpush1.bf16.msra.mxu0 %v553
        %627 = vmatprep.subr.bf16.mxu0 0
        %628 = vmatpush1.bf16.msra.mxu0 %v554
        %629 = vmatprep.subr.bf16.mxu0 0
        %630 = vmatpush1.bf16.msra.mxu0 %v555
        %631 = vmatprep.subr.bf16.mxu0 0
        %632 = vmatpush1.bf16.msra.mxu0 %v556
        %633 = vmatprep.subr.bf16.mxu0 0
        %634 = vmatpush1.bf16.msra.mxu0 %v557
        %635 = vmatprep.subr.bf16.mxu0 0
        %636 = vmatpush1.bf16.msra.mxu0 %v558
        %637 = vmatprep.subr.bf16.mxu0 0
        %638 = vmatpush1.bf16.msra.mxu0 %v559
        %639 = vmatprep.subr.bf16.mxu0 0
        %640 = vmatpush1.bf16.msra.mxu0 %v560
        %641 = vmatprep.mubr.bf16.mxu0 %v410
        %642 = vmatmul.mubr.bf16.gmra.mrb[0].mxu0 %v409
        %v643 = vpop.f32.mrb[0].mxu0
        %v644 = vadd.f32 0.0, %v643
        %v645 = vpop.f32.mrb[0].mxu0
        %v646 = vpop.f32.mrb[0].mxu0
        %v647 = vadd.f32 0.0, %v646
        %v648 = vpop.f32.mrb[0].mxu0
        %649 = vdwg.mxu0
        %650 = vmatprep.subr.bf16.mxu0 0
        %651 = vmatpush1.bf16.msra.mxu0 %v561
        %652 = vmatprep.subr.bf16.mxu0 0
        %653 = vmatpush1.bf16.msra.mxu0 %v562
        %654 = vmatprep.subr.bf16.mxu0 0
        %655 = vmatpush1.bf16.msra.mxu0 %v563
        %656 = vmatprep.subr.bf16.mxu0 0
        %657 = vmatpush1.bf16.msra.mxu0 %v564
        %658 = vmatprep.subr.bf16.mxu0 0
        %659 = vmatpush1.bf16.msra.mxu0 %v565
        %660 = vmatprep.subr.bf16.mxu0 0
        %661 = vmatpush1.bf16.msra.mxu0 %v566
        %662 = vmatprep.subr.bf16.mxu0 0
        %663 = vmatpush1.bf16.msra.mxu0 %v567
        %664 = vmatprep.subr.bf16.mxu0 0
        %665 = vmatpush1.bf16.msra.mxu0 %v568
        %666 = vmatprep.subr.bf16.mxu0 0
        %667 = vmatpush1.bf16.msra.mxu0 %v569
        %668 = vmatprep.subr.bf16.mxu0 0
        %669 = vmatpush1.bf16.msra.mxu0 %v570
        %670 = vmatprep.subr.bf16.mxu0 0
        %671 = vmatpush1.bf16.msra.mxu0 %v571
        %672 = vmatprep.subr.bf16.mxu0 0
        %673 = vmatpush1.bf16.msra.mxu0 %v572
        %674 = vmatprep.subr.bf16.mxu0 0
        %675 = vmatpush1.bf16.msra.mxu0 %v573
        %676 = vmatprep.subr.bf16.mxu0 0
        %677 = vmatpush1.bf16.msra.mxu0 %v574
        %678 = vmatprep.subr.bf16.mxu0 0
        %679 = vmatpush1.bf16.msra.mxu0 %v575
        %680 = vmatprep.subr.bf16.mxu0 0
        %681 = vmatpush1.bf16.msra.mxu0 %v576
        %682 = vmatprep.mubr.bf16.mxu0 %v412
        %683 = vmatmul.mubr.bf16.gmra.mrb[0].mxu0 %v411
        %v684 = vpop.f32.mrb[0].mxu0
        %v685 = vadd.f32 %v644, %v684
        %v686 = vpop.f32.mrb[0].mxu0
        %v687 = vpop.f32.mrb[0].mxu0
        %v688 = vadd.f32 %v647, %v687
        %v689 = vpop.f32.mrb[0].mxu0
        %690 = vdwg.mxu0
        %v691 = vadd.f32 %v327, %v685
        %v692 = vadd.f32 %v328, %v688
        %693 = vst [vmem:[#allocation2] sm:$0xff] %v691
        %694 = vst [vmem:[#allocation2 + $0x8] sm:$0xff] %v692
        %p695 = scmp.eq.s32.totalorder %s22, 1
        // Predicated region
        $region64: #{modified_resnet_fwd.40} parent=54 // pred_check
          %p696 = pneg %p695
        $region65: #{modified_resnet_fwd.40} parent=54 // pred_check_branch
          %698 = sbr.rel (%p696) target = $region67
        $region66: #{modified_resnet_fwd.40} parent=54 // pred_region
          %v699 = vld [vmem:[#allocation2] sm:$0xff]
          %v700 = vld [vmem:[#allocation2 + $0x8] sm:$0xff]
          %v701 = vld [vmem:[%s307] sm:$0x1]
          %v703 = vlaneseq
          %v704 = vshrl.u32 %v703, 7
          %v705 = vsub.s32 0, %v704
          %v706 = vrot.slane %v701, %v705
          %v708 = vmul.f32 %v699, %v706
          %v709 = vmul.f32 %v700, %v706
          %v710 = vld [vmem:[%s310] sm:$0x1]
          %v712 = vlaneseq
          %v713 = vshrl.u32 %v712, 7
          %v714 = vsub.s32 0, %v713
          %v715 = vrot.slane %v710, %v714
          %v717 = vadd.f32 %v708, %v715
          %v718 = vadd.f32 %v709, %v715
          %v719 = vmax.f32 %v717, 0.0
          %v720 = vmax.f32 %v718, 0.0
          %721 = vst [vmem:[%s318] sm:$0xff] %v719
          %722 = vst [vmem:[%s318 + $0x8] sm:$0xff] %v720
        $region67: #{modified_resnet_fwd.40} parent=54 // pred_fallthru
          _
        %s723 = smul.u32 2, %s20
        %p724 = scmp.lt.s32.totalorder %s723, 1
        %s725 = scalar_select %p724, %s723, 1
        %p726 = scmp.lt.s32.totalorder %s21, 0
        %s727 = scalar_select %p726, %s21, 0
        %s728 = sadd.s32 %s727, %s725
        %s729 = smul.addr %s728, 8
        %s730 = scalar_lea.vmem %s4, %s729
        // Predicated region
        $region68: #{modified_resnet_fwd.40} parent=54 // pred_check
          %p731 = pneg %p162
        $region69: #{modified_resnet_fwd.40} parent=54 // pred_check_branch
          %733 = sbr.rel (%p731) target = $region71
        $region70: #{modified_resnet_fwd.40} parent=54 // pred_region
          %s734 = smul.u32 2, %s20
        $region71: #{modified_resnet_fwd.40} parent=54 // pred_fallthru
          _
        // Predicated region
        $region72: #{modified_resnet_fwd.40} parent=54 // pred_check
          %p735 = pneg %p162
        $region73: #{modified_resnet_fwd.40} parent=54 // pred_check_branch
          %737 = sbr.rel (%p735) target = $region75
        $region74: #{modified_resnet_fwd.40} parent=54 // pred_region
          %s738 = smul.u32 2, %s20
          %p739 = scmp.lt.s32.totalorder %s738, 1
          %s740 = scalar_select %p739, %s738, 1
          %p741 = scmp.lt.s32.totalorder %s21, 0
          %s742 = scalar_select %p741, %s21, 0
          %s743 = sadd.s32 %s742, %s740
          %s744 = smul.addr %s743, 8
          %s745 = scalar_lea.vmem %s4, %s744
        $region75: #{modified_resnet_fwd.40} parent=54 // pred_fallthru
          _
      $region55: #{modified_resnet_fwd.40} parent=5 // pred_fallthru
        _
      %p746 = scmp.le.s32.totalorder 2, %s10
      // Predicated region
      $region76: #{modified_resnet_fwd.40} parent=5 // pred_check
        %p747 = pneg %p746
      $region77: #{modified_resnet_fwd.40} parent=5 // pred_check_branch
        %749 = sbr.rel (%p747) target = $region79
      $region78: #{modified_resnet_fwd.40} parent=5 // pred_region
        %s750 = ssub.s32 %s10, 2
      $region79: #{modified_resnet_fwd.40} parent=5 // pred_fallthru
        _
    $region6: #{modified_resnet_fwd.40} parent=1 // loop_footer
      %s14 = sadd.s32 1, %s10
    $region7: #{modified_resnet_fwd.40} parent=1 // loop_footer_branch
      %9 = sbr.rel target = $region3
    $region8: #{modified_resnet_fwd.40} parent=1 // loop_exit
      _

// kernel: modified_resnet_fwd.42
$region0: #{modified_resnet_fwd.42}
  #allocation0 [shape = 'u32[]', space=smem, size = 0x4, offset = 0x4, fixed_abs, tag = 'smem constant byte address 0x4 - core index']
  #allocation1 [shape = 'u32[144,128]{1,0:T(1,128)}', space=vmem, size = 0x12000, scoped, tag = 'internal scratch']
  #allocation2 [shape = 'f32[16,256]{1,0:T(8,128)}', space=vmem, size = 0x4000, scoped, tag = 'scratch operand']
  %s0 = inlined_call_operand.vmem [shape: bf16[16,128], index: 0, kind: input, shape index: {}]
  %s1 = inlined_call_operand.vmem [shape: bf16[128,256], index: 1, kind: input, shape index: {}]
  %s2 = inlined_call_operand.vmem [shape: f32[1,256], index: 2, kind: input, shape index: {}]
  %s3 = inlined_call_operand.vmem [shape: f32[1,256], index: 3, kind: input, shape index: {}]
  %s4 = inlined_call_operand.vmem [shape: f32[16,256], index: 4, kind: input, shape index: {}]
  %s5 = inlined_call_operand.vmem [shape: f32[16,256], index: 5, kind: output, shape index: {}]
  %s6 = sld [smem:[#allocation0]]
  $region38: #{modified_resnet_fwd.42} parent=0
    _
  %s8 = ssub.s32 1, %s6
  %s9 = scalar_select 0, %s8, %s6
  // Predicated region
  $region2: #{modified_resnet_fwd.42} parent=0 // pred_check
    _
  $region3: #{modified_resnet_fwd.42} parent=0 // pred_check_branch
    %11 = sbr.rel (0) target = $region5
  $region4: #{modified_resnet_fwd.42} parent=0 // pred_region
    _
  $region5: #{modified_resnet_fwd.42} parent=0 // pred_fallthru
    _
  // Predicated region
  $region6: #{modified_resnet_fwd.42} parent=0 // pred_check
    _
  $region7: #{modified_resnet_fwd.42} parent=0 // pred_check_branch
    %13 = sbr.rel (0) target = $region9
  $region8: #{modified_resnet_fwd.42} parent=0 // pred_region
    _
  $region9: #{modified_resnet_fwd.42} parent=0 // pred_fallthru
    _
  // Predicated region
  $region10: #{modified_resnet_fwd.42} parent=0 // pred_check
    _
  $region11: #{modified_resnet_fwd.42} parent=0 // pred_check_branch
    %15 = sbr.rel (0) target = $region13
  $region12: #{modified_resnet_fwd.42} parent=0 // pred_region
    _
  $region13: #{modified_resnet_fwd.42} parent=0 // pred_fallthru
    _
  // Predicated region
  $region14: #{modified_resnet_fwd.42} parent=0 // pred_check
    _
  $region15: #{modified_resnet_fwd.42} parent=0 // pred_check_branch
    %17 = sbr.rel (0) target = $region17
  $region16: #{modified_resnet_fwd.42} parent=0 // pred_region
    _
  $region17: #{modified_resnet_fwd.42} parent=0 // pred_fallthru
    _
  // Predicated region
  $region18: #{modified_resnet_fwd.42} parent=0 // pred_check
    _
  $region19: #{modified_resnet_fwd.42} parent=0 // pred_check_branch
    %19 = sbr.rel (0) target = $region21
  $region20: #{modified_resnet_fwd.42} parent=0 // pred_region
    _
  $region21: #{modified_resnet_fwd.42} parent=0 // pred_fallthru
    _
  %p21 = scmp.eq.s32.totalorder 0, 0
  // Predicated region
  $region22: #{modified_resnet_fwd.42} parent=0 // pred_check
    %p22 = pneg %p21
  $region23: #{modified_resnet_fwd.42} parent=0 // pred_check_branch
    %24 = sbr.rel (%p22) target = $region25
  $region24: #{modified_resnet_fwd.42} parent=0 // pred_region
    %25 = vst [vmem:[#allocation2] sm:$0xff] 0.0
    %26 = vst [vmem:[#allocation2 + $0x8] sm:$0xff] 0.0
    %27 = vst [vmem:[#allocation2 + $0x10] sm:$0xff] 0.0
    %28 = vst [vmem:[#allocation2 + $0x18] sm:$0xff] 0.0
  $region25: #{modified_resnet_fwd.42} parent=0 // pred_fallthru
    _
  %v29 = vld [vmem:[#allocation2] sm:$0xff]
  %v30 = vld [vmem:[#allocation2 + $0x8] sm:$0xff]
  %v31 = vld [vmem:[#allocation2 + $0x10] sm:$0xff]
  %v32 = vld [vmem:[#allocation2 + $0x18] sm:$0xff]
  %v33 = vld [vmem:[%s0] sm:$0xf]
  %v34 = vld [vmem:[%s0 + $0x4] sm:$0xf]
  %v35 = vld [vmem:[%s1] sm:$0xff]
  %v36 = vld [vmem:[%s1 + $0x8] sm:$0xff]
  %v37 = vld [vmem:[%s1 + $0x10] sm:$0xff]
  %v38 = vld [vmem:[%s1 + $0x18] sm:$0xff]
  %v39 = vld [vmem:[%s1 + $0x20] sm:$0xff]
  %v40 = vld [vmem:[%s1 + $0x28] sm:$0xff]
  %v41 = vld [vmem:[%s1 + $0x30] sm:$0xff]
  %v42 = vld [vmem:[%s1 + $0x38] sm:$0xff]
  %v43 = vld [vmem:[%s1 + $0x40] sm:$0xff]
  %v44 = vld [vmem:[%s1 + $0x48] sm:$0xff]
  %v45 = vld [vmem:[%s1 + $0x50] sm:$0xff]
  %v46 = vld [vmem:[%s1 + $0x58] sm:$0xff]
  %v47 = vld [vmem:[%s1 + $0x60] sm:$0xff]
  %v48 = vld [vmem:[%s1 + $0x68] sm:$0xff]
  %v49 = vld [vmem:[%s1 + $0x70] sm:$0xff]
  %v50 = vld [vmem:[%s1 + $0x78] sm:$0xff]
  %v53 = vunpack.c.l.b16 %v33
  %v54 = vunpack.c.l.b16 %v34
  %v55 = vpack.c.b16 %v54, %v53
  %v73 = vunpack.c.l.b16 %v35
  %v74 = vunpack.c.h.b16 %v35
  %v75 = vunpack.c.l.b16 %v36
  %v76 = vunpack.c.h.b16 %v36
  %v77 = vunpack.c.l.b16 %v37
  %v78 = vunpack.c.h.b16 %v37
  %v79 = vunpack.c.l.b16 %v38
  %v80 = vunpack.c.h.b16 %v38
  %v81 = vunpack.c.l.b16 %v39
  %v82 = vunpack.c.h.b16 %v39
  %v83 = vunpack.c.l.b16 %v40
  %v84 = vunpack.c.h.b16 %v40
  %v85 = vunpack.c.l.b16 %v41
  %v86 = vunpack.c.h.b16 %v41
  %v87 = vunpack.c.l.b16 %v42
  %v88 = vunpack.c.h.b16 %v42
  %v89 = vunpack.c.l.b16 %v43
  %v90 = vunpack.c.h.b16 %v43
  %v91 = vunpack.c.l.b16 %v44
  %v92 = vunpack.c.h.b16 %v44
  %v93 = vunpack.c.l.b16 %v45
  %v94 = vunpack.c.h.b16 %v45
  %v95 = vunpack.c.l.b16 %v46
  %v96 = vunpack.c.h.b16 %v46
  %v97 = vunpack.c.l.b16 %v47
  %v98 = vunpack.c.h.b16 %v47
  %v99 = vunpack.c.l.b16 %v48
  %v100 = vunpack.c.h.b16 %v48
  %v101 = vunpack.c.l.b16 %v49
  %v102 = vunpack.c.h.b16 %v49
  %v103 = vunpack.c.l.b16 %v50
  %v104 = vunpack.c.h.b16 %v50
  %v105 = vpack.c.b16 %v75, %v73
  %v106 = vpack.c.b16 %v76, %v74
  %v107 = vpack.c.b16 %v79, %v77
  %v108 = vpack.c.b16 %v80, %v78
  %v109 = vpack.c.b16 %v83, %v81
  %v110 = vpack.c.b16 %v84, %v82
  %v111 = vpack.c.b16 %v87, %v85
  %v112 = vpack.c.b16 %v88, %v86
  %v113 = vpack.c.b16 %v91, %v89
  %v114 = vpack.c.b16 %v92, %v90
  %v115 = vpack.c.b16 %v95, %v93
  %v116 = vpack.c.b16 %v96, %v94
  %v117 = vpack.c.b16 %v99, %v97
  %v118 = vpack.c.b16 %v100, %v98
  %v119 = vpack.c.b16 %v103, %v101
  %v120 = vpack.c.b16 %v104, %v102
  %137 = vmatprep.subr.bf16.mxu0 %v106
  %138 = vmatpush1.bf16.msra.mxu0 %v105
  %139 = vmatprep.subr.bf16.mxu0 %v108
  %140 = vmatpush1.bf16.msra.mxu0 %v107
  %141 = vmatprep.subr.bf16.mxu0 %v110
  %142 = vmatpush1.bf16.msra.mxu0 %v109
  %143 = vmatprep.subr.bf16.mxu0 %v112
  %144 = vmatpush1.bf16.msra.mxu0 %v111
  %145 = vmatprep.subr.bf16.mxu0 %v114
  %146 = vmatpush1.bf16.msra.mxu0 %v113
  %147 = vmatprep.subr.bf16.mxu0 %v116
  %148 = vmatpush1.bf16.msra.mxu0 %v115
  %149 = vmatprep.subr.bf16.mxu0 %v118
  %150 = vmatpush1.bf16.msra.mxu0 %v117
  %151 = vmatprep.subr.bf16.mxu0 %v120
  %152 = vmatpush1.bf16.msra.mxu0 %v119
  %153 = vmatprep.subr.bf16.mxu0 0
  %154 = vmatpush1.bf16.msra.mxu0 0
  %155 = vmatprep.subr.bf16.mxu0 0
  %156 = vmatpush1.bf16.msra.mxu0 0
  %157 = vmatprep.subr.bf16.mxu0 0
  %158 = vmatpush1.bf16.msra.mxu0 0
  %159 = vmatprep.subr.bf16.mxu0 0
  %160 = vmatpush1.bf16.msra.mxu0 0
  %161 = vmatprep.subr.bf16.mxu0 0
  %162 = vmatpush1.bf16.msra.mxu0 0
  %163 = vmatprep.subr.bf16.mxu0 0
  %164 = vmatpush1.bf16.msra.mxu0 0
  %165 = vmatprep.subr.bf16.mxu0 0
  %166 = vmatpush1.bf16.msra.mxu0 0
  %167 = vmatprep.subr.bf16.mxu0 0
  %168 = vmatpush1.bf16.msra.mxu0 0
  %169 = vmatprep.mubr.bf16.mxu0 0
  %170 = vmatmul.mubr.bf16.gmra.mrb[0].mxu0 %v55
  %v171 = vpop.f32.mrb[0].mxu0
  %v172 = vadd.f32 0.0, %v171
  %v173 = vpop.f32.mrb[0].mxu0
  %v174 = vadd.f32 0.0, %v173
  %v175 = vpop.f32.mrb[0].mxu0
  %v176 = vadd.f32 0.0, %v175
  %v177 = vpop.f32.mrb[0].mxu0
  %v178 = vadd.f32 0.0, %v177
  %179 = vdwg.mxu0
  %v180 = vadd.f32 %v29, %v172
  %v181 = vadd.f32 %v30, %v174
  %v182 = vadd.f32 %v31, %v176
  %v183 = vadd.f32 %v32, %v178
  %184 = vst [vmem:[#allocation2] sm:$0xff] %v180
  %185 = vst [vmem:[#allocation2 + $0x8] sm:$0xff] %v181
  %186 = vst [vmem:[#allocation2 + $0x10] sm:$0xff] %v182
  %187 = vst [vmem:[#allocation2 + $0x18] sm:$0xff] %v183
  // Predicated region
  $region26: #{modified_resnet_fwd.42} parent=0 // pred_check
    %p188 = pneg %p21
  $region27: #{modified_resnet_fwd.42} parent=0 // pred_check_branch
    %190 = sbr.rel (%p188) target = $region29
  $region28: #{modified_resnet_fwd.42} parent=0 // pred_region
    %v191 = vld [vmem:[#allocation2] sm:$0xff]
    %v192 = vld [vmem:[#allocation2 + $0x8] sm:$0xff]
    %v193 = vld [vmem:[#allocation2 + $0x10] sm:$0xff]
    %v194 = vld [vmem:[#allocation2 + $0x18] sm:$0xff]
    %v195 = vld [vmem:[%s2] sm:$0x3]
    %v197 = vlaneseq
    %v198 = vshrl.u32 %v197, 7
    %v199 = vsub.s32 0, %v198
    %v200 = vrot.slane %v195, %v199
    %v201 = vlaneseq
    %v202 = vshrl.u32 %v201, 7
    %v203 = vsub.s32 1, %v202
    %v204 = vrot.slane %v195, %v203
    %v207 = vmul.f32 %v191, %v200
    %v208 = vmul.f32 %v192, %v204
    %v209 = vmul.f32 %v193, %v200
    %v210 = vmul.f32 %v194, %v204
    %v211 = vld [vmem:[%s3] sm:$0x3]
    %v213 = vlaneseq
    %v214 = vshrl.u32 %v213, 7
    %v215 = vsub.s32 0, %v214
    %v216 = vrot.slane %v211, %v215
    %v217 = vlaneseq
    %v218 = vshrl.u32 %v217, 7
    %v219 = vsub.s32 1, %v218
    %v220 = vrot.slane %v211, %v219
    %v223 = vadd.f32 %v207, %v216
    %v224 = vadd.f32 %v208, %v220
    %v225 = vadd.f32 %v209, %v216
    %v226 = vadd.f32 %v210, %v220
    %v227 = vld [vmem:[%s4] sm:$0xff]
    %v228 = vld [vmem:[%s4 + $0x8] sm:$0xff]
    %v229 = vld [vmem:[%s4 + $0x10] sm:$0xff]
    %v230 = vld [vmem:[%s4 + $0x18] sm:$0xff]
    %v231 = vadd.f32 %v223, %v227
    %v232 = vadd.f32 %v224, %v228
    %v233 = vadd.f32 %v225, %v229
    %v234 = vadd.f32 %v226, %v230
    %v235 = vmax.f32 %v231, 0.0
    %v236 = vmax.f32 %v232, 0.0
    %v237 = vmax.f32 %v233, 0.0
    %v238 = vmax.f32 %v234, 0.0
    %239 = vst [vmem:[%s5] sm:$0xff] %v235
    %240 = vst [vmem:[%s5 + $0x8] sm:$0xff] %v236
    %241 = vst [vmem:[%s5 + $0x10] sm:$0xff] %v237
    %242 = vst [vmem:[%s5 + $0x18] sm:$0xff] %v238
  $region29: #{modified_resnet_fwd.42} parent=0 // pred_fallthru
    _
  // Predicated region
  $region30: #{modified_resnet_fwd.42} parent=0 // pred_check
    _
  $region31: #{modified_resnet_fwd.42} parent=0 // pred_check_branch
    %244 = sbr.rel (0) target = $region33
  $region32: #{modified_resnet_fwd.42} parent=0 // pred_region
    _
  $region33: #{modified_resnet_fwd.42} parent=0 // pred_fallthru
    _
  // Predicated region
  $region34: #{modified_resnet_fwd.42} parent=0 // pred_check
    _
  $region35: #{modified_resnet_fwd.42} parent=0 // pred_check_branch
    %246 = sbr.rel (0) target = $region37
  $region36: #{modified_resnet_fwd.42} parent=0 // pred_region
    _
  $region37: #{modified_resnet_fwd.42} parent=0 // pred_fallthru
    _

// kernel: modified_resnet_fwd.41
$region0: #{modified_resnet_fwd.41}
  #allocation0 [shape = 'u32[]', space=smem, size = 0x4, offset = 0x4, fixed_abs, tag = 'smem constant byte address 0x4 - core index']
  #allocation1 [shape = 'u32[144,128]{1,0:T(1,128)}', space=vmem, size = 0x12000, scoped, tag = 'internal scratch']
  #allocation2 [shape = 'f32[16,256]{1,0:T(8,128)}', space=vmem, size = 0x4000, scoped, tag = 'scratch operand']
  %s0 = inlined_call_operand.vmem [shape: bf16[16,128], index: 0, kind: input, shape index: {}]
  %s1 = inlined_call_operand.vmem [shape: bf16[128,256], index: 1, kind: input, shape index: {}]
  %s2 = inlined_call_operand.vmem [shape: f32[1,256], index: 2, kind: input, shape index: {}]
  %s3 = inlined_call_operand.vmem [shape: f32[1,256], index: 3, kind: input, shape index: {}]
  %s4 = inlined_call_operand.vmem [shape: f32[16,256], index: 4, kind: output, shape index: {}]
  %s5 = sld [smem:[#allocation0]]
  $region34: #{modified_resnet_fwd.41} parent=0
    _
  %s7 = ssub.s32 1, %s5
  %s8 = scalar_select 0, %s7, %s5
  // Predicated region
  $region2: #{modified_resnet_fwd.41} parent=0 // pred_check
    _
  $region3: #{modified_resnet_fwd.41} parent=0 // pred_check_branch
    %10 = sbr.rel (0) target = $region5
  $region4: #{modified_resnet_fwd.41} parent=0 // pred_region
    _
  $region5: #{modified_resnet_fwd.41} parent=0 // pred_fallthru
    _
  // Predicated region
  $region6: #{modified_resnet_fwd.41} parent=0 // pred_check
    _
  $region7: #{modified_resnet_fwd.41} parent=0 // pred_check_branch
    %12 = sbr.rel (0) target = $region9
  $region8: #{modified_resnet_fwd.41} parent=0 // pred_region
    _
  $region9: #{modified_resnet_fwd.41} parent=0 // pred_fallthru
    _
  // Predicated region
  $region10: #{modified_resnet_fwd.41} parent=0 // pred_check
    _
  $region11: #{modified_resnet_fwd.41} parent=0 // pred_check_branch
    %14 = sbr.rel (0) target = $region13
  $region12: #{modified_resnet_fwd.41} parent=0 // pred_region
    _
  $region13: #{modified_resnet_fwd.41} parent=0 // pred_fallthru
    _
  // Predicated region
  $region14: #{modified_resnet_fwd.41} parent=0 // pred_check
    _
  $region15: #{modified_resnet_fwd.41} parent=0 // pred_check_branch
    %16 = sbr.rel (0) target = $region17
  $region16: #{modified_resnet_fwd.41} parent=0 // pred_region
    _
  $region17: #{modified_resnet_fwd.41} parent=0 // pred_fallthru
    _
  %p18 = scmp.eq.s32.totalorder 0, 0
  // Predicated region
  $region18: #{modified_resnet_fwd.41} parent=0 // pred_check
    %p19 = pneg %p18
  $region19: #{modified_resnet_fwd.41} parent=0 // pred_check_branch
    %21 = sbr.rel (%p19) target = $region21
  $region20: #{modified_resnet_fwd.41} parent=0 // pred_region
    %22 = vst [vmem:[#allocation2] sm:$0xff] 0.0
    %23 = vst [vmem:[#allocation2 + $0x8] sm:$0xff] 0.0
    %24 = vst [vmem:[#allocation2 + $0x10] sm:$0xff] 0.0
    %25 = vst [vmem:[#allocation2 + $0x18] sm:$0xff] 0.0
  $region21: #{modified_resnet_fwd.41} parent=0 // pred_fallthru
    _
  %v26 = vld [vmem:[#allocation2] sm:$0xff]
  %v27 = vld [vmem:[#allocation2 + $0x8] sm:$0xff]
  %v28 = vld [vmem:[#allocation2 + $0x10] sm:$0xff]
  %v29 = vld [vmem:[#allocation2 + $0x18] sm:$0xff]
  %v30 = vld [vmem:[%s0] sm:$0xf]
  %v31 = vld [vmem:[%s0 + $0x4] sm:$0xf]
  %v32 = vld [vmem:[%s1] sm:$0xff]
  %v33 = vld [vmem:[%s1 + $0x8] sm:$0xff]
  %v34 = vld [vmem:[%s1 + $0x10] sm:$0xff]
  %v35 = vld [vmem:[%s1 + $0x18] sm:$0xff]
  %v36 = vld [vmem:[%s1 + $0x20] sm:$0xff]
  %v37 = vld [vmem:[%s1 + $0x28] sm:$0xff]
  %v38 = vld [vmem:[%s1 + $0x30] sm:$0xff]
  %v39 = vld [vmem:[%s1 + $0x38] sm:$0xff]
  %v40 = vld [vmem:[%s1 + $0x40] sm:$0xff]
  %v41 = vld [vmem:[%s1 + $0x48] sm:$0xff]
  %v42 = vld [vmem:[%s1 + $0x50] sm:$0xff]
  %v43 = vld [vmem:[%s1 + $0x58] sm:$0xff]
  %v44 = vld [vmem:[%s1 + $0x60] sm:$0xff]
  %v45 = vld [vmem:[%s1 + $0x68] sm:$0xff]
  %v46 = vld [vmem:[%s1 + $0x70] sm:$0xff]
  %v47 = vld [vmem:[%s1 + $0x78] sm:$0xff]
  %v50 = vunpack.c.l.b16 %v30
  %v51 = vunpack.c.l.b16 %v31
  %v52 = vpack.c.b16 %v51, %v50
  %v70 = vunpack.c.l.b16 %v32
  %v71 = vunpack.c.h.b16 %v32
  %v72 = vunpack.c.l.b16 %v33
  %v73 = vunpack.c.h.b16 %v33
  %v74 = vunpack.c.l.b16 %v34
  %v75 = vunpack.c.h.b16 %v34
  %v76 = vunpack.c.l.b16 %v35
  %v77 = vunpack.c.h.b16 %v35
  %v78 = vunpack.c.l.b16 %v36
  %v79 = vunpack.c.h.b16 %v36
  %v80 = vunpack.c.l.b16 %v37
  %v81 = vunpack.c.h.b16 %v37
  %v82 = vunpack.c.l.b16 %v38
  %v83 = vunpack.c.h.b16 %v38
  %v84 = vunpack.c.l.b16 %v39
  %v85 = vunpack.c.h.b16 %v39
  %v86 = vunpack.c.l.b16 %v40
  %v87 = vunpack.c.h.b16 %v40
  %v88 = vunpack.c.l.b16 %v41
  %v89 = vunpack.c.h.b16 %v41
  %v90 = vunpack.c.l.b16 %v42
  %v91 = vunpack.c.h.b16 %v42
  %v92 = vunpack.c.l.b16 %v43
  %v93 = vunpack.c.h.b16 %v43
  %v94 = vunpack.c.l.b16 %v44
  %v95 = vunpack.c.h.b16 %v44
  %v96 = vunpack.c.l.b16 %v45
  %v97 = vunpack.c.h.b16 %v45
  %v98 = vunpack.c.l.b16 %v46
  %v99 = vunpack.c.h.b16 %v46
  %v100 = vunpack.c.l.b16 %v47
  %v101 = vunpack.c.h.b16 %v47
  %v102 = vpack.c.b16 %v72, %v70
  %v103 = vpack.c.b16 %v73, %v71
  %v104 = vpack.c.b16 %v76, %v74
  %v105 = vpack.c.b16 %v77, %v75
  %v106 = vpack.c.b16 %v80, %v78
  %v107 = vpack.c.b16 %v81, %v79
  %v108 = vpack.c.b16 %v84, %v82
  %v109 = vpack.c.b16 %v85, %v83
  %v110 = vpack.c.b16 %v88, %v86
  %v111 = vpack.c.b16 %v89, %v87
  %v112 = vpack.c.b16 %v92, %v90
  %v113 = vpack.c.b16 %v93, %v91
  %v114 = vpack.c.b16 %v96, %v94
  %v115 = vpack.c.b16 %v97, %v95
  %v116 = vpack.c.b16 %v100, %v98
  %v117 = vpack.c.b16 %v101, %v99
  %134 = vmatprep.subr.bf16.mxu0 %v103
  %135 = vmatpush1.bf16.msra.mxu0 %v102
  %136 = vmatprep.subr.bf16.mxu0 %v105
  %137 = vmatpush1.bf16.msra.mxu0 %v104
  %138 = vmatprep.subr.bf16.mxu0 %v107
  %139 = vmatpush1.bf16.msra.mxu0 %v106
  %140 = vmatprep.subr.bf16.mxu0 %v109
  %141 = vmatpush1.bf16.msra.mxu0 %v108
  %142 = vmatprep.subr.bf16.mxu0 %v111
  %143 = vmatpush1.bf16.msra.mxu0 %v110
  %144 = vmatprep.subr.bf16.mxu0 %v113
  %145 = vmatpush1.bf16.msra.mxu0 %v112
  %146 = vmatprep.subr.bf16.mxu0 %v115
  %147 = vmatpush1.bf16.msra.mxu0 %v114
  %148 = vmatprep.subr.bf16.mxu0 %v117
  %149 = vmatpush1.bf16.msra.mxu0 %v116
  %150 = vmatprep.subr.bf16.mxu0 0
  %151 = vmatpush1.bf16.msra.mxu0 0
  %152 = vmatprep.subr.bf16.mxu0 0
  %153 = vmatpush1.bf16.msra.mxu0 0
  %154 = vmatprep.subr.bf16.mxu0 0
  %155 = vmatpush1.bf16.msra.mxu0 0
  %156 = vmatprep.subr.bf16.mxu0 0
  %157 = vmatpush1.bf16.msra.mxu0 0
  %158 = vmatprep.subr.bf16.mxu0 0
  %159 = vmatpush1.bf16.msra.mxu0 0
  %160 = vmatprep.subr.bf16.mxu0 0
  %161 = vmatpush1.bf16.msra.mxu0 0
  %162 = vmatprep.subr.bf16.mxu0 0
  %163 = vmatpush1.bf16.msra.mxu0 0
  %164 = vmatprep.subr.bf16.mxu0 0
  %165 = vmatpush1.bf16.msra.mxu0 0
  %166 = vmatprep.mubr.bf16.mxu0 0
  %167 = vmatmul.mubr.bf16.gmra.mrb[0].mxu0 %v52
  %v168 = vpop.f32.mrb[0].mxu0
  %v169 = vadd.f32 0.0, %v168
  %v170 = vpop.f32.mrb[0].mxu0
  %v171 = vadd.f32 0.0, %v170
  %v172 = vpop.f32.mrb[0].mxu0
  %v173 = vadd.f32 0.0, %v172
  %v174 = vpop.f32.mrb[0].mxu0
  %v175 = vadd.f32 0.0, %v174
  %176 = vdwg.mxu0
  %v177 = vadd.f32 %v26, %v169
  %v178 = vadd.f32 %v27, %v171
  %v179 = vadd.f32 %v28, %v173
  %v180 = vadd.f32 %v29, %v175
  %181 = vst [vmem:[#allocation2] sm:$0xff] %v177
  %182 = vst [vmem:[#allocation2 + $0x8] sm:$0xff] %v178
  %183 = vst [vmem:[#allocation2 + $0x10] sm:$0xff] %v179
  %184 = vst [vmem:[#allocation2 + $0x18] sm:$0xff] %v180
  // Predicated region
  $region22: #{modified_resnet_fwd.41} parent=0 // pred_check
    %p185 = pneg %p18
  $region23: #{modified_resnet_fwd.41} parent=0 // pred_check_branch
    %187 = sbr.rel (%p185) target = $region25
  $region24: #{modified_resnet_fwd.41} parent=0 // pred_region
    %v188 = vld [vmem:[#allocation2] sm:$0xff]
    %v189 = vld [vmem:[#allocation2 + $0x8] sm:$0xff]
    %v190 = vld [vmem:[#allocation2 + $0x10] sm:$0xff]
    %v191 = vld [vmem:[#allocation2 + $0x18] sm:$0xff]
    %v192 = vld [vmem:[%s2] sm:$0x3]
    %v194 = vlaneseq
    %v195 = vshrl.u32 %v194, 7
    %v196 = vsub.s32 0, %v195
    %v197 = vrot.slane %v192, %v196
    %v198 = vlaneseq
    %v199 = vshrl.u32 %v198, 7
    %v200 = vsub.s32 1, %v199
    %v201 = vrot.slane %v192, %v200
    %v204 = vmul.f32 %v188, %v197
    %v205 = vmul.f32 %v189, %v201
    %v206 = vmul.f32 %v190, %v197
    %v207 = vmul.f32 %v191, %v201
    %v208 = vld [vmem:[%s3] sm:$0x3]
    %v210 = vlaneseq
    %v211 = vshrl.u32 %v210, 7
    %v212 = vsub.s32 0, %v211
    %v213 = vrot.slane %v208, %v212
    %v214 = vlaneseq
    %v215 = vshrl.u32 %v214, 7
    %v216 = vsub.s32 1, %v215
    %v217 = vrot.slane %v208, %v216
    %v220 = vadd.f32 %v204, %v213
    %v221 = vadd.f32 %v205, %v217
    %v222 = vadd.f32 %v206, %v213
    %v223 = vadd.f32 %v207, %v217
    %224 = vst [vmem:[%s4] sm:$0xff] %v220
    %225 = vst [vmem:[%s4 + $0x8] sm:$0xff] %v221
    %226 = vst [vmem:[%s4 + $0x10] sm:$0xff] %v222
    %227 = vst [vmem:[%s4 + $0x18] sm:$0xff] %v223
  $region25: #{modified_resnet_fwd.41} parent=0 // pred_fallthru
    _
  // Predicated region
  $region26: #{modified_resnet_fwd.41} parent=0 // pred_check
    _
  $region27: #{modified_resnet_fwd.41} parent=0 // pred_check_branch
    %229 = sbr.rel (0) target = $region29
  $region28: #{modified_resnet_fwd.41} parent=0 // pred_region
    _
  $region29: #{modified_resnet_fwd.41} parent=0 // pred_fallthru
    _
  // Predicated region
  $region30: #{modified_resnet_fwd.41} parent=0 // pred_check
    _
  $region31: #{modified_resnet_fwd.41} parent=0 // pred_check_branch
    %231 = sbr.rel (0) target = $region33
  $region32: #{modified_resnet_fwd.41} parent=0 // pred_region
    _
  $region33: #{modified_resnet_fwd.41} parent=0 // pred_fallthru
    _

// kernel: modified_resnet_fwd.44
$region0: #{modified_resnet_fwd.44}
  #allocation0 [shape = 'u32[]', space=smem, size = 0x4, offset = 0x4, fixed_abs, tag = 'smem constant byte address 0x4 - core index']
  #allocation1 [shape = 'u32[144,128]{1,0:T(1,128)}', space=vmem, size = 0x12000, scoped, tag = 'internal scratch']
  #allocation2 [shape = 'f32[16,256]{1,0:T(8,128)}', space=vmem, size = 0x4000, scoped, tag = 'scratch operand']
  %s0 = inlined_call_operand.vmem [shape: bf16[16,256], index: 0, kind: input, shape index: {}]
  %s1 = inlined_call_operand.vmem [shape: bf16[256,256], index: 1, kind: input, shape index: {}]
  %s2 = inlined_call_operand.vmem [shape: f32[1,256], index: 2, kind: input, shape index: {}]
  %s3 = inlined_call_operand.vmem [shape: f32[1,256], index: 3, kind: input, shape index: {}]
  %s4 = inlined_call_operand.vmem [shape: f32[16,256], index: 4, kind: output, shape index: {}]
  %s5 = sld [smem:[#allocation0]]
  $region34: #{modified_resnet_fwd.44} parent=0
    _
  %s7 = ssub.s32 1, %s5
  %s8 = scalar_select 0, %s7, %s5
  // Predicated region
  $region2: #{modified_resnet_fwd.44} parent=0 // pred_check
    _
  $region3: #{modified_resnet_fwd.44} parent=0 // pred_check_branch
    %10 = sbr.rel (0) target = $region5
  $region4: #{modified_resnet_fwd.44} parent=0 // pred_region
    _
  $region5: #{modified_resnet_fwd.44} parent=0 // pred_fallthru
    _
  // Predicated region
  $region6: #{modified_resnet_fwd.44} parent=0 // pred_check
    _
  $region7: #{modified_resnet_fwd.44} parent=0 // pred_check_branch
    %12 = sbr.rel (0) target = $region9
  $region8: #{modified_resnet_fwd.44} parent=0 // pred_region
    _
  $region9: #{modified_resnet_fwd.44} parent=0 // pred_fallthru
    _
  // Predicated region
  $region10: #{modified_resnet_fwd.44} parent=0 // pred_check
    _
  $region11: #{modified_resnet_fwd.44} parent=0 // pred_check_branch
    %14 = sbr.rel (0) target = $region13
  $region12: #{modified_resnet_fwd.44} parent=0 // pred_region
    _
  $region13: #{modified_resnet_fwd.44} parent=0 // pred_fallthru
    _
  // Predicated region
  $region14: #{modified_resnet_fwd.44} parent=0 // pred_check
    _
  $region15: #{modified_resnet_fwd.44} parent=0 // pred_check_branch
    %16 = sbr.rel (0) target = $region17
  $region16: #{modified_resnet_fwd.44} parent=0 // pred_region
    _
  $region17: #{modified_resnet_fwd.44} parent=0 // pred_fallthru
    _
  %p17 = scmp.eq.s32.totalorder 0, 0
  // Predicated region
  $region18: #{modified_resnet_fwd.44} parent=0 // pred_check
    %p18 = pneg %p17
  $region19: #{modified_resnet_fwd.44} parent=0 // pred_check_branch
    %20 = sbr.rel (%p18) target = $region21
  $region20: #{modified_resnet_fwd.44} parent=0 // pred_region
    %21 = vst [vmem:[#allocation2] sm:$0xff] 0.0
    %22 = vst [vmem:[#allocation2 + $0x8] sm:$0xff] 0.0
    %23 = vst [vmem:[#allocation2 + $0x10] sm:$0xff] 0.0
    %24 = vst [vmem:[#allocation2 + $0x18] sm:$0xff] 0.0
  $region21: #{modified_resnet_fwd.44} parent=0 // pred_fallthru
    _
  %v25 = vld [vmem:[#allocation2] sm:$0xff]
  %v26 = vld [vmem:[#allocation2 + $0x8] sm:$0xff]
  %v27 = vld [vmem:[#allocation2 + $0x10] sm:$0xff]
  %v28 = vld [vmem:[#allocation2 + $0x18] sm:$0xff]
  %v29 = vld [vmem:[%s0] sm:$0xff]
  %v30 = vld [vmem:[%s0 + $0x8] sm:$0xff]
  %v31 = vld [vmem:[%s1] sm:$0xff]
  %v32 = vld [vmem:[%s1 + $0x8] sm:$0xff]
  %v33 = vld [vmem:[%s1 + $0x10] sm:$0xff]
  %v34 = vld [vmem:[%s1 + $0x18] sm:$0xff]
  %v35 = vld [vmem:[%s1 + $0x20] sm:$0xff]
  %v36 = vld [vmem:[%s1 + $0x28] sm:$0xff]
  %v37 = vld [vmem:[%s1 + $0x30] sm:$0xff]
  %v38 = vld [vmem:[%s1 + $0x38] sm:$0xff]
  %v39 = vld [vmem:[%s1 + $0x40] sm:$0xff]
  %v40 = vld [vmem:[%s1 + $0x48] sm:$0xff]
  %v41 = vld [vmem:[%s1 + $0x50] sm:$0xff]
  %v42 = vld [vmem:[%s1 + $0x58] sm:$0xff]
  %v43 = vld [vmem:[%s1 + $0x60] sm:$0xff]
  %v44 = vld [vmem:[%s1 + $0x68] sm:$0xff]
  %v45 = vld [vmem:[%s1 + $0x70] sm:$0xff]
  %v46 = vld [vmem:[%s1 + $0x78] sm:$0xff]
  %v47 = vld [vmem:[%s1 + $0x80] sm:$0xff]
  %v48 = vld [vmem:[%s1 + $0x88] sm:$0xff]
  %v49 = vld [vmem:[%s1 + $0x90] sm:$0xff]
  %v50 = vld [vmem:[%s1 + $0x98] sm:$0xff]
  %v51 = vld [vmem:[%s1 + $0xa0] sm:$0xff]
  %v52 = vld [vmem:[%s1 + $0xa8] sm:$0xff]
  %v53 = vld [vmem:[%s1 + $0xb0] sm:$0xff]
  %v54 = vld [vmem:[%s1 + $0xb8] sm:$0xff]
  %v55 = vld [vmem:[%s1 + $0xc0] sm:$0xff]
  %v56 = vld [vmem:[%s1 + $0xc8] sm:$0xff]
  %v57 = vld [vmem:[%s1 + $0xd0] sm:$0xff]
  %v58 = vld [vmem:[%s1 + $0xd8] sm:$0xff]
  %v59 = vld [vmem:[%s1 + $0xe0] sm:$0xff]
  %v60 = vld [vmem:[%s1 + $0xe8] sm:$0xff]
  %v61 = vld [vmem:[%s1 + $0xf0] sm:$0xff]
  %v62 = vld [vmem:[%s1 + $0xf8] sm:$0xff]
  %v65 = vunpack.c.l.b16 %v29
  %v66 = vunpack.c.h.b16 %v29
  %v67 = vunpack.c.l.b16 %v30
  %v68 = vunpack.c.h.b16 %v30
  %v69 = vpack.c.b16 %v67, %v65
  %v70 = vpack.c.b16 %v68, %v66
  %v105 = vunpack.c.l.b16 %v31
  %v106 = vunpack.c.h.b16 %v31
  %v107 = vunpack.c.l.b16 %v32
  %v108 = vunpack.c.h.b16 %v32
  %v109 = vunpack.c.l.b16 %v33
  %v110 = vunpack.c.h.b16 %v33
  %v111 = vunpack.c.l.b16 %v34
  %v112 = vunpack.c.h.b16 %v34
  %v113 = vunpack.c.l.b16 %v35
  %v114 = vunpack.c.h.b16 %v35
  %v115 = vunpack.c.l.b16 %v36
  %v116 = vunpack.c.h.b16 %v36
  %v117 = vunpack.c.l.b16 %v37
  %v118 = vunpack.c.h.b16 %v37
  %v119 = vunpack.c.l.b16 %v38
  %v120 = vunpack.c.h.b16 %v38
  %v121 = vunpack.c.l.b16 %v39
  %v122 = vunpack.c.h.b16 %v39
  %v123 = vunpack.c.l.b16 %v40
  %v124 = vunpack.c.h.b16 %v40
  %v125 = vunpack.c.l.b16 %v41
  %v126 = vunpack.c.h.b16 %v41
  %v127 = vunpack.c.l.b16 %v42
  %v128 = vunpack.c.h.b16 %v42
  %v129 = vunpack.c.l.b16 %v43
  %v130 = vunpack.c.h.b16 %v43
  %v131 = vunpack.c.l.b16 %v44
  %v132 = vunpack.c.h.b16 %v44
  %v133 = vunpack.c.l.b16 %v45
  %v134 = vunpack.c.h.b16 %v45
  %v135 = vunpack.c.l.b16 %v46
  %v136 = vunpack.c.h.b16 %v46
  %v137 = vunpack.c.l.b16 %v47
  %v138 = vunpack.c.h.b16 %v47
  %v139 = vunpack.c.l.b16 %v48
  %v140 = vunpack.c.h.b16 %v48
  %v141 = vunpack.c.l.b16 %v49
  %v142 = vunpack.c.h.b16 %v49
  %v143 = vunpack.c.l.b16 %v50
  %v144 = vunpack.c.h.b16 %v50
  %v145 = vunpack.c.l.b16 %v51
  %v146 = vunpack.c.h.b16 %v51
  %v147 = vunpack.c.l.b16 %v52
  %v148 = vunpack.c.h.b16 %v52
  %v149 = vunpack.c.l.b16 %v53
  %v150 = vunpack.c.h.b16 %v53
  %v151 = vunpack.c.l.b16 %v54
  %v152 = vunpack.c.h.b16 %v54
  %v153 = vunpack.c.l.b16 %v55
  %v154 = vunpack.c.h.b16 %v55
  %v155 = vunpack.c.l.b16 %v56
  %v156 = vunpack.c.h.b16 %v56
  %v157 = vunpack.c.l.b16 %v57
  %v158 = vunpack.c.h.b16 %v57
  %v159 = vunpack.c.l.b16 %v58
  %v160 = vunpack.c.h.b16 %v58
  %v161 = vunpack.c.l.b16 %v59
  %v162 = vunpack.c.h.b16 %v59
  %v163 = vunpack.c.l.b16 %v60
  %v164 = vunpack.c.h.b16 %v60
  %v165 = vunpack.c.l.b16 %v61
  %v166 = vunpack.c.h.b16 %v61
  %v167 = vunpack.c.l.b16 %v62
  %v168 = vunpack.c.h.b16 %v62
  %v169 = vpack.c.b16 %v107, %v105
  %v170 = vpack.c.b16 %v108, %v106
  %v171 = vpack.c.b16 %v111, %v109
  %v172 = vpack.c.b16 %v112, %v110
  %v173 = vpack.c.b16 %v115, %v113
  %v174 = vpack.c.b16 %v116, %v114
  %v175 = vpack.c.b16 %v119, %v117
  %v176 = vpack.c.b16 %v120, %v118
  %v177 = vpack.c.b16 %v123, %v121
  %v178 = vpack.c.b16 %v124, %v122
  %v179 = vpack.c.b16 %v127, %v125
  %v180 = vpack.c.b16 %v128, %v126
  %v181 = vpack.c.b16 %v131, %v129
  %v182 = vpack.c.b16 %v132, %v130
  %v183 = vpack.c.b16 %v135, %v133
  %v184 = vpack.c.b16 %v136, %v134
  %v185 = vpack.c.b16 %v139, %v137
  %v186 = vpack.c.b16 %v140, %v138
  %v187 = vpack.c.b16 %v143, %v141
  %v188 = vpack.c.b16 %v144, %v142
  %v189 = vpack.c.b16 %v147, %v145
  %v190 = vpack.c.b16 %v148, %v146
  %v191 = vpack.c.b16 %v151, %v149
  %v192 = vpack.c.b16 %v152, %v150
  %v193 = vpack.c.b16 %v155, %v153
  %v194 = vpack.c.b16 %v156, %v154
  %v195 = vpack.c.b16 %v159, %v157
  %v196 = vpack.c.b16 %v160, %v158
  %v197 = vpack.c.b16 %v163, %v161
  %v198 = vpack.c.b16 %v164, %v162
  %v199 = vpack.c.b16 %v167, %v165
  %v200 = vpack.c.b16 %v168, %v166
  %233 = vmatprep.subr.bf16.mxu0 %v170
  %234 = vmatpush1.bf16.msra.mxu0 %v169
  %235 = vmatprep.subr.bf16.mxu0 %v172
  %236 = vmatpush1.bf16.msra.mxu0 %v171
  %237 = vmatprep.subr.bf16.mxu0 %v174
  %238 = vmatpush1.bf16.msra.mxu0 %v173
  %239 = vmatprep.subr.bf16.mxu0 %v176
  %240 = vmatpush1.bf16.msra.mxu0 %v175
  %241 = vmatprep.subr.bf16.mxu0 %v178
  %242 = vmatpush1.bf16.msra.mxu0 %v177
  %243 = vmatprep.subr.bf16.mxu0 %v180
  %244 = vmatpush1.bf16.msra.mxu0 %v179
  %245 = vmatprep.subr.bf16.mxu0 %v182
  %246 = vmatpush1.bf16.msra.mxu0 %v181
  %247 = vmatprep.subr.bf16.mxu0 %v184
  %248 = vmatpush1.bf16.msra.mxu0 %v183
  %249 = vmatprep.subr.bf16.mxu0 %v186
  %250 = vmatpush1.bf16.msra.mxu0 %v185
  %251 = vmatprep.subr.bf16.mxu0 %v188
  %252 = vmatpush1.bf16.msra.mxu0 %v187
  %253 = vmatprep.subr.bf16.mxu0 %v190
  %254 = vmatpush1.bf16.msra.mxu0 %v189
  %255 = vmatprep.subr.bf16.mxu0 %v192
  %256 = vmatpush1.bf16.msra.mxu0 %v191
  %257 = vmatprep.subr.bf16.mxu0 %v194
  %258 = vmatpush1.bf16.msra.mxu0 %v193
  %259 = vmatprep.subr.bf16.mxu0 %v196
  %260 = vmatpush1.bf16.msra.mxu0 %v195
  %261 = vmatprep.subr.bf16.mxu0 %v198
  %262 = vmatpush1.bf16.msra.mxu0 %v197
  %263 = vmatprep.subr.bf16.mxu0 %v200
  %264 = vmatpush1.bf16.msra.mxu0 %v199
  %265 = vmatprep.mubr.bf16.mxu0 %v70
  %266 = vmatmul.mubr.bf16.gmra.mrb[0].mxu0 %v69
  %v267 = vpop.f32.mrb[0].mxu0
  %v268 = vadd.f32 0.0, %v267
  %v269 = vpop.f32.mrb[0].mxu0
  %v270 = vadd.f32 0.0, %v269
  %v271 = vpop.f32.mrb[0].mxu0
  %v272 = vadd.f32 0.0, %v271
  %v273 = vpop.f32.mrb[0].mxu0
  %v274 = vadd.f32 0.0, %v273
  %275 = vdwg.mxu0
  %v276 = vadd.f32 %v25, %v268
  %v277 = vadd.f32 %v26, %v270
  %v278 = vadd.f32 %v27, %v272
  %v279 = vadd.f32 %v28, %v274
  %280 = vst [vmem:[#allocation2] sm:$0xff] %v276
  %281 = vst [vmem:[#allocation2 + $0x8] sm:$0xff] %v277
  %282 = vst [vmem:[#allocation2 + $0x10] sm:$0xff] %v278
  %283 = vst [vmem:[#allocation2 + $0x18] sm:$0xff] %v279
  // Predicated region
  $region22: #{modified_resnet_fwd.44} parent=0 // pred_check
    %p284 = pneg %p17
  $region23: #{modified_resnet_fwd.44} parent=0 // pred_check_branch
    %286 = sbr.rel (%p284) target = $region25
  $region24: #{modified_resnet_fwd.44} parent=0 // pred_region
    %v287 = vld [vmem:[#allocation2] sm:$0xff]
    %v288 = vld [vmem:[#allocation2 + $0x8] sm:$0xff]
    %v289 = vld [vmem:[#allocation2 + $0x10] sm:$0xff]
    %v290 = vld [vmem:[#allocation2 + $0x18] sm:$0xff]
    %v291 = vld [vmem:[%s2] sm:$0x3]
    %v293 = vlaneseq
    %v294 = vshrl.u32 %v293, 7
    %v295 = vsub.s32 0, %v294
    %v296 = vrot.slane %v291, %v295
    %v297 = vlaneseq
    %v298 = vshrl.u32 %v297, 7
    %v299 = vsub.s32 1, %v298
    %v300 = vrot.slane %v291, %v299
    %v303 = vmul.f32 %v287, %v296
    %v304 = vmul.f32 %v288, %v300
    %v305 = vmul.f32 %v289, %v296
    %v306 = vmul.f32 %v290, %v300
    %v307 = vld [vmem:[%s3] sm:$0x3]
    %v309 = vlaneseq
    %v310 = vshrl.u32 %v309, 7
    %v311 = vsub.s32 0, %v310
    %v312 = vrot.slane %v307, %v311
    %v313 = vlaneseq
    %v314 = vshrl.u32 %v313, 7
    %v315 = vsub.s32 1, %v314
    %v316 = vrot.slane %v307, %v315
    %v319 = vadd.f32 %v303, %v312
    %v320 = vadd.f32 %v304, %v316
    %v321 = vadd.f32 %v305, %v312
    %v322 = vadd.f32 %v306, %v316
    %323 = vst [vmem:[%s4] sm:$0xff] %v319
    %324 = vst [vmem:[%s4 + $0x8] sm:$0xff] %v320
    %325 = vst [vmem:[%s4 + $0x10] sm:$0xff] %v321
    %326 = vst [vmem:[%s4 + $0x18] sm:$0xff] %v322
  $region25: #{modified_resnet_fwd.44} parent=0 // pred_fallthru
    _
  // Predicated region
  $region26: #{modified_resnet_fwd.44} parent=0 // pred_check
    _
  $region27: #{modified_resnet_fwd.44} parent=0 // pred_check_branch
    %328 = sbr.rel (0) target = $region29
  $region28: #{modified_resnet_fwd.44} parent=0 // pred_region
    _
  $region29: #{modified_resnet_fwd.44} parent=0 // pred_fallthru
    _
  // Predicated region
  $region30: #{modified_resnet_fwd.44} parent=0 // pred_check
    _
  $region31: #{modified_resnet_fwd.44} parent=0 // pred_check_branch
    %330 = sbr.rel (0) target = $region33
  $region32: #{modified_resnet_fwd.44} parent=0 // pred_region
    _
  $region33: #{modified_resnet_fwd.44} parent=0 // pred_fallthru
    _

// kernel: modified_resnet_fwd.46
$region0: #{modified_resnet_fwd.46}
  #allocation0 [shape = 'u32[]', space=smem, size = 0x4, offset = 0x4, fixed_abs, tag = 'smem constant byte address 0x4 - core index']
  #allocation1 [shape = 'u32[144,128]{1,0:T(1,128)}', space=vmem, size = 0x12000, scoped, tag = 'internal scratch']
  %s0 = inlined_call_operand.vmem [shape: f32[8,64], index: 0, kind: input, shape index: {}]
  %s1 = inlined_call_operand.vmem [shape: f32[8,2,64], index: 1, kind: input, shape index: {}]
  %s2 = inlined_call_operand.vmem [shape: f32[8,2,64], index: 2, kind: input, shape index: {}]
  %s3 = inlined_call_operand.vmem [shape: f32[8,64], index: 3, kind: output, shape index: {}]
  %s4 = sld [smem:[#allocation0]]
  $region22: #{modified_resnet_fwd.46} parent=0
    _
  %s6 = ssub.s32 1, %s4
  %s7 = scalar_select 0, %s6, %s4
  // Predicated region
  $region2: #{modified_resnet_fwd.46} parent=0 // pred_check
    _
  $region3: #{modified_resnet_fwd.46} parent=0 // pred_check_branch
    %9 = sbr.rel (0) target = $region5
  $region4: #{modified_resnet_fwd.46} parent=0 // pred_region
    _
  $region5: #{modified_resnet_fwd.46} parent=0 // pred_fallthru
    _
  // Predicated region
  $region6: #{modified_resnet_fwd.46} parent=0 // pred_check
    _
  $region7: #{modified_resnet_fwd.46} parent=0 // pred_check_branch
    %11 = sbr.rel (0) target = $region9
  $region8: #{modified_resnet_fwd.46} parent=0 // pred_region
    _
  $region9: #{modified_resnet_fwd.46} parent=0 // pred_fallthru
    _
  // Predicated region
  $region10: #{modified_resnet_fwd.46} parent=0 // pred_check
    _
  $region11: #{modified_resnet_fwd.46} parent=0 // pred_check_branch
    %13 = sbr.rel (0) target = $region13
  $region12: #{modified_resnet_fwd.46} parent=0 // pred_region
    _
  $region13: #{modified_resnet_fwd.46} parent=0 // pred_fallthru
    _
  %v14 = vld [vmem:[%s0] sm:$0xff]
  %v15 = vld [vmem:[%s1] sm:$0x3]
  %v16 = vld [vmem:[%s1 + $0x2] sm:$0x3]
  %v17 = vld [vmem:[%s1 + $0x4] sm:$0x3]
  %v18 = vld [vmem:[%s1 + $0x6] sm:$0x3]
  %v19 = vld [vmem:[%s1 + $0x8] sm:$0x3]
  %v20 = vld [vmem:[%s1 + $0xa] sm:$0x3]
  %v21 = vld [vmem:[%s1 + $0xc] sm:$0x3]
  %v22 = vld [vmem:[%s1 + $0xe] sm:$0x3]
  %v23 = vld [vmem:[%s2] sm:$0x3]
  %v24 = vld [vmem:[%s2 + $0x2] sm:$0x3]
  %v25 = vld [vmem:[%s2 + $0x4] sm:$0x3]
  %v26 = vld [vmem:[%s2 + $0x6] sm:$0x3]
  %v27 = vld [vmem:[%s2 + $0x8] sm:$0x3]
  %v28 = vld [vmem:[%s2 + $0xa] sm:$0x3]
  %v29 = vld [vmem:[%s2 + $0xc] sm:$0x3]
  %v30 = vld [vmem:[%s2 + $0xe] sm:$0x3]
  %v32 = vcombine.high %v14, %v14
  %v34 = vunpack.c.l.s4 1966171168
  %v35 = vunpack.c.0.s8 %v34
  %v36 = vlaneseq
  %v37 = vshrl.u32 %v36, 7
  %v38 = vsub.s32 %v35, %v37
  %v39 = vrot.slane %v14, %v38
  %v41 = vunpack.c.l.s4 1966171168
  %v42 = vunpack.c.0.s8 %v41
  %v43 = vlaneseq
  %v44 = vshrl.u32 %v43, 7
  %v45 = vsub.s32 %v42, %v44
  %v46 = vrot.slane %v32, %v45
  %v47 = vcombine.high %v39, %v39
  %v48 = vcombine.high %v46, %v46
  %v50 = vunpack.c.l.s4 1966171168
  %v51 = vunpack.c.0.s8 %v50
  %v52 = vlaneseq
  %v53 = vshrl.u32 %v52, 7
  %v54 = vsub.s32 %v51, %v53
  %v55 = vrot.slane %v39, %v54
  %v57 = vunpack.c.l.s4 1966171168
  %v58 = vunpack.c.0.s8 %v57
  %v59 = vlaneseq
  %v60 = vshrl.u32 %v59, 7
  %v61 = vsub.s32 %v58, %v60
  %v62 = vrot.slane %v46, %v61
  %v64 = vunpack.c.l.s4 1966171168
  %v65 = vunpack.c.0.s8 %v64
  %v66 = vlaneseq
  %v67 = vshrl.u32 %v66, 7
  %v68 = vsub.s32 %v65, %v67
  %v69 = vrot.slane %v47, %v68
  %v71 = vunpack.c.l.s4 1966171168
  %v72 = vunpack.c.0.s8 %v71
  %v73 = vlaneseq
  %v74 = vshrl.u32 %v73, 7
  %v75 = vsub.s32 %v72, %v74
  %v76 = vrot.slane %v48, %v75
  %v77 = vcombine.high %v55, %v55
  %v78 = vcombine.high %v62, %v62
  %v79 = vcombine.high %v69, %v69
  %v80 = vcombine.high %v76, %v76
  %v81 = vlaneseq
  %v82 = vshrl.u32 %v81, 7
  %v83 = vsub.s32 0, %v82
  %v84 = vrot.slane %v55, %v83
  %v85 = vlaneseq
  %v86 = vshrl.u32 %v85, 7
  %v87 = vsub.s32 0, %v86
  %v88 = vrot.slane %v69, %v87
  %v89 = vlaneseq
  %v90 = vshrl.u32 %v89, 7
  %v91 = vsub.s32 0, %v90
  %v92 = vrot.slane %v77, %v91
  %v93 = vlaneseq
  %v94 = vshrl.u32 %v93, 7
  %v95 = vsub.s32 0, %v94
  %v96 = vrot.slane %v79, %v95
  %v97 = vlaneseq
  %v98 = vshrl.u32 %v97, 7
  %v99 = vsub.s32 0, %v98
  %v100 = vrot.slane %v62, %v99
  %v101 = vlaneseq
  %v102 = vshrl.u32 %v101, 7
  %v103 = vsub.s32 0, %v102
  %v104 = vrot.slane %v76, %v103
  %v105 = vlaneseq
  %v106 = vshrl.u32 %v105, 7
  %v107 = vsub.s32 0, %v106
  %v108 = vrot.slane %v78, %v107
  %v109 = vlaneseq
  %v110 = vshrl.u32 %v109, 7
  %v111 = vsub.s32 0, %v110
  %v112 = vrot.slane %v80, %v111
  %v121 = vmul.f32 %v84, %v15
  %v122 = vmul.f32 %v88, %v16
  %v123 = vmul.f32 %v92, %v17
  %v124 = vmul.f32 %v96, %v18
  %v125 = vmul.f32 %v100, %v19
  %v126 = vmul.f32 %v104, %v20
  %v127 = vmul.f32 %v108, %v21
  %v128 = vmul.f32 %v112, %v22
  %vm129 = vcmask 517120
  %v130 = vsel %vm129, %v121, 0.0
  %131 = vadd.xlane.f32.xlu0 %v130
  %v132 = vpop.xlane.xlu0 %131
  %v133 = vsel %vm129, %v122, 0.0
  %134 = vadd.xlane.f32.xlu0 %v133
  %v135 = vpop.xlane.xlu0 %134
  %v136 = vsel %vm129, %v123, 0.0
  %137 = vadd.xlane.f32.xlu0 %v136
  %v138 = vpop.xlane.xlu0 %137
  %v139 = vsel %vm129, %v124, 0.0
  %140 = vadd.xlane.f32.xlu0 %v139
  %v141 = vpop.xlane.xlu0 %140
  %v142 = vsel %vm129, %v125, 0.0
  %143 = vadd.xlane.f32.xlu0 %v142
  %v144 = vpop.xlane.xlu0 %143
  %v145 = vsel %vm129, %v126, 0.0
  %146 = vadd.xlane.f32.xlu0 %v145
  %v147 = vpop.xlane.xlu0 %146
  %v148 = vsel %vm129, %v127, 0.0
  %149 = vadd.xlane.f32.xlu0 %v148
  %v150 = vpop.xlane.xlu0 %149
  %v151 = vsel %vm129, %v128, 0.0
  %152 = vadd.xlane.f32.xlu0 %v151
  %v153 = vpop.xlane.xlu0 %152
  %v162 = vlaneseq
  %v163 = vand.u32 %v162, 127
  %v164 = vlaneseq
  %v165 = vshrl.u32 %v164, 7
  %v166 = vsub.s32 %v163, %v165
  %v167 = vrot.slane %v132, %v166
  %v168 = vlaneseq
  %v169 = vshrl.u32 %v168, 7
  %v170 = vsub.s32 %v163, %v169
  %v171 = vrot.slane %v135, %v170
  %v172 = vlaneseq
  %v173 = vshrl.u32 %v172, 7
  %v174 = vsub.s32 %v163, %v173
  %v175 = vrot.slane %v138, %v174
  %v176 = vlaneseq
  %v177 = vshrl.u32 %v176, 7
  %v178 = vsub.s32 %v163, %v177
  %v179 = vrot.slane %v141, %v178
  %v180 = vlaneseq
  %v181 = vshrl.u32 %v180, 7
  %v182 = vsub.s32 %v163, %v181
  %v183 = vrot.slane %v144, %v182
  %v184 = vlaneseq
  %v185 = vshrl.u32 %v184, 7
  %v186 = vsub.s32 %v163, %v185
  %v187 = vrot.slane %v147, %v186
  %v188 = vlaneseq
  %v189 = vshrl.u32 %v188, 7
  %v190 = vsub.s32 %v163, %v189
  %v191 = vrot.slane %v150, %v190
  %v192 = vlaneseq
  %v193 = vshrl.u32 %v192, 7
  %v194 = vsub.s32 %v163, %v193
  %v195 = vrot.slane %v153, %v194
  %vm196 = vcmask 1041409
  %v197 = vsel %vm196, %v171, %v167
  %vm198 = vcmask 1042434
  %v199 = vsel %vm198, %v175, %v197
  %vm200 = vcmask 1043459
  %v201 = vsel %vm200, %v179, %v199
  %vm202 = vcmask 1044484
  %v203 = vsel %vm202, %v183, %v201
  %vm204 = vcmask 1045509
  %v205 = vsel %vm204, %v187, %v203
  %vm206 = vcmask 1046534
  %v207 = vsel %vm206, %v191, %v205
  %vm208 = vcmask 1047559
  %v209 = vsel %vm208, %v195, %v207
  %vm211 = vcmask 15360
  %v212 = vsel %vm211, %v209, -inf
  %213 = vmax.xlane.f32.xlu0 %v212
  %v214 = vpop.xlane.xlu0 %213
  %v216 = vlaneseq
  %v217 = vshrl.u32 %v216, 7
  %v218 = vsub.s32 0, %v217
  %v219 = vrot.slane %v214, %v218
  %v220 = vlaneseq
  %v221 = vshrl.u32 %v220, 7
  %v222 = vsub.s32 1, %v221
  %v223 = vrot.slane %v214, %v222
  %v224 = vlaneseq
  %v225 = vshrl.u32 %v224, 7
  %v226 = vsub.s32 2, %v225
  %v227 = vrot.slane %v214, %v226
  %v228 = vlaneseq
  %v229 = vshrl.u32 %v228, 7
  %v230 = vsub.s32 3, %v229
  %v231 = vrot.slane %v214, %v230
  %v232 = vlaneseq
  %v233 = vshrl.u32 %v232, 7
  %v234 = vsub.s32 4, %v233
  %v235 = vrot.slane %v214, %v234
  %v236 = vlaneseq
  %v237 = vshrl.u32 %v236, 7
  %v238 = vsub.s32 5, %v237
  %v239 = vrot.slane %v214, %v238
  %v240 = vlaneseq
  %v241 = vshrl.u32 %v240, 7
  %v242 = vsub.s32 6, %v241
  %v243 = vrot.slane %v214, %v242
  %v244 = vlaneseq
  %v245 = vshrl.u32 %v244, 7
  %v246 = vsub.s32 7, %v245
  %v247 = vrot.slane %v214, %v246
  %v256 = vsub.f32 %v132, %v219
  %v257 = vsub.f32 %v135, %v223
  %v258 = vsub.f32 %v138, %v227
  %v259 = vsub.f32 %v141, %v231
  %v260 = vsub.f32 %v144, %v235
  %v261 = vsub.f32 %v147, %v239
  %v262 = vsub.f32 %v150, %v243
  %v263 = vsub.f32 %v153, %v247
  %v264 = vmul.f32 %v256, 1.442695
  %v265 = vpow.pop %v264
  %v266 = vmul.f32 %v257, 1.442695
  %v267 = vpow.pop %v266
  %v268 = vmul.f32 %v258, 1.442695
  %v269 = vpow.pop %v268
  %v270 = vmul.f32 %v259, 1.442695
  %v271 = vpow.pop %v270
  %v272 = vmul.f32 %v260, 1.442695
  %v273 = vpow.pop %v272
  %v274 = vmul.f32 %v261, 1.442695
  %v275 = vpow.pop %v274
  %v276 = vmul.f32 %v262, 1.442695
  %v277 = vpow.pop %v276
  %v278 = vmul.f32 %v263, 1.442695
  %v279 = vpow.pop %v278
  %288 = vset.pattern.permute.xlu0 0
  %289 = vperm.xlu0 %288, %v265
  %v290 = vpop.permute.xlu0 %289
  %291 = vset.pattern.permute.xlu0 0
  %292 = vperm.xlu0 %291, %v267
  %v293 = vpop.permute.xlu0 %292
  %294 = vset.pattern.permute.xlu0 0
  %295 = vperm.xlu0 %294, %v269
  %v296 = vpop.permute.xlu0 %295
  %297 = vset.pattern.permute.xlu0 0
  %298 = vperm.xlu0 %297, %v271
  %v299 = vpop.permute.xlu0 %298
  %300 = vset.pattern.permute.xlu0 0
  %301 = vperm.xlu0 %300, %v273
  %v302 = vpop.permute.xlu0 %301
  %303 = vset.pattern.permute.xlu0 0
  %304 = vperm.xlu0 %303, %v275
  %v305 = vpop.permute.xlu0 %304
  %306 = vset.pattern.permute.xlu0 0
  %307 = vperm.xlu0 %306, %v277
  %v308 = vpop.permute.xlu0 %307
  %309 = vset.pattern.permute.xlu0 0
  %310 = vperm.xlu0 %309, %v279
  %v311 = vpop.permute.xlu0 %310
  %v312 = vlaneseq
  %v313 = vshrl.u32 %v312, 7
  %v314 = vsub.s32 %v163, %v313
  %v315 = vrot.slane %v290, %v314
  %v316 = vlaneseq
  %v317 = vshrl.u32 %v316, 7
  %v318 = vsub.s32 %v163, %v317
  %v319 = vrot.slane %v293, %v318
  %v320 = vlaneseq
  %v321 = vshrl.u32 %v320, 7
  %v322 = vsub.s32 %v163, %v321
  %v323 = vrot.slane %v296, %v322
  %v324 = vlaneseq
  %v325 = vshrl.u32 %v324, 7
  %v326 = vsub.s32 %v163, %v325
  %v327 = vrot.slane %v299, %v326
  %v328 = vlaneseq
  %v329 = vshrl.u32 %v328, 7
  %v330 = vsub.s32 %v163, %v329
  %v331 = vrot.slane %v302, %v330
  %v332 = vlaneseq
  %v333 = vshrl.u32 %v332, 7
  %v334 = vsub.s32 %v163, %v333
  %v335 = vrot.slane %v305, %v334
  %v336 = vlaneseq
  %v337 = vshrl.u32 %v336, 7
  %v338 = vsub.s32 %v163, %v337
  %v339 = vrot.slane %v308, %v338
  %v340 = vlaneseq
  %v341 = vshrl.u32 %v340, 7
  %v342 = vsub.s32 %v163, %v341
  %v343 = vrot.slane %v311, %v342
  %v344 = vsel %vm196, %v319, %v315
  %v345 = vsel %vm198, %v323, %v344
  %v346 = vsel %vm200, %v327, %v345
  %v347 = vsel %vm202, %v331, %v346
  %v348 = vsel %vm204, %v335, %v347
  %v349 = vsel %vm206, %v339, %v348
  %v350 = vsel %vm208, %v343, %v349
  %v352 = vsel %vm211, %v350, 0.0
  %353 = vadd.xlane.f32.xlu0 %v352
  %v354 = vpop.xlane.xlu0 %353
  %v355 = vrcp.pop %v354
  %v357 = vlaneseq
  %v358 = vshrl.u32 %v357, 7
  %v359 = vsub.s32 0, %v358
  %v360 = vrot.slane %v355, %v359
  %v361 = vlaneseq
  %v362 = vshrl.u32 %v361, 7
  %v363 = vsub.s32 1, %v362
  %v364 = vrot.slane %v355, %v363
  %v365 = vlaneseq
  %v366 = vshrl.u32 %v365, 7
  %v367 = vsub.s32 2, %v366
  %v368 = vrot.slane %v355, %v367
  %v369 = vlaneseq
  %v370 = vshrl.u32 %v369, 7
  %v371 = vsub.s32 3, %v370
  %v372 = vrot.slane %v355, %v371
  %v373 = vlaneseq
  %v374 = vshrl.u32 %v373, 7
  %v375 = vsub.s32 4, %v374
  %v376 = vrot.slane %v355, %v375
  %v377 = vlaneseq
  %v378 = vshrl.u32 %v377, 7
  %v379 = vsub.s32 5, %v378
  %v380 = vrot.slane %v355, %v379
  %v381 = vlaneseq
  %v382 = vshrl.u32 %v381, 7
  %v383 = vsub.s32 6, %v382
  %v384 = vrot.slane %v355, %v383
  %v385 = vlaneseq
  %v386 = vshrl.u32 %v385, 7
  %v387 = vsub.s32 7, %v386
  %v388 = vrot.slane %v355, %v387
  %v397 = vmul.f32 %v265, %v360
  %v398 = vmul.f32 %v267, %v364
  %v399 = vmul.f32 %v269, %v368
  %v400 = vmul.f32 %v271, %v372
  %v401 = vmul.f32 %v273, %v376
  %v402 = vmul.f32 %v275, %v380
  %v403 = vmul.f32 %v277, %v384
  %v404 = vmul.f32 %v279, %v388
  %406 = vset.pattern.permute.xlu0 0
  %407 = vperm.xlu0 %406, %v397
  %v408 = vpop.permute.xlu0 %407
  %411 = vset.pattern.permute.xlu0 0
  %412 = vperm.xlu0 %411, %v398
  %v413 = vpop.permute.xlu0 %412
  %416 = vset.pattern.permute.xlu0 0
  %417 = vperm.xlu0 %416, %v399
  %v418 = vpop.permute.xlu0 %417
  %421 = vset.pattern.permute.xlu0 0
  %422 = vperm.xlu0 %421, %v400
  %v423 = vpop.permute.xlu0 %422
  %426 = vset.pattern.permute.xlu0 0
  %427 = vperm.xlu0 %426, %v401
  %v428 = vpop.permute.xlu0 %427
  %431 = vset.pattern.permute.xlu0 0
  %432 = vperm.xlu0 %431, %v402
  %v433 = vpop.permute.xlu0 %432
  %436 = vset.pattern.permute.xlu0 0
  %437 = vperm.xlu0 %436, %v403
  %v438 = vpop.permute.xlu0 %437
  %441 = vset.pattern.permute.xlu0 0
  %442 = vperm.xlu0 %441, %v404
  %v443 = vpop.permute.xlu0 %442
  %v445 = vmul.f32 %v408, %v23
  %v446 = vmul.f32 %v413, %v24
  %v447 = vmul.f32 %v418, %v25
  %v448 = vmul.f32 %v423, %v26
  %v449 = vmul.f32 %v428, %v27
  %v450 = vmul.f32 %v433, %v28
  %v451 = vmul.f32 %v438, %v29
  %v452 = vmul.f32 %v443, %v30
  %v453 = vsel %vm129, %v445, 0.0
  %v454 = vrot.slane %v453, 4
  %v455 = vadd.f32 %v453, %v454
  %v456 = vrot.slane %v455, 2
  %v457 = vadd.f32 %v455, %v456
  %v458 = vrot.slane %v457, 1
  %v459 = vadd.f32 %v457, %v458
  %v460 = vsel %vm129, %v446, 0.0
  %v461 = vrot.slane %v460, 4
  %v462 = vadd.f32 %v460, %v461
  %v463 = vrot.slane %v462, 2
  %v464 = vadd.f32 %v462, %v463
  %v465 = vrot.slane %v464, 1
  %v466 = vadd.f32 %v464, %v465
  %v467 = vsel %vm129, %v447, 0.0
  %v468 = vrot.slane %v467, 4
  %v469 = vadd.f32 %v467, %v468
  %v470 = vrot.slane %v469, 2
  %v471 = vadd.f32 %v469, %v470
  %v472 = vrot.slane %v471, 1
  %v473 = vadd.f32 %v471, %v472
  %v474 = vsel %vm129, %v448, 0.0
  %v475 = vrot.slane %v474, 4
  %v476 = vadd.f32 %v474, %v475
  %v477 = vrot.slane %v476, 2
  %v478 = vadd.f32 %v476, %v477
  %v479 = vrot.slane %v478, 1
  %v480 = vadd.f32 %v478, %v479
  %v481 = vsel %vm129, %v449, 0.0
  %v482 = vrot.slane %v481, 4
  %v483 = vadd.f32 %v481, %v482
  %v484 = vrot.slane %v483, 2
  %v485 = vadd.f32 %v483, %v484
  %v486 = vrot.slane %v485, 1
  %v487 = vadd.f32 %v485, %v486
  %v488 = vsel %vm129, %v450, 0.0
  %v489 = vrot.slane %v488, 4
  %v490 = vadd.f32 %v488, %v489
  %v491 = vrot.slane %v490, 2
  %v492 = vadd.f32 %v490, %v491
  %v493 = vrot.slane %v492, 1
  %v494 = vadd.f32 %v492, %v493
  %v495 = vsel %vm129, %v451, 0.0
  %v496 = vrot.slane %v495, 4
  %v497 = vadd.f32 %v495, %v496
  %v498 = vrot.slane %v497, 2
  %v499 = vadd.f32 %v497, %v498
  %v500 = vrot.slane %v499, 1
  %v501 = vadd.f32 %v499, %v500
  %v502 = vsel %vm129, %v452, 0.0
  %v503 = vrot.slane %v502, 4
  %v504 = vadd.f32 %v502, %v503
  %v505 = vrot.slane %v504, 2
  %v506 = vadd.f32 %v504, %v505
  %v507 = vrot.slane %v506, 1
  %v508 = vadd.f32 %v506, %v507
  %v517 = vsel %vm196, %v466, %v459
  %v518 = vsel %vm198, %v473, %v517
  %v519 = vsel %vm200, %v480, %v518
  %v520 = vsel %vm202, %v487, %v519
  %v521 = vsel %vm204, %v494, %v520
  %v522 = vsel %vm206, %v501, %v521
  %v523 = vsel %vm208, %v508, %v522
  %vm525 = vcmask 523264
  %526 = vst.msk [vmem:[%s3] sm:$0xff] %vm525, %v523
  // Predicated region
  $region14: #{modified_resnet_fwd.46} parent=0 // pred_check
    _
  $region15: #{modified_resnet_fwd.46} parent=0 // pred_check_branch
    %528 = sbr.rel (0) target = $region17
  $region16: #{modified_resnet_fwd.46} parent=0 // pred_region
    _
  $region17: #{modified_resnet_fwd.46} parent=0 // pred_fallthru
    _
  // Predicated region
  $region18: #{modified_resnet_fwd.46} parent=0 // pred_check
    _
  $region19: #{modified_resnet_fwd.46} parent=0 // pred_check_branch
    %530 = sbr.rel (0) target = $region21
  $region20: #{modified_resnet_fwd.46} parent=0 // pred_region
    _
  $region21: #{modified_resnet_fwd.46} parent=0 // pred_fallthru
    _

// kernel: modified_resnet_fwd.47
$region0: #{modified_resnet_fwd.47}
  #allocation0 [shape = 'u32[]', space=smem, size = 0x4, offset = 0x4, fixed_abs, tag = 'smem constant byte address 0x4 - core index']
  #allocation1 [shape = 'u32[144,128]{1,0:T(1,128)}', space=vmem, size = 0x12000, scoped, tag = 'internal scratch']
  #allocation2 [shape = 'f32[16,128]{1,0:T(8,128)}', space=vmem, size = 0x2000, scoped, tag = 'scratch operand']
  %s0 = inlined_call_operand.vmem [shape: bf16[16,256], index: 0, kind: input, shape index: {}]
  %s1 = inlined_call_operand.vmem [shape: bf16[256,128], index: 1, kind: input, shape index: {}]
  %s2 = inlined_call_operand.vmem [shape: f32[1,128], index: 2, kind: input, shape index: {}]
  %s3 = inlined_call_operand.vmem [shape: f32[1,128], index: 3, kind: input, shape index: {}]
  %s4 = inlined_call_operand.vmem [shape: f32[16,128], index: 4, kind: output, shape index: {}]
  %s5 = sld [smem:[#allocation0]]
  $region34: #{modified_resnet_fwd.47} parent=0
    _
  %s7 = ssub.s32 1, %s5
  %s8 = scalar_select 0, %s7, %s5
  // Predicated region
  $region2: #{modified_resnet_fwd.47} parent=0 // pred_check
    _
  $region3: #{modified_resnet_fwd.47} parent=0 // pred_check_branch
    %10 = sbr.rel (0) target = $region5
  $region4: #{modified_resnet_fwd.47} parent=0 // pred_region
    _
  $region5: #{modified_resnet_fwd.47} parent=0 // pred_fallthru
    _
  // Predicated region
  $region6: #{modified_resnet_fwd.47} parent=0 // pred_check
    _
  $region7: #{modified_resnet_fwd.47} parent=0 // pred_check_branch
    %12 = sbr.rel (0) target = $region9
  $region8: #{modified_resnet_fwd.47} parent=0 // pred_region
    _
  $region9: #{modified_resnet_fwd.47} parent=0 // pred_fallthru
    _
  // Predicated region
  $region10: #{modified_resnet_fwd.47} parent=0 // pred_check
    _
  $region11: #{modified_resnet_fwd.47} parent=0 // pred_check_branch
    %14 = sbr.rel (0) target = $region13
  $region12: #{modified_resnet_fwd.47} parent=0 // pred_region
    _
  $region13: #{modified_resnet_fwd.47} parent=0 // pred_fallthru
    _
  // Predicated region
  $region14: #{modified_resnet_fwd.47} parent=0 // pred_check
    _
  $region15: #{modified_resnet_fwd.47} parent=0 // pred_check_branch
    %16 = sbr.rel (0) target = $region17
  $region16: #{modified_resnet_fwd.47} parent=0 // pred_region
    _
  $region17: #{modified_resnet_fwd.47} parent=0 // pred_fallthru
    _
  %p18 = scmp.eq.s32.totalorder 0, 0
  // Predicated region
  $region18: #{modified_resnet_fwd.47} parent=0 // pred_check
    %p19 = pneg %p18
  $region19: #{modified_resnet_fwd.47} parent=0 // pred_check_branch
    %21 = sbr.rel (%p19) target = $region21
  $region20: #{modified_resnet_fwd.47} parent=0 // pred_region
    %22 = vst [vmem:[#allocation2] sm:$0xff] 0.0
    %23 = vst [vmem:[#allocation2 + $0x8] sm:$0xff] 0.0
  $region21: #{modified_resnet_fwd.47} parent=0 // pred_fallthru
    _
  %v24 = vld [vmem:[#allocation2] sm:$0xff]
  %v25 = vld [vmem:[#allocation2 + $0x8] sm:$0xff]
  %v26 = vld [vmem:[%s0] sm:$0xff]
  %v27 = vld [vmem:[%s0 + $0x8] sm:$0xff]
  %v28 = vld [vmem:[%s1] sm:$0xf]
  %v29 = vld [vmem:[%s1 + $0x4] sm:$0xf]
  %v30 = vld [vmem:[%s1 + $0x8] sm:$0xf]
  %v31 = vld [vmem:[%s1 + $0xc] sm:$0xf]
  %v32 = vld [vmem:[%s1 + $0x10] sm:$0xf]
  %v33 = vld [vmem:[%s1 + $0x14] sm:$0xf]
  %v34 = vld [vmem:[%s1 + $0x18] sm:$0xf]
  %v35 = vld [vmem:[%s1 + $0x1c] sm:$0xf]
  %v36 = vld [vmem:[%s1 + $0x20] sm:$0xf]
  %v37 = vld [vmem:[%s1 + $0x24] sm:$0xf]
  %v38 = vld [vmem:[%s1 + $0x28] sm:$0xf]
  %v39 = vld [vmem:[%s1 + $0x2c] sm:$0xf]
  %v40 = vld [vmem:[%s1 + $0x30] sm:$0xf]
  %v41 = vld [vmem:[%s1 + $0x34] sm:$0xf]
  %v42 = vld [vmem:[%s1 + $0x38] sm:$0xf]
  %v43 = vld [vmem:[%s1 + $0x3c] sm:$0xf]
  %v44 = vld [vmem:[%s1 + $0x40] sm:$0xf]
  %v45 = vld [vmem:[%s1 + $0x44] sm:$0xf]
  %v46 = vld [vmem:[%s1 + $0x48] sm:$0xf]
  %v47 = vld [vmem:[%s1 + $0x4c] sm:$0xf]
  %v48 = vld [vmem:[%s1 + $0x50] sm:$0xf]
  %v49 = vld [vmem:[%s1 + $0x54] sm:$0xf]
  %v50 = vld [vmem:[%s1 + $0x58] sm:$0xf]
  %v51 = vld [vmem:[%s1 + $0x5c] sm:$0xf]
  %v52 = vld [vmem:[%s1 + $0x60] sm:$0xf]
  %v53 = vld [vmem:[%s1 + $0x64] sm:$0xf]
  %v54 = vld [vmem:[%s1 + $0x68] sm:$0xf]
  %v55 = vld [vmem:[%s1 + $0x6c] sm:$0xf]
  %v56 = vld [vmem:[%s1 + $0x70] sm:$0xf]
  %v57 = vld [vmem:[%s1 + $0x74] sm:$0xf]
  %v58 = vld [vmem:[%s1 + $0x78] sm:$0xf]
  %v59 = vld [vmem:[%s1 + $0x7c] sm:$0xf]
  %v62 = vunpack.c.l.b16 %v26
  %v63 = vunpack.c.h.b16 %v26
  %v64 = vunpack.c.l.b16 %v27
  %v65 = vunpack.c.h.b16 %v27
  %v66 = vpack.c.b16 %v64, %v62
  %v67 = vpack.c.b16 %v65, %v63
  %v102 = vunpack.c.l.b16 %v28
  %v103 = vunpack.c.l.b16 %v29
  %v104 = vunpack.c.l.b16 %v30
  %v105 = vunpack.c.l.b16 %v31
  %v106 = vunpack.c.l.b16 %v32
  %v107 = vunpack.c.l.b16 %v33
  %v108 = vunpack.c.l.b16 %v34
  %v109 = vunpack.c.l.b16 %v35
  %v110 = vunpack.c.l.b16 %v36
  %v111 = vunpack.c.l.b16 %v37
  %v112 = vunpack.c.l.b16 %v38
  %v113 = vunpack.c.l.b16 %v39
  %v114 = vunpack.c.l.b16 %v40
  %v115 = vunpack.c.l.b16 %v41
  %v116 = vunpack.c.l.b16 %v42
  %v117 = vunpack.c.l.b16 %v43
  %v118 = vunpack.c.l.b16 %v44
  %v119 = vunpack.c.l.b16 %v45
  %v120 = vunpack.c.l.b16 %v46
  %v121 = vunpack.c.l.b16 %v47
  %v122 = vunpack.c.l.b16 %v48
  %v123 = vunpack.c.l.b16 %v49
  %v124 = vunpack.c.l.b16 %v50
  %v125 = vunpack.c.l.b16 %v51
  %v126 = vunpack.c.l.b16 %v52
  %v127 = vunpack.c.l.b16 %v53
  %v128 = vunpack.c.l.b16 %v54
  %v129 = vunpack.c.l.b16 %v55
  %v130 = vunpack.c.l.b16 %v56
  %v131 = vunpack.c.l.b16 %v57
  %v132 = vunpack.c.l.b16 %v58
  %v133 = vunpack.c.l.b16 %v59
  %v134 = vpack.c.b16 %v103, %v102
  %v135 = vpack.c.b16 %v105, %v104
  %v136 = vpack.c.b16 %v107, %v106
  %v137 = vpack.c.b16 %v109, %v108
  %v138 = vpack.c.b16 %v111, %v110
  %v139 = vpack.c.b16 %v113, %v112
  %v140 = vpack.c.b16 %v115, %v114
  %v141 = vpack.c.b16 %v117, %v116
  %v142 = vpack.c.b16 %v119, %v118
  %v143 = vpack.c.b16 %v121, %v120
  %v144 = vpack.c.b16 %v123, %v122
  %v145 = vpack.c.b16 %v125, %v124
  %v146 = vpack.c.b16 %v127, %v126
  %v147 = vpack.c.b16 %v129, %v128
  %v148 = vpack.c.b16 %v131, %v130
  %v149 = vpack.c.b16 %v133, %v132
  %166 = vmatprep.subr.bf16.mxu0 0
  %167 = vmatpush1.bf16.msra.mxu0 %v134
  %168 = vmatprep.subr.bf16.mxu0 0
  %169 = vmatpush1.bf16.msra.mxu0 %v135
  %170 = vmatprep.subr.bf16.mxu0 0
  %171 = vmatpush1.bf16.msra.mxu0 %v136
  %172 = vmatprep.subr.bf16.mxu0 0
  %173 = vmatpush1.bf16.msra.mxu0 %v137
  %174 = vmatprep.subr.bf16.mxu0 0
  %175 = vmatpush1.bf16.msra.mxu0 %v138
  %176 = vmatprep.subr.bf16.mxu0 0
  %177 = vmatpush1.bf16.msra.mxu0 %v139
  %178 = vmatprep.subr.bf16.mxu0 0
  %179 = vmatpush1.bf16.msra.mxu0 %v140
  %180 = vmatprep.subr.bf16.mxu0 0
  %181 = vmatpush1.bf16.msra.mxu0 %v141
  %182 = vmatprep.subr.bf16.mxu0 0
  %183 = vmatpush1.bf16.msra.mxu0 %v142
  %184 = vmatprep.subr.bf16.mxu0 0
  %185 = vmatpush1.bf16.msra.mxu0 %v143
  %186 = vmatprep.subr.bf16.mxu0 0
  %187 = vmatpush1.bf16.msra.mxu0 %v144
  %188 = vmatprep.subr.bf16.mxu0 0
  %189 = vmatpush1.bf16.msra.mxu0 %v145
  %190 = vmatprep.subr.bf16.mxu0 0
  %191 = vmatpush1.bf16.msra.mxu0 %v146
  %192 = vmatprep.subr.bf16.mxu0 0
  %193 = vmatpush1.bf16.msra.mxu0 %v147
  %194 = vmatprep.subr.bf16.mxu0 0
  %195 = vmatpush1.bf16.msra.mxu0 %v148
  %196 = vmatprep.subr.bf16.mxu0 0
  %197 = vmatpush1.bf16.msra.mxu0 %v149
  %198 = vmatprep.mubr.bf16.mxu0 %v67
  %199 = vmatmul.mubr.bf16.gmra.mrb[0].mxu0 %v66
  %v200 = vpop.f32.mrb[0].mxu0
  %v201 = vadd.f32 0.0, %v200
  %v202 = vpop.f32.mrb[0].mxu0
  %v203 = vpop.f32.mrb[0].mxu0
  %v204 = vadd.f32 0.0, %v203
  %v205 = vpop.f32.mrb[0].mxu0
  %206 = vdwg.mxu0
  %v207 = vadd.f32 %v24, %v201
  %v208 = vadd.f32 %v25, %v204
  %209 = vst [vmem:[#allocation2] sm:$0xff] %v207
  %210 = vst [vmem:[#allocation2 + $0x8] sm:$0xff] %v208
  // Predicated region
  $region22: #{modified_resnet_fwd.47} parent=0 // pred_check
    %p211 = pneg %p18
  $region23: #{modified_resnet_fwd.47} parent=0 // pred_check_branch
    %213 = sbr.rel (%p211) target = $region25
  $region24: #{modified_resnet_fwd.47} parent=0 // pred_region
    %v214 = vld [vmem:[#allocation2] sm:$0xff]
    %v215 = vld [vmem:[#allocation2 + $0x8] sm:$0xff]
    %v216 = vld [vmem:[%s2] sm:$0x1]
    %v218 = vlaneseq
    %v219 = vshrl.u32 %v218, 7
    %v220 = vsub.s32 0, %v219
    %v221 = vrot.slane %v216, %v220
    %v223 = vmul.f32 %v214, %v221
    %v224 = vmul.f32 %v215, %v221
    %v225 = vld [vmem:[%s3] sm:$0x1]
    %v227 = vlaneseq
    %v228 = vshrl.u32 %v227, 7
    %v229 = vsub.s32 0, %v228
    %v230 = vrot.slane %v225, %v229
    %v232 = vadd.f32 %v223, %v230
    %v233 = vadd.f32 %v224, %v230
    %234 = vst [vmem:[%s4] sm:$0xff] %v232
    %235 = vst [vmem:[%s4 + $0x8] sm:$0xff] %v233
  $region25: #{modified_resnet_fwd.47} parent=0 // pred_fallthru
    _
  // Predicated region
  $region26: #{modified_resnet_fwd.47} parent=0 // pred_check
    _
  $region27: #{modified_resnet_fwd.47} parent=0 // pred_check_branch
    %237 = sbr.rel (0) target = $region29
  $region28: #{modified_resnet_fwd.47} parent=0 // pred_region
    _
  $region29: #{modified_resnet_fwd.47} parent=0 // pred_fallthru
    _
  // Predicated region
  $region30: #{modified_resnet_fwd.47} parent=0 // pred_check
    _
  $region31: #{modified_resnet_fwd.47} parent=0 // pred_check_branch
    %239 = sbr.rel (0) target = $region33
  $region32: #{modified_resnet_fwd.47} parent=0 // pred_region
    _
  $region33: #{modified_resnet_fwd.47} parent=0 // pred_fallthru
    _

</llo_original>
